<compile_context>
chip_gen: v7x
topology: tpu7x:2x2x1
jax: 0.10.0
libtpu: 0.0.40
codegen_flags: <defaults>
</compile_context>

<pallas_src>
import functools

import jax
import jax.numpy as jnp
from jax.experimental import pallas as pl
from jax.experimental.pallas import tpu as pltpu


_LANE = 128
# Single-buffered weight scratch must fit comfortably under v7x's 64 MiB
# physical VMEM (with room for activations, biases, outputs).
_VMEM_PARAM_BUDGET = 40 * 1024 * 1024


def _round_up(x, m):
    return (x + m - 1) // m * m


def _fused_ae_kernel(x_ref, *refs):
    """Entire 8-layer autoencoder in one kernel invocation.

    refs layout:
      [0:16]   (w1_hbm, b1, w2_hbm, b2, ..., w8_hbm, b8)   inputs
               w*_hbm: padded bf16 (K, N) refs left in HBM (pl.ANY)
               b*:     padded f32 (1, N) refs in VMEM
      [16]     recon_ref  (Mp, out_np) f32 output
      [17]     enc_ref    (Mp, enc_np) f32 output
      [18:26]  per-layer VMEM weight scratch buffers (bf16)
      [26]     DMA semaphore array, shape (8,)
    """
    w_hbm = [refs[2 * i] for i in range(8)]
    b_vmem = [refs[2 * i + 1] for i in range(8)]
    recon_ref = refs[16]
    enc_ref = refs[17]
    w_vmem = list(refs[18:26])
    sems = refs[26]

    # Kick off every weight DMA up front (in layer order) so later layers'
    # HBM reads overlap the matmuls of earlier layers.  The kernel is
    # weight-HBM-bandwidth bound, so this is the dominant win.
    copies = []
    for i in range(8):
        cp = pltpu.make_async_copy(w_hbm[i], w_vmem[i], sems.at[i])
        cp.start()
        copies.append(cp)

    h = x_ref[...]  # bf16 (Mp, K0p), zero-padded rows/cols
    for layer in range(8):
        copies[layer].wait()
        acc = jnp.dot(h, w_vmem[layer][...],
                      preferred_element_type=jnp.float32) + b_vmem[layer][...]
        if layer == 3:
            enc_ref[...] = acc                  # encoded = pre-ReLU layer-4 output
        if layer < 7:
            # ReLU; Dropout(p=0.6) is identity in eval mode.
            h = jnp.maximum(acc, 0.0).astype(jnp.bfloat16)
        else:
            recon_ref[...] = acc                # final layer: no ReLU


def prepare_params(raw_params):
    """One-time prep: cast weights to bf16, zero-pad K/N to lane multiples.

    raw_params: list of 8 (w, b), w shape (in_features, out_features), b (out,).
    Returns flat tuple (w1, b1, ..., w8, b8) ready for the fused kernel.
    Zero padding is exact: padded K rows contribute 0, padded N cols are sliced off.
    """
    flat = []
    total_bytes = 0
    for w, b in raw_params:
        K, N = w.shape
        Kp, Np = _round_up(K, _LANE), _round_up(N, _LANE)
        wp = jnp.pad(w.astype(jnp.bfloat16), ((0, Kp - K), (0, Np - N)))
        bp = jnp.pad(b.astype(jnp.float32), ((0, Np - N),)).reshape(1, Np)
        flat += [wp, bp]
        total_bytes += Kp * Np * 2 + Np * 4
    if total_bytes > _VMEM_PARAM_BUDGET:
        raise ValueError(
            f"padded params ({total_bytes} bytes) exceed the fused-kernel VMEM "
            "budget; a weight-streaming variant is required for this config")
    return tuple(flat)


def linear_autoencoder_forward(prepared_params, x, *, encoded_dim):
    """Eval-mode forward; returns (reconstruction, encoded) like the PyTorch module."""
    M, in_dim = x.shape
    Mp = _round_up(max(M, 16), 16)            # bf16 sublane-friendly row count
    K0p = prepared_params[0].shape[0]         # padded input dim
    out_np = prepared_params[14].shape[1]     # padded final output dim
    enc_np = prepared_params[6].shape[1]      # padded encoded dim (layer-4 cols)

    xp = jnp.pad(x.astype(jnp.bfloat16), ((0, Mp - M), (0, K0p - in_dim)))

    weight_shapes = [prepared_params[2 * i].shape for i in range(8)]
    weight_bytes = sum(k * n * 2 for k, n in weight_shapes)

    # x in VMEM, weights left in HBM (manually DMA'd), biases in VMEM.
    in_specs = [pl.BlockSpec(memory_space=pltpu.MemorySpace.VMEM)]
    for _ in range(8):
        in_specs.append(pl.BlockSpec(memory_space=pl.ANY))
        in_specs.append(pl.BlockSpec(memory_space=pltpu.MemorySpace.VMEM))

    scratch_shapes = [pltpu.VMEM(s, jnp.bfloat16) for s in weight_shapes]
    scratch_shapes.append(pltpu.SemaphoreType.DMA((8,)))

    flops = 2 * Mp * sum(k * n for k, n in weight_shapes)
    bytes_accessed = (weight_bytes + xp.size * 2
                      + (Mp * out_np + Mp * enc_np) * 4)
    cost = pl.CostEstimate(flops=flops, transcendentals=0,
                           bytes_accessed=bytes_accessed)

    # Single-buffered weight scratch + activations/outputs + slack.
    vmem_limit = weight_bytes + 16 * 1024 * 1024

    recon_p, enc_p = pl.pallas_call(
        _fused_ae_kernel,
        out_shape=(
            jax.ShapeDtypeStruct((Mp, out_np), jnp.float32),
            jax.ShapeDtypeStruct((Mp, enc_np), jnp.float32),
        ),
        in_specs=in_specs,
        out_specs=(
            pl.BlockSpec(memory_space=pltpu.MemorySpace.VMEM),
            pl.BlockSpec(memory_space=pltpu.MemorySpace.VMEM),
        ),
        scratch_shapes=scratch_shapes,
        compiler_params=pltpu.CompilerParams(vmem_limit_bytes=vmem_limit),
        cost_estimate=cost,
    )(xp, *prepared_params)

    return recon_p[:M, :in_dim], enc_p[:M, :encoded_dim]


def init_params(key, input_dim, encoded_dim, dtype=jnp.float32):
    """Deterministic PyTorch-nn.Linear-style init: U(-1/sqrt(fan_in), 1/sqrt(fan_in))."""
    dims = [input_dim, 2000, 1000, 500, encoded_dim, 500, 1000, 2000, input_dim]
    params = []
    for idx in range(8):
        fan_in, fan_out = dims[idx], dims[idx + 1]
        key, kw, kb = jax.random.split(key, 3)
        bound = 1.0 / (fan_in ** 0.5)
        w = jax.random.uniform(kw, (fan_in, fan_out), dtype, -bound, bound)
        b = jax.random.uniform(kb, (fan_out,), dtype, -bound, bound)
        params.append((w, b))
    return params


def _ref_forward(raw_params, x):
    """Plain-JAX reference mimicking the kernel's numerics (bf16 weights/activations)."""
    h = x.astype(jnp.bfloat16)
    enc = None
    out = None
    for i, (w, b) in enumerate(raw_params):
        acc = jnp.dot(h, w.astype(jnp.bfloat16),
                      preferred_element_type=jnp.float32) + b.astype(jnp.float32)
        if i == 3:
            enc = acc
        if i < 7:
            h = jnp.maximum(acc, 0.0).astype(jnp.bfloat16)
        else:
            out = acc
    return out, enc


if __name__ == "__main__":
    batch = 2
    input_dim = 256
    encoded_dim = 32

    key = jax.random.PRNGKey(0)
    key, kx = jax.random.split(key)
    x = jax.random.normal(kx, (batch, input_dim), dtype=jnp.float32)
    raw_params = init_params(key, input_dim, encoded_dim)

    prepared = prepare_params(raw_params)   # one-time pad + bf16 cast (not per forward)

    fwd = jax.jit(functools.partial(linear_autoencoder_forward, encoded_dim=encoded_dim))
    recon, encoded = fwd(prepared, x)
    jax.block_until_ready((recon, encoded))

    assert recon.shape == (batch, input_dim)
    assert encoded.shape == (batch, encoded_dim)

    r_ref, e_ref = _ref_forward(raw_params, x)
    assert jnp.allclose(recon, r_ref, atol=2e-2, rtol=2e-2), (
        "recon mismatch, max abs err = %f" % float(jnp.max(jnp.abs(recon - r_ref))))
    assert jnp.allclose(encoded, e_ref, atol=2e-2, rtol=2e-2), (
        "encoded mismatch, max abs err = %f" % float(jnp.max(jnp.abs(encoded - e_ref))))

    print("KERNEL_OK")
</pallas_src>

<mosaic_0001>
module attributes {stable_mosaic.version = 11 : i64} {
  func.func @_fused_ae_kernel(%arg0: memref<16x256xbf16, #tpu.memory_space<vmem>>, %arg1: memref<256x2048xbf16, #tpu.memory_space<any>>, %arg2: memref<1x2048xf32, #tpu.memory_space<vmem>>, %arg3: memref<2048x1024xbf16, #tpu.memory_space<any>>, %arg4: memref<1x1024xf32, #tpu.memory_space<vmem>>, %arg5: memref<1024x512xbf16, #tpu.memory_space<any>>, %arg6: memref<1x512xf32, #tpu.memory_space<vmem>>, %arg7: memref<512x128xbf16, #tpu.memory_space<any>>, %arg8: memref<1x128xf32, #tpu.memory_space<vmem>>, %arg9: memref<128x512xbf16, #tpu.memory_space<any>>, %arg10: memref<1x512xf32, #tpu.memory_space<vmem>>, %arg11: memref<512x1024xbf16, #tpu.memory_space<any>>, %arg12: memref<1x1024xf32, #tpu.memory_space<vmem>>, %arg13: memref<1024x2048xbf16, #tpu.memory_space<any>>, %arg14: memref<1x2048xf32, #tpu.memory_space<vmem>>, %arg15: memref<2048x256xbf16, #tpu.memory_space<any>>, %arg16: memref<1x256xf32, #tpu.memory_space<vmem>>, %arg17: memref<16x256xf32, #tpu.memory_space<vmem>>, %arg18: memref<16x128xf32, #tpu.memory_space<vmem>>, %arg19: memref<256x2048xbf16, #tpu.memory_space<vmem>>, %arg20: memref<2048x1024xbf16, #tpu.memory_space<vmem>>, %arg21: memref<1024x512xbf16, #tpu.memory_space<vmem>>, %arg22: memref<512x128xbf16, #tpu.memory_space<vmem>>, %arg23: memref<128x512xbf16, #tpu.memory_space<vmem>>, %arg24: memref<512x1024xbf16, #tpu.memory_space<vmem>>, %arg25: memref<1024x2048xbf16, #tpu.memory_space<vmem>>, %arg26: memref<2048x256xbf16, #tpu.memory_space<vmem>>, %arg27: memref<8x!tpu.dma_semaphore, #tpu.memory_space<semaphore_mem>>) attributes {dimension_semantics = [], scalar_prefetch = 0 : i64, scratch_operands = 9 : i64, tpu.core_type = #tpu.core_type<tc>} {
    %c0_i32 = arith.constant 0 : i32
    %0 = tpu.memref_slice %arg27[%c0_i32] : memref<8x!tpu.dma_semaphore, #tpu.memory_space<semaphore_mem>> -> memref<1x!tpu.dma_semaphore, #tpu.memory_space<semaphore_mem>>
    %1 = tpu.memref_squeeze %0 : memref<1x!tpu.dma_semaphore, #tpu.memory_space<semaphore_mem>> -> memref<!tpu.dma_semaphore, #tpu.memory_space<semaphore_mem>>
    tpu.enqueue_dma source(%arg1 : memref<256x2048xbf16, #tpu.memory_space<any>>) target(%arg19 : memref<256x2048xbf16, #tpu.memory_space<vmem>>) target_semaphore(%1 : memref<!tpu.dma_semaphore, #tpu.memory_space<semaphore_mem>>)
    %c1_i32 = arith.constant 1 : i32
    %2 = tpu.memref_slice %arg27[%c1_i32] : memref<8x!tpu.dma_semaphore, #tpu.memory_space<semaphore_mem>> -> memref<1x!tpu.dma_semaphore, #tpu.memory_space<semaphore_mem>>
    %3 = tpu.memref_squeeze %2 : memref<1x!tpu.dma_semaphore, #tpu.memory_space<semaphore_mem>> -> memref<!tpu.dma_semaphore, #tpu.memory_space<semaphore_mem>>
    tpu.enqueue_dma source(%arg3 : memref<2048x1024xbf16, #tpu.memory_space<any>>) target(%arg20 : memref<2048x1024xbf16, #tpu.memory_space<vmem>>) target_semaphore(%3 : memref<!tpu.dma_semaphore, #tpu.memory_space<semaphore_mem>>)
    %c2_i32 = arith.constant 2 : i32
    %4 = tpu.memref_slice %arg27[%c2_i32] : memref<8x!tpu.dma_semaphore, #tpu.memory_space<semaphore_mem>> -> memref<1x!tpu.dma_semaphore, #tpu.memory_space<semaphore_mem>>
    %5 = tpu.memref_squeeze %4 : memref<1x!tpu.dma_semaphore, #tpu.memory_space<semaphore_mem>> -> memref<!tpu.dma_semaphore, #tpu.memory_space<semaphore_mem>>
    tpu.enqueue_dma source(%arg5 : memref<1024x512xbf16, #tpu.memory_space<any>>) target(%arg21 : memref<1024x512xbf16, #tpu.memory_space<vmem>>) target_semaphore(%5 : memref<!tpu.dma_semaphore, #tpu.memory_space<semaphore_mem>>)
    %c3_i32 = arith.constant 3 : i32
    %6 = tpu.memref_slice %arg27[%c3_i32] : memref<8x!tpu.dma_semaphore, #tpu.memory_space<semaphore_mem>> -> memref<1x!tpu.dma_semaphore, #tpu.memory_space<semaphore_mem>>
    %7 = tpu.memref_squeeze %6 : memref<1x!tpu.dma_semaphore, #tpu.memory_space<semaphore_mem>> -> memref<!tpu.dma_semaphore, #tpu.memory_space<semaphore_mem>>
    tpu.enqueue_dma source(%arg7 : memref<512x128xbf16, #tpu.memory_space<any>>) target(%arg22 : memref<512x128xbf16, #tpu.memory_space<vmem>>) target_semaphore(%7 : memref<!tpu.dma_semaphore, #tpu.memory_space<semaphore_mem>>)
    %c4_i32 = arith.constant 4 : i32
    %8 = tpu.memref_slice %arg27[%c4_i32] : memref<8x!tpu.dma_semaphore, #tpu.memory_space<semaphore_mem>> -> memref<1x!tpu.dma_semaphore, #tpu.memory_space<semaphore_mem>>
    %9 = tpu.memref_squeeze %8 : memref<1x!tpu.dma_semaphore, #tpu.memory_space<semaphore_mem>> -> memref<!tpu.dma_semaphore, #tpu.memory_space<semaphore_mem>>
    tpu.enqueue_dma source(%arg9 : memref<128x512xbf16, #tpu.memory_space<any>>) target(%arg23 : memref<128x512xbf16, #tpu.memory_space<vmem>>) target_semaphore(%9 : memref<!tpu.dma_semaphore, #tpu.memory_space<semaphore_mem>>)
    %c5_i32 = arith.constant 5 : i32
    %10 = tpu.memref_slice %arg27[%c5_i32] : memref<8x!tpu.dma_semaphore, #tpu.memory_space<semaphore_mem>> -> memref<1x!tpu.dma_semaphore, #tpu.memory_space<semaphore_mem>>
    %11 = tpu.memref_squeeze %10 : memref<1x!tpu.dma_semaphore, #tpu.memory_space<semaphore_mem>> -> memref<!tpu.dma_semaphore, #tpu.memory_space<semaphore_mem>>
    tpu.enqueue_dma source(%arg11 : memref<512x1024xbf16, #tpu.memory_space<any>>) target(%arg24 : memref<512x1024xbf16, #tpu.memory_space<vmem>>) target_semaphore(%11 : memref<!tpu.dma_semaphore, #tpu.memory_space<semaphore_mem>>)
    %c6_i32 = arith.constant 6 : i32
    %12 = tpu.memref_slice %arg27[%c6_i32] : memref<8x!tpu.dma_semaphore, #tpu.memory_space<semaphore_mem>> -> memref<1x!tpu.dma_semaphore, #tpu.memory_space<semaphore_mem>>
    %13 = tpu.memref_squeeze %12 : memref<1x!tpu.dma_semaphore, #tpu.memory_space<semaphore_mem>> -> memref<!tpu.dma_semaphore, #tpu.memory_space<semaphore_mem>>
    tpu.enqueue_dma source(%arg13 : memref<1024x2048xbf16, #tpu.memory_space<any>>) target(%arg25 : memref<1024x2048xbf16, #tpu.memory_space<vmem>>) target_semaphore(%13 : memref<!tpu.dma_semaphore, #tpu.memory_space<semaphore_mem>>)
    %c7_i32 = arith.constant 7 : i32
    %14 = tpu.memref_slice %arg27[%c7_i32] : memref<8x!tpu.dma_semaphore, #tpu.memory_space<semaphore_mem>> -> memref<1x!tpu.dma_semaphore, #tpu.memory_space<semaphore_mem>>
    %15 = tpu.memref_squeeze %14 : memref<1x!tpu.dma_semaphore, #tpu.memory_space<semaphore_mem>> -> memref<!tpu.dma_semaphore, #tpu.memory_space<semaphore_mem>>
    tpu.enqueue_dma source(%arg15 : memref<2048x256xbf16, #tpu.memory_space<any>>) target(%arg26 : memref<2048x256xbf16, #tpu.memory_space<vmem>>) target_semaphore(%15 : memref<!tpu.dma_semaphore, #tpu.memory_space<semaphore_mem>>)
    %c0 = arith.constant 0 : index
    %c0_0 = arith.constant 0 : index
    %16 = vector.load %arg0[%c0, %c0_0] : memref<16x256xbf16, #tpu.memory_space<vmem>>, vector<16x256xbf16>
    %c0_i32_1 = arith.constant 0 : i32
    %17 = tpu.memref_slice %arg27[%c0_i32_1] : memref<8x!tpu.dma_semaphore, #tpu.memory_space<semaphore_mem>> -> memref<1x!tpu.dma_semaphore, #tpu.memory_space<semaphore_mem>>
    %18 = tpu.memref_squeeze %17 : memref<1x!tpu.dma_semaphore, #tpu.memory_space<semaphore_mem>> -> memref<!tpu.dma_semaphore, #tpu.memory_space<semaphore_mem>>
    tpu.wait_dma2 semaphore(%18 : memref<!tpu.dma_semaphore, #tpu.memory_space<semaphore_mem>>) src(%arg1 : memref<256x2048xbf16, #tpu.memory_space<any>>) dst(%arg19 : memref<256x2048xbf16, #tpu.memory_space<vmem>>)
    %c0_2 = arith.constant 0 : index
    %c0_3 = arith.constant 0 : index
    %19 = vector.load %arg19[%c0_2, %c0_3] : memref<256x2048xbf16, #tpu.memory_space<vmem>>, vector<256x2048xbf16>
    %cst = arith.constant dense<0.000000e+00> : vector<16x2048xf32>
    %20 = tpu.matmul %16, %19, %cst {dimension_numbers = #tpu.dot_dimension_numbers<[1], [0], [0], [1], [0, 0, 1, 1], [], []>} : vector<16x256xbf16>, vector<256x2048xbf16>, vector<16x2048xf32> -> vector<16x2048xf32>
    %c0_4 = arith.constant 0 : index
    %c0_5 = arith.constant 0 : index
    %21 = vector.load %arg2[%c0_4, %c0_5] : memref<1x2048xf32, #tpu.memory_space<vmem>>, vector<1x2048xf32>
    %22 = vector.broadcast %21 : vector<1x2048xf32> to vector<16x2048xf32>
    %23 = arith.addf %20, %22 : vector<16x2048xf32>
    %cst_6 = arith.constant 0.000000e+00 : f32
    %24 = vector.broadcast %cst_6 : f32 to vector<16x2048xf32>
    %25 = arith.maximumf %23, %24 : vector<16x2048xf32>
    %26 = arith.truncf %25 : vector<16x2048xf32> to vector<16x2048xbf16>
    %c1_i32_7 = arith.constant 1 : i32
    %27 = tpu.memref_slice %arg27[%c1_i32_7] : memref<8x!tpu.dma_semaphore, #tpu.memory_space<semaphore_mem>> -> memref<1x!tpu.dma_semaphore, #tpu.memory_space<semaphore_mem>>
    %28 = tpu.memref_squeeze %27 : memref<1x!tpu.dma_semaphore, #tpu.memory_space<semaphore_mem>> -> memref<!tpu.dma_semaphore, #tpu.memory_space<semaphore_mem>>
    tpu.wait_dma2 semaphore(%28 : memref<!tpu.dma_semaphore, #tpu.memory_space<semaphore_mem>>) src(%arg3 : memref<2048x1024xbf16, #tpu.memory_space<any>>) dst(%arg20 : memref<2048x1024xbf16, #tpu.memory_space<vmem>>)
    %c0_8 = arith.constant 0 : index
    %c0_9 = arith.constant 0 : index
    %29 = vector.load %arg20[%c0_8, %c0_9] : memref<2048x1024xbf16, #tpu.memory_space<vmem>>, vector<2048x1024xbf16>
    %cst_10 = arith.constant dense<0.000000e+00> : vector<16x1024xf32>
    %30 = tpu.matmul %26, %29, %cst_10 {dimension_numbers = #tpu.dot_dimension_numbers<[1], [0], [0], [1], [0, 0, 1, 1], [], []>} : vector<16x2048xbf16>, vector<2048x1024xbf16>, vector<16x1024xf32> -> vector<16x1024xf32>
    %c0_11 = arith.constant 0 : index
    %c0_12 = arith.constant 0 : index
    %31 = vector.load %arg4[%c0_11, %c0_12] : memref<1x1024xf32, #tpu.memory_space<vmem>>, vector<1x1024xf32>
    %32 = vector.broadcast %31 : vector<1x1024xf32> to vector<16x1024xf32>
    %33 = arith.addf %30, %32 : vector<16x1024xf32>
    %cst_13 = arith.constant 0.000000e+00 : f32
    %34 = vector.broadcast %cst_13 : f32 to vector<16x1024xf32>
    %35 = arith.maximumf %33, %34 : vector<16x1024xf32>
    %36 = arith.truncf %35 : vector<16x1024xf32> to vector<16x1024xbf16>
    %c2_i32_14 = arith.constant 2 : i32
    %37 = tpu.memref_slice %arg27[%c2_i32_14] : memref<8x!tpu.dma_semaphore, #tpu.memory_space<semaphore_mem>> -> memref<1x!tpu.dma_semaphore, #tpu.memory_space<semaphore_mem>>
    %38 = tpu.memref_squeeze %37 : memref<1x!tpu.dma_semaphore, #tpu.memory_space<semaphore_mem>> -> memref<!tpu.dma_semaphore, #tpu.memory_space<semaphore_mem>>
    tpu.wait_dma2 semaphore(%38 : memref<!tpu.dma_semaphore, #tpu.memory_space<semaphore_mem>>) src(%arg5 : memref<1024x512xbf16, #tpu.memory_space<any>>) dst(%arg21 : memref<1024x512xbf16, #tpu.memory_space<vmem>>)
    %c0_15 = arith.constant 0 : index
    %c0_16 = arith.constant 0 : index
    %39 = vector.load %arg21[%c0_15, %c0_16] : memref<1024x512xbf16, #tpu.memory_space<vmem>>, vector<1024x512xbf16>
    %cst_17 = arith.constant dense<0.000000e+00> : vector<16x512xf32>
    %40 = tpu.matmul %36, %39, %cst_17 {dimension_numbers = #tpu.dot_dimension_numbers<[1], [0], [0], [1], [0, 0, 1, 1], [], []>} : vector<16x1024xbf16>, vector<1024x512xbf16>, vector<16x512xf32> -> vector<16x512xf32>
    %c0_18 = arith.constant 0 : index
    %c0_19 = arith.constant 0 : index
    %41 = vector.load %arg6[%c0_18, %c0_19] : memref<1x512xf32, #tpu.memory_space<vmem>>, vector<1x512xf32>
    %42 = vector.broadcast %41 : vector<1x512xf32> to vector<16x512xf32>
    %43 = arith.addf %40, %42 : vector<16x512xf32>
    %cst_20 = arith.constant 0.000000e+00 : f32
    %44 = vector.broadcast %cst_20 : f32 to vector<16x512xf32>
    %45 = arith.maximumf %43, %44 : vector<16x512xf32>
    %46 = arith.truncf %45 : vector<16x512xf32> to vector<16x512xbf16>
    %c3_i32_21 = arith.constant 3 : i32
    %47 = tpu.memref_slice %arg27[%c3_i32_21] : memref<8x!tpu.dma_semaphore, #tpu.memory_space<semaphore_mem>> -> memref<1x!tpu.dma_semaphore, #tpu.memory_space<semaphore_mem>>
    %48 = tpu.memref_squeeze %47 : memref<1x!tpu.dma_semaphore, #tpu.memory_space<semaphore_mem>> -> memref<!tpu.dma_semaphore, #tpu.memory_space<semaphore_mem>>
    tpu.wait_dma2 semaphore(%48 : memref<!tpu.dma_semaphore, #tpu.memory_space<semaphore_mem>>) src(%arg7 : memref<512x128xbf16, #tpu.memory_space<any>>) dst(%arg22 : memref<512x128xbf16, #tpu.memory_space<vmem>>)
    %c0_22 = arith.constant 0 : index
    %c0_23 = arith.constant 0 : index
    %49 = vector.load %arg22[%c0_22, %c0_23] : memref<512x128xbf16, #tpu.memory_space<vmem>>, vector<512x128xbf16>
    %cst_24 = arith.constant dense<0.000000e+00> : vector<16x128xf32>
    %50 = tpu.matmul %46, %49, %cst_24 {dimension_numbers = #tpu.dot_dimension_numbers<[1], [0], [0], [1], [0, 0, 1, 1], [], []>} : vector<16x512xbf16>, vector<512x128xbf16>, vector<16x128xf32> -> vector<16x128xf32>
    %c0_25 = arith.constant 0 : index
    %c0_26 = arith.constant 0 : index
    %51 = vector.load %arg8[%c0_25, %c0_26] : memref<1x128xf32, #tpu.memory_space<vmem>>, vector<1x128xf32>
    %52 = vector.broadcast %51 : vector<1x128xf32> to vector<16x128xf32>
    %53 = arith.addf %50, %52 : vector<16x128xf32>
    %c0_27 = arith.constant 0 : index
    %c0_28 = arith.constant 0 : index
    %54 = vector.load %arg18[%c0_27, %c0_28] : memref<16x128xf32, #tpu.memory_space<vmem>>, vector<16x128xf32>
    tpu.vector_store %arg18[%c0_27, %c0_28], %53 {strides = array<i32>} : memref<16x128xf32, #tpu.memory_space<vmem>>, vector<16x128xf32>,
    %cst_29 = arith.constant 0.000000e+00 : f32
    %55 = vector.broadcast %cst_29 : f32 to vector<16x128xf32>
    %56 = arith.maximumf %53, %55 : vector<16x128xf32>
    %57 = arith.truncf %56 : vector<16x128xf32> to vector<16x128xbf16>
    %c4_i32_30 = arith.constant 4 : i32
    %58 = tpu.memref_slice %arg27[%c4_i32_30] : memref<8x!tpu.dma_semaphore, #tpu.memory_space<semaphore_mem>> -> memref<1x!tpu.dma_semaphore, #tpu.memory_space<semaphore_mem>>
    %59 = tpu.memref_squeeze %58 : memref<1x!tpu.dma_semaphore, #tpu.memory_space<semaphore_mem>> -> memref<!tpu.dma_semaphore, #tpu.memory_space<semaphore_mem>>
    tpu.wait_dma2 semaphore(%59 : memref<!tpu.dma_semaphore, #tpu.memory_space<semaphore_mem>>) src(%arg9 : memref<128x512xbf16, #tpu.memory_space<any>>) dst(%arg23 : memref<128x512xbf16, #tpu.memory_space<vmem>>)
    %c0_31 = arith.constant 0 : index
    %c0_32 = arith.constant 0 : index
    %60 = vector.load %arg23[%c0_31, %c0_32] : memref<128x512xbf16, #tpu.memory_space<vmem>>, vector<128x512xbf16>
    %cst_33 = arith.constant dense<0.000000e+00> : vector<16x512xf32>
    %61 = tpu.matmul %57, %60, %cst_33 {dimension_numbers = #tpu.dot_dimension_numbers<[1], [0], [0], [1], [0, 0, 1, 1], [], []>} : vector<16x128xbf16>, vector<128x512xbf16>, vector<16x512xf32> -> vector<16x512xf32>
    %c0_34 = arith.constant 0 : index
    %c0_35 = arith.constant 0 : index
    %62 = vector.load %arg10[%c0_34, %c0_35] : memref<1x512xf32, #tpu.memory_space<vmem>>, vector<1x512xf32>
    %63 = vector.broadcast %62 : vector<1x512xf32> to vector<16x512xf32>
    %64 = arith.addf %61, %63 : vector<16x512xf32>
    %cst_36 = arith.constant 0.000000e+00 : f32
    %65 = vector.broadcast %cst_36 : f32 to vector<16x512xf32>
    %66 = arith.maximumf %64, %65 : vector<16x512xf32>
    %67 = arith.truncf %66 : vector<16x512xf32> to vector<16x512xbf16>
    %c5_i32_37 = arith.constant 5 : i32
    %68 = tpu.memref_slice %arg27[%c5_i32_37] : memref<8x!tpu.dma_semaphore, #tpu.memory_space<semaphore_mem>> -> memref<1x!tpu.dma_semaphore, #tpu.memory_space<semaphore_mem>>
    %69 = tpu.memref_squeeze %68 : memref<1x!tpu.dma_semaphore, #tpu.memory_space<semaphore_mem>> -> memref<!tpu.dma_semaphore, #tpu.memory_space<semaphore_mem>>
    tpu.wait_dma2 semaphore(%69 : memref<!tpu.dma_semaphore, #tpu.memory_space<semaphore_mem>>) src(%arg11 : memref<512x1024xbf16, #tpu.memory_space<any>>) dst(%arg24 : memref<512x1024xbf16, #tpu.memory_space<vmem>>)
    %c0_38 = arith.constant 0 : index
    %c0_39 = arith.constant 0 : index
    %70 = vector.load %arg24[%c0_38, %c0_39] : memref<512x1024xbf16, #tpu.memory_space<vmem>>, vector<512x1024xbf16>
    %cst_40 = arith.constant dense<0.000000e+00> : vector<16x1024xf32>
    %71 = tpu.matmul %67, %70, %cst_40 {dimension_numbers = #tpu.dot_dimension_numbers<[1], [0], [0], [1], [0, 0, 1, 1], [], []>} : vector<16x512xbf16>, vector<512x1024xbf16>, vector<16x1024xf32> -> vector<16x1024xf32>
    %c0_41 = arith.constant 0 : index
    %c0_42 = arith.constant 0 : index
    %72 = vector.load %arg12[%c0_41, %c0_42] : memref<1x1024xf32, #tpu.memory_space<vmem>>, vector<1x1024xf32>
    %73 = vector.broadcast %72 : vector<1x1024xf32> to vector<16x1024xf32>
    %74 = arith.addf %71, %73 : vector<16x1024xf32>
    %cst_43 = arith.constant 0.000000e+00 : f32
    %75 = vector.broadcast %cst_43 : f32 to vector<16x1024xf32>
    %76 = arith.maximumf %74, %75 : vector<16x1024xf32>
    %77 = arith.truncf %76 : vector<16x1024xf32> to vector<16x1024xbf16>
    %c6_i32_44 = arith.constant 6 : i32
    %78 = tpu.memref_slice %arg27[%c6_i32_44] : memref<8x!tpu.dma_semaphore, #tpu.memory_space<semaphore_mem>> -> memref<1x!tpu.dma_semaphore, #tpu.memory_space<semaphore_mem>>
    %79 = tpu.memref_squeeze %78 : memref<1x!tpu.dma_semaphore, #tpu.memory_space<semaphore_mem>> -> memref<!tpu.dma_semaphore, #tpu.memory_space<semaphore_mem>>
    tpu.wait_dma2 semaphore(%79 : memref<!tpu.dma_semaphore, #tpu.memory_space<semaphore_mem>>) src(%arg13 : memref<1024x2048xbf16, #tpu.memory_space<any>>) dst(%arg25 : memref<1024x2048xbf16, #tpu.memory_space<vmem>>)
    %c0_45 = arith.constant 0 : index
    %c0_46 = arith.constant 0 : index
    %80 = vector.load %arg25[%c0_45, %c0_46] : memref<1024x2048xbf16, #tpu.memory_space<vmem>>, vector<1024x2048xbf16>
    %cst_47 = arith.constant dense<0.000000e+00> : vector<16x2048xf32>
    %81 = tpu.matmul %77, %80, %cst_47 {dimension_numbers = #tpu.dot_dimension_numbers<[1], [0], [0], [1], [0, 0, 1, 1], [], []>} : vector<16x1024xbf16>, vector<1024x2048xbf16>, vector<16x2048xf32> -> vector<16x2048xf32>
    %c0_48 = arith.constant 0 : index
    %c0_49 = arith.constant 0 : index
    %82 = vector.load %arg14[%c0_48, %c0_49] : memref<1x2048xf32, #tpu.memory_space<vmem>>, vector<1x2048xf32>
    %83 = vector.broadcast %82 : vector<1x2048xf32> to vector<16x2048xf32>
    %84 = arith.addf %81, %83 : vector<16x2048xf32>
    %cst_50 = arith.constant 0.000000e+00 : f32
    %85 = vector.broadcast %cst_50 : f32 to vector<16x2048xf32>
    %86 = arith.maximumf %84, %85 : vector<16x2048xf32>
    %87 = arith.truncf %86 : vector<16x2048xf32> to vector<16x2048xbf16>
    %c7_i32_51 = arith.constant 7 : i32
    %88 = tpu.memref_slice %arg27[%c7_i32_51] : memref<8x!tpu.dma_semaphore, #tpu.memory_space<semaphore_mem>> -> memref<1x!tpu.dma_semaphore, #tpu.memory_space<semaphore_mem>>
    %89 = tpu.memref_squeeze %88 : memref<1x!tpu.dma_semaphore, #tpu.memory_space<semaphore_mem>> -> memref<!tpu.dma_semaphore, #tpu.memory_space<semaphore_mem>>
    tpu.wait_dma2 semaphore(%89 : memref<!tpu.dma_semaphore, #tpu.memory_space<semaphore_mem>>) src(%arg15 : memref<2048x256xbf16, #tpu.memory_space<any>>) dst(%arg26 : memref<2048x256xbf16, #tpu.memory_space<vmem>>)
    %c0_52 = arith.constant 0 : index
    %c0_53 = arith.constant 0 : index
    %90 = vector.load %arg26[%c0_52, %c0_53] : memref<2048x256xbf16, #tpu.memory_space<vmem>>, vector<2048x256xbf16>
    %cst_54 = arith.constant dense<0.000000e+00> : vector<16x256xf32>
    %91 = tpu.matmul %87, %90, %cst_54 {dimension_numbers = #tpu.dot_dimension_numbers<[1], [0], [0], [1], [0, 0, 1, 1], [], []>} : vector<16x2048xbf16>, vector<2048x256xbf16>, vector<16x256xf32> -> vector<16x256xf32>
    %c0_55 = arith.constant 0 : index
    %c0_56 = arith.constant 0 : index
    %92 = vector.load %arg16[%c0_55, %c0_56] : memref<1x256xf32, #tpu.memory_space<vmem>>, vector<1x256xf32>
    %93 = vector.broadcast %92 : vector<1x256xf32> to vector<16x256xf32>
    %94 = arith.addf %91, %93 : vector<16x256xf32>
    %c0_57 = arith.constant 0 : index
    %c0_58 = arith.constant 0 : index
    %95 = vector.load %arg17[%c0_57, %c0_58] : memref<16x256xf32, #tpu.memory_space<vmem>>, vector<16x256xf32>
    tpu.vector_store %arg17[%c0_57, %c0_58], %94 {strides = array<i32>} : memref<16x256xf32, #tpu.memory_space<vmem>>, vector<16x256xf32>,
    return
  }
}

</mosaic_0001>

<llo_original>
// kernel: linear_autoencoder_forward.1
$region0: #{linear_autoencoder_forward.1}
  #allocation0 [shape = 'u32[]', space=smem, size = 0x4, offset = 0x4, fixed_abs, tag = 'smem constant byte address 0x4 - core index']
  #allocation1 [shape = 'u32[144,128]{1,0:T(1,128)}', space=vmem, size = 0x12000, scoped, tag = 'internal scratch']
  #allocation2 [shape = 'bf16[256,2048]{1,0:T(16,128)(2,1)}', space=vmem, size = 0x100000, scoped, tag = 'scratch operand']
  #allocation3 [shape = 'bf16[2048,1024]{1,0:T(16,128)(2,1)}', space=vmem, size = 0x400000, scoped, tag = 'scratch operand']
  #allocation4 [shape = 'bf16[1024,512]{1,0:T(16,128)(2,1)}', space=vmem, size = 0x100000, scoped, tag = 'scratch operand']
  #allocation5 [shape = 'bf16[512,128]{1,0:T(16,128)(2,1)}', space=vmem, size = 0x20000, scoped, tag = 'scratch operand']
  #allocation6 [shape = 'bf16[128,512]{1,0:T(16,128)(2,1)}', space=vmem, size = 0x20000, scoped, tag = 'scratch operand']
  #allocation7 [shape = 'bf16[512,1024]{1,0:T(16,128)(2,1)}', space=vmem, size = 0x100000, scoped, tag = 'scratch operand']
  #allocation8 [shape = 'bf16[1024,2048]{1,0:T(16,128)(2,1)}', space=vmem, size = 0x400000, scoped, tag = 'scratch operand']
  #allocation9 [shape = 'bf16[2048,256]{1,0:T(16,128)(2,1)}', space=vmem, size = 0x100000, scoped, tag = 'scratch operand']
  #allocation10 [shape = 's32[8]{0}', space=sflag, size = 0x20, scoped, tag = 'scratch operand']
  #allocation24 [shape = 's32[]', space=sflag, size = 0x4, offset = 0, fixed_abs, tag = 'sflag constant byte address 0x0 - dummy sync flag']
  #allocation26 [shape = 's32[]', space=sflag, size = 0x4, offset = 0, fixed_abs, tag = 'sflag constant byte address 0x0 - dummy sync flag']
  #allocation28 [shape = 's32[]', space=sflag, size = 0x4, offset = 0, fixed_abs, tag = 'sflag constant byte address 0x0 - dummy sync flag']
  #allocation30 [shape = 's32[]', space=sflag, size = 0x4, offset = 0, fixed_abs, tag = 'sflag constant byte address 0x0 - dummy sync flag']
  #allocation31 [shape = 's32[]', space=sflag, size = 0x4, offset = 0, fixed_abs, tag = 'sflag constant byte address 0x0 - dummy sync flag']
  #allocation32 [shape = 'u32[]', space=smem, size = 0x4, offset = 0x44, fixed_abs, tag = 'smem constant byte address 0x44 - assertion arg 0']
  #allocation33 [shape = 'u32[]', space=smem, size = 0x4, offset = 0x48, fixed_abs, tag = 'smem constant byte address 0x48 - assertion arg 1']
  #allocation34 [shape = 's32[]', space=sflag, size = 0x4, offset = 0, fixed_abs, tag = 'sflag constant byte address 0x0 - dummy sync flag']
  #allocation36 [shape = 's32[]', space=sflag, size = 0x4, offset = 0, fixed_abs, tag = 'sflag constant byte address 0x0 - dummy sync flag']
  #allocation38 [shape = 's32[]', space=sflag, size = 0x4, offset = 0, fixed_abs, tag = 'sflag constant byte address 0x0 - dummy sync flag']
  #allocation40 [shape = 's32[]', space=sflag, size = 0x4, offset = 0, fixed_abs, tag = 'sflag constant byte address 0x0 - dummy sync flag']
  %s0 = inlined_call_operand.vmem [shape: bf16[16,256], index: 0, kind: input, shape index: {}]
  %s1 = inlined_call_operand.hbm [shape: bf16[256,2048], index: 1, kind: input, shape index: {}]
  %s2 = inlined_call_operand.hbm [shape: f32[1,2048], index: 2, kind: input, shape index: {}]
  %s3 = inlined_call_operand.hbm [shape: bf16[2048,1024], index: 3, kind: input, shape index: {}]
  %s4 = inlined_call_operand.hbm [shape: f32[1,1024], index: 4, kind: input, shape index: {}]
  %s5 = inlined_call_operand.hbm [shape: bf16[1024,512], index: 5, kind: input, shape index: {}]
  %s6 = inlined_call_operand.hbm [shape: f32[1,512], index: 6, kind: input, shape index: {}]
  %s7 = inlined_call_operand.hbm [shape: bf16[512,128], index: 7, kind: input, shape index: {}]
  %s8 = inlined_call_operand.hbm [shape: f32[1,128], index: 8, kind: input, shape index: {}]
  %s9 = inlined_call_operand.hbm [shape: bf16[128,512], index: 9, kind: input, shape index: {}]
  %s10 = inlined_call_operand.hbm [shape: f32[1,512], index: 10, kind: input, shape index: {}]
  %s11 = inlined_call_operand.hbm [shape: bf16[512,1024], index: 11, kind: input, shape index: {}]
  %s12 = inlined_call_operand.hbm [shape: f32[1,1024], index: 12, kind: input, shape index: {}]
  %s13 = inlined_call_operand.hbm [shape: bf16[1024,2048], index: 13, kind: input, shape index: {}]
  %s14 = inlined_call_operand.hbm [shape: f32[1,2048], index: 14, kind: input, shape index: {}]
  %s15 = inlined_call_operand.hbm [shape: bf16[2048,256], index: 15, kind: input, shape index: {}]
  %s16 = inlined_call_operand.hbm [shape: f32[1,256], index: 16, kind: input, shape index: {}]
  %s17 = inlined_call_operand.vmem [shape: f32[16,256], index: 17, kind: output, shape index: {0}]
  %s18 = inlined_call_operand.vmem [shape: f32[16,128], index: 18, kind: output, shape index: {1}]
  %19 = xla_tuple %s17, %s18
  %s20 = sld [smem:[#allocation0]]
  $region90: #{linear_autoencoder_forward.1} parent=0
    _
  %s22 = ssub.s32 1, %s20
  %s23 = scalar_select 0, %s22, %s20
  $region1: #{linear_autoencoder_forward.1} parent=0
    #allocation11 [shape = 'u8[8192]{0}', space=vmem, size = 0x2000, scoped, tag = 'input window, operand 2, single buffered']
    #allocation12 [shape = 's32[1]{0}', space=sflag, size = 0x4, scoped, tag = 'scoped memory for linear_autoencoder_forward.1']
    #allocation13 [shape = 'u8[4096]{0}', space=vmem, size = 0x1000, scoped, tag = 'input window, operand 4, single buffered']
    #allocation14 [shape = 's32[1]{0}', space=sflag, size = 0x4, scoped, tag = 'scoped memory for linear_autoencoder_forward.1']
    #allocation15 [shape = 'u8[2048]{0}', space=vmem, size = 0x800, scoped, tag = 'input window, operand 6, single buffered']
    #allocation16 [shape = 'u8[512]{0}', space=vmem, size = 0x400, scoped, tag = 'input window, operand 8, single buffered']
    #allocation17 [shape = 's32[1]{0}', space=sflag, size = 0x4, scoped, tag = 'scoped memory for linear_autoencoder_forward.1']
    #allocation18 [shape = 'u8[2048]{0}', space=vmem, size = 0x800, scoped, tag = 'input window, operand 10, single buffered']
    #allocation19 [shape = 'u8[4096]{0}', space=vmem, size = 0x1000, scoped, tag = 'input window, operand 12, single buffered']
    #allocation20 [shape = 's32[1]{0}', space=sflag, size = 0x4, scoped, tag = 'scoped memory for linear_autoencoder_forward.1']
    #allocation21 [shape = 'u8[8192]{0}', space=vmem, size = 0x2000, scoped, tag = 'input window, operand 14, single buffered']
    #allocation22 [shape = 'u8[1024]{0}', space=vmem, size = 0x400, scoped, tag = 'input window, operand 16, single buffered']
    #allocation23 [shape = 's32[1]{0}', space=sflag, size = 0x4, scoped, tag = 'scoped memory for linear_autoencoder_forward.1']
    #allocation25 [shape = 'u32[9]{0}', space=smem, size = 0x24, scoped, tag = 'DMA stride descriptor']
    #allocation27 [shape = 'u32[9]{0}', space=smem, size = 0x24, scoped, tag = 'DMA stride descriptor']
    #allocation29 [shape = 'u32[9]{0}', space=smem, size = 0x24, scoped, tag = 'DMA stride descriptor']
    #allocation35 [shape = 'u32[9]{0}', space=smem, size = 0x24, scoped, tag = 'DMA stride descriptor']
    #allocation37 [shape = 'u32[9]{0}', space=smem, size = 0x24, scoped, tag = 'DMA stride descriptor']
    #allocation39 [shape = 'u32[9]{0}', space=smem, size = 0x24, scoped, tag = 'DMA stride descriptor']
    #allocation41 [shape = 'u32[9]{0}', space=smem, size = 0x24, scoped, tag = 'DMA stride descriptor']
    %24 = vsyncpa [#allocation12], 0
    %25 = vsyncpa [#allocation14], 0
    %26 = vsyncpa [#allocation17], 0
    %27 = vsyncpa [#allocation20], 0
    %28 = vsyncpa [#allocation23], 0
    // Predicated region
    $region2: #{linear_autoencoder_forward.1} parent=1 // pred_check
      _
    $region3: #{linear_autoencoder_forward.1} parent=1 // pred_check_branch
      %30 = sbr.rel (0) target = $region5
    $region4: #{linear_autoencoder_forward.1} parent=1 // pred_region
      _
    $region5: #{linear_autoencoder_forward.1} parent=1 // pred_fallthru
      _
    // Predicated region
    $region6: #{linear_autoencoder_forward.1} parent=1 // pred_check
      _
    $region7: #{linear_autoencoder_forward.1} parent=1 // pred_check_branch
      %32 = sbr.rel (0) target = $region9
    $region8: #{linear_autoencoder_forward.1} parent=1 // pred_region
      %s34 = ssub.s32 256, 256
      %35 = vsyncadd [#allocation12], %s34
      %s37 = sshll.u32 [#allocation11], 4
      %s38 = int_to_ptr.vmem [resolvable:$true] %s37
      %40 = dma.hbm_to_vmem [thread:$0]  %s2, 256, %s38, [#allocation12]
    $region9: #{linear_autoencoder_forward.1} parent=1 // pred_fallthru
      _
    // Predicated region
    $region10: #{linear_autoencoder_forward.1} parent=1 // pred_check
      _
    $region11: #{linear_autoencoder_forward.1} parent=1 // pred_check_branch
      %42 = sbr.rel (0) target = $region13
    $region12: #{linear_autoencoder_forward.1} parent=1 // pred_region
      %s44 = ssub.s32 128, 128
      %45 = vsyncadd [#allocation14], %s44
      %s47 = sshll.u32 [#allocation13], 4
      %s48 = int_to_ptr.vmem [resolvable:$true] %s47
      %50 = dma.hbm_to_vmem [thread:$0]  %s4, 128, %s48, [#allocation14]
    $region13: #{linear_autoencoder_forward.1} parent=1 // pred_fallthru
      _
    // Predicated region
    $region14: #{linear_autoencoder_forward.1} parent=1 // pred_check
      _
    $region15: #{linear_autoencoder_forward.1} parent=1 // pred_check_branch
      %52 = sbr.rel (0) target = $region17
    $region16: #{linear_autoencoder_forward.1} parent=1 // pred_region
      %s54 = ssub.s32 64, 64
      %55 = vsyncadd [#allocation14], %s54
      %s57 = sshll.u32 [#allocation15], 4
      %s58 = int_to_ptr.vmem [resolvable:$true] %s57
      %60 = dma.hbm_to_vmem [thread:$0]  %s6, 64, %s58, [#allocation14]
    $region17: #{linear_autoencoder_forward.1} parent=1 // pred_fallthru
      _
    // Predicated region
    $region18: #{linear_autoencoder_forward.1} parent=1 // pred_check
      _
    $region19: #{linear_autoencoder_forward.1} parent=1 // pred_check_branch
      %62 = sbr.rel (0) target = $region21
    $region20: #{linear_autoencoder_forward.1} parent=1 // pred_region
      %s64 = ssub.s32 16, 16
      %65 = vsyncadd [#allocation17], %s64
      %s67 = sshll.u32 [#allocation16], 4
      %s68 = int_to_ptr.vmem [resolvable:$true] %s67
      %70 = dma.hbm_to_vmem [thread:$0]  %s8, 16, %s68, [#allocation17]
    $region21: #{linear_autoencoder_forward.1} parent=1 // pred_fallthru
      _
    // Predicated region
    $region22: #{linear_autoencoder_forward.1} parent=1 // pred_check
      _
    $region23: #{linear_autoencoder_forward.1} parent=1 // pred_check_branch
      %72 = sbr.rel (0) target = $region25
    $region24: #{linear_autoencoder_forward.1} parent=1 // pred_region
      %s74 = ssub.s32 64, 64
      %75 = vsyncadd [#allocation17], %s74
      %s77 = sshll.u32 [#allocation18], 4
      %s78 = int_to_ptr.vmem [resolvable:$true] %s77
      %80 = dma.hbm_to_vmem [thread:$0]  %s10, 64, %s78, [#allocation17]
    $region25: #{linear_autoencoder_forward.1} parent=1 // pred_fallthru
      _
    // Predicated region
    $region26: #{linear_autoencoder_forward.1} parent=1 // pred_check
      _
    $region27: #{linear_autoencoder_forward.1} parent=1 // pred_check_branch
      %82 = sbr.rel (0) target = $region29
    $region28: #{linear_autoencoder_forward.1} parent=1 // pred_region
      %s84 = ssub.s32 128, 128
      %85 = vsyncadd [#allocation20], %s84
      %s87 = sshll.u32 [#allocation19], 4
      %s88 = int_to_ptr.vmem [resolvable:$true] %s87
      %90 = dma.hbm_to_vmem [thread:$0]  %s12, 128, %s88, [#allocation20]
    $region29: #{linear_autoencoder_forward.1} parent=1 // pred_fallthru
      _
    // Predicated region
    $region30: #{linear_autoencoder_forward.1} parent=1 // pred_check
      _
    $region31: #{linear_autoencoder_forward.1} parent=1 // pred_check_branch
      %92 = sbr.rel (0) target = $region33
    $region32: #{linear_autoencoder_forward.1} parent=1 // pred_region
      %s94 = ssub.s32 256, 256
      %95 = vsyncadd [#allocation20], %s94
      %s97 = sshll.u32 [#allocation21], 4
      %s98 = int_to_ptr.vmem [resolvable:$true] %s97
      %100 = dma.hbm_to_vmem [thread:$0]  %s14, 256, %s98, [#allocation20]
    $region33: #{linear_autoencoder_forward.1} parent=1 // pred_fallthru
      _
    // Predicated region
    $region34: #{linear_autoencoder_forward.1} parent=1 // pred_check
      _
    $region35: #{linear_autoencoder_forward.1} parent=1 // pred_check_branch
      %102 = sbr.rel (0) target = $region37
    $region36: #{linear_autoencoder_forward.1} parent=1 // pred_region
      %s104 = ssub.s32 32, 32
      %105 = vsyncadd [#allocation23], %s104
      %s107 = sshll.u32 [#allocation22], 4
      %s108 = int_to_ptr.vmem [resolvable:$true] %s107
      %110 = dma.hbm_to_vmem [thread:$0]  %s16, 32, %s108, [#allocation23]
    $region37: #{linear_autoencoder_forward.1} parent=1 // pred_fallthru
      _
    // Predicated region
    $region38: #{linear_autoencoder_forward.1} parent=1 // pred_check
      _
    $region39: #{linear_autoencoder_forward.1} parent=1 // pred_check_branch
      %112 = sbr.rel (0) target = $region41
    $region40: #{linear_autoencoder_forward.1} parent=1 // pred_region
      %113 = dma.done [#allocation12], 256
    $region41: #{linear_autoencoder_forward.1} parent=1 // pred_fallthru
      _
    // Predicated region
    $region42: #{linear_autoencoder_forward.1} parent=1 // pred_check
      _
    $region43: #{linear_autoencoder_forward.1} parent=1 // pred_check_branch
      %115 = sbr.rel (0) target = $region45
    $region44: #{linear_autoencoder_forward.1} parent=1 // pred_region
      %116 = dma.done [#allocation14], 128
    $region45: #{linear_autoencoder_forward.1} parent=1 // pred_fallthru
      _
    // Predicated region
    $region46: #{linear_autoencoder_forward.1} parent=1 // pred_check
      _
    $region47: #{linear_autoencoder_forward.1} parent=1 // pred_check_branch
      %118 = sbr.rel (0) target = $region49
    $region48: #{linear_autoencoder_forward.1} parent=1 // pred_region
      %119 = dma.done [#allocation14], 64
    $region49: #{linear_autoencoder_forward.1} parent=1 // pred_fallthru
      _
    // Predicated region
    $region50: #{linear_autoencoder_forward.1} parent=1 // pred_check
      _
    $region51: #{linear_autoencoder_forward.1} parent=1 // pred_check_branch
      %121 = sbr.rel (0) target = $region53
    $region52: #{linear_autoencoder_forward.1} parent=1 // pred_region
      %122 = dma.done [#allocation17], 16
    $region53: #{linear_autoencoder_forward.1} parent=1 // pred_fallthru
      _
    // Predicated region
    $region54: #{linear_autoencoder_forward.1} parent=1 // pred_check
      _
    $region55: #{linear_autoencoder_forward.1} parent=1 // pred_check_branch
      %124 = sbr.rel (0) target = $region57
    $region56: #{linear_autoencoder_forward.1} parent=1 // pred_region
      %125 = dma.done [#allocation17], 64
    $region57: #{linear_autoencoder_forward.1} parent=1 // pred_fallthru
      _
    // Predicated region
    $region58: #{linear_autoencoder_forward.1} parent=1 // pred_check
      _
    $region59: #{linear_autoencoder_forward.1} parent=1 // pred_check_branch
      %127 = sbr.rel (0) target = $region61
    $region60: #{linear_autoencoder_forward.1} parent=1 // pred_region
      %128 = dma.done [#allocation20], 128
    $region61: #{linear_autoencoder_forward.1} parent=1 // pred_fallthru
      _
    // Predicated region
    $region62: #{linear_autoencoder_forward.1} parent=1 // pred_check
      _
    $region63: #{linear_autoencoder_forward.1} parent=1 // pred_check_branch
      %130 = sbr.rel (0) target = $region65
    $region64: #{linear_autoencoder_forward.1} parent=1 // pred_region
      %131 = dma.done [#allocation20], 256
    $region65: #{linear_autoencoder_forward.1} parent=1 // pred_fallthru
      _
    // Predicated region
    $region66: #{linear_autoencoder_forward.1} parent=1 // pred_check
      _
    $region67: #{linear_autoencoder_forward.1} parent=1 // pred_check_branch
      %133 = sbr.rel (0) target = $region69
    $region68: #{linear_autoencoder_forward.1} parent=1 // pred_region
      %134 = dma.done [#allocation23], 32
    $region69: #{linear_autoencoder_forward.1} parent=1 // pred_fallthru
      _
    %s137 = sshll.u32 1, 14
    %s138 = sxor.u32 4294967295, %s137
    %s140 = sld [smem:[#allocation0]]
    %s141 = sadd.s32 2, %s140
    %s143 = sshll.u32 7, 26
    %s144 = sxor.u32 4294967295, %s143
    %s145 = sand.u32 0, %s144
    %s146 = sshll.u32 %s141, 26
    %s147 = sor.u32 %s145, %s146
    %s148 = sshll.u32 [#allocation2], 4
    %s149 = int_to_ptr.vmem [resolvable:$true] %s148
    %152 = sst [smem:[#allocation25]] 2048
    %s153 = scalar_lea.smem [#allocation25], 1
    %154 = sst [smem:[%s153]] 2048
    %s155 = scalar_lea.smem [#allocation25], 2
    %156 = sst [smem:[%s155]] 16
    %s157 = scalar_lea.smem [#allocation25], 3
    %158 = sst [smem:[%s157]] 64
    %s159 = scalar_lea.smem [#allocation25], 4
    %160 = sst [smem:[%s159]] 128
    %s161 = scalar_lea.smem [#allocation25], 5
    %162 = sst [smem:[%s161]] 2
    %s163 = scalar_lea.smem [#allocation25], 6
    %164 = sst [smem:[%s163]] 1024
    %s165 = scalar_lea.smem [#allocation25], 7
    %166 = sst [smem:[%s165]] 64
    %s167 = scalar_lea.smem [#allocation25], 8
    %168 = sst [smem:[%s167]] 4
    %170 = dma.general %s1, 32768, %s149, [#allocation10], [#allocation24], [#allocation25], %s147, 0
    %s171 = scalar_lea.sflag [#allocation10], 1
    %s173 = sshll.u32 1, 14
    %s174 = sxor.u32 4294967295, %s173
    %s176 = sadd.s32 2, %s140
    %s178 = sshll.u32 7, 26
    %s179 = sxor.u32 4294967295, %s178
    %s180 = sand.u32 0, %s179
    %s181 = sshll.u32 %s176, 26
    %s182 = sor.u32 %s180, %s181
    %s183 = sshll.u32 [#allocation3], 4
    %s184 = int_to_ptr.vmem [resolvable:$true] %s183
    %187 = sst [smem:[#allocation27]] 1024
    %s188 = scalar_lea.smem [#allocation27], 1
    %189 = sst [smem:[%s188]] 1024
    %s190 = scalar_lea.smem [#allocation27], 2
    %191 = sst [smem:[%s190]] 8
    %s192 = scalar_lea.smem [#allocation27], 3
    %193 = sst [smem:[%s192]] 64
    %s194 = scalar_lea.smem [#allocation27], 4
    %195 = sst [smem:[%s194]] 128
    %s196 = scalar_lea.smem [#allocation27], 5
    %197 = sst [smem:[%s196]] 2
    %s198 = scalar_lea.smem [#allocation27], 6
    %199 = sst [smem:[%s198]] 512
    %s200 = scalar_lea.smem [#allocation27], 7
    %201 = sst [smem:[%s200]] 64
    %s202 = scalar_lea.smem [#allocation27], 8
    %203 = sst [smem:[%s202]] 4
    %205 = dma.general %s3, 131072, %s184, %s171, [#allocation26], [#allocation27], %s182, 0
    %s206 = scalar_lea.sflag [#allocation10], 2
    %s208 = sshll.u32 1, 14
    %s209 = sxor.u32 4294967295, %s208
    %s211 = sadd.s32 2, %s140
    %s213 = sshll.u32 7, 26
    %s214 = sxor.u32 4294967295, %s213
    %s215 = sand.u32 0, %s214
    %s216 = sshll.u32 %s211, 26
    %s217 = sor.u32 %s215, %s216
    %s218 = sshll.u32 [#allocation4], 4
    %s219 = int_to_ptr.vmem [resolvable:$true] %s218
    %222 = sst [smem:[#allocation29]] 512
    %s223 = scalar_lea.smem [#allocation29], 1
    %224 = sst [smem:[%s223]] 512
    %s225 = scalar_lea.smem [#allocation29], 2
    %226 = sst [smem:[%s225]] 4
    %s227 = scalar_lea.smem [#allocation29], 3
    %228 = sst [smem:[%s227]] 64
    %s229 = scalar_lea.smem [#allocation29], 4
    %230 = sst [smem:[%s229]] 128
    %s231 = scalar_lea.smem [#allocation29], 5
    %232 = sst [smem:[%s231]] 2
    %s233 = scalar_lea.smem [#allocation29], 6
    %234 = sst [smem:[%s233]] 256
    %s235 = scalar_lea.smem [#allocation29], 7
    %236 = sst [smem:[%s235]] 64
    %s237 = scalar_lea.smem [#allocation29], 8
    %238 = sst [smem:[%s237]] 4
    %240 = dma.general %s5, 32768, %s219, %s206, [#allocation28], [#allocation29], %s217, 0
    %s241 = scalar_lea.sflag [#allocation10], 3
    // Predicated region
    $region70: #{linear_autoencoder_forward.1} parent=1 // pred_check
      _
    $region71: #{linear_autoencoder_forward.1} parent=1 // pred_check_branch
      %243 = sbr.rel target = $region73
    $region72: #{linear_autoencoder_forward.1} parent=1 // pred_region
      %244 = sst [smem:[#allocation32]] [#allocation31]
      %245 = sst [smem:[#allocation33]] [#allocation30]
    $region73: #{linear_autoencoder_forward.1} parent=1 // pred_fallthru
      _
    %247 = shalt.err (0)
    %s249 = sshll.u32 [#allocation5], 4
    %s250 = int_to_ptr.vmem [resolvable:$true] %s249
    %252 = dma.hbm_to_vmem [thread:$0]  %s7, 4096, %s250, %s241
    %s253 = scalar_lea.sflag [#allocation10], 4
    %s255 = sshll.u32 1, 14
    %s256 = sxor.u32 4294967295, %s255
    %s258 = sadd.s32 2, %s140
    %s260 = sshll.u32 7, 26
    %s261 = sxor.u32 4294967295, %s260
    %s262 = sand.u32 0, %s261
    %s263 = sshll.u32 %s258, 26
    %s264 = sor.u32 %s262, %s263
    %s265 = sshll.u32 [#allocation6], 4
    %s266 = int_to_ptr.vmem [resolvable:$true] %s265
    %269 = sst [smem:[#allocation35]] 512
    %s270 = scalar_lea.smem [#allocation35], 1
    %271 = sst [smem:[%s270]] 512
    %s272 = scalar_lea.smem [#allocation35], 2
    %273 = sst [smem:[%s272]] 4
    %s274 = scalar_lea.smem [#allocation35], 3
    %275 = sst [smem:[%s274]] 64
    %s276 = scalar_lea.smem [#allocation35], 4
    %277 = sst [smem:[%s276]] 128
    %s278 = scalar_lea.smem [#allocation35], 5
    %279 = sst [smem:[%s278]] 2
    %s280 = scalar_lea.smem [#allocation35], 6
    %281 = sst [smem:[%s280]] 256
    %s282 = scalar_lea.smem [#allocation35], 7
    %283 = sst [smem:[%s282]] 64
    %s284 = scalar_lea.smem [#allocation35], 8
    %285 = sst [smem:[%s284]] 4
    %287 = dma.general %s9, 4096, %s266, %s253, [#allocation34], [#allocation35], %s264, 0
    %s288 = scalar_lea.sflag [#allocation10], 5
    %s290 = sshll.u32 1, 14
    %s291 = sxor.u32 4294967295, %s290
    %s293 = sadd.s32 2, %s140
    %s295 = sshll.u32 7, 26
    %s296 = sxor.u32 4294967295, %s295
    %s297 = sand.u32 0, %s296
    %s298 = sshll.u32 %s293, 26
    %s299 = sor.u32 %s297, %s298
    %s300 = sshll.u32 [#allocation7], 4
    %s301 = int_to_ptr.vmem [resolvable:$true] %s300
    %304 = sst [smem:[#allocation37]] 1024
    %s305 = scalar_lea.smem [#allocation37], 1
    %306 = sst [smem:[%s305]] 1024
    %s307 = scalar_lea.smem [#allocation37], 2
    %308 = sst [smem:[%s307]] 8
    %s309 = scalar_lea.smem [#allocation37], 3
    %310 = sst [smem:[%s309]] 64
    %s311 = scalar_lea.smem [#allocation37], 4
    %312 = sst [smem:[%s311]] 128
    %s313 = scalar_lea.smem [#allocation37], 5
    %314 = sst [smem:[%s313]] 2
    %s315 = scalar_lea.smem [#allocation37], 6
    %316 = sst [smem:[%s315]] 512
    %s317 = scalar_lea.smem [#allocation37], 7
    %318 = sst [smem:[%s317]] 64
    %s319 = scalar_lea.smem [#allocation37], 8
    %320 = sst [smem:[%s319]] 4
    %322 = dma.general %s11, 32768, %s301, %s288, [#allocation36], [#allocation37], %s299, 0
    %s323 = scalar_lea.sflag [#allocation10], 6
    %s325 = sshll.u32 1, 14
    %s326 = sxor.u32 4294967295, %s325
    %s328 = sadd.s32 2, %s140
    %s330 = sshll.u32 7, 26
    %s331 = sxor.u32 4294967295, %s330
    %s332 = sand.u32 0, %s331
    %s333 = sshll.u32 %s328, 26
    %s334 = sor.u32 %s332, %s333
    %s335 = sshll.u32 [#allocation8], 4
    %s336 = int_to_ptr.vmem [resolvable:$true] %s335
    %339 = sst [smem:[#allocation39]] 2048
    %s340 = scalar_lea.smem [#allocation39], 1
    %341 = sst [smem:[%s340]] 2048
    %s342 = scalar_lea.smem [#allocation39], 2
    %343 = sst [smem:[%s342]] 16
    %s344 = scalar_lea.smem [#allocation39], 3
    %345 = sst [smem:[%s344]] 64
    %s346 = scalar_lea.smem [#allocation39], 4
    %347 = sst [smem:[%s346]] 128
    %s348 = scalar_lea.smem [#allocation39], 5
    %349 = sst [smem:[%s348]] 2
    %s350 = scalar_lea.smem [#allocation39], 6
    %351 = sst [smem:[%s350]] 1024
    %s352 = scalar_lea.smem [#allocation39], 7
    %353 = sst [smem:[%s352]] 64
    %s354 = scalar_lea.smem [#allocation39], 8
    %355 = sst [smem:[%s354]] 4
    %357 = dma.general %s13, 131072, %s336, %s323, [#allocation38], [#allocation39], %s334, 0
    %s358 = scalar_lea.sflag [#allocation10], 7
    %s360 = sshll.u32 1, 14
    %s361 = sxor.u32 4294967295, %s360
    %s363 = sadd.s32 2, %s140
    %s365 = sshll.u32 7, 26
    %s366 = sxor.u32 4294967295, %s365
    %s367 = sand.u32 0, %s366
    %s368 = sshll.u32 %s363, 26
    %s369 = sor.u32 %s367, %s368
    %s370 = sshll.u32 [#allocation9], 4
    %s371 = int_to_ptr.vmem [resolvable:$true] %s370
    %374 = sst [smem:[#allocation41]] 256
    %s375 = scalar_lea.smem [#allocation41], 1
    %376 = sst [smem:[%s375]] 256
    %s377 = scalar_lea.smem [#allocation41], 2
    %378 = sst [smem:[%s377]] 2
    %s379 = scalar_lea.smem [#allocation41], 3
    %380 = sst [smem:[%s379]] 64
    %s381 = scalar_lea.smem [#allocation41], 4
    %382 = sst [smem:[%s381]] 128
    %s383 = scalar_lea.smem [#allocation41], 5
    %384 = sst [smem:[%s383]] 2
    %s385 = scalar_lea.smem [#allocation41], 6
    %386 = sst [smem:[%s385]] 128
    %s387 = scalar_lea.smem [#allocation41], 7
    %388 = sst [smem:[%s387]] 64
    %s389 = scalar_lea.smem [#allocation41], 8
    %390 = sst [smem:[%s389]] 4
    %392 = dma.general %s15, 32768, %s371, %s358, [#allocation40], [#allocation41], %s369, 0
    %v393 = vld [vmem:[%s0] sm:$0xff]
    %v394 = vld [vmem:[%s0 + $0x8] sm:$0xff]
    %s395 = smul.u32 4, 32
    %s396 = smul.u32 %s395, 16
    %s397 = sshll.u32 %s396, 4
    %398 = dma.done [#allocation10], %s397
    %v399 = vld [vmem:[#allocation2] sm:$0xff]
    %v400 = vld [vmem:[#allocation2 + $0x8] sm:$0xff]
    %v401 = vld [vmem:[#allocation2 + $0x10] sm:$0xff]
    %v402 = vld [vmem:[#allocation2 + $0x18] sm:$0xff]
    %v403 = vld [vmem:[#allocation2 + $0x20] sm:$0xff]
    %v404 = vld [vmem:[#allocation2 + $0x28] sm:$0xff]
    %v405 = vld [vmem:[#allocation2 + $0x30] sm:$0xff]
    %v406 = vld [vmem:[#allocation2 + $0x38] sm:$0xff]
    %v407 = vld [vmem:[#allocation2 + $0x40] sm:$0xff]
    %v408 = vld [vmem:[#allocation2 + $0x48] sm:$0xff]
    %v409 = vld [vmem:[#allocation2 + $0x50] sm:$0xff]
    %v410 = vld [vmem:[#allocation2 + $0x58] sm:$0xff]
    %v411 = vld [vmem:[#allocation2 + $0x60] sm:$0xff]
    %v412 = vld [vmem:[#allocation2 + $0x68] sm:$0xff]
    %v413 = vld [vmem:[#allocation2 + $0x70] sm:$0xff]
    %v414 = vld [vmem:[#allocation2 + $0x78] sm:$0xff]
    %v415 = vld [vmem:[#allocation2 + $0x80] sm:$0xff]
    %v416 = vld [vmem:[#allocation2 + $0x88] sm:$0xff]
    %v417 = vld [vmem:[#allocation2 + $0x90] sm:$0xff]
    %v418 = vld [vmem:[#allocation2 + $0x98] sm:$0xff]
    %v419 = vld [vmem:[#allocation2 + $0xa0] sm:$0xff]
    %v420 = vld [vmem:[#allocation2 + $0xa8] sm:$0xff]
    %v421 = vld [vmem:[#allocation2 + $0xb0] sm:$0xff]
    %v422 = vld [vmem:[#allocation2 + $0xb8] sm:$0xff]
    %v423 = vld [vmem:[#allocation2 + $0xc0] sm:$0xff]
    %v424 = vld [vmem:[#allocation2 + $0xc8] sm:$0xff]
    %v425 = vld [vmem:[#allocation2 + $0xd0] sm:$0xff]
    %v426 = vld [vmem:[#allocation2 + $0xd8] sm:$0xff]
    %v427 = vld [vmem:[#allocation2 + $0xe0] sm:$0xff]
    %v428 = vld [vmem:[#allocation2 + $0xe8] sm:$0xff]
    %v429 = vld [vmem:[#allocation2 + $0xf0] sm:$0xff]
    %v430 = vld [vmem:[#allocation2 + $0xf8] sm:$0xff]
    %v431 = vld [vmem:[#allocation2 + $0x100] sm:$0xff]
    %v432 = vld [vmem:[#allocation2 + $0x108] sm:$0xff]
    %v433 = vld [vmem:[#allocation2 + $0x110] sm:$0xff]
    %v434 = vld [vmem:[#allocation2 + $0x118] sm:$0xff]
    %v435 = vld [vmem:[#allocation2 + $0x120] sm:$0xff]
    %v436 = vld [vmem:[#allocation2 + $0x128] sm:$0xff]
    %v437 = vld [vmem:[#allocation2 + $0x130] sm:$0xff]
    %v438 = vld [vmem:[#allocation2 + $0x138] sm:$0xff]
    %v439 = vld [vmem:[#allocation2 + $0x140] sm:$0xff]
    %v440 = vld [vmem:[#allocation2 + $0x148] sm:$0xff]
    %v441 = vld [vmem:[#allocation2 + $0x150] sm:$0xff]
    %v442 = vld [vmem:[#allocation2 + $0x158] sm:$0xff]
    %v443 = vld [vmem:[#allocation2 + $0x160] sm:$0xff]
    %v444 = vld [vmem:[#allocation2 + $0x168] sm:$0xff]
    %v445 = vld [vmem:[#allocation2 + $0x170] sm:$0xff]
    %v446 = vld [vmem:[#allocation2 + $0x178] sm:$0xff]
    %v447 = vld [vmem:[#allocation2 + $0x180] sm:$0xff]
    %v448 = vld [vmem:[#allocation2 + $0x188] sm:$0xff]
    %v449 = vld [vmem:[#allocation2 + $0x190] sm:$0xff]
    %v450 = vld [vmem:[#allocation2 + $0x198] sm:$0xff]
    %v451 = vld [vmem:[#allocation2 + $0x1a0] sm:$0xff]
    %v452 = vld [vmem:[#allocation2 + $0x1a8] sm:$0xff]
    %v453 = vld [vmem:[#allocation2 + $0x1b0] sm:$0xff]
    %v454 = vld [vmem:[#allocation2 + $0x1b8] sm:$0xff]
    %v455 = vld [vmem:[#allocation2 + $0x1c0] sm:$0xff]
    %v456 = vld [vmem:[#allocation2 + $0x1c8] sm:$0xff]
    %v457 = vld [vmem:[#allocation2 + $0x1d0] sm:$0xff]
    %v458 = vld [vmem:[#allocation2 + $0x1d8] sm:$0xff]
    %v459 = vld [vmem:[#allocation2 + $0x1e0] sm:$0xff]
    %v460 = vld [vmem:[#allocation2 + $0x1e8] sm:$0xff]
    %v461 = vld [vmem:[#allocation2 + $0x1f0] sm:$0xff]
    %v462 = vld [vmem:[#allocation2 + $0x1f8] sm:$0xff]
    %v463 = vld [vmem:[#allocation2 + $0x200] sm:$0xff]
    %v464 = vld [vmem:[#allocation2 + $0x208] sm:$0xff]
    %v465 = vld [vmem:[#allocation2 + $0x210] sm:$0xff]
    %v466 = vld [vmem:[#allocation2 + $0x218] sm:$0xff]
    %v467 = vld [vmem:[#allocation2 + $0x220] sm:$0xff]
    %v468 = vld [vmem:[#allocation2 + $0x228] sm:$0xff]
    %v469 = vld [vmem:[#allocation2 + $0x230] sm:$0xff]
    %v470 = vld [vmem:[#allocation2 + $0x238] sm:$0xff]
    %v471 = vld [vmem:[#allocation2 + $0x240] sm:$0xff]
    %v472 = vld [vmem:[#allocation2 + $0x248] sm:$0xff]
    %v473 = vld [vmem:[#allocation2 + $0x250] sm:$0xff]
    %v474 = vld [vmem:[#allocation2 + $0x258] sm:$0xff]
    %v475 = vld [vmem:[#allocation2 + $0x260] sm:$0xff]
    %v476 = vld [vmem:[#allocation2 + $0x268] sm:$0xff]
    %v477 = vld [vmem:[#allocation2 + $0x270] sm:$0xff]
    %v478 = vld [vmem:[#allocation2 + $0x278] sm:$0xff]
    %v479 = vld [vmem:[#allocation2 + $0x280] sm:$0xff]
    %v480 = vld [vmem:[#allocation2 + $0x288] sm:$0xff]
    %v481 = vld [vmem:[#allocation2 + $0x290] sm:$0xff]
    %v482 = vld [vmem:[#allocation2 + $0x298] sm:$0xff]
    %v483 = vld [vmem:[#allocation2 + $0x2a0] sm:$0xff]
    %v484 = vld [vmem:[#allocation2 + $0x2a8] sm:$0xff]
    %v485 = vld [vmem:[#allocation2 + $0x2b0] sm:$0xff]
    %v486 = vld [vmem:[#allocation2 + $0x2b8] sm:$0xff]
    %v487 = vld [vmem:[#allocation2 + $0x2c0] sm:$0xff]
    %v488 = vld [vmem:[#allocation2 + $0x2c8] sm:$0xff]
    %v489 = vld [vmem:[#allocation2 + $0x2d0] sm:$0xff]
    %v490 = vld [vmem:[#allocation2 + $0x2d8] sm:$0xff]
    %v491 = vld [vmem:[#allocation2 + $0x2e0] sm:$0xff]
    %v492 = vld [vmem:[#allocation2 + $0x2e8] sm:$0xff]
    %v493 = vld [vmem:[#allocation2 + $0x2f0] sm:$0xff]
    %v494 = vld [vmem:[#allocation2 + $0x2f8] sm:$0xff]
    %v495 = vld [vmem:[#allocation2 + $0x300] sm:$0xff]
    %v496 = vld [vmem:[#allocation2 + $0x308] sm:$0xff]
    %v497 = vld [vmem:[#allocation2 + $0x310] sm:$0xff]
    %v498 = vld [vmem:[#allocation2 + $0x318] sm:$0xff]
    %v499 = vld [vmem:[#allocation2 + $0x320] sm:$0xff]
    %v500 = vld [vmem:[#allocation2 + $0x328] sm:$0xff]
    %v501 = vld [vmem:[#allocation2 + $0x330] sm:$0xff]
    %v502 = vld [vmem:[#allocation2 + $0x338] sm:$0xff]
    %v503 = vld [vmem:[#allocation2 + $0x340] sm:$0xff]
    %v504 = vld [vmem:[#allocation2 + $0x348] sm:$0xff]
    %v505 = vld [vmem:[#allocation2 + $0x350] sm:$0xff]
    %v506 = vld [vmem:[#allocation2 + $0x358] sm:$0xff]
    %v507 = vld [vmem:[#allocation2 + $0x360] sm:$0xff]
    %v508 = vld [vmem:[#allocation2 + $0x368] sm:$0xff]
    %v509 = vld [vmem:[#allocation2 + $0x370] sm:$0xff]
    %v510 = vld [vmem:[#allocation2 + $0x378] sm:$0xff]
    %v511 = vld [vmem:[#allocation2 + $0x380] sm:$0xff]
    %v512 = vld [vmem:[#allocation2 + $0x388] sm:$0xff]
    %v513 = vld [vmem:[#allocation2 + $0x390] sm:$0xff]
    %v514 = vld [vmem:[#allocation2 + $0x398] sm:$0xff]
    %v515 = vld [vmem:[#allocation2 + $0x3a0] sm:$0xff]
    %v516 = vld [vmem:[#allocation2 + $0x3a8] sm:$0xff]
    %v517 = vld [vmem:[#allocation2 + $0x3b0] sm:$0xff]
    %v518 = vld [vmem:[#allocation2 + $0x3b8] sm:$0xff]
    %v519 = vld [vmem:[#allocation2 + $0x3c0] sm:$0xff]
    %v520 = vld [vmem:[#allocation2 + $0x3c8] sm:$0xff]
    %v521 = vld [vmem:[#allocation2 + $0x3d0] sm:$0xff]
    %v522 = vld [vmem:[#allocation2 + $0x3d8] sm:$0xff]
    %v523 = vld [vmem:[#allocation2 + $0x3e0] sm:$0xff]
    %v524 = vld [vmem:[#allocation2 + $0x3e8] sm:$0xff]
    %v525 = vld [vmem:[#allocation2 + $0x3f0] sm:$0xff]
    %v526 = vld [vmem:[#allocation2 + $0x3f8] sm:$0xff]
    %v527 = vld [vmem:[#allocation2 + $0x400] sm:$0xff]
    %v528 = vld [vmem:[#allocation2 + $0x408] sm:$0xff]
    %v529 = vld [vmem:[#allocation2 + $0x410] sm:$0xff]
    %v530 = vld [vmem:[#allocation2 + $0x418] sm:$0xff]
    %v531 = vld [vmem:[#allocation2 + $0x420] sm:$0xff]
    %v532 = vld [vmem:[#allocation2 + $0x428] sm:$0xff]
    %v533 = vld [vmem:[#allocation2 + $0x430] sm:$0xff]
    %v534 = vld [vmem:[#allocation2 + $0x438] sm:$0xff]
    %v535 = vld [vmem:[#allocation2 + $0x440] sm:$0xff]
    %v536 = vld [vmem:[#allocation2 + $0x448] sm:$0xff]
    %v537 = vld [vmem:[#allocation2 + $0x450] sm:$0xff]
    %v538 = vld [vmem:[#allocation2 + $0x458] sm:$0xff]
    %v539 = vld [vmem:[#allocation2 + $0x460] sm:$0xff]
    %v540 = vld [vmem:[#allocation2 + $0x468] sm:$0xff]
    %v541 = vld [vmem:[#allocation2 + $0x470] sm:$0xff]
    %v542 = vld [vmem:[#allocation2 + $0x478] sm:$0xff]
    %v543 = vld [vmem:[#allocation2 + $0x480] sm:$0xff]
    %v544 = vld [vmem:[#allocation2 + $0x488] sm:$0xff]
    %v545 = vld [vmem:[#allocation2 + $0x490] sm:$0xff]
    %v546 = vld [vmem:[#allocation2 + $0x498] sm:$0xff]
    %v547 = vld [vmem:[#allocation2 + $0x4a0] sm:$0xff]
    %v548 = vld [vmem:[#allocation2 + $0x4a8] sm:$0xff]
    %v549 = vld [vmem:[#allocation2 + $0x4b0] sm:$0xff]
    %v550 = vld [vmem:[#allocation2 + $0x4b8] sm:$0xff]
    %v551 = vld [vmem:[#allocation2 + $0x4c0] sm:$0xff]
    %v552 = vld [vmem:[#allocation2 + $0x4c8] sm:$0xff]
    %v553 = vld [vmem:[#allocation2 + $0x4d0] sm:$0xff]
    %v554 = vld [vmem:[#allocation2 + $0x4d8] sm:$0xff]
    %v555 = vld [vmem:[#allocation2 + $0x4e0] sm:$0xff]
    %v556 = vld [vmem:[#allocation2 + $0x4e8] sm:$0xff]
    %v557 = vld [vmem:[#allocation2 + $0x4f0] sm:$0xff]
    %v558 = vld [vmem:[#allocation2 + $0x4f8] sm:$0xff]
    %v559 = vld [vmem:[#allocation2 + $0x500] sm:$0xff]
    %v560 = vld [vmem:[#allocation2 + $0x508] sm:$0xff]
    %v561 = vld [vmem:[#allocation2 + $0x510] sm:$0xff]
    %v562 = vld [vmem:[#allocation2 + $0x518] sm:$0xff]
    %v563 = vld [vmem:[#allocation2 + $0x520] sm:$0xff]
    %v564 = vld [vmem:[#allocation2 + $0x528] sm:$0xff]
    %v565 = vld [vmem:[#allocation2 + $0x530] sm:$0xff]
    %v566 = vld [vmem:[#allocation2 + $0x538] sm:$0xff]
    %v567 = vld [vmem:[#allocation2 + $0x540] sm:$0xff]
    %v568 = vld [vmem:[#allocation2 + $0x548] sm:$0xff]
    %v569 = vld [vmem:[#allocation2 + $0x550] sm:$0xff]
    %v570 = vld [vmem:[#allocation2 + $0x558] sm:$0xff]
    %v571 = vld [vmem:[#allocation2 + $0x560] sm:$0xff]
    %v572 = vld [vmem:[#allocation2 + $0x568] sm:$0xff]
    %v573 = vld [vmem:[#allocation2 + $0x570] sm:$0xff]
    %v574 = vld [vmem:[#allocation2 + $0x578] sm:$0xff]
    %v575 = vld [vmem:[#allocation2 + $0x580] sm:$0xff]
    %v576 = vld [vmem:[#allocation2 + $0x588] sm:$0xff]
    %v577 = vld [vmem:[#allocation2 + $0x590] sm:$0xff]
    %v578 = vld [vmem:[#allocation2 + $0x598] sm:$0xff]
    %v579 = vld [vmem:[#allocation2 + $0x5a0] sm:$0xff]
    %v580 = vld [vmem:[#allocation2 + $0x5a8] sm:$0xff]
    %v581 = vld [vmem:[#allocation2 + $0x5b0] sm:$0xff]
    %v582 = vld [vmem:[#allocation2 + $0x5b8] sm:$0xff]
    %v583 = vld [vmem:[#allocation2 + $0x5c0] sm:$0xff]
    %v584 = vld [vmem:[#allocation2 + $0x5c8] sm:$0xff]
    %v585 = vld [vmem:[#allocation2 + $0x5d0] sm:$0xff]
    %v586 = vld [vmem:[#allocation2 + $0x5d8] sm:$0xff]
    %v587 = vld [vmem:[#allocation2 + $0x5e0] sm:$0xff]
    %v588 = vld [vmem:[#allocation2 + $0x5e8] sm:$0xff]
    %v589 = vld [vmem:[#allocation2 + $0x5f0] sm:$0xff]
    %v590 = vld [vmem:[#allocation2 + $0x5f8] sm:$0xff]
    %v591 = vld [vmem:[#allocation2 + $0x600] sm:$0xff]
    %v592 = vld [vmem:[#allocation2 + $0x608] sm:$0xff]
    %v593 = vld [vmem:[#allocation2 + $0x610] sm:$0xff]
    %v594 = vld [vmem:[#allocation2 + $0x618] sm:$0xff]
    %v595 = vld [vmem:[#allocation2 + $0x620] sm:$0xff]
    %v596 = vld [vmem:[#allocation2 + $0x628] sm:$0xff]
    %v597 = vld [vmem:[#allocation2 + $0x630] sm:$0xff]
    %v598 = vld [vmem:[#allocation2 + $0x638] sm:$0xff]
    %v599 = vld [vmem:[#allocation2 + $0x640] sm:$0xff]
    %v600 = vld [vmem:[#allocation2 + $0x648] sm:$0xff]
    %v601 = vld [vmem:[#allocation2 + $0x650] sm:$0xff]
    %v602 = vld [vmem:[#allocation2 + $0x658] sm:$0xff]
    %v603 = vld [vmem:[#allocation2 + $0x660] sm:$0xff]
    %v604 = vld [vmem:[#allocation2 + $0x668] sm:$0xff]
    %v605 = vld [vmem:[#allocation2 + $0x670] sm:$0xff]
    %v606 = vld [vmem:[#allocation2 + $0x678] sm:$0xff]
    %v607 = vld [vmem:[#allocation2 + $0x680] sm:$0xff]
    %v608 = vld [vmem:[#allocation2 + $0x688] sm:$0xff]
    %v609 = vld [vmem:[#allocation2 + $0x690] sm:$0xff]
    %v610 = vld [vmem:[#allocation2 + $0x698] sm:$0xff]
    %v611 = vld [vmem:[#allocation2 + $0x6a0] sm:$0xff]
    %v612 = vld [vmem:[#allocation2 + $0x6a8] sm:$0xff]
    %v613 = vld [vmem:[#allocation2 + $0x6b0] sm:$0xff]
    %v614 = vld [vmem:[#allocation2 + $0x6b8] sm:$0xff]
    %v615 = vld [vmem:[#allocation2 + $0x6c0] sm:$0xff]
    %v616 = vld [vmem:[#allocation2 + $0x6c8] sm:$0xff]
    %v617 = vld [vmem:[#allocation2 + $0x6d0] sm:$0xff]
    %v618 = vld [vmem:[#allocation2 + $0x6d8] sm:$0xff]
    %v619 = vld [vmem:[#allocation2 + $0x6e0] sm:$0xff]
    %v620 = vld [vmem:[#allocation2 + $0x6e8] sm:$0xff]
    %v621 = vld [vmem:[#allocation2 + $0x6f0] sm:$0xff]
    %v622 = vld [vmem:[#allocation2 + $0x6f8] sm:$0xff]
    %v623 = vld [vmem:[#allocation2 + $0x700] sm:$0xff]
    %v624 = vld [vmem:[#allocation2 + $0x708] sm:$0xff]
    %v625 = vld [vmem:[#allocation2 + $0x710] sm:$0xff]
    %v626 = vld [vmem:[#allocation2 + $0x718] sm:$0xff]
    %v627 = vld [vmem:[#allocation2 + $0x720] sm:$0xff]
    %v628 = vld [vmem:[#allocation2 + $0x728] sm:$0xff]
    %v629 = vld [vmem:[#allocation2 + $0x730] sm:$0xff]
    %v630 = vld [vmem:[#allocation2 + $0x738] sm:$0xff]
    %v631 = vld [vmem:[#allocation2 + $0x740] sm:$0xff]
    %v632 = vld [vmem:[#allocation2 + $0x748] sm:$0xff]
    %v633 = vld [vmem:[#allocation2 + $0x750] sm:$0xff]
    %v634 = vld [vmem:[#allocation2 + $0x758] sm:$0xff]
    %v635 = vld [vmem:[#allocation2 + $0x760] sm:$0xff]
    %v636 = vld [vmem:[#allocation2 + $0x768] sm:$0xff]
    %v637 = vld [vmem:[#allocation2 + $0x770] sm:$0xff]
    %v638 = vld [vmem:[#allocation2 + $0x778] sm:$0xff]
    %v639 = vld [vmem:[#allocation2 + $0x780] sm:$0xff]
    %v640 = vld [vmem:[#allocation2 + $0x788] sm:$0xff]
    %v641 = vld [vmem:[#allocation2 + $0x790] sm:$0xff]
    %v642 = vld [vmem:[#allocation2 + $0x798] sm:$0xff]
    %v643 = vld [vmem:[#allocation2 + $0x7a0] sm:$0xff]
    %v644 = vld [vmem:[#allocation2 + $0x7a8] sm:$0xff]
    %v645 = vld [vmem:[#allocation2 + $0x7b0] sm:$0xff]
    %v646 = vld [vmem:[#allocation2 + $0x7b8] sm:$0xff]
    %v647 = vld [vmem:[#allocation2 + $0x7c0] sm:$0xff]
    %v648 = vld [vmem:[#allocation2 + $0x7c8] sm:$0xff]
    %v649 = vld [vmem:[#allocation2 + $0x7d0] sm:$0xff]
    %v650 = vld [vmem:[#allocation2 + $0x7d8] sm:$0xff]
    %v651 = vld [vmem:[#allocation2 + $0x7e0] sm:$0xff]
    %v652 = vld [vmem:[#allocation2 + $0x7e8] sm:$0xff]
    %v653 = vld [vmem:[#allocation2 + $0x7f0] sm:$0xff]
    %v654 = vld [vmem:[#allocation2 + $0x7f8] sm:$0xff]
    %v655 = vld [vmem:[#allocation11] sm:$0xff]
    %v656 = vld [vmem:[#allocation11 + $0x8] sm:$0xff]
    %v659 = vlaneseq
    %v660 = vshrl.u32 %v659, 7
    %v661 = vsub.s32 0, %v660
    %v662 = vrot.slane %v655, %v661
    %v663 = vlaneseq
    %v664 = vshrl.u32 %v663, 7
    %v665 = vsub.s32 1, %v664
    %v666 = vrot.slane %v655, %v665
    %v667 = vlaneseq
    %v668 = vshrl.u32 %v667, 7
    %v669 = vsub.s32 2, %v668
    %v670 = vrot.slane %v655, %v669
    %v671 = vlaneseq
    %v672 = vshrl.u32 %v671, 7
    %v673 = vsub.s32 3, %v672
    %v674 = vrot.slane %v655, %v673
    %v675 = vlaneseq
    %v676 = vshrl.u32 %v675, 7
    %v677 = vsub.s32 4, %v676
    %v678 = vrot.slane %v655, %v677
    %v679 = vlaneseq
    %v680 = vshrl.u32 %v679, 7
    %v681 = vsub.s32 5, %v680
    %v682 = vrot.slane %v655, %v681
    %v683 = vlaneseq
    %v684 = vshrl.u32 %v683, 7
    %v685 = vsub.s32 6, %v684
    %v686 = vrot.slane %v655, %v685
    %v687 = vlaneseq
    %v688 = vshrl.u32 %v687, 7
    %v689 = vsub.s32 7, %v688
    %v690 = vrot.slane %v655, %v689
    %v691 = vlaneseq
    %v692 = vshrl.u32 %v691, 7
    %v693 = vsub.s32 0, %v692
    %v694 = vrot.slane %v656, %v693
    %v695 = vlaneseq
    %v696 = vshrl.u32 %v695, 7
    %v697 = vsub.s32 1, %v696
    %v698 = vrot.slane %v656, %v697
    %v699 = vlaneseq
    %v700 = vshrl.u32 %v699, 7
    %v701 = vsub.s32 2, %v700
    %v702 = vrot.slane %v656, %v701
    %v703 = vlaneseq
    %v704 = vshrl.u32 %v703, 7
    %v705 = vsub.s32 3, %v704
    %v706 = vrot.slane %v656, %v705
    %v707 = vlaneseq
    %v708 = vshrl.u32 %v707, 7
    %v709 = vsub.s32 4, %v708
    %v710 = vrot.slane %v656, %v709
    %v711 = vlaneseq
    %v712 = vshrl.u32 %v711, 7
    %v713 = vsub.s32 5, %v712
    %v714 = vrot.slane %v656, %v713
    %v715 = vlaneseq
    %v716 = vshrl.u32 %v715, 7
    %v717 = vsub.s32 6, %v716
    %v718 = vrot.slane %v656, %v717
    %v719 = vlaneseq
    %v720 = vshrl.u32 %v719, 7
    %v721 = vsub.s32 7, %v720
    %v722 = vrot.slane %v656, %v721
    %v741 = vunpack.c.l.b16 %v393
    %v742 = vunpack.c.h.b16 %v393
    %v743 = vunpack.c.l.b16 %v394
    %v744 = vunpack.c.h.b16 %v394
    %v745 = vpack.c.b16 %v743, %v741
    %v746 = vpack.c.b16 %v744, %v742
    %749 = vmatprep.subr.bf16.mxu0 %v400
    %750 = vmatpush1.bf16.msra.mxu0 %v399
    %751 = vmatprep.subr.bf16.mxu0 %v416
    %752 = vmatpush1.bf16.msra.mxu0 %v415
    %753 = vmatprep.subr.bf16.mxu0 %v432
    %754 = vmatpush1.bf16.msra.mxu0 %v431
    %755 = vmatprep.subr.bf16.mxu0 %v448
    %756 = vmatpush1.bf16.msra.mxu0 %v447
    %757 = vmatprep.subr.bf16.mxu0 %v464
    %758 = vmatpush1.bf16.msra.mxu0 %v463
    %759 = vmatprep.subr.bf16.mxu0 %v480
    %760 = vmatpush1.bf16.msra.mxu0 %v479
    %761 = vmatprep.subr.bf16.mxu0 %v496
    %762 = vmatpush1.bf16.msra.mxu0 %v495
    %763 = vmatprep.subr.bf16.mxu0 %v512
    %764 = vmatpush1.bf16.msra.mxu0 %v511
    %765 = vmatprep.subr.bf16.mxu0 %v528
    %766 = vmatpush1.bf16.msra.mxu0 %v527
    %767 = vmatprep.subr.bf16.mxu0 %v544
    %768 = vmatpush1.bf16.msra.mxu0 %v543
    %769 = vmatprep.subr.bf16.mxu0 %v560
    %770 = vmatpush1.bf16.msra.mxu0 %v559
    %771 = vmatprep.subr.bf16.mxu0 %v576
    %772 = vmatpush1.bf16.msra.mxu0 %v575
    %773 = vmatprep.subr.bf16.mxu0 %v592
    %774 = vmatpush1.bf16.msra.mxu0 %v591
    %775 = vmatprep.subr.bf16.mxu0 %v608
    %776 = vmatpush1.bf16.msra.mxu0 %v607
    %777 = vmatprep.subr.bf16.mxu0 %v624
    %778 = vmatpush1.bf16.msra.mxu0 %v623
    %779 = vmatprep.subr.bf16.mxu0 %v640
    %780 = vmatpush1.bf16.msra.mxu0 %v639
    %781 = vmatprep.mubr.bf16.mxu0 %v746
    %782 = vmatmul.mubr.bf16.gmra.mrb[0].mxu0 %v745
    %v783 = vpop.f32.mrb[0].mxu0
    %v784 = vadd.f32 %v662, %v783
    %v785 = vpop.f32.mrb[0].mxu0
    %v786 = vadd.f32 %v666, %v785
    %v787 = vpop.f32.mrb[0].mxu0
    %v788 = vadd.f32 %v662, %v787
    %v789 = vpop.f32.mrb[0].mxu0
    %v790 = vadd.f32 %v666, %v789
    %791 = vdwg.mxu0
    %792 = vmatprep.subr.bf16.mxu0 %v402
    %793 = vmatpush1.bf16.msra.mxu0 %v401
    %794 = vmatprep.subr.bf16.mxu0 %v418
    %795 = vmatpush1.bf16.msra.mxu0 %v417
    %796 = vmatprep.subr.bf16.mxu0 %v434
    %797 = vmatpush1.bf16.msra.mxu0 %v433
    %798 = vmatprep.subr.bf16.mxu0 %v450
    %799 = vmatpush1.bf16.msra.mxu0 %v449
    %800 = vmatprep.subr.bf16.mxu0 %v466
    %801 = vmatpush1.bf16.msra.mxu0 %v465
    %802 = vmatprep.subr.bf16.mxu0 %v482
    %803 = vmatpush1.bf16.msra.mxu0 %v481
    %804 = vmatprep.subr.bf16.mxu0 %v498
    %805 = vmatpush1.bf16.msra.mxu0 %v497
    %806 = vmatprep.subr.bf16.mxu0 %v514
    %807 = vmatpush1.bf16.msra.mxu0 %v513
    %808 = vmatprep.subr.bf16.mxu0 %v530
    %809 = vmatpush1.bf16.msra.mxu0 %v529
    %810 = vmatprep.subr.bf16.mxu0 %v546
    %811 = vmatpush1.bf16.msra.mxu0 %v545
    %812 = vmatprep.subr.bf16.mxu0 %v562
    %813 = vmatpush1.bf16.msra.mxu0 %v561
    %814 = vmatprep.subr.bf16.mxu0 %v578
    %815 = vmatpush1.bf16.msra.mxu0 %v577
    %816 = vmatprep.subr.bf16.mxu0 %v594
    %817 = vmatpush1.bf16.msra.mxu0 %v593
    %818 = vmatprep.subr.bf16.mxu0 %v610
    %819 = vmatpush1.bf16.msra.mxu0 %v609
    %820 = vmatprep.subr.bf16.mxu0 %v626
    %821 = vmatpush1.bf16.msra.mxu0 %v625
    %822 = vmatprep.subr.bf16.mxu0 %v642
    %823 = vmatpush1.bf16.msra.mxu0 %v641
    %824 = vmatprep.mubr.bf16.mxu0 %v746
    %825 = vmatmul.mubr.bf16.gmra.mrb[0].mxu0 %v745
    %v826 = vpop.f32.mrb[0].mxu0
    %v827 = vadd.f32 %v670, %v826
    %v828 = vpop.f32.mrb[0].mxu0
    %v829 = vadd.f32 %v674, %v828
    %v830 = vpop.f32.mrb[0].mxu0
    %v831 = vadd.f32 %v670, %v830
    %v832 = vpop.f32.mrb[0].mxu0
    %v833 = vadd.f32 %v674, %v832
    %834 = vdwg.mxu0
    %835 = vmatprep.subr.bf16.mxu0 %v404
    %836 = vmatpush1.bf16.msra.mxu0 %v403
    %837 = vmatprep.subr.bf16.mxu0 %v420
    %838 = vmatpush1.bf16.msra.mxu0 %v419
    %839 = vmatprep.subr.bf16.mxu0 %v436
    %840 = vmatpush1.bf16.msra.mxu0 %v435
    %841 = vmatprep.subr.bf16.mxu0 %v452
    %842 = vmatpush1.bf16.msra.mxu0 %v451
    %843 = vmatprep.subr.bf16.mxu0 %v468
    %844 = vmatpush1.bf16.msra.mxu0 %v467
    %845 = vmatprep.subr.bf16.mxu0 %v484
    %846 = vmatpush1.bf16.msra.mxu0 %v483
    %847 = vmatprep.subr.bf16.mxu0 %v500
    %848 = vmatpush1.bf16.msra.mxu0 %v499
    %849 = vmatprep.subr.bf16.mxu0 %v516
    %850 = vmatpush1.bf16.msra.mxu0 %v515
    %851 = vmatprep.subr.bf16.mxu0 %v532
    %852 = vmatpush1.bf16.msra.mxu0 %v531
    %853 = vmatprep.subr.bf16.mxu0 %v548
    %854 = vmatpush1.bf16.msra.mxu0 %v547
    %855 = vmatprep.subr.bf16.mxu0 %v564
    %856 = vmatpush1.bf16.msra.mxu0 %v563
    %857 = vmatprep.subr.bf16.mxu0 %v580
    %858 = vmatpush1.bf16.msra.mxu0 %v579
    %859 = vmatprep.subr.bf16.mxu0 %v596
    %860 = vmatpush1.bf16.msra.mxu0 %v595
    %861 = vmatprep.subr.bf16.mxu0 %v612
    %862 = vmatpush1.bf16.msra.mxu0 %v611
    %863 = vmatprep.subr.bf16.mxu0 %v628
    %864 = vmatpush1.bf16.msra.mxu0 %v627
    %865 = vmatprep.subr.bf16.mxu0 %v644
    %866 = vmatpush1.bf16.msra.mxu0 %v643
    %867 = vmatprep.mubr.bf16.mxu0 %v746
    %868 = vmatmul.mubr.bf16.gmra.mrb[0].mxu0 %v745
    %v869 = vpop.f32.mrb[0].mxu0
    %v870 = vadd.f32 %v678, %v869
    %v871 = vpop.f32.mrb[0].mxu0
    %v872 = vadd.f32 %v682, %v871
    %v873 = vpop.f32.mrb[0].mxu0
    %v874 = vadd.f32 %v678, %v873
    %v875 = vpop.f32.mrb[0].mxu0
    %v876 = vadd.f32 %v682, %v875
    %877 = vdwg.mxu0
    %878 = vmatprep.subr.bf16.mxu0 %v406
    %879 = vmatpush1.bf16.msra.mxu0 %v405
    %880 = vmatprep.subr.bf16.mxu0 %v422
    %881 = vmatpush1.bf16.msra.mxu0 %v421
    %882 = vmatprep.subr.bf16.mxu0 %v438
    %883 = vmatpush1.bf16.msra.mxu0 %v437
    %884 = vmatprep.subr.bf16.mxu0 %v454
    %885 = vmatpush1.bf16.msra.mxu0 %v453
    %886 = vmatprep.subr.bf16.mxu0 %v470
    %887 = vmatpush1.bf16.msra.mxu0 %v469
    %888 = vmatprep.subr.bf16.mxu0 %v486
    %889 = vmatpush1.bf16.msra.mxu0 %v485
    %890 = vmatprep.subr.bf16.mxu0 %v502
    %891 = vmatpush1.bf16.msra.mxu0 %v501
    %892 = vmatprep.subr.bf16.mxu0 %v518
    %893 = vmatpush1.bf16.msra.mxu0 %v517
    %894 = vmatprep.subr.bf16.mxu0 %v534
    %895 = vmatpush1.bf16.msra.mxu0 %v533
    %896 = vmatprep.subr.bf16.mxu0 %v550
    %897 = vmatpush1.bf16.msra.mxu0 %v549
    %898 = vmatprep.subr.bf16.mxu0 %v566
    %899 = vmatpush1.bf16.msra.mxu0 %v565
    %900 = vmatprep.subr.bf16.mxu0 %v582
    %901 = vmatpush1.bf16.msra.mxu0 %v581
    %902 = vmatprep.subr.bf16.mxu0 %v598
    %903 = vmatpush1.bf16.msra.mxu0 %v597
    %904 = vmatprep.subr.bf16.mxu0 %v614
    %905 = vmatpush1.bf16.msra.mxu0 %v613
    %906 = vmatprep.subr.bf16.mxu0 %v630
    %907 = vmatpush1.bf16.msra.mxu0 %v629
    %908 = vmatprep.subr.bf16.mxu0 %v646
    %909 = vmatpush1.bf16.msra.mxu0 %v645
    %910 = vmatprep.mubr.bf16.mxu0 %v746
    %911 = vmatmul.mubr.bf16.gmra.mrb[0].mxu0 %v745
    %v912 = vpop.f32.mrb[0].mxu0
    %v913 = vadd.f32 %v686, %v912
    %v914 = vpop.f32.mrb[0].mxu0
    %v915 = vadd.f32 %v690, %v914
    %v916 = vpop.f32.mrb[0].mxu0
    %v917 = vadd.f32 %v686, %v916
    %v918 = vpop.f32.mrb[0].mxu0
    %v919 = vadd.f32 %v690, %v918
    %920 = vdwg.mxu0
    %921 = vmatprep.subr.bf16.mxu0 %v408
    %922 = vmatpush1.bf16.msra.mxu0 %v407
    %923 = vmatprep.subr.bf16.mxu0 %v424
    %924 = vmatpush1.bf16.msra.mxu0 %v423
    %925 = vmatprep.subr.bf16.mxu0 %v440
    %926 = vmatpush1.bf16.msra.mxu0 %v439
    %927 = vmatprep.subr.bf16.mxu0 %v456
    %928 = vmatpush1.bf16.msra.mxu0 %v455
    %929 = vmatprep.subr.bf16.mxu0 %v472
    %930 = vmatpush1.bf16.msra.mxu0 %v471
    %931 = vmatprep.subr.bf16.mxu0 %v488
    %932 = vmatpush1.bf16.msra.mxu0 %v487
    %933 = vmatprep.subr.bf16.mxu0 %v504
    %934 = vmatpush1.bf16.msra.mxu0 %v503
    %935 = vmatprep.subr.bf16.mxu0 %v520
    %936 = vmatpush1.bf16.msra.mxu0 %v519
    %937 = vmatprep.subr.bf16.mxu0 %v536
    %938 = vmatpush1.bf16.msra.mxu0 %v535
    %939 = vmatprep.subr.bf16.mxu0 %v552
    %940 = vmatpush1.bf16.msra.mxu0 %v551
    %941 = vmatprep.subr.bf16.mxu0 %v568
    %942 = vmatpush1.bf16.msra.mxu0 %v567
    %943 = vmatprep.subr.bf16.mxu0 %v584
    %944 = vmatpush1.bf16.msra.mxu0 %v583
    %945 = vmatprep.subr.bf16.mxu0 %v600
    %946 = vmatpush1.bf16.msra.mxu0 %v599
    %947 = vmatprep.subr.bf16.mxu0 %v616
    %948 = vmatpush1.bf16.msra.mxu0 %v615
    %949 = vmatprep.subr.bf16.mxu0 %v632
    %950 = vmatpush1.bf16.msra.mxu0 %v631
    %951 = vmatprep.subr.bf16.mxu0 %v648
    %952 = vmatpush1.bf16.msra.mxu0 %v647
    %953 = vmatprep.mubr.bf16.mxu0 %v746
    %954 = vmatmul.mubr.bf16.gmra.mrb[0].mxu0 %v745
    %v955 = vpop.f32.mrb[0].mxu0
    %v956 = vadd.f32 %v694, %v955
    %v957 = vpop.f32.mrb[0].mxu0
    %v958 = vadd.f32 %v698, %v957
    %v959 = vpop.f32.mrb[0].mxu0
    %v960 = vadd.f32 %v694, %v959
    %v961 = vpop.f32.mrb[0].mxu0
    %v962 = vadd.f32 %v698, %v961
    %963 = vdwg.mxu0
    %964 = vmatprep.subr.bf16.mxu0 %v410
    %965 = vmatpush1.bf16.msra.mxu0 %v409
    %966 = vmatprep.subr.bf16.mxu0 %v426
    %967 = vmatpush1.bf16.msra.mxu0 %v425
    %968 = vmatprep.subr.bf16.mxu0 %v442
    %969 = vmatpush1.bf16.msra.mxu0 %v441
    %970 = vmatprep.subr.bf16.mxu0 %v458
    %971 = vmatpush1.bf16.msra.mxu0 %v457
    %972 = vmatprep.subr.bf16.mxu0 %v474
    %973 = vmatpush1.bf16.msra.mxu0 %v473
    %974 = vmatprep.subr.bf16.mxu0 %v490
    %975 = vmatpush1.bf16.msra.mxu0 %v489
    %976 = vmatprep.subr.bf16.mxu0 %v506
    %977 = vmatpush1.bf16.msra.mxu0 %v505
    %978 = vmatprep.subr.bf16.mxu0 %v522
    %979 = vmatpush1.bf16.msra.mxu0 %v521
    %980 = vmatprep.subr.bf16.mxu0 %v538
    %981 = vmatpush1.bf16.msra.mxu0 %v537
    %982 = vmatprep.subr.bf16.mxu0 %v554
    %983 = vmatpush1.bf16.msra.mxu0 %v553
    %984 = vmatprep.subr.bf16.mxu0 %v570
    %985 = vmatpush1.bf16.msra.mxu0 %v569
    %986 = vmatprep.subr.bf16.mxu0 %v586
    %987 = vmatpush1.bf16.msra.mxu0 %v585
    %988 = vmatprep.subr.bf16.mxu0 %v602
    %989 = vmatpush1.bf16.msra.mxu0 %v601
    %990 = vmatprep.subr.bf16.mxu0 %v618
    %991 = vmatpush1.bf16.msra.mxu0 %v617
    %992 = vmatprep.subr.bf16.mxu0 %v634
    %993 = vmatpush1.bf16.msra.mxu0 %v633
    %994 = vmatprep.subr.bf16.mxu0 %v650
    %995 = vmatpush1.bf16.msra.mxu0 %v649
    %996 = vmatprep.mubr.bf16.mxu0 %v746
    %997 = vmatmul.mubr.bf16.gmra.mrb[0].mxu0 %v745
    %v998 = vpop.f32.mrb[0].mxu0
    %v999 = vadd.f32 %v702, %v998
    %v1000 = vpop.f32.mrb[0].mxu0
    %v1001 = vadd.f32 %v706, %v1000
    %v1002 = vpop.f32.mrb[0].mxu0
    %v1003 = vadd.f32 %v702, %v1002
    %v1004 = vpop.f32.mrb[0].mxu0
    %v1005 = vadd.f32 %v706, %v1004
    %1006 = vdwg.mxu0
    %1007 = vmatprep.subr.bf16.mxu0 %v412
    %1008 = vmatpush1.bf16.msra.mxu0 %v411
    %1009 = vmatprep.subr.bf16.mxu0 %v428
    %1010 = vmatpush1.bf16.msra.mxu0 %v427
    %1011 = vmatprep.subr.bf16.mxu0 %v444
    %1012 = vmatpush1.bf16.msra.mxu0 %v443
    %1013 = vmatprep.subr.bf16.mxu0 %v460
    %1014 = vmatpush1.bf16.msra.mxu0 %v459
    %1015 = vmatprep.subr.bf16.mxu0 %v476
    %1016 = vmatpush1.bf16.msra.mxu0 %v475
    %1017 = vmatprep.subr.bf16.mxu0 %v492
    %1018 = vmatpush1.bf16.msra.mxu0 %v491
    %1019 = vmatprep.subr.bf16.mxu0 %v508
    %1020 = vmatpush1.bf16.msra.mxu0 %v507
    %1021 = vmatprep.subr.bf16.mxu0 %v524
    %1022 = vmatpush1.bf16.msra.mxu0 %v523
    %1023 = vmatprep.subr.bf16.mxu0 %v540
    %1024 = vmatpush1.bf16.msra.mxu0 %v539
    %1025 = vmatprep.subr.bf16.mxu0 %v556
    %1026 = vmatpush1.bf16.msra.mxu0 %v555
    %1027 = vmatprep.subr.bf16.mxu0 %v572
    %1028 = vmatpush1.bf16.msra.mxu0 %v571
    %1029 = vmatprep.subr.bf16.mxu0 %v588
    %1030 = vmatpush1.bf16.msra.mxu0 %v587
    %1031 = vmatprep.subr.bf16.mxu0 %v604
    %1032 = vmatpush1.bf16.msra.mxu0 %v603
    %1033 = vmatprep.subr.bf16.mxu0 %v620
    %1034 = vmatpush1.bf16.msra.mxu0 %v619
    %1035 = vmatprep.subr.bf16.mxu0 %v636
    %1036 = vmatpush1.bf16.msra.mxu0 %v635
    %1037 = vmatprep.subr.bf16.mxu0 %v652
    %1038 = vmatpush1.bf16.msra.mxu0 %v651
    %1039 = vmatprep.mubr.bf16.mxu0 %v746
    %1040 = vmatmul.mubr.bf16.gmra.mrb[0].mxu0 %v745
    %v1041 = vpop.f32.mrb[0].mxu0
    %v1042 = vadd.f32 %v710, %v1041
    %v1043 = vpop.f32.mrb[0].mxu0
    %v1044 = vadd.f32 %v714, %v1043
    %v1045 = vpop.f32.mrb[0].mxu0
    %v1046 = vadd.f32 %v710, %v1045
    %v1047 = vpop.f32.mrb[0].mxu0
    %v1048 = vadd.f32 %v714, %v1047
    %1049 = vdwg.mxu0
    %1050 = vmatprep.subr.bf16.mxu0 %v414
    %1051 = vmatpush1.bf16.msra.mxu0 %v413
    %1052 = vmatprep.subr.bf16.mxu0 %v430
    %1053 = vmatpush1.bf16.msra.mxu0 %v429
    %1054 = vmatprep.subr.bf16.mxu0 %v446
    %1055 = vmatpush1.bf16.msra.mxu0 %v445
    %1056 = vmatprep.subr.bf16.mxu0 %v462
    %1057 = vmatpush1.bf16.msra.mxu0 %v461
    %1058 = vmatprep.subr.bf16.mxu0 %v478
    %1059 = vmatpush1.bf16.msra.mxu0 %v477
    %1060 = vmatprep.subr.bf16.mxu0 %v494
    %1061 = vmatpush1.bf16.msra.mxu0 %v493
    %1062 = vmatprep.subr.bf16.mxu0 %v510
    %1063 = vmatpush1.bf16.msra.mxu0 %v509
    %1064 = vmatprep.subr.bf16.mxu0 %v526
    %1065 = vmatpush1.bf16.msra.mxu0 %v525
    %1066 = vmatprep.subr.bf16.mxu0 %v542
    %1067 = vmatpush1.bf16.msra.mxu0 %v541
    %1068 = vmatprep.subr.bf16.mxu0 %v558
    %1069 = vmatpush1.bf16.msra.mxu0 %v557
    %1070 = vmatprep.subr.bf16.mxu0 %v574
    %1071 = vmatpush1.bf16.msra.mxu0 %v573
    %1072 = vmatprep.subr.bf16.mxu0 %v590
    %1073 = vmatpush1.bf16.msra.mxu0 %v589
    %1074 = vmatprep.subr.bf16.mxu0 %v606
    %1075 = vmatpush1.bf16.msra.mxu0 %v605
    %1076 = vmatprep.subr.bf16.mxu0 %v622
    %1077 = vmatpush1.bf16.msra.mxu0 %v621
    %1078 = vmatprep.subr.bf16.mxu0 %v638
    %1079 = vmatpush1.bf16.msra.mxu0 %v637
    %1080 = vmatprep.subr.bf16.mxu0 %v654
    %1081 = vmatpush1.bf16.msra.mxu0 %v653
    %1082 = vmatprep.mubr.bf16.mxu0 %v746
    %1083 = vmatmul.mubr.bf16.gmra.mrb[0].mxu0 %v745
    %v1084 = vpop.f32.mrb[0].mxu0
    %v1085 = vadd.f32 %v718, %v1084
    %v1086 = vpop.f32.mrb[0].mxu0
    %v1087 = vadd.f32 %v722, %v1086
    %v1088 = vpop.f32.mrb[0].mxu0
    %v1089 = vadd.f32 %v718, %v1088
    %v1090 = vpop.f32.mrb[0].mxu0
    %v1091 = vadd.f32 %v722, %v1090
    %1092 = vdwg.mxu0
    %v1093 = vmax.f32 %v784, 0.0
    %v1094 = vmax.f32 %v786, 0.0
    %v1095 = vmax.f32 %v827, 0.0
    %v1096 = vmax.f32 %v829, 0.0
    %v1097 = vmax.f32 %v870, 0.0
    %v1098 = vmax.f32 %v872, 0.0
    %v1099 = vmax.f32 %v913, 0.0
    %v1100 = vmax.f32 %v915, 0.0
    %v1101 = vmax.f32 %v956, 0.0
    %v1102 = vmax.f32 %v958, 0.0
    %v1103 = vmax.f32 %v999, 0.0
    %v1104 = vmax.f32 %v1001, 0.0
    %v1105 = vmax.f32 %v1042, 0.0
    %v1106 = vmax.f32 %v1044, 0.0
    %v1107 = vmax.f32 %v1085, 0.0
    %v1108 = vmax.f32 %v1087, 0.0
    %v1109 = vmax.f32 %v788, 0.0
    %v1110 = vmax.f32 %v790, 0.0
    %v1111 = vmax.f32 %v831, 0.0
    %v1112 = vmax.f32 %v833, 0.0
    %v1113 = vmax.f32 %v874, 0.0
    %v1114 = vmax.f32 %v876, 0.0
    %v1115 = vmax.f32 %v917, 0.0
    %v1116 = vmax.f32 %v919, 0.0
    %v1117 = vmax.f32 %v960, 0.0
    %v1118 = vmax.f32 %v962, 0.0
    %v1119 = vmax.f32 %v1003, 0.0
    %v1120 = vmax.f32 %v1005, 0.0
    %v1121 = vmax.f32 %v1046, 0.0
    %v1122 = vmax.f32 %v1048, 0.0
    %v1123 = vmax.f32 %v1089, 0.0
    %v1124 = vmax.f32 %v1091, 0.0
    %v1125 = vpack.c.bf16 %v1109, %v1093
    %v1126 = vpack.c.bf16 %v1110, %v1094
    %v1127 = vpack.c.bf16 %v1111, %v1095
    %v1128 = vpack.c.bf16 %v1112, %v1096
    %v1129 = vpack.c.bf16 %v1113, %v1097
    %v1130 = vpack.c.bf16 %v1114, %v1098
    %v1131 = vpack.c.bf16 %v1115, %v1099
    %v1132 = vpack.c.bf16 %v1116, %v1100
    %v1133 = vpack.c.bf16 %v1117, %v1101
    %v1134 = vpack.c.bf16 %v1118, %v1102
    %v1135 = vpack.c.bf16 %v1119, %v1103
    %v1136 = vpack.c.bf16 %v1120, %v1104
    %v1137 = vpack.c.bf16 %v1121, %v1105
    %v1138 = vpack.c.bf16 %v1122, %v1106
    %v1139 = vpack.c.bf16 %v1123, %v1107
    %v1140 = vpack.c.bf16 %v1124, %v1108
    %s1141 = smul.u32 4, 256
    %s1142 = smul.u32 %s1141, 8
    %s1143 = sshll.u32 %s1142, 4
    %1144 = dma.done %s171, %s1143
    %v1145 = vld [vmem:[#allocation3] sm:$0xff]
    %v1146 = vld [vmem:[#allocation3 + $0x8] sm:$0xff]
    %v1147 = vld [vmem:[#allocation3 + $0x10] sm:$0xff]
    %v1148 = vld [vmem:[#allocation3 + $0x18] sm:$0xff]
    %v1149 = vld [vmem:[#allocation3 + $0x20] sm:$0xff]
    %v1150 = vld [vmem:[#allocation3 + $0x28] sm:$0xff]
    %v1151 = vld [vmem:[#allocation3 + $0x30] sm:$0xff]
    %v1152 = vld [vmem:[#allocation3 + $0x38] sm:$0xff]
    %v1153 = vld [vmem:[#allocation3 + $0x40] sm:$0xff]
    %v1154 = vld [vmem:[#allocation3 + $0x48] sm:$0xff]
    %v1155 = vld [vmem:[#allocation3 + $0x50] sm:$0xff]
    %v1156 = vld [vmem:[#allocation3 + $0x58] sm:$0xff]
    %v1157 = vld [vmem:[#allocation3 + $0x60] sm:$0xff]
    %v1158 = vld [vmem:[#allocation3 + $0x68] sm:$0xff]
    %v1159 = vld [vmem:[#allocation3 + $0x70] sm:$0xff]
    %v1160 = vld [vmem:[#allocation3 + $0x78] sm:$0xff]
    %v1161 = vld [vmem:[#allocation3 + $0x80] sm:$0xff]
    %v1162 = vld [vmem:[#allocation3 + $0x88] sm:$0xff]
    %v1163 = vld [vmem:[#allocation3 + $0x90] sm:$0xff]
    %v1164 = vld [vmem:[#allocation3 + $0x98] sm:$0xff]
    %v1165 = vld [vmem:[#allocation3 + $0xa0] sm:$0xff]
    %v1166 = vld [vmem:[#allocation3 + $0xa8] sm:$0xff]
    %v1167 = vld [vmem:[#allocation3 + $0xb0] sm:$0xff]
    %v1168 = vld [vmem:[#allocation3 + $0xb8] sm:$0xff]
    %v1169 = vld [vmem:[#allocation3 + $0xc0] sm:$0xff]
    %v1170 = vld [vmem:[#allocation3 + $0xc8] sm:$0xff]
    %v1171 = vld [vmem:[#allocation3 + $0xd0] sm:$0xff]
    %v1172 = vld [vmem:[#allocation3 + $0xd8] sm:$0xff]
    %v1173 = vld [vmem:[#allocation3 + $0xe0] sm:$0xff]
    %v1174 = vld [vmem:[#allocation3 + $0xe8] sm:$0xff]
    %v1175 = vld [vmem:[#allocation3 + $0xf0] sm:$0xff]
    %v1176 = vld [vmem:[#allocation3 + $0xf8] sm:$0xff]
    %v1177 = vld [vmem:[#allocation3 + $0x100] sm:$0xff]
    %v1178 = vld [vmem:[#allocation3 + $0x108] sm:$0xff]
    %v1179 = vld [vmem:[#allocation3 + $0x110] sm:$0xff]
    %v1180 = vld [vmem:[#allocation3 + $0x118] sm:$0xff]
    %v1181 = vld [vmem:[#allocation3 + $0x120] sm:$0xff]
    %v1182 = vld [vmem:[#allocation3 + $0x128] sm:$0xff]
    %v1183 = vld [vmem:[#allocation3 + $0x130] sm:$0xff]
    %v1184 = vld [vmem:[#allocation3 + $0x138] sm:$0xff]
    %v1185 = vld [vmem:[#allocation3 + $0x140] sm:$0xff]
    %v1186 = vld [vmem:[#allocation3 + $0x148] sm:$0xff]
    %v1187 = vld [vmem:[#allocation3 + $0x150] sm:$0xff]
    %v1188 = vld [vmem:[#allocation3 + $0x158] sm:$0xff]
    %v1189 = vld [vmem:[#allocation3 + $0x160] sm:$0xff]
    %v1190 = vld [vmem:[#allocation3 + $0x168] sm:$0xff]
    %v1191 = vld [vmem:[#allocation3 + $0x170] sm:$0xff]
    %v1192 = vld [vmem:[#allocation3 + $0x178] sm:$0xff]
    %v1193 = vld [vmem:[#allocation3 + $0x180] sm:$0xff]
    %v1194 = vld [vmem:[#allocation3 + $0x188] sm:$0xff]
    %v1195 = vld [vmem:[#allocation3 + $0x190] sm:$0xff]
    %v1196 = vld [vmem:[#allocation3 + $0x198] sm:$0xff]
    %v1197 = vld [vmem:[#allocation3 + $0x1a0] sm:$0xff]
    %v1198 = vld [vmem:[#allocation3 + $0x1a8] sm:$0xff]
    %v1199 = vld [vmem:[#allocation3 + $0x1b0] sm:$0xff]
    %v1200 = vld [vmem:[#allocation3 + $0x1b8] sm:$0xff]
    %v1201 = vld [vmem:[#allocation3 + $0x1c0] sm:$0xff]
    %v1202 = vld [vmem:[#allocation3 + $0x1c8] sm:$0xff]
    %v1203 = vld [vmem:[#allocation3 + $0x1d0] sm:$0xff]
    %v1204 = vld [vmem:[#allocation3 + $0x1d8] sm:$0xff]
    %v1205 = vld [vmem:[#allocation3 + $0x1e0] sm:$0xff]
    %v1206 = vld [vmem:[#allocation3 + $0x1e8] sm:$0xff]
    %v1207 = vld [vmem:[#allocation3 + $0x1f0] sm:$0xff]
    %v1208 = vld [vmem:[#allocation3 + $0x1f8] sm:$0xff]
    %v1209 = vld [vmem:[#allocation3 + $0x200] sm:$0xff]
    %v1210 = vld [vmem:[#allocation3 + $0x208] sm:$0xff]
    %v1211 = vld [vmem:[#allocation3 + $0x210] sm:$0xff]
    %v1212 = vld [vmem:[#allocation3 + $0x218] sm:$0xff]
    %v1213 = vld [vmem:[#allocation3 + $0x220] sm:$0xff]
    %v1214 = vld [vmem:[#allocation3 + $0x228] sm:$0xff]
    %v1215 = vld [vmem:[#allocation3 + $0x230] sm:$0xff]
    %v1216 = vld [vmem:[#allocation3 + $0x238] sm:$0xff]
    %v1217 = vld [vmem:[#allocation3 + $0x240] sm:$0xff]
    %v1218 = vld [vmem:[#allocation3 + $0x248] sm:$0xff]
    %v1219 = vld [vmem:[#allocation3 + $0x250] sm:$0xff]
    %v1220 = vld [vmem:[#allocation3 + $0x258] sm:$0xff]
    %v1221 = vld [vmem:[#allocation3 + $0x260] sm:$0xff]
    %v1222 = vld [vmem:[#allocation3 + $0x268] sm:$0xff]
    %v1223 = vld [vmem:[#allocation3 + $0x270] sm:$0xff]
    %v1224 = vld [vmem:[#allocation3 + $0x278] sm:$0xff]
    %v1225 = vld [vmem:[#allocation3 + $0x280] sm:$0xff]
    %v1226 = vld [vmem:[#allocation3 + $0x288] sm:$0xff]
    %v1227 = vld [vmem:[#allocation3 + $0x290] sm:$0xff]
    %v1228 = vld [vmem:[#allocation3 + $0x298] sm:$0xff]
    %v1229 = vld [vmem:[#allocation3 + $0x2a0] sm:$0xff]
    %v1230 = vld [vmem:[#allocation3 + $0x2a8] sm:$0xff]
    %v1231 = vld [vmem:[#allocation3 + $0x2b0] sm:$0xff]
    %v1232 = vld [vmem:[#allocation3 + $0x2b8] sm:$0xff]
    %v1233 = vld [vmem:[#allocation3 + $0x2c0] sm:$0xff]
    %v1234 = vld [vmem:[#allocation3 + $0x2c8] sm:$0xff]
    %v1235 = vld [vmem:[#allocation3 + $0x2d0] sm:$0xff]
    %v1236 = vld [vmem:[#allocation3 + $0x2d8] sm:$0xff]
    %v1237 = vld [vmem:[#allocation3 + $0x2e0] sm:$0xff]
    %v1238 = vld [vmem:[#allocation3 + $0x2e8] sm:$0xff]
    %v1239 = vld [vmem:[#allocation3 + $0x2f0] sm:$0xff]
    %v1240 = vld [vmem:[#allocation3 + $0x2f8] sm:$0xff]
    %v1241 = vld [vmem:[#allocation3 + $0x300] sm:$0xff]
    %v1242 = vld [vmem:[#allocation3 + $0x308] sm:$0xff]
    %v1243 = vld [vmem:[#allocation3 + $0x310] sm:$0xff]
    %v1244 = vld [vmem:[#allocation3 + $0x318] sm:$0xff]
    %v1245 = vld [vmem:[#allocation3 + $0x320] sm:$0xff]
    %v1246 = vld [vmem:[#allocation3 + $0x328] sm:$0xff]
    %v1247 = vld [vmem:[#allocation3 + $0x330] sm:$0xff]
    %v1248 = vld [vmem:[#allocation3 + $0x338] sm:$0xff]
    %v1249 = vld [vmem:[#allocation3 + $0x340] sm:$0xff]
    %v1250 = vld [vmem:[#allocation3 + $0x348] sm:$0xff]
    %v1251 = vld [vmem:[#allocation3 + $0x350] sm:$0xff]
    %v1252 = vld [vmem:[#allocation3 + $0x358] sm:$0xff]
    %v1253 = vld [vmem:[#allocation3 + $0x360] sm:$0xff]
    %v1254 = vld [vmem:[#allocation3 + $0x368] sm:$0xff]
    %v1255 = vld [vmem:[#allocation3 + $0x370] sm:$0xff]
    %v1256 = vld [vmem:[#allocation3 + $0x378] sm:$0xff]
    %v1257 = vld [vmem:[#allocation3 + $0x380] sm:$0xff]
    %v1258 = vld [vmem:[#allocation3 + $0x388] sm:$0xff]
    %v1259 = vld [vmem:[#allocation3 + $0x390] sm:$0xff]
    %v1260 = vld [vmem:[#allocation3 + $0x398] sm:$0xff]
    %v1261 = vld [vmem:[#allocation3 + $0x3a0] sm:$0xff]
    %v1262 = vld [vmem:[#allocation3 + $0x3a8] sm:$0xff]
    %v1263 = vld [vmem:[#allocation3 + $0x3b0] sm:$0xff]
    %v1264 = vld [vmem:[#allocation3 + $0x3b8] sm:$0xff]
    %v1265 = vld [vmem:[#allocation3 + $0x3c0] sm:$0xff]
    %v1266 = vld [vmem:[#allocation3 + $0x3c8] sm:$0xff]
    %v1267 = vld [vmem:[#allocation3 + $0x3d0] sm:$0xff]
    %v1268 = vld [vmem:[#allocation3 + $0x3d8] sm:$0xff]
    %v1269 = vld [vmem:[#allocation3 + $0x3e0] sm:$0xff]
    %v1270 = vld [vmem:[#allocation3 + $0x3e8] sm:$0xff]
    %v1271 = vld [vmem:[#allocation3 + $0x3f0] sm:$0xff]
    %v1272 = vld [vmem:[#allocation3 + $0x3f8] sm:$0xff]
    %v1273 = vld [vmem:[#allocation3 + $0x400] sm:$0xff]
    %v1274 = vld [vmem:[#allocation3 + $0x408] sm:$0xff]
    %v1275 = vld [vmem:[#allocation3 + $0x410] sm:$0xff]
    %v1276 = vld [vmem:[#allocation3 + $0x418] sm:$0xff]
    %v1277 = vld [vmem:[#allocation3 + $0x420] sm:$0xff]
    %v1278 = vld [vmem:[#allocation3 + $0x428] sm:$0xff]
    %v1279 = vld [vmem:[#allocation3 + $0x430] sm:$0xff]
    %v1280 = vld [vmem:[#allocation3 + $0x438] sm:$0xff]
    %v1281 = vld [vmem:[#allocation3 + $0x440] sm:$0xff]
    %v1282 = vld [vmem:[#allocation3 + $0x448] sm:$0xff]
    %v1283 = vld [vmem:[#allocation3 + $0x450] sm:$0xff]
    %v1284 = vld [vmem:[#allocation3 + $0x458] sm:$0xff]
    %v1285 = vld [vmem:[#allocation3 + $0x460] sm:$0xff]
    %v1286 = vld [vmem:[#allocation3 + $0x468] sm:$0xff]
    %v1287 = vld [vmem:[#allocation3 + $0x470] sm:$0xff]
    %v1288 = vld [vmem:[#allocation3 + $0x478] sm:$0xff]
    %v1289 = vld [vmem:[#allocation3 + $0x480] sm:$0xff]
    %v1290 = vld [vmem:[#allocation3 + $0x488] sm:$0xff]
    %v1291 = vld [vmem:[#allocation3 + $0x490] sm:$0xff]
    %v1292 = vld [vmem:[#allocation3 + $0x498] sm:$0xff]
    %v1293 = vld [vmem:[#allocation3 + $0x4a0] sm:$0xff]
    %v1294 = vld [vmem:[#allocation3 + $0x4a8] sm:$0xff]
    %v1295 = vld [vmem:[#allocation3 + $0x4b0] sm:$0xff]
    %v1296 = vld [vmem:[#allocation3 + $0x4b8] sm:$0xff]
    %v1297 = vld [vmem:[#allocation3 + $0x4c0] sm:$0xff]
    %v1298 = vld [vmem:[#allocation3 + $0x4c8] sm:$0xff]
    %v1299 = vld [vmem:[#allocation3 + $0x4d0] sm:$0xff]
    %v1300 = vld [vmem:[#allocation3 + $0x4d8] sm:$0xff]
    %v1301 = vld [vmem:[#allocation3 + $0x4e0] sm:$0xff]
    %v1302 = vld [vmem:[#allocation3 + $0x4e8] sm:$0xff]
    %v1303 = vld [vmem:[#allocation3 + $0x4f0] sm:$0xff]
    %v1304 = vld [vmem:[#allocation3 + $0x4f8] sm:$0xff]
    %v1305 = vld [vmem:[#allocation3 + $0x500] sm:$0xff]
    %v1306 = vld [vmem:[#allocation3 + $0x508] sm:$0xff]
    %v1307 = vld [vmem:[#allocation3 + $0x510] sm:$0xff]
    %v1308 = vld [vmem:[#allocation3 + $0x518] sm:$0xff]
    %v1309 = vld [vmem:[#allocation3 + $0x520] sm:$0xff]
    %v1310 = vld [vmem:[#allocation3 + $0x528] sm:$0xff]
    %v1311 = vld [vmem:[#allocation3 + $0x530] sm:$0xff]
    %v1312 = vld [vmem:[#allocation3 + $0x538] sm:$0xff]
    %v1313 = vld [vmem:[#allocation3 + $0x540] sm:$0xff]
    %v1314 = vld [vmem:[#allocation3 + $0x548] sm:$0xff]
    %v1315 = vld [vmem:[#allocation3 + $0x550] sm:$0xff]
    %v1316 = vld [vmem:[#allocation3 + $0x558] sm:$0xff]
    %v1317 = vld [vmem:[#allocation3 + $0x560] sm:$0xff]
    %v1318 = vld [vmem:[#allocation3 + $0x568] sm:$0xff]
    %v1319 = vld [vmem:[#allocation3 + $0x570] sm:$0xff]
    %v1320 = vld [vmem:[#allocation3 + $0x578] sm:$0xff]
    %v1321 = vld [vmem:[#allocation3 + $0x580] sm:$0xff]
    %v1322 = vld [vmem:[#allocation3 + $0x588] sm:$0xff]
    %v1323 = vld [vmem:[#allocation3 + $0x590] sm:$0xff]
    %v1324 = vld [vmem:[#allocation3 + $0x598] sm:$0xff]
    %v1325 = vld [vmem:[#allocation3 + $0x5a0] sm:$0xff]
    %v1326 = vld [vmem:[#allocation3 + $0x5a8] sm:$0xff]
    %v1327 = vld [vmem:[#allocation3 + $0x5b0] sm:$0xff]
    %v1328 = vld [vmem:[#allocation3 + $0x5b8] sm:$0xff]
    %v1329 = vld [vmem:[#allocation3 + $0x5c0] sm:$0xff]
    %v1330 = vld [vmem:[#allocation3 + $0x5c8] sm:$0xff]
    %v1331 = vld [vmem:[#allocation3 + $0x5d0] sm:$0xff]
    %v1332 = vld [vmem:[#allocation3 + $0x5d8] sm:$0xff]
    %v1333 = vld [vmem:[#allocation3 + $0x5e0] sm:$0xff]
    %v1334 = vld [vmem:[#allocation3 + $0x5e8] sm:$0xff]
    %v1335 = vld [vmem:[#allocation3 + $0x5f0] sm:$0xff]
    %v1336 = vld [vmem:[#allocation3 + $0x5f8] sm:$0xff]
    %v1337 = vld [vmem:[#allocation3 + $0x600] sm:$0xff]
    %v1338 = vld [vmem:[#allocation3 + $0x608] sm:$0xff]
    %v1339 = vld [vmem:[#allocation3 + $0x610] sm:$0xff]
    %v1340 = vld [vmem:[#allocation3 + $0x618] sm:$0xff]
    %v1341 = vld [vmem:[#allocation3 + $0x620] sm:$0xff]
    %v1342 = vld [vmem:[#allocation3 + $0x628] sm:$0xff]
    %v1343 = vld [vmem:[#allocation3 + $0x630] sm:$0xff]
    %v1344 = vld [vmem:[#allocation3 + $0x638] sm:$0xff]
    %v1345 = vld [vmem:[#allocation3 + $0x640] sm:$0xff]
    %v1346 = vld [vmem:[#allocation3 + $0x648] sm:$0xff]
    %v1347 = vld [vmem:[#allocation3 + $0x650] sm:$0xff]
    %v1348 = vld [vmem:[#allocation3 + $0x658] sm:$0xff]
    %v1349 = vld [vmem:[#allocation3 + $0x660] sm:$0xff]
    %v1350 = vld [vmem:[#allocation3 + $0x668] sm:$0xff]
    %v1351 = vld [vmem:[#allocation3 + $0x670] sm:$0xff]
    %v1352 = vld [vmem:[#allocation3 + $0x678] sm:$0xff]
    %v1353 = vld [vmem:[#allocation3 + $0x680] sm:$0xff]
    %v1354 = vld [vmem:[#allocation3 + $0x688] sm:$0xff]
    %v1355 = vld [vmem:[#allocation3 + $0x690] sm:$0xff]
    %v1356 = vld [vmem:[#allocation3 + $0x698] sm:$0xff]
    %v1357 = vld [vmem:[#allocation3 + $0x6a0] sm:$0xff]
    %v1358 = vld [vmem:[#allocation3 + $0x6a8] sm:$0xff]
    %v1359 = vld [vmem:[#allocation3 + $0x6b0] sm:$0xff]
    %v1360 = vld [vmem:[#allocation3 + $0x6b8] sm:$0xff]
    %v1361 = vld [vmem:[#allocation3 + $0x6c0] sm:$0xff]
    %v1362 = vld [vmem:[#allocation3 + $0x6c8] sm:$0xff]
    %v1363 = vld [vmem:[#allocation3 + $0x6d0] sm:$0xff]
    %v1364 = vld [vmem:[#allocation3 + $0x6d8] sm:$0xff]
    %v1365 = vld [vmem:[#allocation3 + $0x6e0] sm:$0xff]
    %v1366 = vld [vmem:[#allocation3 + $0x6e8] sm:$0xff]
    %v1367 = vld [vmem:[#allocation3 + $0x6f0] sm:$0xff]
    %v1368 = vld [vmem:[#allocation3 + $0x6f8] sm:$0xff]
    %v1369 = vld [vmem:[#allocation3 + $0x700] sm:$0xff]
    %v1370 = vld [vmem:[#allocation3 + $0x708] sm:$0xff]
    %v1371 = vld [vmem:[#allocation3 + $0x710] sm:$0xff]
    %v1372 = vld [vmem:[#allocation3 + $0x718] sm:$0xff]
    %v1373 = vld [vmem:[#allocation3 + $0x720] sm:$0xff]
    %v1374 = vld [vmem:[#allocation3 + $0x728] sm:$0xff]
    %v1375 = vld [vmem:[#allocation3 + $0x730] sm:$0xff]
    %v1376 = vld [vmem:[#allocation3 + $0x738] sm:$0xff]
    %v1377 = vld [vmem:[#allocation3 + $0x740] sm:$0xff]
    %v1378 = vld [vmem:[#allocation3 + $0x748] sm:$0xff]
    %v1379 = vld [vmem:[#allocation3 + $0x750] sm:$0xff]
    %v1380 = vld [vmem:[#allocation3 + $0x758] sm:$0xff]
    %v1381 = vld [vmem:[#allocation3 + $0x760] sm:$0xff]
    %v1382 = vld [vmem:[#allocation3 + $0x768] sm:$0xff]
    %v1383 = vld [vmem:[#allocation3 + $0x770] sm:$0xff]
    %v1384 = vld [vmem:[#allocation3 + $0x778] sm:$0xff]
    %v1385 = vld [vmem:[#allocation3 + $0x780] sm:$0xff]
    %v1386 = vld [vmem:[#allocation3 + $0x788] sm:$0xff]
    %v1387 = vld [vmem:[#allocation3 + $0x790] sm:$0xff]
    %v1388 = vld [vmem:[#allocation3 + $0x798] sm:$0xff]
    %v1389 = vld [vmem:[#allocation3 + $0x7a0] sm:$0xff]
    %v1390 = vld [vmem:[#allocation3 + $0x7a8] sm:$0xff]
    %v1391 = vld [vmem:[#allocation3 + $0x7b0] sm:$0xff]
    %v1392 = vld [vmem:[#allocation3 + $0x7b8] sm:$0xff]
    %v1393 = vld [vmem:[#allocation3 + $0x7c0] sm:$0xff]
    %v1394 = vld [vmem:[#allocation3 + $0x7c8] sm:$0xff]
    %v1395 = vld [vmem:[#allocation3 + $0x7d0] sm:$0xff]
    %v1396 = vld [vmem:[#allocation3 + $0x7d8] sm:$0xff]
    %v1397 = vld [vmem:[#allocation3 + $0x7e0] sm:$0xff]
    %v1398 = vld [vmem:[#allocation3 + $0x7e8] sm:$0xff]
    %v1399 = vld [vmem:[#allocation3 + $0x7f0] sm:$0xff]
    %v1400 = vld [vmem:[#allocation3 + $0x7f8] sm:$0xff]
    %v1401 = vld [vmem:[#allocation3 + $0x800] sm:$0xff]
    %v1402 = vld [vmem:[#allocation3 + $0x808] sm:$0xff]
    %v1403 = vld [vmem:[#allocation3 + $0x810] sm:$0xff]
    %v1404 = vld [vmem:[#allocation3 + $0x818] sm:$0xff]
    %v1405 = vld [vmem:[#allocation3 + $0x820] sm:$0xff]
    %v1406 = vld [vmem:[#allocation3 + $0x828] sm:$0xff]
    %v1407 = vld [vmem:[#allocation3 + $0x830] sm:$0xff]
    %v1408 = vld [vmem:[#allocation3 + $0x838] sm:$0xff]
    %v1409 = vld [vmem:[#allocation3 + $0x840] sm:$0xff]
    %v1410 = vld [vmem:[#allocation3 + $0x848] sm:$0xff]
    %v1411 = vld [vmem:[#allocation3 + $0x850] sm:$0xff]
    %v1412 = vld [vmem:[#allocation3 + $0x858] sm:$0xff]
    %v1413 = vld [vmem:[#allocation3 + $0x860] sm:$0xff]
    %v1414 = vld [vmem:[#allocation3 + $0x868] sm:$0xff]
    %v1415 = vld [vmem:[#allocation3 + $0x870] sm:$0xff]
    %v1416 = vld [vmem:[#allocation3 + $0x878] sm:$0xff]
    %v1417 = vld [vmem:[#allocation3 + $0x880] sm:$0xff]
    %v1418 = vld [vmem:[#allocation3 + $0x888] sm:$0xff]
    %v1419 = vld [vmem:[#allocation3 + $0x890] sm:$0xff]
    %v1420 = vld [vmem:[#allocation3 + $0x898] sm:$0xff]
    %v1421 = vld [vmem:[#allocation3 + $0x8a0] sm:$0xff]
    %v1422 = vld [vmem:[#allocation3 + $0x8a8] sm:$0xff]
    %v1423 = vld [vmem:[#allocation3 + $0x8b0] sm:$0xff]
    %v1424 = vld [vmem:[#allocation3 + $0x8b8] sm:$0xff]
    %v1425 = vld [vmem:[#allocation3 + $0x8c0] sm:$0xff]
    %v1426 = vld [vmem:[#allocation3 + $0x8c8] sm:$0xff]
    %v1427 = vld [vmem:[#allocation3 + $0x8d0] sm:$0xff]
    %v1428 = vld [vmem:[#allocation3 + $0x8d8] sm:$0xff]
    %v1429 = vld [vmem:[#allocation3 + $0x8e0] sm:$0xff]
    %v1430 = vld [vmem:[#allocation3 + $0x8e8] sm:$0xff]
    %v1431 = vld [vmem:[#allocation3 + $0x8f0] sm:$0xff]
    %v1432 = vld [vmem:[#allocation3 + $0x8f8] sm:$0xff]
    %v1433 = vld [vmem:[#allocation3 + $0x900] sm:$0xff]
    %v1434 = vld [vmem:[#allocation3 + $0x908] sm:$0xff]
    %v1435 = vld [vmem:[#allocation3 + $0x910] sm:$0xff]
    %v1436 = vld [vmem:[#allocation3 + $0x918] sm:$0xff]
    %v1437 = vld [vmem:[#allocation3 + $0x920] sm:$0xff]
    %v1438 = vld [vmem:[#allocation3 + $0x928] sm:$0xff]
    %v1439 = vld [vmem:[#allocation3 + $0x930] sm:$0xff]
    %v1440 = vld [vmem:[#allocation3 + $0x938] sm:$0xff]
    %v1441 = vld [vmem:[#allocation3 + $0x940] sm:$0xff]
    %v1442 = vld [vmem:[#allocation3 + $0x948] sm:$0xff]
    %v1443 = vld [vmem:[#allocation3 + $0x950] sm:$0xff]
    %v1444 = vld [vmem:[#allocation3 + $0x958] sm:$0xff]
    %v1445 = vld [vmem:[#allocation3 + $0x960] sm:$0xff]
    %v1446 = vld [vmem:[#allocation3 + $0x968] sm:$0xff]
    %v1447 = vld [vmem:[#allocation3 + $0x970] sm:$0xff]
    %v1448 = vld [vmem:[#allocation3 + $0x978] sm:$0xff]
    %v1449 = vld [vmem:[#allocation3 + $0x980] sm:$0xff]
    %v1450 = vld [vmem:[#allocation3 + $0x988] sm:$0xff]
    %v1451 = vld [vmem:[#allocation3 + $0x990] sm:$0xff]
    %v1452 = vld [vmem:[#allocation3 + $0x998] sm:$0xff]
    %v1453 = vld [vmem:[#allocation3 + $0x9a0] sm:$0xff]
    %v1454 = vld [vmem:[#allocation3 + $0x9a8] sm:$0xff]
    %v1455 = vld [vmem:[#allocation3 + $0x9b0] sm:$0xff]
    %v1456 = vld [vmem:[#allocation3 + $0x9b8] sm:$0xff]
    %v1457 = vld [vmem:[#allocation3 + $0x9c0] sm:$0xff]
    %v1458 = vld [vmem:[#allocation3 + $0x9c8] sm:$0xff]
    %v1459 = vld [vmem:[#allocation3 + $0x9d0] sm:$0xff]
    %v1460 = vld [vmem:[#allocation3 + $0x9d8] sm:$0xff]
    %v1461 = vld [vmem:[#allocation3 + $0x9e0] sm:$0xff]
    %v1462 = vld [vmem:[#allocation3 + $0x9e8] sm:$0xff]
    %v1463 = vld [vmem:[#allocation3 + $0x9f0] sm:$0xff]
    %v1464 = vld [vmem:[#allocation3 + $0x9f8] sm:$0xff]
    %v1465 = vld [vmem:[#allocation3 + $0xa00] sm:$0xff]
    %v1466 = vld [vmem:[#allocation3 + $0xa08] sm:$0xff]
    %v1467 = vld [vmem:[#allocation3 + $0xa10] sm:$0xff]
    %v1468 = vld [vmem:[#allocation3 + $0xa18] sm:$0xff]
    %v1469 = vld [vmem:[#allocation3 + $0xa20] sm:$0xff]
    %v1470 = vld [vmem:[#allocation3 + $0xa28] sm:$0xff]
    %v1471 = vld [vmem:[#allocation3 + $0xa30] sm:$0xff]
    %v1472 = vld [vmem:[#allocation3 + $0xa38] sm:$0xff]
    %v1473 = vld [vmem:[#allocation3 + $0xa40] sm:$0xff]
    %v1474 = vld [vmem:[#allocation3 + $0xa48] sm:$0xff]
    %v1475 = vld [vmem:[#allocation3 + $0xa50] sm:$0xff]
    %v1476 = vld [vmem:[#allocation3 + $0xa58] sm:$0xff]
    %v1477 = vld [vmem:[#allocation3 + $0xa60] sm:$0xff]
    %v1478 = vld [vmem:[#allocation3 + $0xa68] sm:$0xff]
    %v1479 = vld [vmem:[#allocation3 + $0xa70] sm:$0xff]
    %v1480 = vld [vmem:[#allocation3 + $0xa78] sm:$0xff]
    %v1481 = vld [vmem:[#allocation3 + $0xa80] sm:$0xff]
    %v1482 = vld [vmem:[#allocation3 + $0xa88] sm:$0xff]
    %v1483 = vld [vmem:[#allocation3 + $0xa90] sm:$0xff]
    %v1484 = vld [vmem:[#allocation3 + $0xa98] sm:$0xff]
    %v1485 = vld [vmem:[#allocation3 + $0xaa0] sm:$0xff]
    %v1486 = vld [vmem:[#allocation3 + $0xaa8] sm:$0xff]
    %v1487 = vld [vmem:[#allocation3 + $0xab0] sm:$0xff]
    %v1488 = vld [vmem:[#allocation3 + $0xab8] sm:$0xff]
    %v1489 = vld [vmem:[#allocation3 + $0xac0] sm:$0xff]
    %v1490 = vld [vmem:[#allocation3 + $0xac8] sm:$0xff]
    %v1491 = vld [vmem:[#allocation3 + $0xad0] sm:$0xff]
    %v1492 = vld [vmem:[#allocation3 + $0xad8] sm:$0xff]
    %v1493 = vld [vmem:[#allocation3 + $0xae0] sm:$0xff]
    %v1494 = vld [vmem:[#allocation3 + $0xae8] sm:$0xff]
    %v1495 = vld [vmem:[#allocation3 + $0xaf0] sm:$0xff]
    %v1496 = vld [vmem:[#allocation3 + $0xaf8] sm:$0xff]
    %v1497 = vld [vmem:[#allocation3 + $0xb00] sm:$0xff]
    %v1498 = vld [vmem:[#allocation3 + $0xb08] sm:$0xff]
    %v1499 = vld [vmem:[#allocation3 + $0xb10] sm:$0xff]
    %v1500 = vld [vmem:[#allocation3 + $0xb18] sm:$0xff]
    %v1501 = vld [vmem:[#allocation3 + $0xb20] sm:$0xff]
    %v1502 = vld [vmem:[#allocation3 + $0xb28] sm:$0xff]
    %v1503 = vld [vmem:[#allocation3 + $0xb30] sm:$0xff]
    %v1504 = vld [vmem:[#allocation3 + $0xb38] sm:$0xff]
    %v1505 = vld [vmem:[#allocation3 + $0xb40] sm:$0xff]
    %v1506 = vld [vmem:[#allocation3 + $0xb48] sm:$0xff]
    %v1507 = vld [vmem:[#allocation3 + $0xb50] sm:$0xff]
    %v1508 = vld [vmem:[#allocation3 + $0xb58] sm:$0xff]
    %v1509 = vld [vmem:[#allocation3 + $0xb60] sm:$0xff]
    %v1510 = vld [vmem:[#allocation3 + $0xb68] sm:$0xff]
    %v1511 = vld [vmem:[#allocation3 + $0xb70] sm:$0xff]
    %v1512 = vld [vmem:[#allocation3 + $0xb78] sm:$0xff]
    %v1513 = vld [vmem:[#allocation3 + $0xb80] sm:$0xff]
    %v1514 = vld [vmem:[#allocation3 + $0xb88] sm:$0xff]
    %v1515 = vld [vmem:[#allocation3 + $0xb90] sm:$0xff]
    %v1516 = vld [vmem:[#allocation3 + $0xb98] sm:$0xff]
    %v1517 = vld [vmem:[#allocation3 + $0xba0] sm:$0xff]
    %v1518 = vld [vmem:[#allocation3 + $0xba8] sm:$0xff]
    %v1519 = vld [vmem:[#allocation3 + $0xbb0] sm:$0xff]
    %v1520 = vld [vmem:[#allocation3 + $0xbb8] sm:$0xff]
    %v1521 = vld [vmem:[#allocation3 + $0xbc0] sm:$0xff]
    %v1522 = vld [vmem:[#allocation3 + $0xbc8] sm:$0xff]
    %v1523 = vld [vmem:[#allocation3 + $0xbd0] sm:$0xff]
    %v1524 = vld [vmem:[#allocation3 + $0xbd8] sm:$0xff]
    %v1525 = vld [vmem:[#allocation3 + $0xbe0] sm:$0xff]
    %v1526 = vld [vmem:[#allocation3 + $0xbe8] sm:$0xff]
    %v1527 = vld [vmem:[#allocation3 + $0xbf0] sm:$0xff]
    %v1528 = vld [vmem:[#allocation3 + $0xbf8] sm:$0xff]
    %v1529 = vld [vmem:[#allocation3 + $0xc00] sm:$0xff]
    %v1530 = vld [vmem:[#allocation3 + $0xc08] sm:$0xff]
    %v1531 = vld [vmem:[#allocation3 + $0xc10] sm:$0xff]
    %v1532 = vld [vmem:[#allocation3 + $0xc18] sm:$0xff]
    %v1533 = vld [vmem:[#allocation3 + $0xc20] sm:$0xff]
    %v1534 = vld [vmem:[#allocation3 + $0xc28] sm:$0xff]
    %v1535 = vld [vmem:[#allocation3 + $0xc30] sm:$0xff]
    %v1536 = vld [vmem:[#allocation3 + $0xc38] sm:$0xff]
    %v1537 = vld [vmem:[#allocation3 + $0xc40] sm:$0xff]
    %v1538 = vld [vmem:[#allocation3 + $0xc48] sm:$0xff]
    %v1539 = vld [vmem:[#allocation3 + $0xc50] sm:$0xff]
    %v1540 = vld [vmem:[#allocation3 + $0xc58] sm:$0xff]
    %v1541 = vld [vmem:[#allocation3 + $0xc60] sm:$0xff]
    %v1542 = vld [vmem:[#allocation3 + $0xc68] sm:$0xff]
    %v1543 = vld [vmem:[#allocation3 + $0xc70] sm:$0xff]
    %v1544 = vld [vmem:[#allocation3 + $0xc78] sm:$0xff]
    %v1545 = vld [vmem:[#allocation3 + $0xc80] sm:$0xff]
    %v1546 = vld [vmem:[#allocation3 + $0xc88] sm:$0xff]
    %v1547 = vld [vmem:[#allocation3 + $0xc90] sm:$0xff]
    %v1548 = vld [vmem:[#allocation3 + $0xc98] sm:$0xff]
    %v1549 = vld [vmem:[#allocation3 + $0xca0] sm:$0xff]
    %v1550 = vld [vmem:[#allocation3 + $0xca8] sm:$0xff]
    %v1551 = vld [vmem:[#allocation3 + $0xcb0] sm:$0xff]
    %v1552 = vld [vmem:[#allocation3 + $0xcb8] sm:$0xff]
    %v1553 = vld [vmem:[#allocation3 + $0xcc0] sm:$0xff]
    %v1554 = vld [vmem:[#allocation3 + $0xcc8] sm:$0xff]
    %v1555 = vld [vmem:[#allocation3 + $0xcd0] sm:$0xff]
    %v1556 = vld [vmem:[#allocation3 + $0xcd8] sm:$0xff]
    %v1557 = vld [vmem:[#allocation3 + $0xce0] sm:$0xff]
    %v1558 = vld [vmem:[#allocation3 + $0xce8] sm:$0xff]
    %v1559 = vld [vmem:[#allocation3 + $0xcf0] sm:$0xff]
    %v1560 = vld [vmem:[#allocation3 + $0xcf8] sm:$0xff]
    %v1561 = vld [vmem:[#allocation3 + $0xd00] sm:$0xff]
    %v1562 = vld [vmem:[#allocation3 + $0xd08] sm:$0xff]
    %v1563 = vld [vmem:[#allocation3 + $0xd10] sm:$0xff]
    %v1564 = vld [vmem:[#allocation3 + $0xd18] sm:$0xff]
    %v1565 = vld [vmem:[#allocation3 + $0xd20] sm:$0xff]
    %v1566 = vld [vmem:[#allocation3 + $0xd28] sm:$0xff]
    %v1567 = vld [vmem:[#allocation3 + $0xd30] sm:$0xff]
    %v1568 = vld [vmem:[#allocation3 + $0xd38] sm:$0xff]
    %v1569 = vld [vmem:[#allocation3 + $0xd40] sm:$0xff]
    %v1570 = vld [vmem:[#allocation3 + $0xd48] sm:$0xff]
    %v1571 = vld [vmem:[#allocation3 + $0xd50] sm:$0xff]
    %v1572 = vld [vmem:[#allocation3 + $0xd58] sm:$0xff]
    %v1573 = vld [vmem:[#allocation3 + $0xd60] sm:$0xff]
    %v1574 = vld [vmem:[#allocation3 + $0xd68] sm:$0xff]
    %v1575 = vld [vmem:[#allocation3 + $0xd70] sm:$0xff]
    %v1576 = vld [vmem:[#allocation3 + $0xd78] sm:$0xff]
    %v1577 = vld [vmem:[#allocation3 + $0xd80] sm:$0xff]
    %v1578 = vld [vmem:[#allocation3 + $0xd88] sm:$0xff]
    %v1579 = vld [vmem:[#allocation3 + $0xd90] sm:$0xff]
    %v1580 = vld [vmem:[#allocation3 + $0xd98] sm:$0xff]
    %v1581 = vld [vmem:[#allocation3 + $0xda0] sm:$0xff]
    %v1582 = vld [vmem:[#allocation3 + $0xda8] sm:$0xff]
    %v1583 = vld [vmem:[#allocation3 + $0xdb0] sm:$0xff]
    %v1584 = vld [vmem:[#allocation3 + $0xdb8] sm:$0xff]
    %v1585 = vld [vmem:[#allocation3 + $0xdc0] sm:$0xff]
    %v1586 = vld [vmem:[#allocation3 + $0xdc8] sm:$0xff]
    %v1587 = vld [vmem:[#allocation3 + $0xdd0] sm:$0xff]
    %v1588 = vld [vmem:[#allocation3 + $0xdd8] sm:$0xff]
    %v1589 = vld [vmem:[#allocation3 + $0xde0] sm:$0xff]
    %v1590 = vld [vmem:[#allocation3 + $0xde8] sm:$0xff]
    %v1591 = vld [vmem:[#allocation3 + $0xdf0] sm:$0xff]
    %v1592 = vld [vmem:[#allocation3 + $0xdf8] sm:$0xff]
    %v1593 = vld [vmem:[#allocation3 + $0xe00] sm:$0xff]
    %v1594 = vld [vmem:[#allocation3 + $0xe08] sm:$0xff]
    %v1595 = vld [vmem:[#allocation3 + $0xe10] sm:$0xff]
    %v1596 = vld [vmem:[#allocation3 + $0xe18] sm:$0xff]
    %v1597 = vld [vmem:[#allocation3 + $0xe20] sm:$0xff]
    %v1598 = vld [vmem:[#allocation3 + $0xe28] sm:$0xff]
    %v1599 = vld [vmem:[#allocation3 + $0xe30] sm:$0xff]
    %v1600 = vld [vmem:[#allocation3 + $0xe38] sm:$0xff]
    %v1601 = vld [vmem:[#allocation3 + $0xe40] sm:$0xff]
    %v1602 = vld [vmem:[#allocation3 + $0xe48] sm:$0xff]
    %v1603 = vld [vmem:[#allocation3 + $0xe50] sm:$0xff]
    %v1604 = vld [vmem:[#allocation3 + $0xe58] sm:$0xff]
    %v1605 = vld [vmem:[#allocation3 + $0xe60] sm:$0xff]
    %v1606 = vld [vmem:[#allocation3 + $0xe68] sm:$0xff]
    %v1607 = vld [vmem:[#allocation3 + $0xe70] sm:$0xff]
    %v1608 = vld [vmem:[#allocation3 + $0xe78] sm:$0xff]
    %v1609 = vld [vmem:[#allocation3 + $0xe80] sm:$0xff]
    %v1610 = vld [vmem:[#allocation3 + $0xe88] sm:$0xff]
    %v1611 = vld [vmem:[#allocation3 + $0xe90] sm:$0xff]
    %v1612 = vld [vmem:[#allocation3 + $0xe98] sm:$0xff]
    %v1613 = vld [vmem:[#allocation3 + $0xea0] sm:$0xff]
    %v1614 = vld [vmem:[#allocation3 + $0xea8] sm:$0xff]
    %v1615 = vld [vmem:[#allocation3 + $0xeb0] sm:$0xff]
    %v1616 = vld [vmem:[#allocation3 + $0xeb8] sm:$0xff]
    %v1617 = vld [vmem:[#allocation3 + $0xec0] sm:$0xff]
    %v1618 = vld [vmem:[#allocation3 + $0xec8] sm:$0xff]
    %v1619 = vld [vmem:[#allocation3 + $0xed0] sm:$0xff]
    %v1620 = vld [vmem:[#allocation3 + $0xed8] sm:$0xff]
    %v1621 = vld [vmem:[#allocation3 + $0xee0] sm:$0xff]
    %v1622 = vld [vmem:[#allocation3 + $0xee8] sm:$0xff]
    %v1623 = vld [vmem:[#allocation3 + $0xef0] sm:$0xff]
    %v1624 = vld [vmem:[#allocation3 + $0xef8] sm:$0xff]
    %v1625 = vld [vmem:[#allocation3 + $0xf00] sm:$0xff]
    %v1626 = vld [vmem:[#allocation3 + $0xf08] sm:$0xff]
    %v1627 = vld [vmem:[#allocation3 + $0xf10] sm:$0xff]
    %v1628 = vld [vmem:[#allocation3 + $0xf18] sm:$0xff]
    %v1629 = vld [vmem:[#allocation3 + $0xf20] sm:$0xff]
    %v1630 = vld [vmem:[#allocation3 + $0xf28] sm:$0xff]
    %v1631 = vld [vmem:[#allocation3 + $0xf30] sm:$0xff]
    %v1632 = vld [vmem:[#allocation3 + $0xf38] sm:$0xff]
    %v1633 = vld [vmem:[#allocation3 + $0xf40] sm:$0xff]
    %v1634 = vld [vmem:[#allocation3 + $0xf48] sm:$0xff]
    %v1635 = vld [vmem:[#allocation3 + $0xf50] sm:$0xff]
    %v1636 = vld [vmem:[#allocation3 + $0xf58] sm:$0xff]
    %v1637 = vld [vmem:[#allocation3 + $0xf60] sm:$0xff]
    %v1638 = vld [vmem:[#allocation3 + $0xf68] sm:$0xff]
    %v1639 = vld [vmem:[#allocation3 + $0xf70] sm:$0xff]
    %v1640 = vld [vmem:[#allocation3 + $0xf78] sm:$0xff]
    %v1641 = vld [vmem:[#allocation3 + $0xf80] sm:$0xff]
    %v1642 = vld [vmem:[#allocation3 + $0xf88] sm:$0xff]
    %v1643 = vld [vmem:[#allocation3 + $0xf90] sm:$0xff]
    %v1644 = vld [vmem:[#allocation3 + $0xf98] sm:$0xff]
    %v1645 = vld [vmem:[#allocation3 + $0xfa0] sm:$0xff]
    %v1646 = vld [vmem:[#allocation3 + $0xfa8] sm:$0xff]
    %v1647 = vld [vmem:[#allocation3 + $0xfb0] sm:$0xff]
    %v1648 = vld [vmem:[#allocation3 + $0xfb8] sm:$0xff]
    %v1649 = vld [vmem:[#allocation3 + $0xfc0] sm:$0xff]
    %v1650 = vld [vmem:[#allocation3 + $0xfc8] sm:$0xff]
    %v1651 = vld [vmem:[#allocation3 + $0xfd0] sm:$0xff]
    %v1652 = vld [vmem:[#allocation3 + $0xfd8] sm:$0xff]
    %v1653 = vld [vmem:[#allocation3 + $0xfe0] sm:$0xff]
    %v1654 = vld [vmem:[#allocation3 + $0xfe8] sm:$0xff]
    %v1655 = vld [vmem:[#allocation3 + $0xff0] sm:$0xff]
    %v1656 = vld [vmem:[#allocation3 + $0xff8] sm:$0xff]
    %v1657 = vld [vmem:[#allocation3 + $0x1000] sm:$0xff]
    %v1658 = vld [vmem:[#allocation3 + $0x1008] sm:$0xff]
    %v1659 = vld [vmem:[#allocation3 + $0x1010] sm:$0xff]
    %v1660 = vld [vmem:[#allocation3 + $0x1018] sm:$0xff]
    %v1661 = vld [vmem:[#allocation3 + $0x1020] sm:$0xff]
    %v1662 = vld [vmem:[#allocation3 + $0x1028] sm:$0xff]
    %v1663 = vld [vmem:[#allocation3 + $0x1030] sm:$0xff]
    %v1664 = vld [vmem:[#allocation3 + $0x1038] sm:$0xff]
    %v1665 = vld [vmem:[#allocation3 + $0x1040] sm:$0xff]
    %v1666 = vld [vmem:[#allocation3 + $0x1048] sm:$0xff]
    %v1667 = vld [vmem:[#allocation3 + $0x1050] sm:$0xff]
    %v1668 = vld [vmem:[#allocation3 + $0x1058] sm:$0xff]
    %v1669 = vld [vmem:[#allocation3 + $0x1060] sm:$0xff]
    %v1670 = vld [vmem:[#allocation3 + $0x1068] sm:$0xff]
    %v1671 = vld [vmem:[#allocation3 + $0x1070] sm:$0xff]
    %v1672 = vld [vmem:[#allocation3 + $0x1078] sm:$0xff]
    %v1673 = vld [vmem:[#allocation3 + $0x1080] sm:$0xff]
    %v1674 = vld [vmem:[#allocation3 + $0x1088] sm:$0xff]
    %v1675 = vld [vmem:[#allocation3 + $0x1090] sm:$0xff]
    %v1676 = vld [vmem:[#allocation3 + $0x1098] sm:$0xff]
    %v1677 = vld [vmem:[#allocation3 + $0x10a0] sm:$0xff]
    %v1678 = vld [vmem:[#allocation3 + $0x10a8] sm:$0xff]
    %v1679 = vld [vmem:[#allocation3 + $0x10b0] sm:$0xff]
    %v1680 = vld [vmem:[#allocation3 + $0x10b8] sm:$0xff]
    %v1681 = vld [vmem:[#allocation3 + $0x10c0] sm:$0xff]
    %v1682 = vld [vmem:[#allocation3 + $0x10c8] sm:$0xff]
    %v1683 = vld [vmem:[#allocation3 + $0x10d0] sm:$0xff]
    %v1684 = vld [vmem:[#allocation3 + $0x10d8] sm:$0xff]
    %v1685 = vld [vmem:[#allocation3 + $0x10e0] sm:$0xff]
    %v1686 = vld [vmem:[#allocation3 + $0x10e8] sm:$0xff]
    %v1687 = vld [vmem:[#allocation3 + $0x10f0] sm:$0xff]
    %v1688 = vld [vmem:[#allocation3 + $0x10f8] sm:$0xff]
    %v1689 = vld [vmem:[#allocation3 + $0x1100] sm:$0xff]
    %v1690 = vld [vmem:[#allocation3 + $0x1108] sm:$0xff]
    %v1691 = vld [vmem:[#allocation3 + $0x1110] sm:$0xff]
    %v1692 = vld [vmem:[#allocation3 + $0x1118] sm:$0xff]
    %v1693 = vld [vmem:[#allocation3 + $0x1120] sm:$0xff]
    %v1694 = vld [vmem:[#allocation3 + $0x1128] sm:$0xff]
    %v1695 = vld [vmem:[#allocation3 + $0x1130] sm:$0xff]
    %v1696 = vld [vmem:[#allocation3 + $0x1138] sm:$0xff]
    %v1697 = vld [vmem:[#allocation3 + $0x1140] sm:$0xff]
    %v1698 = vld [vmem:[#allocation3 + $0x1148] sm:$0xff]
    %v1699 = vld [vmem:[#allocation3 + $0x1150] sm:$0xff]
    %v1700 = vld [vmem:[#allocation3 + $0x1158] sm:$0xff]
    %v1701 = vld [vmem:[#allocation3 + $0x1160] sm:$0xff]
    %v1702 = vld [vmem:[#allocation3 + $0x1168] sm:$0xff]
    %v1703 = vld [vmem:[#allocation3 + $0x1170] sm:$0xff]
    %v1704 = vld [vmem:[#allocation3 + $0x1178] sm:$0xff]
    %v1705 = vld [vmem:[#allocation3 + $0x1180] sm:$0xff]
    %v1706 = vld [vmem:[#allocation3 + $0x1188] sm:$0xff]
    %v1707 = vld [vmem:[#allocation3 + $0x1190] sm:$0xff]
    %v1708 = vld [vmem:[#allocation3 + $0x1198] sm:$0xff]
    %v1709 = vld [vmem:[#allocation3 + $0x11a0] sm:$0xff]
    %v1710 = vld [vmem:[#allocation3 + $0x11a8] sm:$0xff]
    %v1711 = vld [vmem:[#allocation3 + $0x11b0] sm:$0xff]
    %v1712 = vld [vmem:[#allocation3 + $0x11b8] sm:$0xff]
    %v1713 = vld [vmem:[#allocation3 + $0x11c0] sm:$0xff]
    %v1714 = vld [vmem:[#allocation3 + $0x11c8] sm:$0xff]
    %v1715 = vld [vmem:[#allocation3 + $0x11d0] sm:$0xff]
    %v1716 = vld [vmem:[#allocation3 + $0x11d8] sm:$0xff]
    %v1717 = vld [vmem:[#allocation3 + $0x11e0] sm:$0xff]
    %v1718 = vld [vmem:[#allocation3 + $0x11e8] sm:$0xff]
    %v1719 = vld [vmem:[#allocation3 + $0x11f0] sm:$0xff]
    %v1720 = vld [vmem:[#allocation3 + $0x11f8] sm:$0xff]
    %v1721 = vld [vmem:[#allocation3 + $0x1200] sm:$0xff]
    %v1722 = vld [vmem:[#allocation3 + $0x1208] sm:$0xff]
    %v1723 = vld [vmem:[#allocation3 + $0x1210] sm:$0xff]
    %v1724 = vld [vmem:[#allocation3 + $0x1218] sm:$0xff]
    %v1725 = vld [vmem:[#allocation3 + $0x1220] sm:$0xff]
    %v1726 = vld [vmem:[#allocation3 + $0x1228] sm:$0xff]
    %v1727 = vld [vmem:[#allocation3 + $0x1230] sm:$0xff]
    %v1728 = vld [vmem:[#allocation3 + $0x1238] sm:$0xff]
    %v1729 = vld [vmem:[#allocation3 + $0x1240] sm:$0xff]
    %v1730 = vld [vmem:[#allocation3 + $0x1248] sm:$0xff]
    %v1731 = vld [vmem:[#allocation3 + $0x1250] sm:$0xff]
    %v1732 = vld [vmem:[#allocation3 + $0x1258] sm:$0xff]
    %v1733 = vld [vmem:[#allocation3 + $0x1260] sm:$0xff]
    %v1734 = vld [vmem:[#allocation3 + $0x1268] sm:$0xff]
    %v1735 = vld [vmem:[#allocation3 + $0x1270] sm:$0xff]
    %v1736 = vld [vmem:[#allocation3 + $0x1278] sm:$0xff]
    %v1737 = vld [vmem:[#allocation3 + $0x1280] sm:$0xff]
    %v1738 = vld [vmem:[#allocation3 + $0x1288] sm:$0xff]
    %v1739 = vld [vmem:[#allocation3 + $0x1290] sm:$0xff]
    %v1740 = vld [vmem:[#allocation3 + $0x1298] sm:$0xff]
    %v1741 = vld [vmem:[#allocation3 + $0x12a0] sm:$0xff]
    %v1742 = vld [vmem:[#allocation3 + $0x12a8] sm:$0xff]
    %v1743 = vld [vmem:[#allocation3 + $0x12b0] sm:$0xff]
    %v1744 = vld [vmem:[#allocation3 + $0x12b8] sm:$0xff]
    %v1745 = vld [vmem:[#allocation3 + $0x12c0] sm:$0xff]
    %v1746 = vld [vmem:[#allocation3 + $0x12c8] sm:$0xff]
    %v1747 = vld [vmem:[#allocation3 + $0x12d0] sm:$0xff]
    %v1748 = vld [vmem:[#allocation3 + $0x12d8] sm:$0xff]
    %v1749 = vld [vmem:[#allocation3 + $0x12e0] sm:$0xff]
    %v1750 = vld [vmem:[#allocation3 + $0x12e8] sm:$0xff]
    %v1751 = vld [vmem:[#allocation3 + $0x12f0] sm:$0xff]
    %v1752 = vld [vmem:[#allocation3 + $0x12f8] sm:$0xff]
    %v1753 = vld [vmem:[#allocation3 + $0x1300] sm:$0xff]
    %v1754 = vld [vmem:[#allocation3 + $0x1308] sm:$0xff]
    %v1755 = vld [vmem:[#allocation3 + $0x1310] sm:$0xff]
    %v1756 = vld [vmem:[#allocation3 + $0x1318] sm:$0xff]
    %v1757 = vld [vmem:[#allocation3 + $0x1320] sm:$0xff]
    %v1758 = vld [vmem:[#allocation3 + $0x1328] sm:$0xff]
    %v1759 = vld [vmem:[#allocation3 + $0x1330] sm:$0xff]
    %v1760 = vld [vmem:[#allocation3 + $0x1338] sm:$0xff]
    %v1761 = vld [vmem:[#allocation3 + $0x1340] sm:$0xff]
    %v1762 = vld [vmem:[#allocation3 + $0x1348] sm:$0xff]
    %v1763 = vld [vmem:[#allocation3 + $0x1350] sm:$0xff]
    %v1764 = vld [vmem:[#allocation3 + $0x1358] sm:$0xff]
    %v1765 = vld [vmem:[#allocation3 + $0x1360] sm:$0xff]
    %v1766 = vld [vmem:[#allocation3 + $0x1368] sm:$0xff]
    %v1767 = vld [vmem:[#allocation3 + $0x1370] sm:$0xff]
    %v1768 = vld [vmem:[#allocation3 + $0x1378] sm:$0xff]
    %v1769 = vld [vmem:[#allocation3 + $0x1380] sm:$0xff]
    %v1770 = vld [vmem:[#allocation3 + $0x1388] sm:$0xff]
    %v1771 = vld [vmem:[#allocation3 + $0x1390] sm:$0xff]
    %v1772 = vld [vmem:[#allocation3 + $0x1398] sm:$0xff]
    %v1773 = vld [vmem:[#allocation3 + $0x13a0] sm:$0xff]
    %v1774 = vld [vmem:[#allocation3 + $0x13a8] sm:$0xff]
    %v1775 = vld [vmem:[#allocation3 + $0x13b0] sm:$0xff]
    %v1776 = vld [vmem:[#allocation3 + $0x13b8] sm:$0xff]
    %v1777 = vld [vmem:[#allocation3 + $0x13c0] sm:$0xff]
    %v1778 = vld [vmem:[#allocation3 + $0x13c8] sm:$0xff]
    %v1779 = vld [vmem:[#allocation3 + $0x13d0] sm:$0xff]
    %v1780 = vld [vmem:[#allocation3 + $0x13d8] sm:$0xff]
    %v1781 = vld [vmem:[#allocation3 + $0x13e0] sm:$0xff]
    %v1782 = vld [vmem:[#allocation3 + $0x13e8] sm:$0xff]
    %v1783 = vld [vmem:[#allocation3 + $0x13f0] sm:$0xff]
    %v1784 = vld [vmem:[#allocation3 + $0x13f8] sm:$0xff]
    %v1785 = vld [vmem:[#allocation3 + $0x1400] sm:$0xff]
    %v1786 = vld [vmem:[#allocation3 + $0x1408] sm:$0xff]
    %v1787 = vld [vmem:[#allocation3 + $0x1410] sm:$0xff]
    %v1788 = vld [vmem:[#allocation3 + $0x1418] sm:$0xff]
    %v1789 = vld [vmem:[#allocation3 + $0x1420] sm:$0xff]
    %v1790 = vld [vmem:[#allocation3 + $0x1428] sm:$0xff]
    %v1791 = vld [vmem:[#allocation3 + $0x1430] sm:$0xff]
    %v1792 = vld [vmem:[#allocation3 + $0x1438] sm:$0xff]
    %v1793 = vld [vmem:[#allocation3 + $0x1440] sm:$0xff]
    %v1794 = vld [vmem:[#allocation3 + $0x1448] sm:$0xff]
    %v1795 = vld [vmem:[#allocation3 + $0x1450] sm:$0xff]
    %v1796 = vld [vmem:[#allocation3 + $0x1458] sm:$0xff]
    %v1797 = vld [vmem:[#allocation3 + $0x1460] sm:$0xff]
    %v1798 = vld [vmem:[#allocation3 + $0x1468] sm:$0xff]
    %v1799 = vld [vmem:[#allocation3 + $0x1470] sm:$0xff]
    %v1800 = vld [vmem:[#allocation3 + $0x1478] sm:$0xff]
    %v1801 = vld [vmem:[#allocation3 + $0x1480] sm:$0xff]
    %v1802 = vld [vmem:[#allocation3 + $0x1488] sm:$0xff]
    %v1803 = vld [vmem:[#allocation3 + $0x1490] sm:$0xff]
    %v1804 = vld [vmem:[#allocation3 + $0x1498] sm:$0xff]
    %v1805 = vld [vmem:[#allocation3 + $0x14a0] sm:$0xff]
    %v1806 = vld [vmem:[#allocation3 + $0x14a8] sm:$0xff]
    %v1807 = vld [vmem:[#allocation3 + $0x14b0] sm:$0xff]
    %v1808 = vld [vmem:[#allocation3 + $0x14b8] sm:$0xff]
    %v1809 = vld [vmem:[#allocation3 + $0x14c0] sm:$0xff]
    %v1810 = vld [vmem:[#allocation3 + $0x14c8] sm:$0xff]
    %v1811 = vld [vmem:[#allocation3 + $0x14d0] sm:$0xff]
    %v1812 = vld [vmem:[#allocation3 + $0x14d8] sm:$0xff]
    %v1813 = vld [vmem:[#allocation3 + $0x14e0] sm:$0xff]
    %v1814 = vld [vmem:[#allocation3 + $0x14e8] sm:$0xff]
    %v1815 = vld [vmem:[#allocation3 + $0x14f0] sm:$0xff]
    %v1816 = vld [vmem:[#allocation3 + $0x14f8] sm:$0xff]
    %v1817 = vld [vmem:[#allocation3 + $0x1500] sm:$0xff]
    %v1818 = vld [vmem:[#allocation3 + $0x1508] sm:$0xff]
    %v1819 = vld [vmem:[#allocation3 + $0x1510] sm:$0xff]
    %v1820 = vld [vmem:[#allocation3 + $0x1518] sm:$0xff]
    %v1821 = vld [vmem:[#allocation3 + $0x1520] sm:$0xff]
    %v1822 = vld [vmem:[#allocation3 + $0x1528] sm:$0xff]
    %v1823 = vld [vmem:[#allocation3 + $0x1530] sm:$0xff]
    %v1824 = vld [vmem:[#allocation3 + $0x1538] sm:$0xff]
    %v1825 = vld [vmem:[#allocation3 + $0x1540] sm:$0xff]
    %v1826 = vld [vmem:[#allocation3 + $0x1548] sm:$0xff]
    %v1827 = vld [vmem:[#allocation3 + $0x1550] sm:$0xff]
    %v1828 = vld [vmem:[#allocation3 + $0x1558] sm:$0xff]
    %v1829 = vld [vmem:[#allocation3 + $0x1560] sm:$0xff]
    %v1830 = vld [vmem:[#allocation3 + $0x1568] sm:$0xff]
    %v1831 = vld [vmem:[#allocation3 + $0x1570] sm:$0xff]
    %v1832 = vld [vmem:[#allocation3 + $0x1578] sm:$0xff]
    %v1833 = vld [vmem:[#allocation3 + $0x1580] sm:$0xff]
    %v1834 = vld [vmem:[#allocation3 + $0x1588] sm:$0xff]
    %v1835 = vld [vmem:[#allocation3 + $0x1590] sm:$0xff]
    %v1836 = vld [vmem:[#allocation3 + $0x1598] sm:$0xff]
    %v1837 = vld [vmem:[#allocation3 + $0x15a0] sm:$0xff]
    %v1838 = vld [vmem:[#allocation3 + $0x15a8] sm:$0xff]
    %v1839 = vld [vmem:[#allocation3 + $0x15b0] sm:$0xff]
    %v1840 = vld [vmem:[#allocation3 + $0x15b8] sm:$0xff]
    %v1841 = vld [vmem:[#allocation3 + $0x15c0] sm:$0xff]
    %v1842 = vld [vmem:[#allocation3 + $0x15c8] sm:$0xff]
    %v1843 = vld [vmem:[#allocation3 + $0x15d0] sm:$0xff]
    %v1844 = vld [vmem:[#allocation3 + $0x15d8] sm:$0xff]
    %v1845 = vld [vmem:[#allocation3 + $0x15e0] sm:$0xff]
    %v1846 = vld [vmem:[#allocation3 + $0x15e8] sm:$0xff]
    %v1847 = vld [vmem:[#allocation3 + $0x15f0] sm:$0xff]
    %v1848 = vld [vmem:[#allocation3 + $0x15f8] sm:$0xff]
    %v1849 = vld [vmem:[#allocation3 + $0x1600] sm:$0xff]
    %v1850 = vld [vmem:[#allocation3 + $0x1608] sm:$0xff]
    %v1851 = vld [vmem:[#allocation3 + $0x1610] sm:$0xff]
    %v1852 = vld [vmem:[#allocation3 + $0x1618] sm:$0xff]
    %v1853 = vld [vmem:[#allocation3 + $0x1620] sm:$0xff]
    %v1854 = vld [vmem:[#allocation3 + $0x1628] sm:$0xff]
    %v1855 = vld [vmem:[#allocation3 + $0x1630] sm:$0xff]
    %v1856 = vld [vmem:[#allocation3 + $0x1638] sm:$0xff]
    %v1857 = vld [vmem:[#allocation3 + $0x1640] sm:$0xff]
    %v1858 = vld [vmem:[#allocation3 + $0x1648] sm:$0xff]
    %v1859 = vld [vmem:[#allocation3 + $0x1650] sm:$0xff]
    %v1860 = vld [vmem:[#allocation3 + $0x1658] sm:$0xff]
    %v1861 = vld [vmem:[#allocation3 + $0x1660] sm:$0xff]
    %v1862 = vld [vmem:[#allocation3 + $0x1668] sm:$0xff]
    %v1863 = vld [vmem:[#allocation3 + $0x1670] sm:$0xff]
    %v1864 = vld [vmem:[#allocation3 + $0x1678] sm:$0xff]
    %v1865 = vld [vmem:[#allocation3 + $0x1680] sm:$0xff]
    %v1866 = vld [vmem:[#allocation3 + $0x1688] sm:$0xff]
    %v1867 = vld [vmem:[#allocation3 + $0x1690] sm:$0xff]
    %v1868 = vld [vmem:[#allocation3 + $0x1698] sm:$0xff]
    %v1869 = vld [vmem:[#allocation3 + $0x16a0] sm:$0xff]
    %v1870 = vld [vmem:[#allocation3 + $0x16a8] sm:$0xff]
    %v1871 = vld [vmem:[#allocation3 + $0x16b0] sm:$0xff]
    %v1872 = vld [vmem:[#allocation3 + $0x16b8] sm:$0xff]
    %v1873 = vld [vmem:[#allocation3 + $0x16c0] sm:$0xff]
    %v1874 = vld [vmem:[#allocation3 + $0x16c8] sm:$0xff]
    %v1875 = vld [vmem:[#allocation3 + $0x16d0] sm:$0xff]
    %v1876 = vld [vmem:[#allocation3 + $0x16d8] sm:$0xff]
    %v1877 = vld [vmem:[#allocation3 + $0x16e0] sm:$0xff]
    %v1878 = vld [vmem:[#allocation3 + $0x16e8] sm:$0xff]
    %v1879 = vld [vmem:[#allocation3 + $0x16f0] sm:$0xff]
    %v1880 = vld [vmem:[#allocation3 + $0x16f8] sm:$0xff]
    %v1881 = vld [vmem:[#allocation3 + $0x1700] sm:$0xff]
    %v1882 = vld [vmem:[#allocation3 + $0x1708] sm:$0xff]
    %v1883 = vld [vmem:[#allocation3 + $0x1710] sm:$0xff]
    %v1884 = vld [vmem:[#allocation3 + $0x1718] sm:$0xff]
    %v1885 = vld [vmem:[#allocation3 + $0x1720] sm:$0xff]
    %v1886 = vld [vmem:[#allocation3 + $0x1728] sm:$0xff]
    %v1887 = vld [vmem:[#allocation3 + $0x1730] sm:$0xff]
    %v1888 = vld [vmem:[#allocation3 + $0x1738] sm:$0xff]
    %v1889 = vld [vmem:[#allocation3 + $0x1740] sm:$0xff]
    %v1890 = vld [vmem:[#allocation3 + $0x1748] sm:$0xff]
    %v1891 = vld [vmem:[#allocation3 + $0x1750] sm:$0xff]
    %v1892 = vld [vmem:[#allocation3 + $0x1758] sm:$0xff]
    %v1893 = vld [vmem:[#allocation3 + $0x1760] sm:$0xff]
    %v1894 = vld [vmem:[#allocation3 + $0x1768] sm:$0xff]
    %v1895 = vld [vmem:[#allocation3 + $0x1770] sm:$0xff]
    %v1896 = vld [vmem:[#allocation3 + $0x1778] sm:$0xff]
    %v1897 = vld [vmem:[#allocation3 + $0x1780] sm:$0xff]
    %v1898 = vld [vmem:[#allocation3 + $0x1788] sm:$0xff]
    %v1899 = vld [vmem:[#allocation3 + $0x1790] sm:$0xff]
    %v1900 = vld [vmem:[#allocation3 + $0x1798] sm:$0xff]
    %v1901 = vld [vmem:[#allocation3 + $0x17a0] sm:$0xff]
    %v1902 = vld [vmem:[#allocation3 + $0x17a8] sm:$0xff]
    %v1903 = vld [vmem:[#allocation3 + $0x17b0] sm:$0xff]
    %v1904 = vld [vmem:[#allocation3 + $0x17b8] sm:$0xff]
    %v1905 = vld [vmem:[#allocation3 + $0x17c0] sm:$0xff]
    %v1906 = vld [vmem:[#allocation3 + $0x17c8] sm:$0xff]
    %v1907 = vld [vmem:[#allocation3 + $0x17d0] sm:$0xff]
    %v1908 = vld [vmem:[#allocation3 + $0x17d8] sm:$0xff]
    %v1909 = vld [vmem:[#allocation3 + $0x17e0] sm:$0xff]
    %v1910 = vld [vmem:[#allocation3 + $0x17e8] sm:$0xff]
    %v1911 = vld [vmem:[#allocation3 + $0x17f0] sm:$0xff]
    %v1912 = vld [vmem:[#allocation3 + $0x17f8] sm:$0xff]
    %v1913 = vld [vmem:[#allocation3 + $0x1800] sm:$0xff]
    %v1914 = vld [vmem:[#allocation3 + $0x1808] sm:$0xff]
    %v1915 = vld [vmem:[#allocation3 + $0x1810] sm:$0xff]
    %v1916 = vld [vmem:[#allocation3 + $0x1818] sm:$0xff]
    %v1917 = vld [vmem:[#allocation3 + $0x1820] sm:$0xff]
    %v1918 = vld [vmem:[#allocation3 + $0x1828] sm:$0xff]
    %v1919 = vld [vmem:[#allocation3 + $0x1830] sm:$0xff]
    %v1920 = vld [vmem:[#allocation3 + $0x1838] sm:$0xff]
    %v1921 = vld [vmem:[#allocation3 + $0x1840] sm:$0xff]
    %v1922 = vld [vmem:[#allocation3 + $0x1848] sm:$0xff]
    %v1923 = vld [vmem:[#allocation3 + $0x1850] sm:$0xff]
    %v1924 = vld [vmem:[#allocation3 + $0x1858] sm:$0xff]
    %v1925 = vld [vmem:[#allocation3 + $0x1860] sm:$0xff]
    %v1926 = vld [vmem:[#allocation3 + $0x1868] sm:$0xff]
    %v1927 = vld [vmem:[#allocation3 + $0x1870] sm:$0xff]
    %v1928 = vld [vmem:[#allocation3 + $0x1878] sm:$0xff]
    %v1929 = vld [vmem:[#allocation3 + $0x1880] sm:$0xff]
    %v1930 = vld [vmem:[#allocation3 + $0x1888] sm:$0xff]
    %v1931 = vld [vmem:[#allocation3 + $0x1890] sm:$0xff]
    %v1932 = vld [vmem:[#allocation3 + $0x1898] sm:$0xff]
    %v1933 = vld [vmem:[#allocation3 + $0x18a0] sm:$0xff]
    %v1934 = vld [vmem:[#allocation3 + $0x18a8] sm:$0xff]
    %v1935 = vld [vmem:[#allocation3 + $0x18b0] sm:$0xff]
    %v1936 = vld [vmem:[#allocation3 + $0x18b8] sm:$0xff]
    %v1937 = vld [vmem:[#allocation3 + $0x18c0] sm:$0xff]
    %v1938 = vld [vmem:[#allocation3 + $0x18c8] sm:$0xff]
    %v1939 = vld [vmem:[#allocation3 + $0x18d0] sm:$0xff]
    %v1940 = vld [vmem:[#allocation3 + $0x18d8] sm:$0xff]
    %v1941 = vld [vmem:[#allocation3 + $0x18e0] sm:$0xff]
    %v1942 = vld [vmem:[#allocation3 + $0x18e8] sm:$0xff]
    %v1943 = vld [vmem:[#allocation3 + $0x18f0] sm:$0xff]
    %v1944 = vld [vmem:[#allocation3 + $0x18f8] sm:$0xff]
    %v1945 = vld [vmem:[#allocation3 + $0x1900] sm:$0xff]
    %v1946 = vld [vmem:[#allocation3 + $0x1908] sm:$0xff]
    %v1947 = vld [vmem:[#allocation3 + $0x1910] sm:$0xff]
    %v1948 = vld [vmem:[#allocation3 + $0x1918] sm:$0xff]
    %v1949 = vld [vmem:[#allocation3 + $0x1920] sm:$0xff]
    %v1950 = vld [vmem:[#allocation3 + $0x1928] sm:$0xff]
    %v1951 = vld [vmem:[#allocation3 + $0x1930] sm:$0xff]
    %v1952 = vld [vmem:[#allocation3 + $0x1938] sm:$0xff]
    %v1953 = vld [vmem:[#allocation3 + $0x1940] sm:$0xff]
    %v1954 = vld [vmem:[#allocation3 + $0x1948] sm:$0xff]
    %v1955 = vld [vmem:[#allocation3 + $0x1950] sm:$0xff]
    %v1956 = vld [vmem:[#allocation3 + $0x1958] sm:$0xff]
    %v1957 = vld [vmem:[#allocation3 + $0x1960] sm:$0xff]
    %v1958 = vld [vmem:[#allocation3 + $0x1968] sm:$0xff]
    %v1959 = vld [vmem:[#allocation3 + $0x1970] sm:$0xff]
    %v1960 = vld [vmem:[#allocation3 + $0x1978] sm:$0xff]
    %v1961 = vld [vmem:[#allocation3 + $0x1980] sm:$0xff]
    %v1962 = vld [vmem:[#allocation3 + $0x1988] sm:$0xff]
    %v1963 = vld [vmem:[#allocation3 + $0x1990] sm:$0xff]
    %v1964 = vld [vmem:[#allocation3 + $0x1998] sm:$0xff]
    %v1965 = vld [vmem:[#allocation3 + $0x19a0] sm:$0xff]
    %v1966 = vld [vmem:[#allocation3 + $0x19a8] sm:$0xff]
    %v1967 = vld [vmem:[#allocation3 + $0x19b0] sm:$0xff]
    %v1968 = vld [vmem:[#allocation3 + $0x19b8] sm:$0xff]
    %v1969 = vld [vmem:[#allocation3 + $0x19c0] sm:$0xff]
    %v1970 = vld [vmem:[#allocation3 + $0x19c8] sm:$0xff]
    %v1971 = vld [vmem:[#allocation3 + $0x19d0] sm:$0xff]
    %v1972 = vld [vmem:[#allocation3 + $0x19d8] sm:$0xff]
    %v1973 = vld [vmem:[#allocation3 + $0x19e0] sm:$0xff]
    %v1974 = vld [vmem:[#allocation3 + $0x19e8] sm:$0xff]
    %v1975 = vld [vmem:[#allocation3 + $0x19f0] sm:$0xff]
    %v1976 = vld [vmem:[#allocation3 + $0x19f8] sm:$0xff]
    %v1977 = vld [vmem:[#allocation3 + $0x1a00] sm:$0xff]
    %v1978 = vld [vmem:[#allocation3 + $0x1a08] sm:$0xff]
    %v1979 = vld [vmem:[#allocation3 + $0x1a10] sm:$0xff]
    %v1980 = vld [vmem:[#allocation3 + $0x1a18] sm:$0xff]
    %v1981 = vld [vmem:[#allocation3 + $0x1a20] sm:$0xff]
    %v1982 = vld [vmem:[#allocation3 + $0x1a28] sm:$0xff]
    %v1983 = vld [vmem:[#allocation3 + $0x1a30] sm:$0xff]
    %v1984 = vld [vmem:[#allocation3 + $0x1a38] sm:$0xff]
    %v1985 = vld [vmem:[#allocation3 + $0x1a40] sm:$0xff]
    %v1986 = vld [vmem:[#allocation3 + $0x1a48] sm:$0xff]
    %v1987 = vld [vmem:[#allocation3 + $0x1a50] sm:$0xff]
    %v1988 = vld [vmem:[#allocation3 + $0x1a58] sm:$0xff]
    %v1989 = vld [vmem:[#allocation3 + $0x1a60] sm:$0xff]
    %v1990 = vld [vmem:[#allocation3 + $0x1a68] sm:$0xff]
    %v1991 = vld [vmem:[#allocation3 + $0x1a70] sm:$0xff]
    %v1992 = vld [vmem:[#allocation3 + $0x1a78] sm:$0xff]
    %v1993 = vld [vmem:[#allocation3 + $0x1a80] sm:$0xff]
    %v1994 = vld [vmem:[#allocation3 + $0x1a88] sm:$0xff]
    %v1995 = vld [vmem:[#allocation3 + $0x1a90] sm:$0xff]
    %v1996 = vld [vmem:[#allocation3 + $0x1a98] sm:$0xff]
    %v1997 = vld [vmem:[#allocation3 + $0x1aa0] sm:$0xff]
    %v1998 = vld [vmem:[#allocation3 + $0x1aa8] sm:$0xff]
    %v1999 = vld [vmem:[#allocation3 + $0x1ab0] sm:$0xff]
    %v2000 = vld [vmem:[#allocation3 + $0x1ab8] sm:$0xff]
    %v2001 = vld [vmem:[#allocation3 + $0x1ac0] sm:$0xff]
    %v2002 = vld [vmem:[#allocation3 + $0x1ac8] sm:$0xff]
    %v2003 = vld [vmem:[#allocation3 + $0x1ad0] sm:$0xff]
    %v2004 = vld [vmem:[#allocation3 + $0x1ad8] sm:$0xff]
    %v2005 = vld [vmem:[#allocation3 + $0x1ae0] sm:$0xff]
    %v2006 = vld [vmem:[#allocation3 + $0x1ae8] sm:$0xff]
    %v2007 = vld [vmem:[#allocation3 + $0x1af0] sm:$0xff]
    %v2008 = vld [vmem:[#allocation3 + $0x1af8] sm:$0xff]
    %v2009 = vld [vmem:[#allocation3 + $0x1b00] sm:$0xff]
    %v2010 = vld [vmem:[#allocation3 + $0x1b08] sm:$0xff]
    %v2011 = vld [vmem:[#allocation3 + $0x1b10] sm:$0xff]
    %v2012 = vld [vmem:[#allocation3 + $0x1b18] sm:$0xff]
    %v2013 = vld [vmem:[#allocation3 + $0x1b20] sm:$0xff]
    %v2014 = vld [vmem:[#allocation3 + $0x1b28] sm:$0xff]
    %v2015 = vld [vmem:[#allocation3 + $0x1b30] sm:$0xff]
    %v2016 = vld [vmem:[#allocation3 + $0x1b38] sm:$0xff]
    %v2017 = vld [vmem:[#allocation3 + $0x1b40] sm:$0xff]
    %v2018 = vld [vmem:[#allocation3 + $0x1b48] sm:$0xff]
    %v2019 = vld [vmem:[#allocation3 + $0x1b50] sm:$0xff]
    %v2020 = vld [vmem:[#allocation3 + $0x1b58] sm:$0xff]
    %v2021 = vld [vmem:[#allocation3 + $0x1b60] sm:$0xff]
    %v2022 = vld [vmem:[#allocation3 + $0x1b68] sm:$0xff]
    %v2023 = vld [vmem:[#allocation3 + $0x1b70] sm:$0xff]
    %v2024 = vld [vmem:[#allocation3 + $0x1b78] sm:$0xff]
    %v2025 = vld [vmem:[#allocation3 + $0x1b80] sm:$0xff]
    %v2026 = vld [vmem:[#allocation3 + $0x1b88] sm:$0xff]
    %v2027 = vld [vmem:[#allocation3 + $0x1b90] sm:$0xff]
    %v2028 = vld [vmem:[#allocation3 + $0x1b98] sm:$0xff]
    %v2029 = vld [vmem:[#allocation3 + $0x1ba0] sm:$0xff]
    %v2030 = vld [vmem:[#allocation3 + $0x1ba8] sm:$0xff]
    %v2031 = vld [vmem:[#allocation3 + $0x1bb0] sm:$0xff]
    %v2032 = vld [vmem:[#allocation3 + $0x1bb8] sm:$0xff]
    %v2033 = vld [vmem:[#allocation3 + $0x1bc0] sm:$0xff]
    %v2034 = vld [vmem:[#allocation3 + $0x1bc8] sm:$0xff]
    %v2035 = vld [vmem:[#allocation3 + $0x1bd0] sm:$0xff]
    %v2036 = vld [vmem:[#allocation3 + $0x1bd8] sm:$0xff]
    %v2037 = vld [vmem:[#allocation3 + $0x1be0] sm:$0xff]
    %v2038 = vld [vmem:[#allocation3 + $0x1be8] sm:$0xff]
    %v2039 = vld [vmem:[#allocation3 + $0x1bf0] sm:$0xff]
    %v2040 = vld [vmem:[#allocation3 + $0x1bf8] sm:$0xff]
    %v2041 = vld [vmem:[#allocation3 + $0x1c00] sm:$0xff]
    %v2042 = vld [vmem:[#allocation3 + $0x1c08] sm:$0xff]
    %v2043 = vld [vmem:[#allocation3 + $0x1c10] sm:$0xff]
    %v2044 = vld [vmem:[#allocation3 + $0x1c18] sm:$0xff]
    %v2045 = vld [vmem:[#allocation3 + $0x1c20] sm:$0xff]
    %v2046 = vld [vmem:[#allocation3 + $0x1c28] sm:$0xff]
    %v2047 = vld [vmem:[#allocation3 + $0x1c30] sm:$0xff]
    %v2048 = vld [vmem:[#allocation3 + $0x1c38] sm:$0xff]
    %v2049 = vld [vmem:[#allocation3 + $0x1c40] sm:$0xff]
    %v2050 = vld [vmem:[#allocation3 + $0x1c48] sm:$0xff]
    %v2051 = vld [vmem:[#allocation3 + $0x1c50] sm:$0xff]
    %v2052 = vld [vmem:[#allocation3 + $0x1c58] sm:$0xff]
    %v2053 = vld [vmem:[#allocation3 + $0x1c60] sm:$0xff]
    %v2054 = vld [vmem:[#allocation3 + $0x1c68] sm:$0xff]
    %v2055 = vld [vmem:[#allocation3 + $0x1c70] sm:$0xff]
    %v2056 = vld [vmem:[#allocation3 + $0x1c78] sm:$0xff]
    %v2057 = vld [vmem:[#allocation3 + $0x1c80] sm:$0xff]
    %v2058 = vld [vmem:[#allocation3 + $0x1c88] sm:$0xff]
    %v2059 = vld [vmem:[#allocation3 + $0x1c90] sm:$0xff]
    %v2060 = vld [vmem:[#allocation3 + $0x1c98] sm:$0xff]
    %v2061 = vld [vmem:[#allocation3 + $0x1ca0] sm:$0xff]
    %v2062 = vld [vmem:[#allocation3 + $0x1ca8] sm:$0xff]
    %v2063 = vld [vmem:[#allocation3 + $0x1cb0] sm:$0xff]
    %v2064 = vld [vmem:[#allocation3 + $0x1cb8] sm:$0xff]
    %v2065 = vld [vmem:[#allocation3 + $0x1cc0] sm:$0xff]
    %v2066 = vld [vmem:[#allocation3 + $0x1cc8] sm:$0xff]
    %v2067 = vld [vmem:[#allocation3 + $0x1cd0] sm:$0xff]
    %v2068 = vld [vmem:[#allocation3 + $0x1cd8] sm:$0xff]
    %v2069 = vld [vmem:[#allocation3 + $0x1ce0] sm:$0xff]
    %v2070 = vld [vmem:[#allocation3 + $0x1ce8] sm:$0xff]
    %v2071 = vld [vmem:[#allocation3 + $0x1cf0] sm:$0xff]
    %v2072 = vld [vmem:[#allocation3 + $0x1cf8] sm:$0xff]
    %v2073 = vld [vmem:[#allocation3 + $0x1d00] sm:$0xff]
    %v2074 = vld [vmem:[#allocation3 + $0x1d08] sm:$0xff]
    %v2075 = vld [vmem:[#allocation3 + $0x1d10] sm:$0xff]
    %v2076 = vld [vmem:[#allocation3 + $0x1d18] sm:$0xff]
    %v2077 = vld [vmem:[#allocation3 + $0x1d20] sm:$0xff]
    %v2078 = vld [vmem:[#allocation3 + $0x1d28] sm:$0xff]
    %v2079 = vld [vmem:[#allocation3 + $0x1d30] sm:$0xff]
    %v2080 = vld [vmem:[#allocation3 + $0x1d38] sm:$0xff]
    %v2081 = vld [vmem:[#allocation3 + $0x1d40] sm:$0xff]
    %v2082 = vld [vmem:[#allocation3 + $0x1d48] sm:$0xff]
    %v2083 = vld [vmem:[#allocation3 + $0x1d50] sm:$0xff]
    %v2084 = vld [vmem:[#allocation3 + $0x1d58] sm:$0xff]
    %v2085 = vld [vmem:[#allocation3 + $0x1d60] sm:$0xff]
    %v2086 = vld [vmem:[#allocation3 + $0x1d68] sm:$0xff]
    %v2087 = vld [vmem:[#allocation3 + $0x1d70] sm:$0xff]
    %v2088 = vld [vmem:[#allocation3 + $0x1d78] sm:$0xff]
    %v2089 = vld [vmem:[#allocation3 + $0x1d80] sm:$0xff]
    %v2090 = vld [vmem:[#allocation3 + $0x1d88] sm:$0xff]
    %v2091 = vld [vmem:[#allocation3 + $0x1d90] sm:$0xff]
    %v2092 = vld [vmem:[#allocation3 + $0x1d98] sm:$0xff]
    %v2093 = vld [vmem:[#allocation3 + $0x1da0] sm:$0xff]
    %v2094 = vld [vmem:[#allocation3 + $0x1da8] sm:$0xff]
    %v2095 = vld [vmem:[#allocation3 + $0x1db0] sm:$0xff]
    %v2096 = vld [vmem:[#allocation3 + $0x1db8] sm:$0xff]
    %v2097 = vld [vmem:[#allocation3 + $0x1dc0] sm:$0xff]
    %v2098 = vld [vmem:[#allocation3 + $0x1dc8] sm:$0xff]
    %v2099 = vld [vmem:[#allocation3 + $0x1dd0] sm:$0xff]
    %v2100 = vld [vmem:[#allocation3 + $0x1dd8] sm:$0xff]
    %v2101 = vld [vmem:[#allocation3 + $0x1de0] sm:$0xff]
    %v2102 = vld [vmem:[#allocation3 + $0x1de8] sm:$0xff]
    %v2103 = vld [vmem:[#allocation3 + $0x1df0] sm:$0xff]
    %v2104 = vld [vmem:[#allocation3 + $0x1df8] sm:$0xff]
    %v2105 = vld [vmem:[#allocation3 + $0x1e00] sm:$0xff]
    %v2106 = vld [vmem:[#allocation3 + $0x1e08] sm:$0xff]
    %v2107 = vld [vmem:[#allocation3 + $0x1e10] sm:$0xff]
    %v2108 = vld [vmem:[#allocation3 + $0x1e18] sm:$0xff]
    %v2109 = vld [vmem:[#allocation3 + $0x1e20] sm:$0xff]
    %v2110 = vld [vmem:[#allocation3 + $0x1e28] sm:$0xff]
    %v2111 = vld [vmem:[#allocation3 + $0x1e30] sm:$0xff]
    %v2112 = vld [vmem:[#allocation3 + $0x1e38] sm:$0xff]
    %v2113 = vld [vmem:[#allocation3 + $0x1e40] sm:$0xff]
    %v2114 = vld [vmem:[#allocation3 + $0x1e48] sm:$0xff]
    %v2115 = vld [vmem:[#allocation3 + $0x1e50] sm:$0xff]
    %v2116 = vld [vmem:[#allocation3 + $0x1e58] sm:$0xff]
    %v2117 = vld [vmem:[#allocation3 + $0x1e60] sm:$0xff]
    %v2118 = vld [vmem:[#allocation3 + $0x1e68] sm:$0xff]
    %v2119 = vld [vmem:[#allocation3 + $0x1e70] sm:$0xff]
    %v2120 = vld [vmem:[#allocation3 + $0x1e78] sm:$0xff]
    %v2121 = vld [vmem:[#allocation3 + $0x1e80] sm:$0xff]
    %v2122 = vld [vmem:[#allocation3 + $0x1e88] sm:$0xff]
    %v2123 = vld [vmem:[#allocation3 + $0x1e90] sm:$0xff]
    %v2124 = vld [vmem:[#allocation3 + $0x1e98] sm:$0xff]
    %v2125 = vld [vmem:[#allocation3 + $0x1ea0] sm:$0xff]
    %v2126 = vld [vmem:[#allocation3 + $0x1ea8] sm:$0xff]
    %v2127 = vld [vmem:[#allocation3 + $0x1eb0] sm:$0xff]
    %v2128 = vld [vmem:[#allocation3 + $0x1eb8] sm:$0xff]
    %v2129 = vld [vmem:[#allocation3 + $0x1ec0] sm:$0xff]
    %v2130 = vld [vmem:[#allocation3 + $0x1ec8] sm:$0xff]
    %v2131 = vld [vmem:[#allocation3 + $0x1ed0] sm:$0xff]
    %v2132 = vld [vmem:[#allocation3 + $0x1ed8] sm:$0xff]
    %v2133 = vld [vmem:[#allocation3 + $0x1ee0] sm:$0xff]
    %v2134 = vld [vmem:[#allocation3 + $0x1ee8] sm:$0xff]
    %v2135 = vld [vmem:[#allocation3 + $0x1ef0] sm:$0xff]
    %v2136 = vld [vmem:[#allocation3 + $0x1ef8] sm:$0xff]
    %v2137 = vld [vmem:[#allocation3 + $0x1f00] sm:$0xff]
    %v2138 = vld [vmem:[#allocation3 + $0x1f08] sm:$0xff]
    %v2139 = vld [vmem:[#allocation3 + $0x1f10] sm:$0xff]
    %v2140 = vld [vmem:[#allocation3 + $0x1f18] sm:$0xff]
    %v2141 = vld [vmem:[#allocation3 + $0x1f20] sm:$0xff]
    %v2142 = vld [vmem:[#allocation3 + $0x1f28] sm:$0xff]
    %v2143 = vld [vmem:[#allocation3 + $0x1f30] sm:$0xff]
    %v2144 = vld [vmem:[#allocation3 + $0x1f38] sm:$0xff]
    %v2145 = vld [vmem:[#allocation3 + $0x1f40] sm:$0xff]
    %v2146 = vld [vmem:[#allocation3 + $0x1f48] sm:$0xff]
    %v2147 = vld [vmem:[#allocation3 + $0x1f50] sm:$0xff]
    %v2148 = vld [vmem:[#allocation3 + $0x1f58] sm:$0xff]
    %v2149 = vld [vmem:[#allocation3 + $0x1f60] sm:$0xff]
    %v2150 = vld [vmem:[#allocation3 + $0x1f68] sm:$0xff]
    %v2151 = vld [vmem:[#allocation3 + $0x1f70] sm:$0xff]
    %v2152 = vld [vmem:[#allocation3 + $0x1f78] sm:$0xff]
    %v2153 = vld [vmem:[#allocation3 + $0x1f80] sm:$0xff]
    %v2154 = vld [vmem:[#allocation3 + $0x1f88] sm:$0xff]
    %v2155 = vld [vmem:[#allocation3 + $0x1f90] sm:$0xff]
    %v2156 = vld [vmem:[#allocation3 + $0x1f98] sm:$0xff]
    %v2157 = vld [vmem:[#allocation3 + $0x1fa0] sm:$0xff]
    %v2158 = vld [vmem:[#allocation3 + $0x1fa8] sm:$0xff]
    %v2159 = vld [vmem:[#allocation3 + $0x1fb0] sm:$0xff]
    %v2160 = vld [vmem:[#allocation3 + $0x1fb8] sm:$0xff]
    %v2161 = vld [vmem:[#allocation3 + $0x1fc0] sm:$0xff]
    %v2162 = vld [vmem:[#allocation3 + $0x1fc8] sm:$0xff]
    %v2163 = vld [vmem:[#allocation3 + $0x1fd0] sm:$0xff]
    %v2164 = vld [vmem:[#allocation3 + $0x1fd8] sm:$0xff]
    %v2165 = vld [vmem:[#allocation3 + $0x1fe0] sm:$0xff]
    %v2166 = vld [vmem:[#allocation3 + $0x1fe8] sm:$0xff]
    %v2167 = vld [vmem:[#allocation3 + $0x1ff0] sm:$0xff]
    %v2168 = vld [vmem:[#allocation3 + $0x1ff8] sm:$0xff]
    %v2169 = vld [vmem:[#allocation13] sm:$0xff]
    %v2171 = vlaneseq
    %v2172 = vshrl.u32 %v2171, 7
    %v2173 = vsub.s32 0, %v2172
    %v2174 = vrot.slane %v2169, %v2173
    %v2175 = vlaneseq
    %v2176 = vshrl.u32 %v2175, 7
    %v2177 = vsub.s32 1, %v2176
    %v2178 = vrot.slane %v2169, %v2177
    %v2179 = vlaneseq
    %v2180 = vshrl.u32 %v2179, 7
    %v2181 = vsub.s32 2, %v2180
    %v2182 = vrot.slane %v2169, %v2181
    %v2183 = vlaneseq
    %v2184 = vshrl.u32 %v2183, 7
    %v2185 = vsub.s32 3, %v2184
    %v2186 = vrot.slane %v2169, %v2185
    %v2187 = vlaneseq
    %v2188 = vshrl.u32 %v2187, 7
    %v2189 = vsub.s32 4, %v2188
    %v2190 = vrot.slane %v2169, %v2189
    %v2191 = vlaneseq
    %v2192 = vshrl.u32 %v2191, 7
    %v2193 = vsub.s32 5, %v2192
    %v2194 = vrot.slane %v2169, %v2193
    %v2195 = vlaneseq
    %v2196 = vshrl.u32 %v2195, 7
    %v2197 = vsub.s32 6, %v2196
    %v2198 = vrot.slane %v2169, %v2197
    %v2199 = vlaneseq
    %v2200 = vshrl.u32 %v2199, 7
    %v2201 = vsub.s32 7, %v2200
    %v2202 = vrot.slane %v2169, %v2201
    %2211 = vmatprep.subr.bf16.mxu0 %v1146
    %2212 = vmatpush1.bf16.msra.mxu0 %v1145
    %2213 = vmatprep.subr.bf16.mxu0 %v1154
    %2214 = vmatpush1.bf16.msra.mxu0 %v1153
    %2215 = vmatprep.subr.bf16.mxu0 %v1162
    %2216 = vmatpush1.bf16.msra.mxu0 %v1161
    %2217 = vmatprep.subr.bf16.mxu0 %v1170
    %2218 = vmatpush1.bf16.msra.mxu0 %v1169
    %2219 = vmatprep.subr.bf16.mxu0 %v1178
    %2220 = vmatpush1.bf16.msra.mxu0 %v1177
    %2221 = vmatprep.subr.bf16.mxu0 %v1186
    %2222 = vmatpush1.bf16.msra.mxu0 %v1185
    %2223 = vmatprep.subr.bf16.mxu0 %v1194
    %2224 = vmatpush1.bf16.msra.mxu0 %v1193
    %2225 = vmatprep.subr.bf16.mxu0 %v1202
    %2226 = vmatpush1.bf16.msra.mxu0 %v1201
    %2227 = vmatprep.subr.bf16.mxu0 %v1210
    %2228 = vmatpush1.bf16.msra.mxu0 %v1209
    %2229 = vmatprep.subr.bf16.mxu0 %v1218
    %2230 = vmatpush1.bf16.msra.mxu0 %v1217
    %2231 = vmatprep.subr.bf16.mxu0 %v1226
    %2232 = vmatpush1.bf16.msra.mxu0 %v1225
    %2233 = vmatprep.subr.bf16.mxu0 %v1234
    %2234 = vmatpush1.bf16.msra.mxu0 %v1233
    %2235 = vmatprep.subr.bf16.mxu0 %v1242
    %2236 = vmatpush1.bf16.msra.mxu0 %v1241
    %2237 = vmatprep.subr.bf16.mxu0 %v1250
    %2238 = vmatpush1.bf16.msra.mxu0 %v1249
    %2239 = vmatprep.subr.bf16.mxu0 %v1258
    %2240 = vmatpush1.bf16.msra.mxu0 %v1257
    %2241 = vmatprep.subr.bf16.mxu0 %v1266
    %2242 = vmatpush1.bf16.msra.mxu0 %v1265
    %2243 = vmatprep.mubr.bf16.mxu0 %v1126
    %2244 = vmatmul.mubr.bf16.gmra.mrb[0].mxu0 %v1125
    %v2245 = vpop.f32.mrb[0].mxu0
    %v2246 = vadd.f32 %v2174, %v2245
    %v2247 = vpop.f32.mrb[0].mxu0
    %v2248 = vadd.f32 %v2178, %v2247
    %v2249 = vpop.f32.mrb[0].mxu0
    %v2250 = vadd.f32 %v2174, %v2249
    %v2251 = vpop.f32.mrb[0].mxu0
    %v2252 = vadd.f32 %v2178, %v2251
    %2253 = vdwg.mxu0
    %2254 = vmatprep.subr.bf16.mxu0 %v1274
    %2255 = vmatpush1.bf16.msra.mxu0 %v1273
    %2256 = vmatprep.subr.bf16.mxu0 %v1282
    %2257 = vmatpush1.bf16.msra.mxu0 %v1281
    %2258 = vmatprep.subr.bf16.mxu0 %v1290
    %2259 = vmatpush1.bf16.msra.mxu0 %v1289
    %2260 = vmatprep.subr.bf16.mxu0 %v1298
    %2261 = vmatpush1.bf16.msra.mxu0 %v1297
    %2262 = vmatprep.subr.bf16.mxu0 %v1306
    %2263 = vmatpush1.bf16.msra.mxu0 %v1305
    %2264 = vmatprep.subr.bf16.mxu0 %v1314
    %2265 = vmatpush1.bf16.msra.mxu0 %v1313
    %2266 = vmatprep.subr.bf16.mxu0 %v1322
    %2267 = vmatpush1.bf16.msra.mxu0 %v1321
    %2268 = vmatprep.subr.bf16.mxu0 %v1330
    %2269 = vmatpush1.bf16.msra.mxu0 %v1329
    %2270 = vmatprep.subr.bf16.mxu0 %v1338
    %2271 = vmatpush1.bf16.msra.mxu0 %v1337
    %2272 = vmatprep.subr.bf16.mxu0 %v1346
    %2273 = vmatpush1.bf16.msra.mxu0 %v1345
    %2274 = vmatprep.subr.bf16.mxu0 %v1354
    %2275 = vmatpush1.bf16.msra.mxu0 %v1353
    %2276 = vmatprep.subr.bf16.mxu0 %v1362
    %2277 = vmatpush1.bf16.msra.mxu0 %v1361
    %2278 = vmatprep.subr.bf16.mxu0 %v1370
    %2279 = vmatpush1.bf16.msra.mxu0 %v1369
    %2280 = vmatprep.subr.bf16.mxu0 %v1378
    %2281 = vmatpush1.bf16.msra.mxu0 %v1377
    %2282 = vmatprep.subr.bf16.mxu0 %v1386
    %2283 = vmatpush1.bf16.msra.mxu0 %v1385
    %2284 = vmatprep.subr.bf16.mxu0 %v1394
    %2285 = vmatpush1.bf16.msra.mxu0 %v1393
    %2286 = vmatprep.mubr.bf16.mxu0 %v1128
    %2287 = vmatmul.mubr.bf16.gmra.mrb[0].mxu0 %v1127
    %v2288 = vpop.f32.mrb[0].mxu0
    %v2289 = vadd.f32 %v2246, %v2288
    %v2290 = vpop.f32.mrb[0].mxu0
    %v2291 = vadd.f32 %v2248, %v2290
    %v2292 = vpop.f32.mrb[0].mxu0
    %v2293 = vadd.f32 %v2250, %v2292
    %v2294 = vpop.f32.mrb[0].mxu0
    %v2295 = vadd.f32 %v2252, %v2294
    %2296 = vdwg.mxu0
    %2297 = vmatprep.subr.bf16.mxu0 %v1402
    %2298 = vmatpush1.bf16.msra.mxu0 %v1401
    %2299 = vmatprep.subr.bf16.mxu0 %v1410
    %2300 = vmatpush1.bf16.msra.mxu0 %v1409
    %2301 = vmatprep.subr.bf16.mxu0 %v1418
    %2302 = vmatpush1.bf16.msra.mxu0 %v1417
    %2303 = vmatprep.subr.bf16.mxu0 %v1426
    %2304 = vmatpush1.bf16.msra.mxu0 %v1425
    %2305 = vmatprep.subr.bf16.mxu0 %v1434
    %2306 = vmatpush1.bf16.msra.mxu0 %v1433
    %2307 = vmatprep.subr.bf16.mxu0 %v1442
    %2308 = vmatpush1.bf16.msra.mxu0 %v1441
    %2309 = vmatprep.subr.bf16.mxu0 %v1450
    %2310 = vmatpush1.bf16.msra.mxu0 %v1449
    %2311 = vmatprep.subr.bf16.mxu0 %v1458
    %2312 = vmatpush1.bf16.msra.mxu0 %v1457
    %2313 = vmatprep.subr.bf16.mxu0 %v1466
    %2314 = vmatpush1.bf16.msra.mxu0 %v1465
    %2315 = vmatprep.subr.bf16.mxu0 %v1474
    %2316 = vmatpush1.bf16.msra.mxu0 %v1473
    %2317 = vmatprep.subr.bf16.mxu0 %v1482
    %2318 = vmatpush1.bf16.msra.mxu0 %v1481
    %2319 = vmatprep.subr.bf16.mxu0 %v1490
    %2320 = vmatpush1.bf16.msra.mxu0 %v1489
    %2321 = vmatprep.subr.bf16.mxu0 %v1498
    %2322 = vmatpush1.bf16.msra.mxu0 %v1497
    %2323 = vmatprep.subr.bf16.mxu0 %v1506
    %2324 = vmatpush1.bf16.msra.mxu0 %v1505
    %2325 = vmatprep.subr.bf16.mxu0 %v1514
    %2326 = vmatpush1.bf16.msra.mxu0 %v1513
    %2327 = vmatprep.subr.bf16.mxu0 %v1522
    %2328 = vmatpush1.bf16.msra.mxu0 %v1521
    %2329 = vmatprep.mubr.bf16.mxu0 %v1130
    %2330 = vmatmul.mubr.bf16.gmra.mrb[0].mxu0 %v1129
    %v2331 = vpop.f32.mrb[0].mxu0
    %v2332 = vadd.f32 %v2289, %v2331
    %v2333 = vpop.f32.mrb[0].mxu0
    %v2334 = vadd.f32 %v2291, %v2333
    %v2335 = vpop.f32.mrb[0].mxu0
    %v2336 = vadd.f32 %v2293, %v2335
    %v2337 = vpop.f32.mrb[0].mxu0
    %v2338 = vadd.f32 %v2295, %v2337
    %2339 = vdwg.mxu0
    %2340 = vmatprep.subr.bf16.mxu0 %v1530
    %2341 = vmatpush1.bf16.msra.mxu0 %v1529
    %2342 = vmatprep.subr.bf16.mxu0 %v1538
    %2343 = vmatpush1.bf16.msra.mxu0 %v1537
    %2344 = vmatprep.subr.bf16.mxu0 %v1546
    %2345 = vmatpush1.bf16.msra.mxu0 %v1545
    %2346 = vmatprep.subr.bf16.mxu0 %v1554
    %2347 = vmatpush1.bf16.msra.mxu0 %v1553
    %2348 = vmatprep.subr.bf16.mxu0 %v1562
    %2349 = vmatpush1.bf16.msra.mxu0 %v1561
    %2350 = vmatprep.subr.bf16.mxu0 %v1570
    %2351 = vmatpush1.bf16.msra.mxu0 %v1569
    %2352 = vmatprep.subr.bf16.mxu0 %v1578
    %2353 = vmatpush1.bf16.msra.mxu0 %v1577
    %2354 = vmatprep.subr.bf16.mxu0 %v1586
    %2355 = vmatpush1.bf16.msra.mxu0 %v1585
    %2356 = vmatprep.subr.bf16.mxu0 %v1594
    %2357 = vmatpush1.bf16.msra.mxu0 %v1593
    %2358 = vmatprep.subr.bf16.mxu0 %v1602
    %2359 = vmatpush1.bf16.msra.mxu0 %v1601
    %2360 = vmatprep.subr.bf16.mxu0 %v1610
    %2361 = vmatpush1.bf16.msra.mxu0 %v1609
    %2362 = vmatprep.subr.bf16.mxu0 %v1618
    %2363 = vmatpush1.bf16.msra.mxu0 %v1617
    %2364 = vmatprep.subr.bf16.mxu0 %v1626
    %2365 = vmatpush1.bf16.msra.mxu0 %v1625
    %2366 = vmatprep.subr.bf16.mxu0 %v1634
    %2367 = vmatpush1.bf16.msra.mxu0 %v1633
    %2368 = vmatprep.subr.bf16.mxu0 %v1642
    %2369 = vmatpush1.bf16.msra.mxu0 %v1641
    %2370 = vmatprep.subr.bf16.mxu0 %v1650
    %2371 = vmatpush1.bf16.msra.mxu0 %v1649
    %2372 = vmatprep.mubr.bf16.mxu0 %v1132
    %2373 = vmatmul.mubr.bf16.gmra.mrb[0].mxu0 %v1131
    %v2374 = vpop.f32.mrb[0].mxu0
    %v2375 = vadd.f32 %v2332, %v2374
    %v2376 = vpop.f32.mrb[0].mxu0
    %v2377 = vadd.f32 %v2334, %v2376
    %v2378 = vpop.f32.mrb[0].mxu0
    %v2379 = vadd.f32 %v2336, %v2378
    %v2380 = vpop.f32.mrb[0].mxu0
    %v2381 = vadd.f32 %v2338, %v2380
    %2382 = vdwg.mxu0
    %2383 = vmatprep.subr.bf16.mxu0 %v1658
    %2384 = vmatpush1.bf16.msra.mxu0 %v1657
    %2385 = vmatprep.subr.bf16.mxu0 %v1666
    %2386 = vmatpush1.bf16.msra.mxu0 %v1665
    %2387 = vmatprep.subr.bf16.mxu0 %v1674
    %2388 = vmatpush1.bf16.msra.mxu0 %v1673
    %2389 = vmatprep.subr.bf16.mxu0 %v1682
    %2390 = vmatpush1.bf16.msra.mxu0 %v1681
    %2391 = vmatprep.subr.bf16.mxu0 %v1690
    %2392 = vmatpush1.bf16.msra.mxu0 %v1689
    %2393 = vmatprep.subr.bf16.mxu0 %v1698
    %2394 = vmatpush1.bf16.msra.mxu0 %v1697
    %2395 = vmatprep.subr.bf16.mxu0 %v1706
    %2396 = vmatpush1.bf16.msra.mxu0 %v1705
    %2397 = vmatprep.subr.bf16.mxu0 %v1714
    %2398 = vmatpush1.bf16.msra.mxu0 %v1713
    %2399 = vmatprep.subr.bf16.mxu0 %v1722
    %2400 = vmatpush1.bf16.msra.mxu0 %v1721
    %2401 = vmatprep.subr.bf16.mxu0 %v1730
    %2402 = vmatpush1.bf16.msra.mxu0 %v1729
    %2403 = vmatprep.subr.bf16.mxu0 %v1738
    %2404 = vmatpush1.bf16.msra.mxu0 %v1737
    %2405 = vmatprep.subr.bf16.mxu0 %v1746
    %2406 = vmatpush1.bf16.msra.mxu0 %v1745
    %2407 = vmatprep.subr.bf16.mxu0 %v1754
    %2408 = vmatpush1.bf16.msra.mxu0 %v1753
    %2409 = vmatprep.subr.bf16.mxu0 %v1762
    %2410 = vmatpush1.bf16.msra.mxu0 %v1761
    %2411 = vmatprep.subr.bf16.mxu0 %v1770
    %2412 = vmatpush1.bf16.msra.mxu0 %v1769
    %2413 = vmatprep.subr.bf16.mxu0 %v1778
    %2414 = vmatpush1.bf16.msra.mxu0 %v1777
    %2415 = vmatprep.mubr.bf16.mxu0 %v1134
    %2416 = vmatmul.mubr.bf16.gmra.mrb[0].mxu0 %v1133
    %v2417 = vpop.f32.mrb[0].mxu0
    %v2418 = vadd.f32 %v2375, %v2417
    %v2419 = vpop.f32.mrb[0].mxu0
    %v2420 = vadd.f32 %v2377, %v2419
    %v2421 = vpop.f32.mrb[0].mxu0
    %v2422 = vadd.f32 %v2379, %v2421
    %v2423 = vpop.f32.mrb[0].mxu0
    %v2424 = vadd.f32 %v2381, %v2423
    %2425 = vdwg.mxu0
    %2426 = vmatprep.subr.bf16.mxu0 %v1786
    %2427 = vmatpush1.bf16.msra.mxu0 %v1785
    %2428 = vmatprep.subr.bf16.mxu0 %v1794
    %2429 = vmatpush1.bf16.msra.mxu0 %v1793
    %2430 = vmatprep.subr.bf16.mxu0 %v1802
    %2431 = vmatpush1.bf16.msra.mxu0 %v1801
    %2432 = vmatprep.subr.bf16.mxu0 %v1810
    %2433 = vmatpush1.bf16.msra.mxu0 %v1809
    %2434 = vmatprep.subr.bf16.mxu0 %v1818
    %2435 = vmatpush1.bf16.msra.mxu0 %v1817
    %2436 = vmatprep.subr.bf16.mxu0 %v1826
    %2437 = vmatpush1.bf16.msra.mxu0 %v1825
    %2438 = vmatprep.subr.bf16.mxu0 %v1834
    %2439 = vmatpush1.bf16.msra.mxu0 %v1833
    %2440 = vmatprep.subr.bf16.mxu0 %v1842
    %2441 = vmatpush1.bf16.msra.mxu0 %v1841
    %2442 = vmatprep.subr.bf16.mxu0 %v1850
    %2443 = vmatpush1.bf16.msra.mxu0 %v1849
    %2444 = vmatprep.subr.bf16.mxu0 %v1858
    %2445 = vmatpush1.bf16.msra.mxu0 %v1857
    %2446 = vmatprep.subr.bf16.mxu0 %v1866
    %2447 = vmatpush1.bf16.msra.mxu0 %v1865
    %2448 = vmatprep.subr.bf16.mxu0 %v1874
    %2449 = vmatpush1.bf16.msra.mxu0 %v1873
    %2450 = vmatprep.subr.bf16.mxu0 %v1882
    %2451 = vmatpush1.bf16.msra.mxu0 %v1881
    %2452 = vmatprep.subr.bf16.mxu0 %v1890
    %2453 = vmatpush1.bf16.msra.mxu0 %v1889
    %2454 = vmatprep.subr.bf16.mxu0 %v1898
    %2455 = vmatpush1.bf16.msra.mxu0 %v1897
    %2456 = vmatprep.subr.bf16.mxu0 %v1906
    %2457 = vmatpush1.bf16.msra.mxu0 %v1905
    %2458 = vmatprep.mubr.bf16.mxu0 %v1136
    %2459 = vmatmul.mubr.bf16.gmra.mrb[0].mxu0 %v1135
    %v2460 = vpop.f32.mrb[0].mxu0
    %v2461 = vadd.f32 %v2418, %v2460
    %v2462 = vpop.f32.mrb[0].mxu0
    %v2463 = vadd.f32 %v2420, %v2462
    %v2464 = vpop.f32.mrb[0].mxu0
    %v2465 = vadd.f32 %v2422, %v2464
    %v2466 = vpop.f32.mrb[0].mxu0
    %v2467 = vadd.f32 %v2424, %v2466
    %2468 = vdwg.mxu0
    %2469 = vmatprep.subr.bf16.mxu0 %v1914
    %2470 = vmatpush1.bf16.msra.mxu0 %v1913
    %2471 = vmatprep.subr.bf16.mxu0 %v1922
    %2472 = vmatpush1.bf16.msra.mxu0 %v1921
    %2473 = vmatprep.subr.bf16.mxu0 %v1930
    %2474 = vmatpush1.bf16.msra.mxu0 %v1929
    %2475 = vmatprep.subr.bf16.mxu0 %v1938
    %2476 = vmatpush1.bf16.msra.mxu0 %v1937
    %2477 = vmatprep.subr.bf16.mxu0 %v1946
    %2478 = vmatpush1.bf16.msra.mxu0 %v1945
    %2479 = vmatprep.subr.bf16.mxu0 %v1954
    %2480 = vmatpush1.bf16.msra.mxu0 %v1953
    %2481 = vmatprep.subr.bf16.mxu0 %v1962
    %2482 = vmatpush1.bf16.msra.mxu0 %v1961
    %2483 = vmatprep.subr.bf16.mxu0 %v1970
    %2484 = vmatpush1.bf16.msra.mxu0 %v1969
    %2485 = vmatprep.subr.bf16.mxu0 %v1978
    %2486 = vmatpush1.bf16.msra.mxu0 %v1977
    %2487 = vmatprep.subr.bf16.mxu0 %v1986
    %2488 = vmatpush1.bf16.msra.mxu0 %v1985
    %2489 = vmatprep.subr.bf16.mxu0 %v1994
    %2490 = vmatpush1.bf16.msra.mxu0 %v1993
    %2491 = vmatprep.subr.bf16.mxu0 %v2002
    %2492 = vmatpush1.bf16.msra.mxu0 %v2001
    %2493 = vmatprep.subr.bf16.mxu0 %v2010
    %2494 = vmatpush1.bf16.msra.mxu0 %v2009
    %2495 = vmatprep.subr.bf16.mxu0 %v2018
    %2496 = vmatpush1.bf16.msra.mxu0 %v2017
    %2497 = vmatprep.subr.bf16.mxu0 %v2026
    %2498 = vmatpush1.bf16.msra.mxu0 %v2025
    %2499 = vmatprep.subr.bf16.mxu0 %v2034
    %2500 = vmatpush1.bf16.msra.mxu0 %v2033
    %2501 = vmatprep.mubr.bf16.mxu0 %v1138
    %2502 = vmatmul.mubr.bf16.gmra.mrb[0].mxu0 %v1137
    %v2503 = vpop.f32.mrb[0].mxu0
    %v2504 = vadd.f32 %v2461, %v2503
    %v2505 = vpop.f32.mrb[0].mxu0
    %v2506 = vadd.f32 %v2463, %v2505
    %v2507 = vpop.f32.mrb[0].mxu0
    %v2508 = vadd.f32 %v2465, %v2507
    %v2509 = vpop.f32.mrb[0].mxu0
    %v2510 = vadd.f32 %v2467, %v2509
    %2511 = vdwg.mxu0
    %2512 = vmatprep.subr.bf16.mxu0 %v2042
    %2513 = vmatpush1.bf16.msra.mxu0 %v2041
    %2514 = vmatprep.subr.bf16.mxu0 %v2050
    %2515 = vmatpush1.bf16.msra.mxu0 %v2049
    %2516 = vmatprep.subr.bf16.mxu0 %v2058
    %2517 = vmatpush1.bf16.msra.mxu0 %v2057
    %2518 = vmatprep.subr.bf16.mxu0 %v2066
    %2519 = vmatpush1.bf16.msra.mxu0 %v2065
    %2520 = vmatprep.subr.bf16.mxu0 %v2074
    %2521 = vmatpush1.bf16.msra.mxu0 %v2073
    %2522 = vmatprep.subr.bf16.mxu0 %v2082
    %2523 = vmatpush1.bf16.msra.mxu0 %v2081
    %2524 = vmatprep.subr.bf16.mxu0 %v2090
    %2525 = vmatpush1.bf16.msra.mxu0 %v2089
    %2526 = vmatprep.subr.bf16.mxu0 %v2098
    %2527 = vmatpush1.bf16.msra.mxu0 %v2097
    %2528 = vmatprep.subr.bf16.mxu0 %v2106
    %2529 = vmatpush1.bf16.msra.mxu0 %v2105
    %2530 = vmatprep.subr.bf16.mxu0 %v2114
    %2531 = vmatpush1.bf16.msra.mxu0 %v2113
    %2532 = vmatprep.subr.bf16.mxu0 %v2122
    %2533 = vmatpush1.bf16.msra.mxu0 %v2121
    %2534 = vmatprep.subr.bf16.mxu0 %v2130
    %2535 = vmatpush1.bf16.msra.mxu0 %v2129
    %2536 = vmatprep.subr.bf16.mxu0 %v2138
    %2537 = vmatpush1.bf16.msra.mxu0 %v2137
    %2538 = vmatprep.subr.bf16.mxu0 %v2146
    %2539 = vmatpush1.bf16.msra.mxu0 %v2145
    %2540 = vmatprep.subr.bf16.mxu0 %v2154
    %2541 = vmatpush1.bf16.msra.mxu0 %v2153
    %2542 = vmatprep.subr.bf16.mxu0 %v2162
    %2543 = vmatpush1.bf16.msra.mxu0 %v2161
    %2544 = vmatprep.mubr.bf16.mxu0 %v1140
    %2545 = vmatmul.mubr.bf16.gmra.mrb[0].mxu0 %v1139
    %v2546 = vpop.f32.mrb[0].mxu0
    %v2547 = vadd.f32 %v2504, %v2546
    %v2548 = vpop.f32.mrb[0].mxu0
    %v2549 = vadd.f32 %v2506, %v2548
    %v2550 = vpop.f32.mrb[0].mxu0
    %v2551 = vadd.f32 %v2508, %v2550
    %v2552 = vpop.f32.mrb[0].mxu0
    %v2553 = vadd.f32 %v2510, %v2552
    %2554 = vdwg.mxu0
    %2555 = vmatprep.subr.bf16.mxu0 %v1148
    %2556 = vmatpush1.bf16.msra.mxu0 %v1147
    %2557 = vmatprep.subr.bf16.mxu0 %v1156
    %2558 = vmatpush1.bf16.msra.mxu0 %v1155
    %2559 = vmatprep.subr.bf16.mxu0 %v1164
    %2560 = vmatpush1.bf16.msra.mxu0 %v1163
    %2561 = vmatprep.subr.bf16.mxu0 %v1172
    %2562 = vmatpush1.bf16.msra.mxu0 %v1171
    %2563 = vmatprep.subr.bf16.mxu0 %v1180
    %2564 = vmatpush1.bf16.msra.mxu0 %v1179
    %2565 = vmatprep.subr.bf16.mxu0 %v1188
    %2566 = vmatpush1.bf16.msra.mxu0 %v1187
    %2567 = vmatprep.subr.bf16.mxu0 %v1196
    %2568 = vmatpush1.bf16.msra.mxu0 %v1195
    %2569 = vmatprep.subr.bf16.mxu0 %v1204
    %2570 = vmatpush1.bf16.msra.mxu0 %v1203
    %2571 = vmatprep.subr.bf16.mxu0 %v1212
    %2572 = vmatpush1.bf16.msra.mxu0 %v1211
    %2573 = vmatprep.subr.bf16.mxu0 %v1220
    %2574 = vmatpush1.bf16.msra.mxu0 %v1219
    %2575 = vmatprep.subr.bf16.mxu0 %v1228
    %2576 = vmatpush1.bf16.msra.mxu0 %v1227
    %2577 = vmatprep.subr.bf16.mxu0 %v1236
    %2578 = vmatpush1.bf16.msra.mxu0 %v1235
    %2579 = vmatprep.subr.bf16.mxu0 %v1244
    %2580 = vmatpush1.bf16.msra.mxu0 %v1243
    %2581 = vmatprep.subr.bf16.mxu0 %v1252
    %2582 = vmatpush1.bf16.msra.mxu0 %v1251
    %2583 = vmatprep.subr.bf16.mxu0 %v1260
    %2584 = vmatpush1.bf16.msra.mxu0 %v1259
    %2585 = vmatprep.subr.bf16.mxu0 %v1268
    %2586 = vmatpush1.bf16.msra.mxu0 %v1267
    %2587 = vmatprep.mubr.bf16.mxu0 %v1126
    %2588 = vmatmul.mubr.bf16.gmra.mrb[0].mxu0 %v1125
    %v2589 = vpop.f32.mrb[0].mxu0
    %v2590 = vadd.f32 %v2182, %v2589
    %v2591 = vpop.f32.mrb[0].mxu0
    %v2592 = vadd.f32 %v2186, %v2591
    %v2593 = vpop.f32.mrb[0].mxu0
    %v2594 = vadd.f32 %v2182, %v2593
    %v2595 = vpop.f32.mrb[0].mxu0
    %v2596 = vadd.f32 %v2186, %v2595
    %2597 = vdwg.mxu0
    %2598 = vmatprep.subr.bf16.mxu0 %v1276
    %2599 = vmatpush1.bf16.msra.mxu0 %v1275
    %2600 = vmatprep.subr.bf16.mxu0 %v1284
    %2601 = vmatpush1.bf16.msra.mxu0 %v1283
    %2602 = vmatprep.subr.bf16.mxu0 %v1292
    %2603 = vmatpush1.bf16.msra.mxu0 %v1291
    %2604 = vmatprep.subr.bf16.mxu0 %v1300
    %2605 = vmatpush1.bf16.msra.mxu0 %v1299
    %2606 = vmatprep.subr.bf16.mxu0 %v1308
    %2607 = vmatpush1.bf16.msra.mxu0 %v1307
    %2608 = vmatprep.subr.bf16.mxu0 %v1316
    %2609 = vmatpush1.bf16.msra.mxu0 %v1315
    %2610 = vmatprep.subr.bf16.mxu0 %v1324
    %2611 = vmatpush1.bf16.msra.mxu0 %v1323
    %2612 = vmatprep.subr.bf16.mxu0 %v1332
    %2613 = vmatpush1.bf16.msra.mxu0 %v1331
    %2614 = vmatprep.subr.bf16.mxu0 %v1340
    %2615 = vmatpush1.bf16.msra.mxu0 %v1339
    %2616 = vmatprep.subr.bf16.mxu0 %v1348
    %2617 = vmatpush1.bf16.msra.mxu0 %v1347
    %2618 = vmatprep.subr.bf16.mxu0 %v1356
    %2619 = vmatpush1.bf16.msra.mxu0 %v1355
    %2620 = vmatprep.subr.bf16.mxu0 %v1364
    %2621 = vmatpush1.bf16.msra.mxu0 %v1363
    %2622 = vmatprep.subr.bf16.mxu0 %v1372
    %2623 = vmatpush1.bf16.msra.mxu0 %v1371
    %2624 = vmatprep.subr.bf16.mxu0 %v1380
    %2625 = vmatpush1.bf16.msra.mxu0 %v1379
    %2626 = vmatprep.subr.bf16.mxu0 %v1388
    %2627 = vmatpush1.bf16.msra.mxu0 %v1387
    %2628 = vmatprep.subr.bf16.mxu0 %v1396
    %2629 = vmatpush1.bf16.msra.mxu0 %v1395
    %2630 = vmatprep.mubr.bf16.mxu0 %v1128
    %2631 = vmatmul.mubr.bf16.gmra.mrb[0].mxu0 %v1127
    %v2632 = vpop.f32.mrb[0].mxu0
    %v2633 = vadd.f32 %v2590, %v2632
    %v2634 = vpop.f32.mrb[0].mxu0
    %v2635 = vadd.f32 %v2592, %v2634
    %v2636 = vpop.f32.mrb[0].mxu0
    %v2637 = vadd.f32 %v2594, %v2636
    %v2638 = vpop.f32.mrb[0].mxu0
    %v2639 = vadd.f32 %v2596, %v2638
    %2640 = vdwg.mxu0
    %2641 = vmatprep.subr.bf16.mxu0 %v1404
    %2642 = vmatpush1.bf16.msra.mxu0 %v1403
    %2643 = vmatprep.subr.bf16.mxu0 %v1412
    %2644 = vmatpush1.bf16.msra.mxu0 %v1411
    %2645 = vmatprep.subr.bf16.mxu0 %v1420
    %2646 = vmatpush1.bf16.msra.mxu0 %v1419
    %2647 = vmatprep.subr.bf16.mxu0 %v1428
    %2648 = vmatpush1.bf16.msra.mxu0 %v1427
    %2649 = vmatprep.subr.bf16.mxu0 %v1436
    %2650 = vmatpush1.bf16.msra.mxu0 %v1435
    %2651 = vmatprep.subr.bf16.mxu0 %v1444
    %2652 = vmatpush1.bf16.msra.mxu0 %v1443
    %2653 = vmatprep.subr.bf16.mxu0 %v1452
    %2654 = vmatpush1.bf16.msra.mxu0 %v1451
    %2655 = vmatprep.subr.bf16.mxu0 %v1460
    %2656 = vmatpush1.bf16.msra.mxu0 %v1459
    %2657 = vmatprep.subr.bf16.mxu0 %v1468
    %2658 = vmatpush1.bf16.msra.mxu0 %v1467
    %2659 = vmatprep.subr.bf16.mxu0 %v1476
    %2660 = vmatpush1.bf16.msra.mxu0 %v1475
    %2661 = vmatprep.subr.bf16.mxu0 %v1484
    %2662 = vmatpush1.bf16.msra.mxu0 %v1483
    %2663 = vmatprep.subr.bf16.mxu0 %v1492
    %2664 = vmatpush1.bf16.msra.mxu0 %v1491
    %2665 = vmatprep.subr.bf16.mxu0 %v1500
    %2666 = vmatpush1.bf16.msra.mxu0 %v1499
    %2667 = vmatprep.subr.bf16.mxu0 %v1508
    %2668 = vmatpush1.bf16.msra.mxu0 %v1507
    %2669 = vmatprep.subr.bf16.mxu0 %v1516
    %2670 = vmatpush1.bf16.msra.mxu0 %v1515
    %2671 = vmatprep.subr.bf16.mxu0 %v1524
    %2672 = vmatpush1.bf16.msra.mxu0 %v1523
    %2673 = vmatprep.mubr.bf16.mxu0 %v1130
    %2674 = vmatmul.mubr.bf16.gmra.mrb[0].mxu0 %v1129
    %v2675 = vpop.f32.mrb[0].mxu0
    %v2676 = vadd.f32 %v2633, %v2675
    %v2677 = vpop.f32.mrb[0].mxu0
    %v2678 = vadd.f32 %v2635, %v2677
    %v2679 = vpop.f32.mrb[0].mxu0
    %v2680 = vadd.f32 %v2637, %v2679
    %v2681 = vpop.f32.mrb[0].mxu0
    %v2682 = vadd.f32 %v2639, %v2681
    %2683 = vdwg.mxu0
    %2684 = vmatprep.subr.bf16.mxu0 %v1532
    %2685 = vmatpush1.bf16.msra.mxu0 %v1531
    %2686 = vmatprep.subr.bf16.mxu0 %v1540
    %2687 = vmatpush1.bf16.msra.mxu0 %v1539
    %2688 = vmatprep.subr.bf16.mxu0 %v1548
    %2689 = vmatpush1.bf16.msra.mxu0 %v1547
    %2690 = vmatprep.subr.bf16.mxu0 %v1556
    %2691 = vmatpush1.bf16.msra.mxu0 %v1555
    %2692 = vmatprep.subr.bf16.mxu0 %v1564
    %2693 = vmatpush1.bf16.msra.mxu0 %v1563
    %2694 = vmatprep.subr.bf16.mxu0 %v1572
    %2695 = vmatpush1.bf16.msra.mxu0 %v1571
    %2696 = vmatprep.subr.bf16.mxu0 %v1580
    %2697 = vmatpush1.bf16.msra.mxu0 %v1579
    %2698 = vmatprep.subr.bf16.mxu0 %v1588
    %2699 = vmatpush1.bf16.msra.mxu0 %v1587
    %2700 = vmatprep.subr.bf16.mxu0 %v1596
    %2701 = vmatpush1.bf16.msra.mxu0 %v1595
    %2702 = vmatprep.subr.bf16.mxu0 %v1604
    %2703 = vmatpush1.bf16.msra.mxu0 %v1603
    %2704 = vmatprep.subr.bf16.mxu0 %v1612
    %2705 = vmatpush1.bf16.msra.mxu0 %v1611
    %2706 = vmatprep.subr.bf16.mxu0 %v1620
    %2707 = vmatpush1.bf16.msra.mxu0 %v1619
    %2708 = vmatprep.subr.bf16.mxu0 %v1628
    %2709 = vmatpush1.bf16.msra.mxu0 %v1627
    %2710 = vmatprep.subr.bf16.mxu0 %v1636
    %2711 = vmatpush1.bf16.msra.mxu0 %v1635
    %2712 = vmatprep.subr.bf16.mxu0 %v1644
    %2713 = vmatpush1.bf16.msra.mxu0 %v1643
    %2714 = vmatprep.subr.bf16.mxu0 %v1652
    %2715 = vmatpush1.bf16.msra.mxu0 %v1651
    %2716 = vmatprep.mubr.bf16.mxu0 %v1132
    %2717 = vmatmul.mubr.bf16.gmra.mrb[0].mxu0 %v1131
    %v2718 = vpop.f32.mrb[0].mxu0
    %v2719 = vadd.f32 %v2676, %v2718
    %v2720 = vpop.f32.mrb[0].mxu0
    %v2721 = vadd.f32 %v2678, %v2720
    %v2722 = vpop.f32.mrb[0].mxu0
    %v2723 = vadd.f32 %v2680, %v2722
    %v2724 = vpop.f32.mrb[0].mxu0
    %v2725 = vadd.f32 %v2682, %v2724
    %2726 = vdwg.mxu0
    %2727 = vmatprep.subr.bf16.mxu0 %v1660
    %2728 = vmatpush1.bf16.msra.mxu0 %v1659
    %2729 = vmatprep.subr.bf16.mxu0 %v1668
    %2730 = vmatpush1.bf16.msra.mxu0 %v1667
    %2731 = vmatprep.subr.bf16.mxu0 %v1676
    %2732 = vmatpush1.bf16.msra.mxu0 %v1675
    %2733 = vmatprep.subr.bf16.mxu0 %v1684
    %2734 = vmatpush1.bf16.msra.mxu0 %v1683
    %2735 = vmatprep.subr.bf16.mxu0 %v1692
    %2736 = vmatpush1.bf16.msra.mxu0 %v1691
    %2737 = vmatprep.subr.bf16.mxu0 %v1700
    %2738 = vmatpush1.bf16.msra.mxu0 %v1699
    %2739 = vmatprep.subr.bf16.mxu0 %v1708
    %2740 = vmatpush1.bf16.msra.mxu0 %v1707
    %2741 = vmatprep.subr.bf16.mxu0 %v1716
    %2742 = vmatpush1.bf16.msra.mxu0 %v1715
    %2743 = vmatprep.subr.bf16.mxu0 %v1724
    %2744 = vmatpush1.bf16.msra.mxu0 %v1723
    %2745 = vmatprep.subr.bf16.mxu0 %v1732
    %2746 = vmatpush1.bf16.msra.mxu0 %v1731
    %2747 = vmatprep.subr.bf16.mxu0 %v1740
    %2748 = vmatpush1.bf16.msra.mxu0 %v1739
    %2749 = vmatprep.subr.bf16.mxu0 %v1748
    %2750 = vmatpush1.bf16.msra.mxu0 %v1747
    %2751 = vmatprep.subr.bf16.mxu0 %v1756
    %2752 = vmatpush1.bf16.msra.mxu0 %v1755
    %2753 = vmatprep.subr.bf16.mxu0 %v1764
    %2754 = vmatpush1.bf16.msra.mxu0 %v1763
    %2755 = vmatprep.subr.bf16.mxu0 %v1772
    %2756 = vmatpush1.bf16.msra.mxu0 %v1771
    %2757 = vmatprep.subr.bf16.mxu0 %v1780
    %2758 = vmatpush1.bf16.msra.mxu0 %v1779
    %2759 = vmatprep.mubr.bf16.mxu0 %v1134
    %2760 = vmatmul.mubr.bf16.gmra.mrb[0].mxu0 %v1133
    %v2761 = vpop.f32.mrb[0].mxu0
    %v2762 = vadd.f32 %v2719, %v2761
    %v2763 = vpop.f32.mrb[0].mxu0
    %v2764 = vadd.f32 %v2721, %v2763
    %v2765 = vpop.f32.mrb[0].mxu0
    %v2766 = vadd.f32 %v2723, %v2765
    %v2767 = vpop.f32.mrb[0].mxu0
    %v2768 = vadd.f32 %v2725, %v2767
    %2769 = vdwg.mxu0
    %2770 = vmatprep.subr.bf16.mxu0 %v1788
    %2771 = vmatpush1.bf16.msra.mxu0 %v1787
    %2772 = vmatprep.subr.bf16.mxu0 %v1796
    %2773 = vmatpush1.bf16.msra.mxu0 %v1795
    %2774 = vmatprep.subr.bf16.mxu0 %v1804
    %2775 = vmatpush1.bf16.msra.mxu0 %v1803
    %2776 = vmatprep.subr.bf16.mxu0 %v1812
    %2777 = vmatpush1.bf16.msra.mxu0 %v1811
    %2778 = vmatprep.subr.bf16.mxu0 %v1820
    %2779 = vmatpush1.bf16.msra.mxu0 %v1819
    %2780 = vmatprep.subr.bf16.mxu0 %v1828
    %2781 = vmatpush1.bf16.msra.mxu0 %v1827
    %2782 = vmatprep.subr.bf16.mxu0 %v1836
    %2783 = vmatpush1.bf16.msra.mxu0 %v1835
    %2784 = vmatprep.subr.bf16.mxu0 %v1844
    %2785 = vmatpush1.bf16.msra.mxu0 %v1843
    %2786 = vmatprep.subr.bf16.mxu0 %v1852
    %2787 = vmatpush1.bf16.msra.mxu0 %v1851
    %2788 = vmatprep.subr.bf16.mxu0 %v1860
    %2789 = vmatpush1.bf16.msra.mxu0 %v1859
    %2790 = vmatprep.subr.bf16.mxu0 %v1868
    %2791 = vmatpush1.bf16.msra.mxu0 %v1867
    %2792 = vmatprep.subr.bf16.mxu0 %v1876
    %2793 = vmatpush1.bf16.msra.mxu0 %v1875
    %2794 = vmatprep.subr.bf16.mxu0 %v1884
    %2795 = vmatpush1.bf16.msra.mxu0 %v1883
    %2796 = vmatprep.subr.bf16.mxu0 %v1892
    %2797 = vmatpush1.bf16.msra.mxu0 %v1891
    %2798 = vmatprep.subr.bf16.mxu0 %v1900
    %2799 = vmatpush1.bf16.msra.mxu0 %v1899
    %2800 = vmatprep.subr.bf16.mxu0 %v1908
    %2801 = vmatpush1.bf16.msra.mxu0 %v1907
    %2802 = vmatprep.mubr.bf16.mxu0 %v1136
    %2803 = vmatmul.mubr.bf16.gmra.mrb[0].mxu0 %v1135
    %v2804 = vpop.f32.mrb[0].mxu0
    %v2805 = vadd.f32 %v2762, %v2804
    %v2806 = vpop.f32.mrb[0].mxu0
    %v2807 = vadd.f32 %v2764, %v2806
    %v2808 = vpop.f32.mrb[0].mxu0
    %v2809 = vadd.f32 %v2766, %v2808
    %v2810 = vpop.f32.mrb[0].mxu0
    %v2811 = vadd.f32 %v2768, %v2810
    %2812 = vdwg.mxu0
    %2813 = vmatprep.subr.bf16.mxu0 %v1916
    %2814 = vmatpush1.bf16.msra.mxu0 %v1915
    %2815 = vmatprep.subr.bf16.mxu0 %v1924
    %2816 = vmatpush1.bf16.msra.mxu0 %v1923
    %2817 = vmatprep.subr.bf16.mxu0 %v1932
    %2818 = vmatpush1.bf16.msra.mxu0 %v1931
    %2819 = vmatprep.subr.bf16.mxu0 %v1940
    %2820 = vmatpush1.bf16.msra.mxu0 %v1939
    %2821 = vmatprep.subr.bf16.mxu0 %v1948
    %2822 = vmatpush1.bf16.msra.mxu0 %v1947
    %2823 = vmatprep.subr.bf16.mxu0 %v1956
    %2824 = vmatpush1.bf16.msra.mxu0 %v1955
    %2825 = vmatprep.subr.bf16.mxu0 %v1964
    %2826 = vmatpush1.bf16.msra.mxu0 %v1963
    %2827 = vmatprep.subr.bf16.mxu0 %v1972
    %2828 = vmatpush1.bf16.msra.mxu0 %v1971
    %2829 = vmatprep.subr.bf16.mxu0 %v1980
    %2830 = vmatpush1.bf16.msra.mxu0 %v1979
    %2831 = vmatprep.subr.bf16.mxu0 %v1988
    %2832 = vmatpush1.bf16.msra.mxu0 %v1987
    %2833 = vmatprep.subr.bf16.mxu0 %v1996
    %2834 = vmatpush1.bf16.msra.mxu0 %v1995
    %2835 = vmatprep.subr.bf16.mxu0 %v2004
    %2836 = vmatpush1.bf16.msra.mxu0 %v2003
    %2837 = vmatprep.subr.bf16.mxu0 %v2012
    %2838 = vmatpush1.bf16.msra.mxu0 %v2011
    %2839 = vmatprep.subr.bf16.mxu0 %v2020
    %2840 = vmatpush1.bf16.msra.mxu0 %v2019
    %2841 = vmatprep.subr.bf16.mxu0 %v2028
    %2842 = vmatpush1.bf16.msra.mxu0 %v2027
    %2843 = vmatprep.subr.bf16.mxu0 %v2036
    %2844 = vmatpush1.bf16.msra.mxu0 %v2035
    %2845 = vmatprep.mubr.bf16.mxu0 %v1138
    %2846 = vmatmul.mubr.bf16.gmra.mrb[0].mxu0 %v1137
    %v2847 = vpop.f32.mrb[0].mxu0
    %v2848 = vadd.f32 %v2805, %v2847
    %v2849 = vpop.f32.mrb[0].mxu0
    %v2850 = vadd.f32 %v2807, %v2849
    %v2851 = vpop.f32.mrb[0].mxu0
    %v2852 = vadd.f32 %v2809, %v2851
    %v2853 = vpop.f32.mrb[0].mxu0
    %v2854 = vadd.f32 %v2811, %v2853
    %2855 = vdwg.mxu0
    %2856 = vmatprep.subr.bf16.mxu0 %v2044
    %2857 = vmatpush1.bf16.msra.mxu0 %v2043
    %2858 = vmatprep.subr.bf16.mxu0 %v2052
    %2859 = vmatpush1.bf16.msra.mxu0 %v2051
    %2860 = vmatprep.subr.bf16.mxu0 %v2060
    %2861 = vmatpush1.bf16.msra.mxu0 %v2059
    %2862 = vmatprep.subr.bf16.mxu0 %v2068
    %2863 = vmatpush1.bf16.msra.mxu0 %v2067
    %2864 = vmatprep.subr.bf16.mxu0 %v2076
    %2865 = vmatpush1.bf16.msra.mxu0 %v2075
    %2866 = vmatprep.subr.bf16.mxu0 %v2084
    %2867 = vmatpush1.bf16.msra.mxu0 %v2083
    %2868 = vmatprep.subr.bf16.mxu0 %v2092
    %2869 = vmatpush1.bf16.msra.mxu0 %v2091
    %2870 = vmatprep.subr.bf16.mxu0 %v2100
    %2871 = vmatpush1.bf16.msra.mxu0 %v2099
    %2872 = vmatprep.subr.bf16.mxu0 %v2108
    %2873 = vmatpush1.bf16.msra.mxu0 %v2107
    %2874 = vmatprep.subr.bf16.mxu0 %v2116
    %2875 = vmatpush1.bf16.msra.mxu0 %v2115
    %2876 = vmatprep.subr.bf16.mxu0 %v2124
    %2877 = vmatpush1.bf16.msra.mxu0 %v2123
    %2878 = vmatprep.subr.bf16.mxu0 %v2132
    %2879 = vmatpush1.bf16.msra.mxu0 %v2131
    %2880 = vmatprep.subr.bf16.mxu0 %v2140
    %2881 = vmatpush1.bf16.msra.mxu0 %v2139
    %2882 = vmatprep.subr.bf16.mxu0 %v2148
    %2883 = vmatpush1.bf16.msra.mxu0 %v2147
    %2884 = vmatprep.subr.bf16.mxu0 %v2156
    %2885 = vmatpush1.bf16.msra.mxu0 %v2155
    %2886 = vmatprep.subr.bf16.mxu0 %v2164
    %2887 = vmatpush1.bf16.msra.mxu0 %v2163
    %2888 = vmatprep.mubr.bf16.mxu0 %v1140
    %2889 = vmatmul.mubr.bf16.gmra.mrb[0].mxu0 %v1139
    %v2890 = vpop.f32.mrb[0].mxu0
    %v2891 = vadd.f32 %v2848, %v2890
    %v2892 = vpop.f32.mrb[0].mxu0
    %v2893 = vadd.f32 %v2850, %v2892
    %v2894 = vpop.f32.mrb[0].mxu0
    %v2895 = vadd.f32 %v2852, %v2894
    %v2896 = vpop.f32.mrb[0].mxu0
    %v2897 = vadd.f32 %v2854, %v2896
    %2898 = vdwg.mxu0
    %2899 = vmatprep.subr.bf16.mxu0 %v1150
    %2900 = vmatpush1.bf16.msra.mxu0 %v1149
    %2901 = vmatprep.subr.bf16.mxu0 %v1158
    %2902 = vmatpush1.bf16.msra.mxu0 %v1157
    %2903 = vmatprep.subr.bf16.mxu0 %v1166
    %2904 = vmatpush1.bf16.msra.mxu0 %v1165
    %2905 = vmatprep.subr.bf16.mxu0 %v1174
    %2906 = vmatpush1.bf16.msra.mxu0 %v1173
    %2907 = vmatprep.subr.bf16.mxu0 %v1182
    %2908 = vmatpush1.bf16.msra.mxu0 %v1181
    %2909 = vmatprep.subr.bf16.mxu0 %v1190
    %2910 = vmatpush1.bf16.msra.mxu0 %v1189
    %2911 = vmatprep.subr.bf16.mxu0 %v1198
    %2912 = vmatpush1.bf16.msra.mxu0 %v1197
    %2913 = vmatprep.subr.bf16.mxu0 %v1206
    %2914 = vmatpush1.bf16.msra.mxu0 %v1205
    %2915 = vmatprep.subr.bf16.mxu0 %v1214
    %2916 = vmatpush1.bf16.msra.mxu0 %v1213
    %2917 = vmatprep.subr.bf16.mxu0 %v1222
    %2918 = vmatpush1.bf16.msra.mxu0 %v1221
    %2919 = vmatprep.subr.bf16.mxu0 %v1230
    %2920 = vmatpush1.bf16.msra.mxu0 %v1229
    %2921 = vmatprep.subr.bf16.mxu0 %v1238
    %2922 = vmatpush1.bf16.msra.mxu0 %v1237
    %2923 = vmatprep.subr.bf16.mxu0 %v1246
    %2924 = vmatpush1.bf16.msra.mxu0 %v1245
    %2925 = vmatprep.subr.bf16.mxu0 %v1254
    %2926 = vmatpush1.bf16.msra.mxu0 %v1253
    %2927 = vmatprep.subr.bf16.mxu0 %v1262
    %2928 = vmatpush1.bf16.msra.mxu0 %v1261
    %2929 = vmatprep.subr.bf16.mxu0 %v1270
    %2930 = vmatpush1.bf16.msra.mxu0 %v1269
    %2931 = vmatprep.mubr.bf16.mxu0 %v1126
    %2932 = vmatmul.mubr.bf16.gmra.mrb[0].mxu0 %v1125
    %v2933 = vpop.f32.mrb[0].mxu0
    %v2934 = vadd.f32 %v2190, %v2933
    %v2935 = vpop.f32.mrb[0].mxu0
    %v2936 = vadd.f32 %v2194, %v2935
    %v2937 = vpop.f32.mrb[0].mxu0
    %v2938 = vadd.f32 %v2190, %v2937
    %v2939 = vpop.f32.mrb[0].mxu0
    %v2940 = vadd.f32 %v2194, %v2939
    %2941 = vdwg.mxu0
    %2942 = vmatprep.subr.bf16.mxu0 %v1278
    %2943 = vmatpush1.bf16.msra.mxu0 %v1277
    %2944 = vmatprep.subr.bf16.mxu0 %v1286
    %2945 = vmatpush1.bf16.msra.mxu0 %v1285
    %2946 = vmatprep.subr.bf16.mxu0 %v1294
    %2947 = vmatpush1.bf16.msra.mxu0 %v1293
    %2948 = vmatprep.subr.bf16.mxu0 %v1302
    %2949 = vmatpush1.bf16.msra.mxu0 %v1301
    %2950 = vmatprep.subr.bf16.mxu0 %v1310
    %2951 = vmatpush1.bf16.msra.mxu0 %v1309
    %2952 = vmatprep.subr.bf16.mxu0 %v1318
    %2953 = vmatpush1.bf16.msra.mxu0 %v1317
    %2954 = vmatprep.subr.bf16.mxu0 %v1326
    %2955 = vmatpush1.bf16.msra.mxu0 %v1325
    %2956 = vmatprep.subr.bf16.mxu0 %v1334
    %2957 = vmatpush1.bf16.msra.mxu0 %v1333
    %2958 = vmatprep.subr.bf16.mxu0 %v1342
    %2959 = vmatpush1.bf16.msra.mxu0 %v1341
    %2960 = vmatprep.subr.bf16.mxu0 %v1350
    %2961 = vmatpush1.bf16.msra.mxu0 %v1349
    %2962 = vmatprep.subr.bf16.mxu0 %v1358
    %2963 = vmatpush1.bf16.msra.mxu0 %v1357
    %2964 = vmatprep.subr.bf16.mxu0 %v1366
    %2965 = vmatpush1.bf16.msra.mxu0 %v1365
    %2966 = vmatprep.subr.bf16.mxu0 %v1374
    %2967 = vmatpush1.bf16.msra.mxu0 %v1373
    %2968 = vmatprep.subr.bf16.mxu0 %v1382
    %2969 = vmatpush1.bf16.msra.mxu0 %v1381
    %2970 = vmatprep.subr.bf16.mxu0 %v1390
    %2971 = vmatpush1.bf16.msra.mxu0 %v1389
    %2972 = vmatprep.subr.bf16.mxu0 %v1398
    %2973 = vmatpush1.bf16.msra.mxu0 %v1397
    %2974 = vmatprep.mubr.bf16.mxu0 %v1128
    %2975 = vmatmul.mubr.bf16.gmra.mrb[0].mxu0 %v1127
    %v2976 = vpop.f32.mrb[0].mxu0
    %v2977 = vadd.f32 %v2934, %v2976
    %v2978 = vpop.f32.mrb[0].mxu0
    %v2979 = vadd.f32 %v2936, %v2978
    %v2980 = vpop.f32.mrb[0].mxu0
    %v2981 = vadd.f32 %v2938, %v2980
    %v2982 = vpop.f32.mrb[0].mxu0
    %v2983 = vadd.f32 %v2940, %v2982
    %2984 = vdwg.mxu0
    %2985 = vmatprep.subr.bf16.mxu0 %v1406
    %2986 = vmatpush1.bf16.msra.mxu0 %v1405
    %2987 = vmatprep.subr.bf16.mxu0 %v1414
    %2988 = vmatpush1.bf16.msra.mxu0 %v1413
    %2989 = vmatprep.subr.bf16.mxu0 %v1422
    %2990 = vmatpush1.bf16.msra.mxu0 %v1421
    %2991 = vmatprep.subr.bf16.mxu0 %v1430
    %2992 = vmatpush1.bf16.msra.mxu0 %v1429
    %2993 = vmatprep.subr.bf16.mxu0 %v1438
    %2994 = vmatpush1.bf16.msra.mxu0 %v1437
    %2995 = vmatprep.subr.bf16.mxu0 %v1446
    %2996 = vmatpush1.bf16.msra.mxu0 %v1445
    %2997 = vmatprep.subr.bf16.mxu0 %v1454
    %2998 = vmatpush1.bf16.msra.mxu0 %v1453
    %2999 = vmatprep.subr.bf16.mxu0 %v1462
    %3000 = vmatpush1.bf16.msra.mxu0 %v1461
    %3001 = vmatprep.subr.bf16.mxu0 %v1470
    %3002 = vmatpush1.bf16.msra.mxu0 %v1469
    %3003 = vmatprep.subr.bf16.mxu0 %v1478
    %3004 = vmatpush1.bf16.msra.mxu0 %v1477
    %3005 = vmatprep.subr.bf16.mxu0 %v1486
    %3006 = vmatpush1.bf16.msra.mxu0 %v1485
    %3007 = vmatprep.subr.bf16.mxu0 %v1494
    %3008 = vmatpush1.bf16.msra.mxu0 %v1493
    %3009 = vmatprep.subr.bf16.mxu0 %v1502
    %3010 = vmatpush1.bf16.msra.mxu0 %v1501
    %3011 = vmatprep.subr.bf16.mxu0 %v1510
    %3012 = vmatpush1.bf16.msra.mxu0 %v1509
    %3013 = vmatprep.subr.bf16.mxu0 %v1518
    %3014 = vmatpush1.bf16.msra.mxu0 %v1517
    %3015 = vmatprep.subr.bf16.mxu0 %v1526
    %3016 = vmatpush1.bf16.msra.mxu0 %v1525
    %3017 = vmatprep.mubr.bf16.mxu0 %v1130
    %3018 = vmatmul.mubr.bf16.gmra.mrb[0].mxu0 %v1129
    %v3019 = vpop.f32.mrb[0].mxu0
    %v3020 = vadd.f32 %v2977, %v3019
    %v3021 = vpop.f32.mrb[0].mxu0
    %v3022 = vadd.f32 %v2979, %v3021
    %v3023 = vpop.f32.mrb[0].mxu0
    %v3024 = vadd.f32 %v2981, %v3023
    %v3025 = vpop.f32.mrb[0].mxu0
    %v3026 = vadd.f32 %v2983, %v3025
    %3027 = vdwg.mxu0
    %3028 = vmatprep.subr.bf16.mxu0 %v1534
    %3029 = vmatpush1.bf16.msra.mxu0 %v1533
    %3030 = vmatprep.subr.bf16.mxu0 %v1542
    %3031 = vmatpush1.bf16.msra.mxu0 %v1541
    %3032 = vmatprep.subr.bf16.mxu0 %v1550
    %3033 = vmatpush1.bf16.msra.mxu0 %v1549
    %3034 = vmatprep.subr.bf16.mxu0 %v1558
    %3035 = vmatpush1.bf16.msra.mxu0 %v1557
    %3036 = vmatprep.subr.bf16.mxu0 %v1566
    %3037 = vmatpush1.bf16.msra.mxu0 %v1565
    %3038 = vmatprep.subr.bf16.mxu0 %v1574
    %3039 = vmatpush1.bf16.msra.mxu0 %v1573
    %3040 = vmatprep.subr.bf16.mxu0 %v1582
    %3041 = vmatpush1.bf16.msra.mxu0 %v1581
    %3042 = vmatprep.subr.bf16.mxu0 %v1590
    %3043 = vmatpush1.bf16.msra.mxu0 %v1589
    %3044 = vmatprep.subr.bf16.mxu0 %v1598
    %3045 = vmatpush1.bf16.msra.mxu0 %v1597
    %3046 = vmatprep.subr.bf16.mxu0 %v1606
    %3047 = vmatpush1.bf16.msra.mxu0 %v1605
    %3048 = vmatprep.subr.bf16.mxu0 %v1614
    %3049 = vmatpush1.bf16.msra.mxu0 %v1613
    %3050 = vmatprep.subr.bf16.mxu0 %v1622
    %3051 = vmatpush1.bf16.msra.mxu0 %v1621
    %3052 = vmatprep.subr.bf16.mxu0 %v1630
    %3053 = vmatpush1.bf16.msra.mxu0 %v1629
    %3054 = vmatprep.subr.bf16.mxu0 %v1638
    %3055 = vmatpush1.bf16.msra.mxu0 %v1637
    %3056 = vmatprep.subr.bf16.mxu0 %v1646
    %3057 = vmatpush1.bf16.msra.mxu0 %v1645
    %3058 = vmatprep.subr.bf16.mxu0 %v1654
    %3059 = vmatpush1.bf16.msra.mxu0 %v1653
    %3060 = vmatprep.mubr.bf16.mxu0 %v1132
    %3061 = vmatmul.mubr.bf16.gmra.mrb[0].mxu0 %v1131
    %v3062 = vpop.f32.mrb[0].mxu0
    %v3063 = vadd.f32 %v3020, %v3062
    %v3064 = vpop.f32.mrb[0].mxu0
    %v3065 = vadd.f32 %v3022, %v3064
    %v3066 = vpop.f32.mrb[0].mxu0
    %v3067 = vadd.f32 %v3024, %v3066
    %v3068 = vpop.f32.mrb[0].mxu0
    %v3069 = vadd.f32 %v3026, %v3068
    %3070 = vdwg.mxu0
    %3071 = vmatprep.subr.bf16.mxu0 %v1662
    %3072 = vmatpush1.bf16.msra.mxu0 %v1661
    %3073 = vmatprep.subr.bf16.mxu0 %v1670
    %3074 = vmatpush1.bf16.msra.mxu0 %v1669
    %3075 = vmatprep.subr.bf16.mxu0 %v1678
    %3076 = vmatpush1.bf16.msra.mxu0 %v1677
    %3077 = vmatprep.subr.bf16.mxu0 %v1686
    %3078 = vmatpush1.bf16.msra.mxu0 %v1685
    %3079 = vmatprep.subr.bf16.mxu0 %v1694
    %3080 = vmatpush1.bf16.msra.mxu0 %v1693
    %3081 = vmatprep.subr.bf16.mxu0 %v1702
    %3082 = vmatpush1.bf16.msra.mxu0 %v1701
    %3083 = vmatprep.subr.bf16.mxu0 %v1710
    %3084 = vmatpush1.bf16.msra.mxu0 %v1709
    %3085 = vmatprep.subr.bf16.mxu0 %v1718
    %3086 = vmatpush1.bf16.msra.mxu0 %v1717
    %3087 = vmatprep.subr.bf16.mxu0 %v1726
    %3088 = vmatpush1.bf16.msra.mxu0 %v1725
    %3089 = vmatprep.subr.bf16.mxu0 %v1734
    %3090 = vmatpush1.bf16.msra.mxu0 %v1733
    %3091 = vmatprep.subr.bf16.mxu0 %v1742
    %3092 = vmatpush1.bf16.msra.mxu0 %v1741
    %3093 = vmatprep.subr.bf16.mxu0 %v1750
    %3094 = vmatpush1.bf16.msra.mxu0 %v1749
    %3095 = vmatprep.subr.bf16.mxu0 %v1758
    %3096 = vmatpush1.bf16.msra.mxu0 %v1757
    %3097 = vmatprep.subr.bf16.mxu0 %v1766
    %3098 = vmatpush1.bf16.msra.mxu0 %v1765
    %3099 = vmatprep.subr.bf16.mxu0 %v1774
    %3100 = vmatpush1.bf16.msra.mxu0 %v1773
    %3101 = vmatprep.subr.bf16.mxu0 %v1782
    %3102 = vmatpush1.bf16.msra.mxu0 %v1781
    %3103 = vmatprep.mubr.bf16.mxu0 %v1134
    %3104 = vmatmul.mubr.bf16.gmra.mrb[0].mxu0 %v1133
    %v3105 = vpop.f32.mrb[0].mxu0
    %v3106 = vadd.f32 %v3063, %v3105
    %v3107 = vpop.f32.mrb[0].mxu0
    %v3108 = vadd.f32 %v3065, %v3107
    %v3109 = vpop.f32.mrb[0].mxu0
    %v3110 = vadd.f32 %v3067, %v3109
    %v3111 = vpop.f32.mrb[0].mxu0
    %v3112 = vadd.f32 %v3069, %v3111
    %3113 = vdwg.mxu0
    %3114 = vmatprep.subr.bf16.mxu0 %v1790
    %3115 = vmatpush1.bf16.msra.mxu0 %v1789
    %3116 = vmatprep.subr.bf16.mxu0 %v1798
    %3117 = vmatpush1.bf16.msra.mxu0 %v1797
    %3118 = vmatprep.subr.bf16.mxu0 %v1806
    %3119 = vmatpush1.bf16.msra.mxu0 %v1805
    %3120 = vmatprep.subr.bf16.mxu0 %v1814
    %3121 = vmatpush1.bf16.msra.mxu0 %v1813
    %3122 = vmatprep.subr.bf16.mxu0 %v1822
    %3123 = vmatpush1.bf16.msra.mxu0 %v1821
    %3124 = vmatprep.subr.bf16.mxu0 %v1830
    %3125 = vmatpush1.bf16.msra.mxu0 %v1829
    %3126 = vmatprep.subr.bf16.mxu0 %v1838
    %3127 = vmatpush1.bf16.msra.mxu0 %v1837
    %3128 = vmatprep.subr.bf16.mxu0 %v1846
    %3129 = vmatpush1.bf16.msra.mxu0 %v1845
    %3130 = vmatprep.subr.bf16.mxu0 %v1854
    %3131 = vmatpush1.bf16.msra.mxu0 %v1853
    %3132 = vmatprep.subr.bf16.mxu0 %v1862
    %3133 = vmatpush1.bf16.msra.mxu0 %v1861
    %3134 = vmatprep.subr.bf16.mxu0 %v1870
    %3135 = vmatpush1.bf16.msra.mxu0 %v1869
    %3136 = vmatprep.subr.bf16.mxu0 %v1878
    %3137 = vmatpush1.bf16.msra.mxu0 %v1877
    %3138 = vmatprep.subr.bf16.mxu0 %v1886
    %3139 = vmatpush1.bf16.msra.mxu0 %v1885
    %3140 = vmatprep.subr.bf16.mxu0 %v1894
    %3141 = vmatpush1.bf16.msra.mxu0 %v1893
    %3142 = vmatprep.subr.bf16.mxu0 %v1902
    %3143 = vmatpush1.bf16.msra.mxu0 %v1901
    %3144 = vmatprep.subr.bf16.mxu0 %v1910
    %3145 = vmatpush1.bf16.msra.mxu0 %v1909
    %3146 = vmatprep.mubr.bf16.mxu0 %v1136
    %3147 = vmatmul.mubr.bf16.gmra.mrb[0].mxu0 %v1135
    %v3148 = vpop.f32.mrb[0].mxu0
    %v3149 = vadd.f32 %v3106, %v3148
    %v3150 = vpop.f32.mrb[0].mxu0
    %v3151 = vadd.f32 %v3108, %v3150
    %v3152 = vpop.f32.mrb[0].mxu0
    %v3153 = vadd.f32 %v3110, %v3152
    %v3154 = vpop.f32.mrb[0].mxu0
    %v3155 = vadd.f32 %v3112, %v3154
    %3156 = vdwg.mxu0
    %3157 = vmatprep.subr.bf16.mxu0 %v1918
    %3158 = vmatpush1.bf16.msra.mxu0 %v1917
    %3159 = vmatprep.subr.bf16.mxu0 %v1926
    %3160 = vmatpush1.bf16.msra.mxu0 %v1925
    %3161 = vmatprep.subr.bf16.mxu0 %v1934
    %3162 = vmatpush1.bf16.msra.mxu0 %v1933
    %3163 = vmatprep.subr.bf16.mxu0 %v1942
    %3164 = vmatpush1.bf16.msra.mxu0 %v1941
    %3165 = vmatprep.subr.bf16.mxu0 %v1950
    %3166 = vmatpush1.bf16.msra.mxu0 %v1949
    %3167 = vmatprep.subr.bf16.mxu0 %v1958
    %3168 = vmatpush1.bf16.msra.mxu0 %v1957
    %3169 = vmatprep.subr.bf16.mxu0 %v1966
    %3170 = vmatpush1.bf16.msra.mxu0 %v1965
    %3171 = vmatprep.subr.bf16.mxu0 %v1974
    %3172 = vmatpush1.bf16.msra.mxu0 %v1973
    %3173 = vmatprep.subr.bf16.mxu0 %v1982
    %3174 = vmatpush1.bf16.msra.mxu0 %v1981
    %3175 = vmatprep.subr.bf16.mxu0 %v1990
    %3176 = vmatpush1.bf16.msra.mxu0 %v1989
    %3177 = vmatprep.subr.bf16.mxu0 %v1998
    %3178 = vmatpush1.bf16.msra.mxu0 %v1997
    %3179 = vmatprep.subr.bf16.mxu0 %v2006
    %3180 = vmatpush1.bf16.msra.mxu0 %v2005
    %3181 = vmatprep.subr.bf16.mxu0 %v2014
    %3182 = vmatpush1.bf16.msra.mxu0 %v2013
    %3183 = vmatprep.subr.bf16.mxu0 %v2022
    %3184 = vmatpush1.bf16.msra.mxu0 %v2021
    %3185 = vmatprep.subr.bf16.mxu0 %v2030
    %3186 = vmatpush1.bf16.msra.mxu0 %v2029
    %3187 = vmatprep.subr.bf16.mxu0 %v2038
    %3188 = vmatpush1.bf16.msra.mxu0 %v2037
    %3189 = vmatprep.mubr.bf16.mxu0 %v1138
    %3190 = vmatmul.mubr.bf16.gmra.mrb[0].mxu0 %v1137
    %v3191 = vpop.f32.mrb[0].mxu0
    %v3192 = vadd.f32 %v3149, %v3191
    %v3193 = vpop.f32.mrb[0].mxu0
    %v3194 = vadd.f32 %v3151, %v3193
    %v3195 = vpop.f32.mrb[0].mxu0
    %v3196 = vadd.f32 %v3153, %v3195
    %v3197 = vpop.f32.mrb[0].mxu0
    %v3198 = vadd.f32 %v3155, %v3197
    %3199 = vdwg.mxu0
    %3200 = vmatprep.subr.bf16.mxu0 %v2046
    %3201 = vmatpush1.bf16.msra.mxu0 %v2045
    %3202 = vmatprep.subr.bf16.mxu0 %v2054
    %3203 = vmatpush1.bf16.msra.mxu0 %v2053
    %3204 = vmatprep.subr.bf16.mxu0 %v2062
    %3205 = vmatpush1.bf16.msra.mxu0 %v2061
    %3206 = vmatprep.subr.bf16.mxu0 %v2070
    %3207 = vmatpush1.bf16.msra.mxu0 %v2069
    %3208 = vmatprep.subr.bf16.mxu0 %v2078
    %3209 = vmatpush1.bf16.msra.mxu0 %v2077
    %3210 = vmatprep.subr.bf16.mxu0 %v2086
    %3211 = vmatpush1.bf16.msra.mxu0 %v2085
    %3212 = vmatprep.subr.bf16.mxu0 %v2094
    %3213 = vmatpush1.bf16.msra.mxu0 %v2093
    %3214 = vmatprep.subr.bf16.mxu0 %v2102
    %3215 = vmatpush1.bf16.msra.mxu0 %v2101
    %3216 = vmatprep.subr.bf16.mxu0 %v2110
    %3217 = vmatpush1.bf16.msra.mxu0 %v2109
    %3218 = vmatprep.subr.bf16.mxu0 %v2118
    %3219 = vmatpush1.bf16.msra.mxu0 %v2117
    %3220 = vmatprep.subr.bf16.mxu0 %v2126
    %3221 = vmatpush1.bf16.msra.mxu0 %v2125
    %3222 = vmatprep.subr.bf16.mxu0 %v2134
    %3223 = vmatpush1.bf16.msra.mxu0 %v2133
    %3224 = vmatprep.subr.bf16.mxu0 %v2142
    %3225 = vmatpush1.bf16.msra.mxu0 %v2141
    %3226 = vmatprep.subr.bf16.mxu0 %v2150
    %3227 = vmatpush1.bf16.msra.mxu0 %v2149
    %3228 = vmatprep.subr.bf16.mxu0 %v2158
    %3229 = vmatpush1.bf16.msra.mxu0 %v2157
    %3230 = vmatprep.subr.bf16.mxu0 %v2166
    %3231 = vmatpush1.bf16.msra.mxu0 %v2165
    %3232 = vmatprep.mubr.bf16.mxu0 %v1140
    %3233 = vmatmul.mubr.bf16.gmra.mrb[0].mxu0 %v1139
    %v3234 = vpop.f32.mrb[0].mxu0
    %v3235 = vadd.f32 %v3192, %v3234
    %v3236 = vpop.f32.mrb[0].mxu0
    %v3237 = vadd.f32 %v3194, %v3236
    %v3238 = vpop.f32.mrb[0].mxu0
    %v3239 = vadd.f32 %v3196, %v3238
    %v3240 = vpop.f32.mrb[0].mxu0
    %v3241 = vadd.f32 %v3198, %v3240
    %3242 = vdwg.mxu0
    %3243 = vmatprep.subr.bf16.mxu0 %v1152
    %3244 = vmatpush1.bf16.msra.mxu0 %v1151
    %3245 = vmatprep.subr.bf16.mxu0 %v1160
    %3246 = vmatpush1.bf16.msra.mxu0 %v1159
    %3247 = vmatprep.subr.bf16.mxu0 %v1168
    %3248 = vmatpush1.bf16.msra.mxu0 %v1167
    %3249 = vmatprep.subr.bf16.mxu0 %v1176
    %3250 = vmatpush1.bf16.msra.mxu0 %v1175
    %3251 = vmatprep.subr.bf16.mxu0 %v1184
    %3252 = vmatpush1.bf16.msra.mxu0 %v1183
    %3253 = vmatprep.subr.bf16.mxu0 %v1192
    %3254 = vmatpush1.bf16.msra.mxu0 %v1191
    %3255 = vmatprep.subr.bf16.mxu0 %v1200
    %3256 = vmatpush1.bf16.msra.mxu0 %v1199
    %3257 = vmatprep.subr.bf16.mxu0 %v1208
    %3258 = vmatpush1.bf16.msra.mxu0 %v1207
    %3259 = vmatprep.subr.bf16.mxu0 %v1216
    %3260 = vmatpush1.bf16.msra.mxu0 %v1215
    %3261 = vmatprep.subr.bf16.mxu0 %v1224
    %3262 = vmatpush1.bf16.msra.mxu0 %v1223
    %3263 = vmatprep.subr.bf16.mxu0 %v1232
    %3264 = vmatpush1.bf16.msra.mxu0 %v1231
    %3265 = vmatprep.subr.bf16.mxu0 %v1240
    %3266 = vmatpush1.bf16.msra.mxu0 %v1239
    %3267 = vmatprep.subr.bf16.mxu0 %v1248
    %3268 = vmatpush1.bf16.msra.mxu0 %v1247
    %3269 = vmatprep.subr.bf16.mxu0 %v1256
    %3270 = vmatpush1.bf16.msra.mxu0 %v1255
    %3271 = vmatprep.subr.bf16.mxu0 %v1264
    %3272 = vmatpush1.bf16.msra.mxu0 %v1263
    %3273 = vmatprep.subr.bf16.mxu0 %v1272
    %3274 = vmatpush1.bf16.msra.mxu0 %v1271
    %3275 = vmatprep.mubr.bf16.mxu0 %v1126
    %3276 = vmatmul.mubr.bf16.gmra.mrb[0].mxu0 %v1125
    %v3277 = vpop.f32.mrb[0].mxu0
    %v3278 = vadd.f32 %v2198, %v3277
    %v3279 = vpop.f32.mrb[0].mxu0
    %v3280 = vadd.f32 %v2202, %v3279
    %v3281 = vpop.f32.mrb[0].mxu0
    %v3282 = vadd.f32 %v2198, %v3281
    %v3283 = vpop.f32.mrb[0].mxu0
    %v3284 = vadd.f32 %v2202, %v3283
    %3285 = vdwg.mxu0
    %3286 = vmatprep.subr.bf16.mxu0 %v1280
    %3287 = vmatpush1.bf16.msra.mxu0 %v1279
    %3288 = vmatprep.subr.bf16.mxu0 %v1288
    %3289 = vmatpush1.bf16.msra.mxu0 %v1287
    %3290 = vmatprep.subr.bf16.mxu0 %v1296
    %3291 = vmatpush1.bf16.msra.mxu0 %v1295
    %3292 = vmatprep.subr.bf16.mxu0 %v1304
    %3293 = vmatpush1.bf16.msra.mxu0 %v1303
    %3294 = vmatprep.subr.bf16.mxu0 %v1312
    %3295 = vmatpush1.bf16.msra.mxu0 %v1311
    %3296 = vmatprep.subr.bf16.mxu0 %v1320
    %3297 = vmatpush1.bf16.msra.mxu0 %v1319
    %3298 = vmatprep.subr.bf16.mxu0 %v1328
    %3299 = vmatpush1.bf16.msra.mxu0 %v1327
    %3300 = vmatprep.subr.bf16.mxu0 %v1336
    %3301 = vmatpush1.bf16.msra.mxu0 %v1335
    %3302 = vmatprep.subr.bf16.mxu0 %v1344
    %3303 = vmatpush1.bf16.msra.mxu0 %v1343
    %3304 = vmatprep.subr.bf16.mxu0 %v1352
    %3305 = vmatpush1.bf16.msra.mxu0 %v1351
    %3306 = vmatprep.subr.bf16.mxu0 %v1360
    %3307 = vmatpush1.bf16.msra.mxu0 %v1359
    %3308 = vmatprep.subr.bf16.mxu0 %v1368
    %3309 = vmatpush1.bf16.msra.mxu0 %v1367
    %3310 = vmatprep.subr.bf16.mxu0 %v1376
    %3311 = vmatpush1.bf16.msra.mxu0 %v1375
    %3312 = vmatprep.subr.bf16.mxu0 %v1384
    %3313 = vmatpush1.bf16.msra.mxu0 %v1383
    %3314 = vmatprep.subr.bf16.mxu0 %v1392
    %3315 = vmatpush1.bf16.msra.mxu0 %v1391
    %3316 = vmatprep.subr.bf16.mxu0 %v1400
    %3317 = vmatpush1.bf16.msra.mxu0 %v1399
    %3318 = vmatprep.mubr.bf16.mxu0 %v1128
    %3319 = vmatmul.mubr.bf16.gmra.mrb[0].mxu0 %v1127
    %v3320 = vpop.f32.mrb[0].mxu0
    %v3321 = vadd.f32 %v3278, %v3320
    %v3322 = vpop.f32.mrb[0].mxu0
    %v3323 = vadd.f32 %v3280, %v3322
    %v3324 = vpop.f32.mrb[0].mxu0
    %v3325 = vadd.f32 %v3282, %v3324
    %v3326 = vpop.f32.mrb[0].mxu0
    %v3327 = vadd.f32 %v3284, %v3326
    %3328 = vdwg.mxu0
    %3329 = vmatprep.subr.bf16.mxu0 %v1408
    %3330 = vmatpush1.bf16.msra.mxu0 %v1407
    %3331 = vmatprep.subr.bf16.mxu0 %v1416
    %3332 = vmatpush1.bf16.msra.mxu0 %v1415
    %3333 = vmatprep.subr.bf16.mxu0 %v1424
    %3334 = vmatpush1.bf16.msra.mxu0 %v1423
    %3335 = vmatprep.subr.bf16.mxu0 %v1432
    %3336 = vmatpush1.bf16.msra.mxu0 %v1431
    %3337 = vmatprep.subr.bf16.mxu0 %v1440
    %3338 = vmatpush1.bf16.msra.mxu0 %v1439
    %3339 = vmatprep.subr.bf16.mxu0 %v1448
    %3340 = vmatpush1.bf16.msra.mxu0 %v1447
    %3341 = vmatprep.subr.bf16.mxu0 %v1456
    %3342 = vmatpush1.bf16.msra.mxu0 %v1455
    %3343 = vmatprep.subr.bf16.mxu0 %v1464
    %3344 = vmatpush1.bf16.msra.mxu0 %v1463
    %3345 = vmatprep.subr.bf16.mxu0 %v1472
    %3346 = vmatpush1.bf16.msra.mxu0 %v1471
    %3347 = vmatprep.subr.bf16.mxu0 %v1480
    %3348 = vmatpush1.bf16.msra.mxu0 %v1479
    %3349 = vmatprep.subr.bf16.mxu0 %v1488
    %3350 = vmatpush1.bf16.msra.mxu0 %v1487
    %3351 = vmatprep.subr.bf16.mxu0 %v1496
    %3352 = vmatpush1.bf16.msra.mxu0 %v1495
    %3353 = vmatprep.subr.bf16.mxu0 %v1504
    %3354 = vmatpush1.bf16.msra.mxu0 %v1503
    %3355 = vmatprep.subr.bf16.mxu0 %v1512
    %3356 = vmatpush1.bf16.msra.mxu0 %v1511
    %3357 = vmatprep.subr.bf16.mxu0 %v1520
    %3358 = vmatpush1.bf16.msra.mxu0 %v1519
    %3359 = vmatprep.subr.bf16.mxu0 %v1528
    %3360 = vmatpush1.bf16.msra.mxu0 %v1527
    %3361 = vmatprep.mubr.bf16.mxu0 %v1130
    %3362 = vmatmul.mubr.bf16.gmra.mrb[0].mxu0 %v1129
    %v3363 = vpop.f32.mrb[0].mxu0
    %v3364 = vadd.f32 %v3321, %v3363
    %v3365 = vpop.f32.mrb[0].mxu0
    %v3366 = vadd.f32 %v3323, %v3365
    %v3367 = vpop.f32.mrb[0].mxu0
    %v3368 = vadd.f32 %v3325, %v3367
    %v3369 = vpop.f32.mrb[0].mxu0
    %v3370 = vadd.f32 %v3327, %v3369
    %3371 = vdwg.mxu0
    %3372 = vmatprep.subr.bf16.mxu0 %v1536
    %3373 = vmatpush1.bf16.msra.mxu0 %v1535
    %3374 = vmatprep.subr.bf16.mxu0 %v1544
    %3375 = vmatpush1.bf16.msra.mxu0 %v1543
    %3376 = vmatprep.subr.bf16.mxu0 %v1552
    %3377 = vmatpush1.bf16.msra.mxu0 %v1551
    %3378 = vmatprep.subr.bf16.mxu0 %v1560
    %3379 = vmatpush1.bf16.msra.mxu0 %v1559
    %3380 = vmatprep.subr.bf16.mxu0 %v1568
    %3381 = vmatpush1.bf16.msra.mxu0 %v1567
    %3382 = vmatprep.subr.bf16.mxu0 %v1576
    %3383 = vmatpush1.bf16.msra.mxu0 %v1575
    %3384 = vmatprep.subr.bf16.mxu0 %v1584
    %3385 = vmatpush1.bf16.msra.mxu0 %v1583
    %3386 = vmatprep.subr.bf16.mxu0 %v1592
    %3387 = vmatpush1.bf16.msra.mxu0 %v1591
    %3388 = vmatprep.subr.bf16.mxu0 %v1600
    %3389 = vmatpush1.bf16.msra.mxu0 %v1599
    %3390 = vmatprep.subr.bf16.mxu0 %v1608
    %3391 = vmatpush1.bf16.msra.mxu0 %v1607
    %3392 = vmatprep.subr.bf16.mxu0 %v1616
    %3393 = vmatpush1.bf16.msra.mxu0 %v1615
    %3394 = vmatprep.subr.bf16.mxu0 %v1624
    %3395 = vmatpush1.bf16.msra.mxu0 %v1623
    %3396 = vmatprep.subr.bf16.mxu0 %v1632
    %3397 = vmatpush1.bf16.msra.mxu0 %v1631
    %3398 = vmatprep.subr.bf16.mxu0 %v1640
    %3399 = vmatpush1.bf16.msra.mxu0 %v1639
    %3400 = vmatprep.subr.bf16.mxu0 %v1648
    %3401 = vmatpush1.bf16.msra.mxu0 %v1647
    %3402 = vmatprep.subr.bf16.mxu0 %v1656
    %3403 = vmatpush1.bf16.msra.mxu0 %v1655
    %3404 = vmatprep.mubr.bf16.mxu0 %v1132
    %3405 = vmatmul.mubr.bf16.gmra.mrb[0].mxu0 %v1131
    %v3406 = vpop.f32.mrb[0].mxu0
    %v3407 = vadd.f32 %v3364, %v3406
    %v3408 = vpop.f32.mrb[0].mxu0
    %v3409 = vadd.f32 %v3366, %v3408
    %v3410 = vpop.f32.mrb[0].mxu0
    %v3411 = vadd.f32 %v3368, %v3410
    %v3412 = vpop.f32.mrb[0].mxu0
    %v3413 = vadd.f32 %v3370, %v3412
    %3414 = vdwg.mxu0
    %3415 = vmatprep.subr.bf16.mxu0 %v1664
    %3416 = vmatpush1.bf16.msra.mxu0 %v1663
    %3417 = vmatprep.subr.bf16.mxu0 %v1672
    %3418 = vmatpush1.bf16.msra.mxu0 %v1671
    %3419 = vmatprep.subr.bf16.mxu0 %v1680
    %3420 = vmatpush1.bf16.msra.mxu0 %v1679
    %3421 = vmatprep.subr.bf16.mxu0 %v1688
    %3422 = vmatpush1.bf16.msra.mxu0 %v1687
    %3423 = vmatprep.subr.bf16.mxu0 %v1696
    %3424 = vmatpush1.bf16.msra.mxu0 %v1695
    %3425 = vmatprep.subr.bf16.mxu0 %v1704
    %3426 = vmatpush1.bf16.msra.mxu0 %v1703
    %3427 = vmatprep.subr.bf16.mxu0 %v1712
    %3428 = vmatpush1.bf16.msra.mxu0 %v1711
    %3429 = vmatprep.subr.bf16.mxu0 %v1720
    %3430 = vmatpush1.bf16.msra.mxu0 %v1719
    %3431 = vmatprep.subr.bf16.mxu0 %v1728
    %3432 = vmatpush1.bf16.msra.mxu0 %v1727
    %3433 = vmatprep.subr.bf16.mxu0 %v1736
    %3434 = vmatpush1.bf16.msra.mxu0 %v1735
    %3435 = vmatprep.subr.bf16.mxu0 %v1744
    %3436 = vmatpush1.bf16.msra.mxu0 %v1743
    %3437 = vmatprep.subr.bf16.mxu0 %v1752
    %3438 = vmatpush1.bf16.msra.mxu0 %v1751
    %3439 = vmatprep.subr.bf16.mxu0 %v1760
    %3440 = vmatpush1.bf16.msra.mxu0 %v1759
    %3441 = vmatprep.subr.bf16.mxu0 %v1768
    %3442 = vmatpush1.bf16.msra.mxu0 %v1767
    %3443 = vmatprep.subr.bf16.mxu0 %v1776
    %3444 = vmatpush1.bf16.msra.mxu0 %v1775
    %3445 = vmatprep.subr.bf16.mxu0 %v1784
    %3446 = vmatpush1.bf16.msra.mxu0 %v1783
    %3447 = vmatprep.mubr.bf16.mxu0 %v1134
    %3448 = vmatmul.mubr.bf16.gmra.mrb[0].mxu0 %v1133
    %v3449 = vpop.f32.mrb[0].mxu0
    %v3450 = vadd.f32 %v3407, %v3449
    %v3451 = vpop.f32.mrb[0].mxu0
    %v3452 = vadd.f32 %v3409, %v3451
    %v3453 = vpop.f32.mrb[0].mxu0
    %v3454 = vadd.f32 %v3411, %v3453
    %v3455 = vpop.f32.mrb[0].mxu0
    %v3456 = vadd.f32 %v3413, %v3455
    %3457 = vdwg.mxu0
    %3458 = vmatprep.subr.bf16.mxu0 %v1792
    %3459 = vmatpush1.bf16.msra.mxu0 %v1791
    %3460 = vmatprep.subr.bf16.mxu0 %v1800
    %3461 = vmatpush1.bf16.msra.mxu0 %v1799
    %3462 = vmatprep.subr.bf16.mxu0 %v1808
    %3463 = vmatpush1.bf16.msra.mxu0 %v1807
    %3464 = vmatprep.subr.bf16.mxu0 %v1816
    %3465 = vmatpush1.bf16.msra.mxu0 %v1815
    %3466 = vmatprep.subr.bf16.mxu0 %v1824
    %3467 = vmatpush1.bf16.msra.mxu0 %v1823
    %3468 = vmatprep.subr.bf16.mxu0 %v1832
    %3469 = vmatpush1.bf16.msra.mxu0 %v1831
    %3470 = vmatprep.subr.bf16.mxu0 %v1840
    %3471 = vmatpush1.bf16.msra.mxu0 %v1839
    %3472 = vmatprep.subr.bf16.mxu0 %v1848
    %3473 = vmatpush1.bf16.msra.mxu0 %v1847
    %3474 = vmatprep.subr.bf16.mxu0 %v1856
    %3475 = vmatpush1.bf16.msra.mxu0 %v1855
    %3476 = vmatprep.subr.bf16.mxu0 %v1864
    %3477 = vmatpush1.bf16.msra.mxu0 %v1863
    %3478 = vmatprep.subr.bf16.mxu0 %v1872
    %3479 = vmatpush1.bf16.msra.mxu0 %v1871
    %3480 = vmatprep.subr.bf16.mxu0 %v1880
    %3481 = vmatpush1.bf16.msra.mxu0 %v1879
    %3482 = vmatprep.subr.bf16.mxu0 %v1888
    %3483 = vmatpush1.bf16.msra.mxu0 %v1887
    %3484 = vmatprep.subr.bf16.mxu0 %v1896
    %3485 = vmatpush1.bf16.msra.mxu0 %v1895
    %3486 = vmatprep.subr.bf16.mxu0 %v1904
    %3487 = vmatpush1.bf16.msra.mxu0 %v1903
    %3488 = vmatprep.subr.bf16.mxu0 %v1912
    %3489 = vmatpush1.bf16.msra.mxu0 %v1911
    %3490 = vmatprep.mubr.bf16.mxu0 %v1136
    %3491 = vmatmul.mubr.bf16.gmra.mrb[0].mxu0 %v1135
    %v3492 = vpop.f32.mrb[0].mxu0
    %v3493 = vadd.f32 %v3450, %v3492
    %v3494 = vpop.f32.mrb[0].mxu0
    %v3495 = vadd.f32 %v3452, %v3494
    %v3496 = vpop.f32.mrb[0].mxu0
    %v3497 = vadd.f32 %v3454, %v3496
    %v3498 = vpop.f32.mrb[0].mxu0
    %v3499 = vadd.f32 %v3456, %v3498
    %3500 = vdwg.mxu0
    %3501 = vmatprep.subr.bf16.mxu0 %v1920
    %3502 = vmatpush1.bf16.msra.mxu0 %v1919
    %3503 = vmatprep.subr.bf16.mxu0 %v1928
    %3504 = vmatpush1.bf16.msra.mxu0 %v1927
    %3505 = vmatprep.subr.bf16.mxu0 %v1936
    %3506 = vmatpush1.bf16.msra.mxu0 %v1935
    %3507 = vmatprep.subr.bf16.mxu0 %v1944
    %3508 = vmatpush1.bf16.msra.mxu0 %v1943
    %3509 = vmatprep.subr.bf16.mxu0 %v1952
    %3510 = vmatpush1.bf16.msra.mxu0 %v1951
    %3511 = vmatprep.subr.bf16.mxu0 %v1960
    %3512 = vmatpush1.bf16.msra.mxu0 %v1959
    %3513 = vmatprep.subr.bf16.mxu0 %v1968
    %3514 = vmatpush1.bf16.msra.mxu0 %v1967
    %3515 = vmatprep.subr.bf16.mxu0 %v1976
    %3516 = vmatpush1.bf16.msra.mxu0 %v1975
    %3517 = vmatprep.subr.bf16.mxu0 %v1984
    %3518 = vmatpush1.bf16.msra.mxu0 %v1983
    %3519 = vmatprep.subr.bf16.mxu0 %v1992
    %3520 = vmatpush1.bf16.msra.mxu0 %v1991
    %3521 = vmatprep.subr.bf16.mxu0 %v2000
    %3522 = vmatpush1.bf16.msra.mxu0 %v1999
    %3523 = vmatprep.subr.bf16.mxu0 %v2008
    %3524 = vmatpush1.bf16.msra.mxu0 %v2007
    %3525 = vmatprep.subr.bf16.mxu0 %v2016
    %3526 = vmatpush1.bf16.msra.mxu0 %v2015
    %3527 = vmatprep.subr.bf16.mxu0 %v2024
    %3528 = vmatpush1.bf16.msra.mxu0 %v2023
    %3529 = vmatprep.subr.bf16.mxu0 %v2032
    %3530 = vmatpush1.bf16.msra.mxu0 %v2031
    %3531 = vmatprep.subr.bf16.mxu0 %v2040
    %3532 = vmatpush1.bf16.msra.mxu0 %v2039
    %3533 = vmatprep.mubr.bf16.mxu0 %v1138
    %3534 = vmatmul.mubr.bf16.gmra.mrb[0].mxu0 %v1137
    %v3535 = vpop.f32.mrb[0].mxu0
    %v3536 = vadd.f32 %v3493, %v3535
    %v3537 = vpop.f32.mrb[0].mxu0
    %v3538 = vadd.f32 %v3495, %v3537
    %v3539 = vpop.f32.mrb[0].mxu0
    %v3540 = vadd.f32 %v3497, %v3539
    %v3541 = vpop.f32.mrb[0].mxu0
    %v3542 = vadd.f32 %v3499, %v3541
    %3543 = vdwg.mxu0
    %3544 = vmatprep.subr.bf16.mxu0 %v2048
    %3545 = vmatpush1.bf16.msra.mxu0 %v2047
    %3546 = vmatprep.subr.bf16.mxu0 %v2056
    %3547 = vmatpush1.bf16.msra.mxu0 %v2055
    %3548 = vmatprep.subr.bf16.mxu0 %v2064
    %3549 = vmatpush1.bf16.msra.mxu0 %v2063
    %3550 = vmatprep.subr.bf16.mxu0 %v2072
    %3551 = vmatpush1.bf16.msra.mxu0 %v2071
    %3552 = vmatprep.subr.bf16.mxu0 %v2080
    %3553 = vmatpush1.bf16.msra.mxu0 %v2079
    %3554 = vmatprep.subr.bf16.mxu0 %v2088
    %3555 = vmatpush1.bf16.msra.mxu0 %v2087
    %3556 = vmatprep.subr.bf16.mxu0 %v2096
    %3557 = vmatpush1.bf16.msra.mxu0 %v2095
    %3558 = vmatprep.subr.bf16.mxu0 %v2104
    %3559 = vmatpush1.bf16.msra.mxu0 %v2103
    %3560 = vmatprep.subr.bf16.mxu0 %v2112
    %3561 = vmatpush1.bf16.msra.mxu0 %v2111
    %3562 = vmatprep.subr.bf16.mxu0 %v2120
    %3563 = vmatpush1.bf16.msra.mxu0 %v2119
    %3564 = vmatprep.subr.bf16.mxu0 %v2128
    %3565 = vmatpush1.bf16.msra.mxu0 %v2127
    %3566 = vmatprep.subr.bf16.mxu0 %v2136
    %3567 = vmatpush1.bf16.msra.mxu0 %v2135
    %3568 = vmatprep.subr.bf16.mxu0 %v2144
    %3569 = vmatpush1.bf16.msra.mxu0 %v2143
    %3570 = vmatprep.subr.bf16.mxu0 %v2152
    %3571 = vmatpush1.bf16.msra.mxu0 %v2151
    %3572 = vmatprep.subr.bf16.mxu0 %v2160
    %3573 = vmatpush1.bf16.msra.mxu0 %v2159
    %3574 = vmatprep.subr.bf16.mxu0 %v2168
    %3575 = vmatpush1.bf16.msra.mxu0 %v2167
    %3576 = vmatprep.mubr.bf16.mxu0 %v1140
    %3577 = vmatmul.mubr.bf16.gmra.mrb[0].mxu0 %v1139
    %v3578 = vpop.f32.mrb[0].mxu0
    %v3579 = vadd.f32 %v3536, %v3578
    %v3580 = vpop.f32.mrb[0].mxu0
    %v3581 = vadd.f32 %v3538, %v3580
    %v3582 = vpop.f32.mrb[0].mxu0
    %v3583 = vadd.f32 %v3540, %v3582
    %v3584 = vpop.f32.mrb[0].mxu0
    %v3585 = vadd.f32 %v3542, %v3584
    %3586 = vdwg.mxu0
    %v3587 = vmax.f32 %v2547, 0.0
    %v3588 = vmax.f32 %v2549, 0.0
    %v3589 = vmax.f32 %v2891, 0.0
    %v3590 = vmax.f32 %v2893, 0.0
    %v3591 = vmax.f32 %v3235, 0.0
    %v3592 = vmax.f32 %v3237, 0.0
    %v3593 = vmax.f32 %v3579, 0.0
    %v3594 = vmax.f32 %v3581, 0.0
    %v3595 = vmax.f32 %v2551, 0.0
    %v3596 = vmax.f32 %v2553, 0.0
    %v3597 = vmax.f32 %v2895, 0.0
    %v3598 = vmax.f32 %v2897, 0.0
    %v3599 = vmax.f32 %v3239, 0.0
    %v3600 = vmax.f32 %v3241, 0.0
    %v3601 = vmax.f32 %v3583, 0.0
    %v3602 = vmax.f32 %v3585, 0.0
    %v3603 = vpack.c.bf16 %v3595, %v3587
    %v3604 = vpack.c.bf16 %v3596, %v3588
    %v3605 = vpack.c.bf16 %v3597, %v3589
    %v3606 = vpack.c.bf16 %v3598, %v3590
    %v3607 = vpack.c.bf16 %v3599, %v3591
    %v3608 = vpack.c.bf16 %v3600, %v3592
    %v3609 = vpack.c.bf16 %v3601, %v3593
    %v3610 = vpack.c.bf16 %v3602, %v3594
    %s3611 = smul.u32 4, 128
    %s3612 = smul.u32 %s3611, 4
    %s3613 = sshll.u32 %s3612, 4
    %3614 = dma.done %s206, %s3613
    %v3615 = vld [vmem:[#allocation4] sm:$0xff]
    %v3616 = vld [vmem:[#allocation4 + $0x8] sm:$0xff]
    %v3617 = vld [vmem:[#allocation4 + $0x10] sm:$0xff]
    %v3618 = vld [vmem:[#allocation4 + $0x18] sm:$0xff]
    %v3619 = vld [vmem:[#allocation4 + $0x20] sm:$0xff]
    %v3620 = vld [vmem:[#allocation4 + $0x28] sm:$0xff]
    %v3621 = vld [vmem:[#allocation4 + $0x30] sm:$0xff]
    %v3622 = vld [vmem:[#allocation4 + $0x38] sm:$0xff]
    %v3623 = vld [vmem:[#allocation4 + $0x40] sm:$0xff]
    %v3624 = vld [vmem:[#allocation4 + $0x48] sm:$0xff]
    %v3625 = vld [vmem:[#allocation4 + $0x50] sm:$0xff]
    %v3626 = vld [vmem:[#allocation4 + $0x58] sm:$0xff]
    %v3627 = vld [vmem:[#allocation4 + $0x60] sm:$0xff]
    %v3628 = vld [vmem:[#allocation4 + $0x68] sm:$0xff]
    %v3629 = vld [vmem:[#allocation4 + $0x70] sm:$0xff]
    %v3630 = vld [vmem:[#allocation4 + $0x78] sm:$0xff]
    %v3631 = vld [vmem:[#allocation4 + $0x80] sm:$0xff]
    %v3632 = vld [vmem:[#allocation4 + $0x88] sm:$0xff]
    %v3633 = vld [vmem:[#allocation4 + $0x90] sm:$0xff]
    %v3634 = vld [vmem:[#allocation4 + $0x98] sm:$0xff]
    %v3635 = vld [vmem:[#allocation4 + $0xa0] sm:$0xff]
    %v3636 = vld [vmem:[#allocation4 + $0xa8] sm:$0xff]
    %v3637 = vld [vmem:[#allocation4 + $0xb0] sm:$0xff]
    %v3638 = vld [vmem:[#allocation4 + $0xb8] sm:$0xff]
    %v3639 = vld [vmem:[#allocation4 + $0xc0] sm:$0xff]
    %v3640 = vld [vmem:[#allocation4 + $0xc8] sm:$0xff]
    %v3641 = vld [vmem:[#allocation4 + $0xd0] sm:$0xff]
    %v3642 = vld [vmem:[#allocation4 + $0xd8] sm:$0xff]
    %v3643 = vld [vmem:[#allocation4 + $0xe0] sm:$0xff]
    %v3644 = vld [vmem:[#allocation4 + $0xe8] sm:$0xff]
    %v3645 = vld [vmem:[#allocation4 + $0xf0] sm:$0xff]
    %v3646 = vld [vmem:[#allocation4 + $0xf8] sm:$0xff]
    %v3647 = vld [vmem:[#allocation4 + $0x100] sm:$0xff]
    %v3648 = vld [vmem:[#allocation4 + $0x108] sm:$0xff]
    %v3649 = vld [vmem:[#allocation4 + $0x110] sm:$0xff]
    %v3650 = vld [vmem:[#allocation4 + $0x118] sm:$0xff]
    %v3651 = vld [vmem:[#allocation4 + $0x120] sm:$0xff]
    %v3652 = vld [vmem:[#allocation4 + $0x128] sm:$0xff]
    %v3653 = vld [vmem:[#allocation4 + $0x130] sm:$0xff]
    %v3654 = vld [vmem:[#allocation4 + $0x138] sm:$0xff]
    %v3655 = vld [vmem:[#allocation4 + $0x140] sm:$0xff]
    %v3656 = vld [vmem:[#allocation4 + $0x148] sm:$0xff]
    %v3657 = vld [vmem:[#allocation4 + $0x150] sm:$0xff]
    %v3658 = vld [vmem:[#allocation4 + $0x158] sm:$0xff]
    %v3659 = vld [vmem:[#allocation4 + $0x160] sm:$0xff]
    %v3660 = vld [vmem:[#allocation4 + $0x168] sm:$0xff]
    %v3661 = vld [vmem:[#allocation4 + $0x170] sm:$0xff]
    %v3662 = vld [vmem:[#allocation4 + $0x178] sm:$0xff]
    %v3663 = vld [vmem:[#allocation4 + $0x180] sm:$0xff]
    %v3664 = vld [vmem:[#allocation4 + $0x188] sm:$0xff]
    %v3665 = vld [vmem:[#allocation4 + $0x190] sm:$0xff]
    %v3666 = vld [vmem:[#allocation4 + $0x198] sm:$0xff]
    %v3667 = vld [vmem:[#allocation4 + $0x1a0] sm:$0xff]
    %v3668 = vld [vmem:[#allocation4 + $0x1a8] sm:$0xff]
    %v3669 = vld [vmem:[#allocation4 + $0x1b0] sm:$0xff]
    %v3670 = vld [vmem:[#allocation4 + $0x1b8] sm:$0xff]
    %v3671 = vld [vmem:[#allocation4 + $0x1c0] sm:$0xff]
    %v3672 = vld [vmem:[#allocation4 + $0x1c8] sm:$0xff]
    %v3673 = vld [vmem:[#allocation4 + $0x1d0] sm:$0xff]
    %v3674 = vld [vmem:[#allocation4 + $0x1d8] sm:$0xff]
    %v3675 = vld [vmem:[#allocation4 + $0x1e0] sm:$0xff]
    %v3676 = vld [vmem:[#allocation4 + $0x1e8] sm:$0xff]
    %v3677 = vld [vmem:[#allocation4 + $0x1f0] sm:$0xff]
    %v3678 = vld [vmem:[#allocation4 + $0x1f8] sm:$0xff]
    %v3679 = vld [vmem:[#allocation4 + $0x200] sm:$0xff]
    %v3680 = vld [vmem:[#allocation4 + $0x208] sm:$0xff]
    %v3681 = vld [vmem:[#allocation4 + $0x210] sm:$0xff]
    %v3682 = vld [vmem:[#allocation4 + $0x218] sm:$0xff]
    %v3683 = vld [vmem:[#allocation4 + $0x220] sm:$0xff]
    %v3684 = vld [vmem:[#allocation4 + $0x228] sm:$0xff]
    %v3685 = vld [vmem:[#allocation4 + $0x230] sm:$0xff]
    %v3686 = vld [vmem:[#allocation4 + $0x238] sm:$0xff]
    %v3687 = vld [vmem:[#allocation4 + $0x240] sm:$0xff]
    %v3688 = vld [vmem:[#allocation4 + $0x248] sm:$0xff]
    %v3689 = vld [vmem:[#allocation4 + $0x250] sm:$0xff]
    %v3690 = vld [vmem:[#allocation4 + $0x258] sm:$0xff]
    %v3691 = vld [vmem:[#allocation4 + $0x260] sm:$0xff]
    %v3692 = vld [vmem:[#allocation4 + $0x268] sm:$0xff]
    %v3693 = vld [vmem:[#allocation4 + $0x270] sm:$0xff]
    %v3694 = vld [vmem:[#allocation4 + $0x278] sm:$0xff]
    %v3695 = vld [vmem:[#allocation4 + $0x280] sm:$0xff]
    %v3696 = vld [vmem:[#allocation4 + $0x288] sm:$0xff]
    %v3697 = vld [vmem:[#allocation4 + $0x290] sm:$0xff]
    %v3698 = vld [vmem:[#allocation4 + $0x298] sm:$0xff]
    %v3699 = vld [vmem:[#allocation4 + $0x2a0] sm:$0xff]
    %v3700 = vld [vmem:[#allocation4 + $0x2a8] sm:$0xff]
    %v3701 = vld [vmem:[#allocation4 + $0x2b0] sm:$0xff]
    %v3702 = vld [vmem:[#allocation4 + $0x2b8] sm:$0xff]
    %v3703 = vld [vmem:[#allocation4 + $0x2c0] sm:$0xff]
    %v3704 = vld [vmem:[#allocation4 + $0x2c8] sm:$0xff]
    %v3705 = vld [vmem:[#allocation4 + $0x2d0] sm:$0xff]
    %v3706 = vld [vmem:[#allocation4 + $0x2d8] sm:$0xff]
    %v3707 = vld [vmem:[#allocation4 + $0x2e0] sm:$0xff]
    %v3708 = vld [vmem:[#allocation4 + $0x2e8] sm:$0xff]
    %v3709 = vld [vmem:[#allocation4 + $0x2f0] sm:$0xff]
    %v3710 = vld [vmem:[#allocation4 + $0x2f8] sm:$0xff]
    %v3711 = vld [vmem:[#allocation4 + $0x300] sm:$0xff]
    %v3712 = vld [vmem:[#allocation4 + $0x308] sm:$0xff]
    %v3713 = vld [vmem:[#allocation4 + $0x310] sm:$0xff]
    %v3714 = vld [vmem:[#allocation4 + $0x318] sm:$0xff]
    %v3715 = vld [vmem:[#allocation4 + $0x320] sm:$0xff]
    %v3716 = vld [vmem:[#allocation4 + $0x328] sm:$0xff]
    %v3717 = vld [vmem:[#allocation4 + $0x330] sm:$0xff]
    %v3718 = vld [vmem:[#allocation4 + $0x338] sm:$0xff]
    %v3719 = vld [vmem:[#allocation4 + $0x340] sm:$0xff]
    %v3720 = vld [vmem:[#allocation4 + $0x348] sm:$0xff]
    %v3721 = vld [vmem:[#allocation4 + $0x350] sm:$0xff]
    %v3722 = vld [vmem:[#allocation4 + $0x358] sm:$0xff]
    %v3723 = vld [vmem:[#allocation4 + $0x360] sm:$0xff]
    %v3724 = vld [vmem:[#allocation4 + $0x368] sm:$0xff]
    %v3725 = vld [vmem:[#allocation4 + $0x370] sm:$0xff]
    %v3726 = vld [vmem:[#allocation4 + $0x378] sm:$0xff]
    %v3727 = vld [vmem:[#allocation4 + $0x380] sm:$0xff]
    %v3728 = vld [vmem:[#allocation4 + $0x388] sm:$0xff]
    %v3729 = vld [vmem:[#allocation4 + $0x390] sm:$0xff]
    %v3730 = vld [vmem:[#allocation4 + $0x398] sm:$0xff]
    %v3731 = vld [vmem:[#allocation4 + $0x3a0] sm:$0xff]
    %v3732 = vld [vmem:[#allocation4 + $0x3a8] sm:$0xff]
    %v3733 = vld [vmem:[#allocation4 + $0x3b0] sm:$0xff]
    %v3734 = vld [vmem:[#allocation4 + $0x3b8] sm:$0xff]
    %v3735 = vld [vmem:[#allocation4 + $0x3c0] sm:$0xff]
    %v3736 = vld [vmem:[#allocation4 + $0x3c8] sm:$0xff]
    %v3737 = vld [vmem:[#allocation4 + $0x3d0] sm:$0xff]
    %v3738 = vld [vmem:[#allocation4 + $0x3d8] sm:$0xff]
    %v3739 = vld [vmem:[#allocation4 + $0x3e0] sm:$0xff]
    %v3740 = vld [vmem:[#allocation4 + $0x3e8] sm:$0xff]
    %v3741 = vld [vmem:[#allocation4 + $0x3f0] sm:$0xff]
    %v3742 = vld [vmem:[#allocation4 + $0x3f8] sm:$0xff]
    %v3743 = vld [vmem:[#allocation4 + $0x400] sm:$0xff]
    %v3744 = vld [vmem:[#allocation4 + $0x408] sm:$0xff]
    %v3745 = vld [vmem:[#allocation4 + $0x410] sm:$0xff]
    %v3746 = vld [vmem:[#allocation4 + $0x418] sm:$0xff]
    %v3747 = vld [vmem:[#allocation4 + $0x420] sm:$0xff]
    %v3748 = vld [vmem:[#allocation4 + $0x428] sm:$0xff]
    %v3749 = vld [vmem:[#allocation4 + $0x430] sm:$0xff]
    %v3750 = vld [vmem:[#allocation4 + $0x438] sm:$0xff]
    %v3751 = vld [vmem:[#allocation4 + $0x440] sm:$0xff]
    %v3752 = vld [vmem:[#allocation4 + $0x448] sm:$0xff]
    %v3753 = vld [vmem:[#allocation4 + $0x450] sm:$0xff]
    %v3754 = vld [vmem:[#allocation4 + $0x458] sm:$0xff]
    %v3755 = vld [vmem:[#allocation4 + $0x460] sm:$0xff]
    %v3756 = vld [vmem:[#allocation4 + $0x468] sm:$0xff]
    %v3757 = vld [vmem:[#allocation4 + $0x470] sm:$0xff]
    %v3758 = vld [vmem:[#allocation4 + $0x478] sm:$0xff]
    %v3759 = vld [vmem:[#allocation4 + $0x480] sm:$0xff]
    %v3760 = vld [vmem:[#allocation4 + $0x488] sm:$0xff]
    %v3761 = vld [vmem:[#allocation4 + $0x490] sm:$0xff]
    %v3762 = vld [vmem:[#allocation4 + $0x498] sm:$0xff]
    %v3763 = vld [vmem:[#allocation4 + $0x4a0] sm:$0xff]
    %v3764 = vld [vmem:[#allocation4 + $0x4a8] sm:$0xff]
    %v3765 = vld [vmem:[#allocation4 + $0x4b0] sm:$0xff]
    %v3766 = vld [vmem:[#allocation4 + $0x4b8] sm:$0xff]
    %v3767 = vld [vmem:[#allocation4 + $0x4c0] sm:$0xff]
    %v3768 = vld [vmem:[#allocation4 + $0x4c8] sm:$0xff]
    %v3769 = vld [vmem:[#allocation4 + $0x4d0] sm:$0xff]
    %v3770 = vld [vmem:[#allocation4 + $0x4d8] sm:$0xff]
    %v3771 = vld [vmem:[#allocation4 + $0x4e0] sm:$0xff]
    %v3772 = vld [vmem:[#allocation4 + $0x4e8] sm:$0xff]
    %v3773 = vld [vmem:[#allocation4 + $0x4f0] sm:$0xff]
    %v3774 = vld [vmem:[#allocation4 + $0x4f8] sm:$0xff]
    %v3775 = vld [vmem:[#allocation4 + $0x500] sm:$0xff]
    %v3776 = vld [vmem:[#allocation4 + $0x508] sm:$0xff]
    %v3777 = vld [vmem:[#allocation4 + $0x510] sm:$0xff]
    %v3778 = vld [vmem:[#allocation4 + $0x518] sm:$0xff]
    %v3779 = vld [vmem:[#allocation4 + $0x520] sm:$0xff]
    %v3780 = vld [vmem:[#allocation4 + $0x528] sm:$0xff]
    %v3781 = vld [vmem:[#allocation4 + $0x530] sm:$0xff]
    %v3782 = vld [vmem:[#allocation4 + $0x538] sm:$0xff]
    %v3783 = vld [vmem:[#allocation4 + $0x540] sm:$0xff]
    %v3784 = vld [vmem:[#allocation4 + $0x548] sm:$0xff]
    %v3785 = vld [vmem:[#allocation4 + $0x550] sm:$0xff]
    %v3786 = vld [vmem:[#allocation4 + $0x558] sm:$0xff]
    %v3787 = vld [vmem:[#allocation4 + $0x560] sm:$0xff]
    %v3788 = vld [vmem:[#allocation4 + $0x568] sm:$0xff]
    %v3789 = vld [vmem:[#allocation4 + $0x570] sm:$0xff]
    %v3790 = vld [vmem:[#allocation4 + $0x578] sm:$0xff]
    %v3791 = vld [vmem:[#allocation4 + $0x580] sm:$0xff]
    %v3792 = vld [vmem:[#allocation4 + $0x588] sm:$0xff]
    %v3793 = vld [vmem:[#allocation4 + $0x590] sm:$0xff]
    %v3794 = vld [vmem:[#allocation4 + $0x598] sm:$0xff]
    %v3795 = vld [vmem:[#allocation4 + $0x5a0] sm:$0xff]
    %v3796 = vld [vmem:[#allocation4 + $0x5a8] sm:$0xff]
    %v3797 = vld [vmem:[#allocation4 + $0x5b0] sm:$0xff]
    %v3798 = vld [vmem:[#allocation4 + $0x5b8] sm:$0xff]
    %v3799 = vld [vmem:[#allocation4 + $0x5c0] sm:$0xff]
    %v3800 = vld [vmem:[#allocation4 + $0x5c8] sm:$0xff]
    %v3801 = vld [vmem:[#allocation4 + $0x5d0] sm:$0xff]
    %v3802 = vld [vmem:[#allocation4 + $0x5d8] sm:$0xff]
    %v3803 = vld [vmem:[#allocation4 + $0x5e0] sm:$0xff]
    %v3804 = vld [vmem:[#allocation4 + $0x5e8] sm:$0xff]
    %v3805 = vld [vmem:[#allocation4 + $0x5f0] sm:$0xff]
    %v3806 = vld [vmem:[#allocation4 + $0x5f8] sm:$0xff]
    %v3807 = vld [vmem:[#allocation4 + $0x600] sm:$0xff]
    %v3808 = vld [vmem:[#allocation4 + $0x608] sm:$0xff]
    %v3809 = vld [vmem:[#allocation4 + $0x610] sm:$0xff]
    %v3810 = vld [vmem:[#allocation4 + $0x618] sm:$0xff]
    %v3811 = vld [vmem:[#allocation4 + $0x620] sm:$0xff]
    %v3812 = vld [vmem:[#allocation4 + $0x628] sm:$0xff]
    %v3813 = vld [vmem:[#allocation4 + $0x630] sm:$0xff]
    %v3814 = vld [vmem:[#allocation4 + $0x638] sm:$0xff]
    %v3815 = vld [vmem:[#allocation4 + $0x640] sm:$0xff]
    %v3816 = vld [vmem:[#allocation4 + $0x648] sm:$0xff]
    %v3817 = vld [vmem:[#allocation4 + $0x650] sm:$0xff]
    %v3818 = vld [vmem:[#allocation4 + $0x658] sm:$0xff]
    %v3819 = vld [vmem:[#allocation4 + $0x660] sm:$0xff]
    %v3820 = vld [vmem:[#allocation4 + $0x668] sm:$0xff]
    %v3821 = vld [vmem:[#allocation4 + $0x670] sm:$0xff]
    %v3822 = vld [vmem:[#allocation4 + $0x678] sm:$0xff]
    %v3823 = vld [vmem:[#allocation4 + $0x680] sm:$0xff]
    %v3824 = vld [vmem:[#allocation4 + $0x688] sm:$0xff]
    %v3825 = vld [vmem:[#allocation4 + $0x690] sm:$0xff]
    %v3826 = vld [vmem:[#allocation4 + $0x698] sm:$0xff]
    %v3827 = vld [vmem:[#allocation4 + $0x6a0] sm:$0xff]
    %v3828 = vld [vmem:[#allocation4 + $0x6a8] sm:$0xff]
    %v3829 = vld [vmem:[#allocation4 + $0x6b0] sm:$0xff]
    %v3830 = vld [vmem:[#allocation4 + $0x6b8] sm:$0xff]
    %v3831 = vld [vmem:[#allocation4 + $0x6c0] sm:$0xff]
    %v3832 = vld [vmem:[#allocation4 + $0x6c8] sm:$0xff]
    %v3833 = vld [vmem:[#allocation4 + $0x6d0] sm:$0xff]
    %v3834 = vld [vmem:[#allocation4 + $0x6d8] sm:$0xff]
    %v3835 = vld [vmem:[#allocation4 + $0x6e0] sm:$0xff]
    %v3836 = vld [vmem:[#allocation4 + $0x6e8] sm:$0xff]
    %v3837 = vld [vmem:[#allocation4 + $0x6f0] sm:$0xff]
    %v3838 = vld [vmem:[#allocation4 + $0x6f8] sm:$0xff]
    %v3839 = vld [vmem:[#allocation4 + $0x700] sm:$0xff]
    %v3840 = vld [vmem:[#allocation4 + $0x708] sm:$0xff]
    %v3841 = vld [vmem:[#allocation4 + $0x710] sm:$0xff]
    %v3842 = vld [vmem:[#allocation4 + $0x718] sm:$0xff]
    %v3843 = vld [vmem:[#allocation4 + $0x720] sm:$0xff]
    %v3844 = vld [vmem:[#allocation4 + $0x728] sm:$0xff]
    %v3845 = vld [vmem:[#allocation4 + $0x730] sm:$0xff]
    %v3846 = vld [vmem:[#allocation4 + $0x738] sm:$0xff]
    %v3847 = vld [vmem:[#allocation4 + $0x740] sm:$0xff]
    %v3848 = vld [vmem:[#allocation4 + $0x748] sm:$0xff]
    %v3849 = vld [vmem:[#allocation4 + $0x750] sm:$0xff]
    %v3850 = vld [vmem:[#allocation4 + $0x758] sm:$0xff]
    %v3851 = vld [vmem:[#allocation4 + $0x760] sm:$0xff]
    %v3852 = vld [vmem:[#allocation4 + $0x768] sm:$0xff]
    %v3853 = vld [vmem:[#allocation4 + $0x770] sm:$0xff]
    %v3854 = vld [vmem:[#allocation4 + $0x778] sm:$0xff]
    %v3855 = vld [vmem:[#allocation4 + $0x780] sm:$0xff]
    %v3856 = vld [vmem:[#allocation4 + $0x788] sm:$0xff]
    %v3857 = vld [vmem:[#allocation4 + $0x790] sm:$0xff]
    %v3858 = vld [vmem:[#allocation4 + $0x798] sm:$0xff]
    %v3859 = vld [vmem:[#allocation4 + $0x7a0] sm:$0xff]
    %v3860 = vld [vmem:[#allocation4 + $0x7a8] sm:$0xff]
    %v3861 = vld [vmem:[#allocation4 + $0x7b0] sm:$0xff]
    %v3862 = vld [vmem:[#allocation4 + $0x7b8] sm:$0xff]
    %v3863 = vld [vmem:[#allocation4 + $0x7c0] sm:$0xff]
    %v3864 = vld [vmem:[#allocation4 + $0x7c8] sm:$0xff]
    %v3865 = vld [vmem:[#allocation4 + $0x7d0] sm:$0xff]
    %v3866 = vld [vmem:[#allocation4 + $0x7d8] sm:$0xff]
    %v3867 = vld [vmem:[#allocation4 + $0x7e0] sm:$0xff]
    %v3868 = vld [vmem:[#allocation4 + $0x7e8] sm:$0xff]
    %v3869 = vld [vmem:[#allocation4 + $0x7f0] sm:$0xff]
    %v3870 = vld [vmem:[#allocation4 + $0x7f8] sm:$0xff]
    %v3871 = vld [vmem:[#allocation15] sm:$0xf]
    %v3873 = vlaneseq
    %v3874 = vshrl.u32 %v3873, 7
    %v3875 = vsub.s32 0, %v3874
    %v3876 = vrot.slane %v3871, %v3875
    %v3877 = vlaneseq
    %v3878 = vshrl.u32 %v3877, 7
    %v3879 = vsub.s32 1, %v3878
    %v3880 = vrot.slane %v3871, %v3879
    %v3881 = vlaneseq
    %v3882 = vshrl.u32 %v3881, 7
    %v3883 = vsub.s32 2, %v3882
    %v3884 = vrot.slane %v3871, %v3883
    %v3885 = vlaneseq
    %v3886 = vshrl.u32 %v3885, 7
    %v3887 = vsub.s32 3, %v3886
    %v3888 = vrot.slane %v3871, %v3887
    %3893 = vmatprep.subr.bf16.mxu0 %v3616
    %3894 = vmatpush1.bf16.msra.mxu0 %v3615
    %3895 = vmatprep.subr.bf16.mxu0 %v3620
    %3896 = vmatpush1.bf16.msra.mxu0 %v3619
    %3897 = vmatprep.subr.bf16.mxu0 %v3624
    %3898 = vmatpush1.bf16.msra.mxu0 %v3623
    %3899 = vmatprep.subr.bf16.mxu0 %v3628
    %3900 = vmatpush1.bf16.msra.mxu0 %v3627
    %3901 = vmatprep.subr.bf16.mxu0 %v3632
    %3902 = vmatpush1.bf16.msra.mxu0 %v3631
    %3903 = vmatprep.subr.bf16.mxu0 %v3636
    %3904 = vmatpush1.bf16.msra.mxu0 %v3635
    %3905 = vmatprep.subr.bf16.mxu0 %v3640
    %3906 = vmatpush1.bf16.msra.mxu0 %v3639
    %3907 = vmatprep.subr.bf16.mxu0 %v3644
    %3908 = vmatpush1.bf16.msra.mxu0 %v3643
    %3909 = vmatprep.subr.bf16.mxu0 %v3648
    %3910 = vmatpush1.bf16.msra.mxu0 %v3647
    %3911 = vmatprep.subr.bf16.mxu0 %v3652
    %3912 = vmatpush1.bf16.msra.mxu0 %v3651
    %3913 = vmatprep.subr.bf16.mxu0 %v3656
    %3914 = vmatpush1.bf16.msra.mxu0 %v3655
    %3915 = vmatprep.subr.bf16.mxu0 %v3660
    %3916 = vmatpush1.bf16.msra.mxu0 %v3659
    %3917 = vmatprep.subr.bf16.mxu0 %v3664
    %3918 = vmatpush1.bf16.msra.mxu0 %v3663
    %3919 = vmatprep.subr.bf16.mxu0 %v3668
    %3920 = vmatpush1.bf16.msra.mxu0 %v3667
    %3921 = vmatprep.subr.bf16.mxu0 %v3672
    %3922 = vmatpush1.bf16.msra.mxu0 %v3671
    %3923 = vmatprep.subr.bf16.mxu0 %v3676
    %3924 = vmatpush1.bf16.msra.mxu0 %v3675
    %3925 = vmatprep.mubr.bf16.mxu0 %v3604
    %3926 = vmatmul.mubr.bf16.gmra.mrb[0].mxu0 %v3603
    %v3927 = vpop.f32.mrb[0].mxu0
    %v3928 = vadd.f32 %v3876, %v3927
    %v3929 = vpop.f32.mrb[0].mxu0
    %v3930 = vadd.f32 %v3880, %v3929
    %v3931 = vpop.f32.mrb[0].mxu0
    %v3932 = vadd.f32 %v3876, %v3931
    %v3933 = vpop.f32.mrb[0].mxu0
    %v3934 = vadd.f32 %v3880, %v3933
    %3935 = vdwg.mxu0
    %3936 = vmatprep.subr.bf16.mxu0 %v3680
    %3937 = vmatpush1.bf16.msra.mxu0 %v3679
    %3938 = vmatprep.subr.bf16.mxu0 %v3684
    %3939 = vmatpush1.bf16.msra.mxu0 %v3683
    %3940 = vmatprep.subr.bf16.mxu0 %v3688
    %3941 = vmatpush1.bf16.msra.mxu0 %v3687
    %3942 = vmatprep.subr.bf16.mxu0 %v3692
    %3943 = vmatpush1.bf16.msra.mxu0 %v3691
    %3944 = vmatprep.subr.bf16.mxu0 %v3696
    %3945 = vmatpush1.bf16.msra.mxu0 %v3695
    %3946 = vmatprep.subr.bf16.mxu0 %v3700
    %3947 = vmatpush1.bf16.msra.mxu0 %v3699
    %3948 = vmatprep.subr.bf16.mxu0 %v3704
    %3949 = vmatpush1.bf16.msra.mxu0 %v3703
    %3950 = vmatprep.subr.bf16.mxu0 %v3708
    %3951 = vmatpush1.bf16.msra.mxu0 %v3707
    %3952 = vmatprep.subr.bf16.mxu0 %v3712
    %3953 = vmatpush1.bf16.msra.mxu0 %v3711
    %3954 = vmatprep.subr.bf16.mxu0 %v3716
    %3955 = vmatpush1.bf16.msra.mxu0 %v3715
    %3956 = vmatprep.subr.bf16.mxu0 %v3720
    %3957 = vmatpush1.bf16.msra.mxu0 %v3719
    %3958 = vmatprep.subr.bf16.mxu0 %v3724
    %3959 = vmatpush1.bf16.msra.mxu0 %v3723
    %3960 = vmatprep.subr.bf16.mxu0 %v3728
    %3961 = vmatpush1.bf16.msra.mxu0 %v3727
    %3962 = vmatprep.subr.bf16.mxu0 %v3732
    %3963 = vmatpush1.bf16.msra.mxu0 %v3731
    %3964 = vmatprep.subr.bf16.mxu0 %v3736
    %3965 = vmatpush1.bf16.msra.mxu0 %v3735
    %3966 = vmatprep.subr.bf16.mxu0 %v3740
    %3967 = vmatpush1.bf16.msra.mxu0 %v3739
    %3968 = vmatprep.mubr.bf16.mxu0 %v3606
    %3969 = vmatmul.mubr.bf16.gmra.mrb[0].mxu0 %v3605
    %v3970 = vpop.f32.mrb[0].mxu0
    %v3971 = vadd.f32 %v3928, %v3970
    %v3972 = vpop.f32.mrb[0].mxu0
    %v3973 = vadd.f32 %v3930, %v3972
    %v3974 = vpop.f32.mrb[0].mxu0
    %v3975 = vadd.f32 %v3932, %v3974
    %v3976 = vpop.f32.mrb[0].mxu0
    %v3977 = vadd.f32 %v3934, %v3976
    %3978 = vdwg.mxu0
    %3979 = vmatprep.subr.bf16.mxu0 %v3744
    %3980 = vmatpush1.bf16.msra.mxu0 %v3743
    %3981 = vmatprep.subr.bf16.mxu0 %v3748
    %3982 = vmatpush1.bf16.msra.mxu0 %v3747
    %3983 = vmatprep.subr.bf16.mxu0 %v3752
    %3984 = vmatpush1.bf16.msra.mxu0 %v3751
    %3985 = vmatprep.subr.bf16.mxu0 %v3756
    %3986 = vmatpush1.bf16.msra.mxu0 %v3755
    %3987 = vmatprep.subr.bf16.mxu0 %v3760
    %3988 = vmatpush1.bf16.msra.mxu0 %v3759
    %3989 = vmatprep.subr.bf16.mxu0 %v3764
    %3990 = vmatpush1.bf16.msra.mxu0 %v3763
    %3991 = vmatprep.subr.bf16.mxu0 %v3768
    %3992 = vmatpush1.bf16.msra.mxu0 %v3767
    %3993 = vmatprep.subr.bf16.mxu0 %v3772
    %3994 = vmatpush1.bf16.msra.mxu0 %v3771
    %3995 = vmatprep.subr.bf16.mxu0 %v3776
    %3996 = vmatpush1.bf16.msra.mxu0 %v3775
    %3997 = vmatprep.subr.bf16.mxu0 %v3780
    %3998 = vmatpush1.bf16.msra.mxu0 %v3779
    %3999 = vmatprep.subr.bf16.mxu0 %v3784
    %4000 = vmatpush1.bf16.msra.mxu0 %v3783
    %4001 = vmatprep.subr.bf16.mxu0 %v3788
    %4002 = vmatpush1.bf16.msra.mxu0 %v3787
    %4003 = vmatprep.subr.bf16.mxu0 %v3792
    %4004 = vmatpush1.bf16.msra.mxu0 %v3791
    %4005 = vmatprep.subr.bf16.mxu0 %v3796
    %4006 = vmatpush1.bf16.msra.mxu0 %v3795
    %4007 = vmatprep.subr.bf16.mxu0 %v3800
    %4008 = vmatpush1.bf16.msra.mxu0 %v3799
    %4009 = vmatprep.subr.bf16.mxu0 %v3804
    %4010 = vmatpush1.bf16.msra.mxu0 %v3803
    %4011 = vmatprep.mubr.bf16.mxu0 %v3608
    %4012 = vmatmul.mubr.bf16.gmra.mrb[0].mxu0 %v3607
    %v4013 = vpop.f32.mrb[0].mxu0
    %v4014 = vadd.f32 %v3971, %v4013
    %v4015 = vpop.f32.mrb[0].mxu0
    %v4016 = vadd.f32 %v3973, %v4015
    %v4017 = vpop.f32.mrb[0].mxu0
    %v4018 = vadd.f32 %v3975, %v4017
    %v4019 = vpop.f32.mrb[0].mxu0
    %v4020 = vadd.f32 %v3977, %v4019
    %4021 = vdwg.mxu0
    %4022 = vmatprep.subr.bf16.mxu0 %v3808
    %4023 = vmatpush1.bf16.msra.mxu0 %v3807
    %4024 = vmatprep.subr.bf16.mxu0 %v3812
    %4025 = vmatpush1.bf16.msra.mxu0 %v3811
    %4026 = vmatprep.subr.bf16.mxu0 %v3816
    %4027 = vmatpush1.bf16.msra.mxu0 %v3815
    %4028 = vmatprep.subr.bf16.mxu0 %v3820
    %4029 = vmatpush1.bf16.msra.mxu0 %v3819
    %4030 = vmatprep.subr.bf16.mxu0 %v3824
    %4031 = vmatpush1.bf16.msra.mxu0 %v3823
    %4032 = vmatprep.subr.bf16.mxu0 %v3828
    %4033 = vmatpush1.bf16.msra.mxu0 %v3827
    %4034 = vmatprep.subr.bf16.mxu0 %v3832
    %4035 = vmatpush1.bf16.msra.mxu0 %v3831
    %4036 = vmatprep.subr.bf16.mxu0 %v3836
    %4037 = vmatpush1.bf16.msra.mxu0 %v3835
    %4038 = vmatprep.subr.bf16.mxu0 %v3840
    %4039 = vmatpush1.bf16.msra.mxu0 %v3839
    %4040 = vmatprep.subr.bf16.mxu0 %v3844
    %4041 = vmatpush1.bf16.msra.mxu0 %v3843
    %4042 = vmatprep.subr.bf16.mxu0 %v3848
    %4043 = vmatpush1.bf16.msra.mxu0 %v3847
    %4044 = vmatprep.subr.bf16.mxu0 %v3852
    %4045 = vmatpush1.bf16.msra.mxu0 %v3851
    %4046 = vmatprep.subr.bf16.mxu0 %v3856
    %4047 = vmatpush1.bf16.msra.mxu0 %v3855
    %4048 = vmatprep.subr.bf16.mxu0 %v3860
    %4049 = vmatpush1.bf16.msra.mxu0 %v3859
    %4050 = vmatprep.subr.bf16.mxu0 %v3864
    %4051 = vmatpush1.bf16.msra.mxu0 %v3863
    %4052 = vmatprep.subr.bf16.mxu0 %v3868
    %4053 = vmatpush1.bf16.msra.mxu0 %v3867
    %4054 = vmatprep.mubr.bf16.mxu0 %v3610
    %4055 = vmatmul.mubr.bf16.gmra.mrb[0].mxu0 %v3609
    %v4056 = vpop.f32.mrb[0].mxu0
    %v4057 = vadd.f32 %v4014, %v4056
    %v4058 = vpop.f32.mrb[0].mxu0
    %v4059 = vadd.f32 %v4016, %v4058
    %v4060 = vpop.f32.mrb[0].mxu0
    %v4061 = vadd.f32 %v4018, %v4060
    %v4062 = vpop.f32.mrb[0].mxu0
    %v4063 = vadd.f32 %v4020, %v4062
    %4064 = vdwg.mxu0
    %4065 = vmatprep.subr.bf16.mxu0 %v3618
    %4066 = vmatpush1.bf16.msra.mxu0 %v3617
    %4067 = vmatprep.subr.bf16.mxu0 %v3622
    %4068 = vmatpush1.bf16.msra.mxu0 %v3621
    %4069 = vmatprep.subr.bf16.mxu0 %v3626
    %4070 = vmatpush1.bf16.msra.mxu0 %v3625
    %4071 = vmatprep.subr.bf16.mxu0 %v3630
    %4072 = vmatpush1.bf16.msra.mxu0 %v3629
    %4073 = vmatprep.subr.bf16.mxu0 %v3634
    %4074 = vmatpush1.bf16.msra.mxu0 %v3633
    %4075 = vmatprep.subr.bf16.mxu0 %v3638
    %4076 = vmatpush1.bf16.msra.mxu0 %v3637
    %4077 = vmatprep.subr.bf16.mxu0 %v3642
    %4078 = vmatpush1.bf16.msra.mxu0 %v3641
    %4079 = vmatprep.subr.bf16.mxu0 %v3646
    %4080 = vmatpush1.bf16.msra.mxu0 %v3645
    %4081 = vmatprep.subr.bf16.mxu0 %v3650
    %4082 = vmatpush1.bf16.msra.mxu0 %v3649
    %4083 = vmatprep.subr.bf16.mxu0 %v3654
    %4084 = vmatpush1.bf16.msra.mxu0 %v3653
    %4085 = vmatprep.subr.bf16.mxu0 %v3658
    %4086 = vmatpush1.bf16.msra.mxu0 %v3657
    %4087 = vmatprep.subr.bf16.mxu0 %v3662
    %4088 = vmatpush1.bf16.msra.mxu0 %v3661
    %4089 = vmatprep.subr.bf16.mxu0 %v3666
    %4090 = vmatpush1.bf16.msra.mxu0 %v3665
    %4091 = vmatprep.subr.bf16.mxu0 %v3670
    %4092 = vmatpush1.bf16.msra.mxu0 %v3669
    %4093 = vmatprep.subr.bf16.mxu0 %v3674
    %4094 = vmatpush1.bf16.msra.mxu0 %v3673
    %4095 = vmatprep.subr.bf16.mxu0 %v3678
    %4096 = vmatpush1.bf16.msra.mxu0 %v3677
    %4097 = vmatprep.mubr.bf16.mxu0 %v3604
    %4098 = vmatmul.mubr.bf16.gmra.mrb[0].mxu0 %v3603
    %v4099 = vpop.f32.mrb[0].mxu0
    %v4100 = vadd.f32 %v3884, %v4099
    %v4101 = vpop.f32.mrb[0].mxu0
    %v4102 = vadd.f32 %v3888, %v4101
    %v4103 = vpop.f32.mrb[0].mxu0
    %v4104 = vadd.f32 %v3884, %v4103
    %v4105 = vpop.f32.mrb[0].mxu0
    %v4106 = vadd.f32 %v3888, %v4105
    %4107 = vdwg.mxu0
    %4108 = vmatprep.subr.bf16.mxu0 %v3682
    %4109 = vmatpush1.bf16.msra.mxu0 %v3681
    %4110 = vmatprep.subr.bf16.mxu0 %v3686
    %4111 = vmatpush1.bf16.msra.mxu0 %v3685
    %4112 = vmatprep.subr.bf16.mxu0 %v3690
    %4113 = vmatpush1.bf16.msra.mxu0 %v3689
    %4114 = vmatprep.subr.bf16.mxu0 %v3694
    %4115 = vmatpush1.bf16.msra.mxu0 %v3693
    %4116 = vmatprep.subr.bf16.mxu0 %v3698
    %4117 = vmatpush1.bf16.msra.mxu0 %v3697
    %4118 = vmatprep.subr.bf16.mxu0 %v3702
    %4119 = vmatpush1.bf16.msra.mxu0 %v3701
    %4120 = vmatprep.subr.bf16.mxu0 %v3706
    %4121 = vmatpush1.bf16.msra.mxu0 %v3705
    %4122 = vmatprep.subr.bf16.mxu0 %v3710
    %4123 = vmatpush1.bf16.msra.mxu0 %v3709
    %4124 = vmatprep.subr.bf16.mxu0 %v3714
    %4125 = vmatpush1.bf16.msra.mxu0 %v3713
    %4126 = vmatprep.subr.bf16.mxu0 %v3718
    %4127 = vmatpush1.bf16.msra.mxu0 %v3717
    %4128 = vmatprep.subr.bf16.mxu0 %v3722
    %4129 = vmatpush1.bf16.msra.mxu0 %v3721
    %4130 = vmatprep.subr.bf16.mxu0 %v3726
    %4131 = vmatpush1.bf16.msra.mxu0 %v3725
    %4132 = vmatprep.subr.bf16.mxu0 %v3730
    %4133 = vmatpush1.bf16.msra.mxu0 %v3729
    %4134 = vmatprep.subr.bf16.mxu0 %v3734
    %4135 = vmatpush1.bf16.msra.mxu0 %v3733
    %4136 = vmatprep.subr.bf16.mxu0 %v3738
    %4137 = vmatpush1.bf16.msra.mxu0 %v3737
    %4138 = vmatprep.subr.bf16.mxu0 %v3742
    %4139 = vmatpush1.bf16.msra.mxu0 %v3741
    %4140 = vmatprep.mubr.bf16.mxu0 %v3606
    %4141 = vmatmul.mubr.bf16.gmra.mrb[0].mxu0 %v3605
    %v4142 = vpop.f32.mrb[0].mxu0
    %v4143 = vadd.f32 %v4100, %v4142
    %v4144 = vpop.f32.mrb[0].mxu0
    %v4145 = vadd.f32 %v4102, %v4144
    %v4146 = vpop.f32.mrb[0].mxu0
    %v4147 = vadd.f32 %v4104, %v4146
    %v4148 = vpop.f32.mrb[0].mxu0
    %v4149 = vadd.f32 %v4106, %v4148
    %4150 = vdwg.mxu0
    %4151 = vmatprep.subr.bf16.mxu0 %v3746
    %4152 = vmatpush1.bf16.msra.mxu0 %v3745
    %4153 = vmatprep.subr.bf16.mxu0 %v3750
    %4154 = vmatpush1.bf16.msra.mxu0 %v3749
    %4155 = vmatprep.subr.bf16.mxu0 %v3754
    %4156 = vmatpush1.bf16.msra.mxu0 %v3753
    %4157 = vmatprep.subr.bf16.mxu0 %v3758
    %4158 = vmatpush1.bf16.msra.mxu0 %v3757
    %4159 = vmatprep.subr.bf16.mxu0 %v3762
    %4160 = vmatpush1.bf16.msra.mxu0 %v3761
    %4161 = vmatprep.subr.bf16.mxu0 %v3766
    %4162 = vmatpush1.bf16.msra.mxu0 %v3765
    %4163 = vmatprep.subr.bf16.mxu0 %v3770
    %4164 = vmatpush1.bf16.msra.mxu0 %v3769
    %4165 = vmatprep.subr.bf16.mxu0 %v3774
    %4166 = vmatpush1.bf16.msra.mxu0 %v3773
    %4167 = vmatprep.subr.bf16.mxu0 %v3778
    %4168 = vmatpush1.bf16.msra.mxu0 %v3777
    %4169 = vmatprep.subr.bf16.mxu0 %v3782
    %4170 = vmatpush1.bf16.msra.mxu0 %v3781
    %4171 = vmatprep.subr.bf16.mxu0 %v3786
    %4172 = vmatpush1.bf16.msra.mxu0 %v3785
    %4173 = vmatprep.subr.bf16.mxu0 %v3790
    %4174 = vmatpush1.bf16.msra.mxu0 %v3789
    %4175 = vmatprep.subr.bf16.mxu0 %v3794
    %4176 = vmatpush1.bf16.msra.mxu0 %v3793
    %4177 = vmatprep.subr.bf16.mxu0 %v3798
    %4178 = vmatpush1.bf16.msra.mxu0 %v3797
    %4179 = vmatprep.subr.bf16.mxu0 %v3802
    %4180 = vmatpush1.bf16.msra.mxu0 %v3801
    %4181 = vmatprep.subr.bf16.mxu0 %v3806
    %4182 = vmatpush1.bf16.msra.mxu0 %v3805
    %4183 = vmatprep.mubr.bf16.mxu0 %v3608
    %4184 = vmatmul.mubr.bf16.gmra.mrb[0].mxu0 %v3607
    %v4185 = vpop.f32.mrb[0].mxu0
    %v4186 = vadd.f32 %v4143, %v4185
    %v4187 = vpop.f32.mrb[0].mxu0
    %v4188 = vadd.f32 %v4145, %v4187
    %v4189 = vpop.f32.mrb[0].mxu0
    %v4190 = vadd.f32 %v4147, %v4189
    %v4191 = vpop.f32.mrb[0].mxu0
    %v4192 = vadd.f32 %v4149, %v4191
    %4193 = vdwg.mxu0
    %4194 = vmatprep.subr.bf16.mxu0 %v3810
    %4195 = vmatpush1.bf16.msra.mxu0 %v3809
    %4196 = vmatprep.subr.bf16.mxu0 %v3814
    %4197 = vmatpush1.bf16.msra.mxu0 %v3813
    %4198 = vmatprep.subr.bf16.mxu0 %v3818
    %4199 = vmatpush1.bf16.msra.mxu0 %v3817
    %4200 = vmatprep.subr.bf16.mxu0 %v3822
    %4201 = vmatpush1.bf16.msra.mxu0 %v3821
    %4202 = vmatprep.subr.bf16.mxu0 %v3826
    %4203 = vmatpush1.bf16.msra.mxu0 %v3825
    %4204 = vmatprep.subr.bf16.mxu0 %v3830
    %4205 = vmatpush1.bf16.msra.mxu0 %v3829
    %4206 = vmatprep.subr.bf16.mxu0 %v3834
    %4207 = vmatpush1.bf16.msra.mxu0 %v3833
    %4208 = vmatprep.subr.bf16.mxu0 %v3838
    %4209 = vmatpush1.bf16.msra.mxu0 %v3837
    %4210 = vmatprep.subr.bf16.mxu0 %v3842
    %4211 = vmatpush1.bf16.msra.mxu0 %v3841
    %4212 = vmatprep.subr.bf16.mxu0 %v3846
    %4213 = vmatpush1.bf16.msra.mxu0 %v3845
    %4214 = vmatprep.subr.bf16.mxu0 %v3850
    %4215 = vmatpush1.bf16.msra.mxu0 %v3849
    %4216 = vmatprep.subr.bf16.mxu0 %v3854
    %4217 = vmatpush1.bf16.msra.mxu0 %v3853
    %4218 = vmatprep.subr.bf16.mxu0 %v3858
    %4219 = vmatpush1.bf16.msra.mxu0 %v3857
    %4220 = vmatprep.subr.bf16.mxu0 %v3862
    %4221 = vmatpush1.bf16.msra.mxu0 %v3861
    %4222 = vmatprep.subr.bf16.mxu0 %v3866
    %4223 = vmatpush1.bf16.msra.mxu0 %v3865
    %4224 = vmatprep.subr.bf16.mxu0 %v3870
    %4225 = vmatpush1.bf16.msra.mxu0 %v3869
    %4226 = vmatprep.mubr.bf16.mxu0 %v3610
    %4227 = vmatmul.mubr.bf16.gmra.mrb[0].mxu0 %v3609
    %v4228 = vpop.f32.mrb[0].mxu0
    %v4229 = vadd.f32 %v4186, %v4228
    %v4230 = vpop.f32.mrb[0].mxu0
    %v4231 = vadd.f32 %v4188, %v4230
    %v4232 = vpop.f32.mrb[0].mxu0
    %v4233 = vadd.f32 %v4190, %v4232
    %v4234 = vpop.f32.mrb[0].mxu0
    %v4235 = vadd.f32 %v4192, %v4234
    %4236 = vdwg.mxu0
    %v4237 = vmax.f32 %v4057, 0.0
    %v4238 = vmax.f32 %v4059, 0.0
    %v4239 = vmax.f32 %v4229, 0.0
    %v4240 = vmax.f32 %v4231, 0.0
    %v4241 = vmax.f32 %v4061, 0.0
    %v4242 = vmax.f32 %v4063, 0.0
    %v4243 = vmax.f32 %v4233, 0.0
    %v4244 = vmax.f32 %v4235, 0.0
    %v4245 = vpack.c.bf16 %v4241, %v4237
    %v4246 = vpack.c.bf16 %v4242, %v4238
    %v4247 = vpack.c.bf16 %v4243, %v4239
    %v4248 = vpack.c.bf16 %v4244, %v4240
    %s4249 = smul.u32 4, 64
    %s4250 = smul.u32 %s4249, 1
    %s4251 = sshll.u32 %s4250, 4
    %4252 = dma.done %s241, %s4251
    %v4253 = vld [vmem:[#allocation5] sm:$0xff]
    %v4254 = vld [vmem:[#allocation5 + $0x8] sm:$0xff]
    %v4255 = vld [vmem:[#allocation5 + $0x10] sm:$0xff]
    %v4256 = vld [vmem:[#allocation5 + $0x18] sm:$0xff]
    %v4257 = vld [vmem:[#allocation5 + $0x20] sm:$0xff]
    %v4258 = vld [vmem:[#allocation5 + $0x28] sm:$0xff]
    %v4259 = vld [vmem:[#allocation5 + $0x30] sm:$0xff]
    %v4260 = vld [vmem:[#allocation5 + $0x38] sm:$0xff]
    %v4261 = vld [vmem:[#allocation5 + $0x40] sm:$0xff]
    %v4262 = vld [vmem:[#allocation5 + $0x48] sm:$0xff]
    %v4263 = vld [vmem:[#allocation5 + $0x50] sm:$0xff]
    %v4264 = vld [vmem:[#allocation5 + $0x58] sm:$0xff]
    %v4265 = vld [vmem:[#allocation5 + $0x60] sm:$0xff]
    %v4266 = vld [vmem:[#allocation5 + $0x68] sm:$0xff]
    %v4267 = vld [vmem:[#allocation5 + $0x70] sm:$0xff]
    %v4268 = vld [vmem:[#allocation5 + $0x78] sm:$0xff]
    %v4269 = vld [vmem:[#allocation5 + $0x80] sm:$0xff]
    %v4270 = vld [vmem:[#allocation5 + $0x88] sm:$0xff]
    %v4271 = vld [vmem:[#allocation5 + $0x90] sm:$0xff]
    %v4272 = vld [vmem:[#allocation5 + $0x98] sm:$0xff]
    %v4273 = vld [vmem:[#allocation5 + $0xa0] sm:$0xff]
    %v4274 = vld [vmem:[#allocation5 + $0xa8] sm:$0xff]
    %v4275 = vld [vmem:[#allocation5 + $0xb0] sm:$0xff]
    %v4276 = vld [vmem:[#allocation5 + $0xb8] sm:$0xff]
    %v4277 = vld [vmem:[#allocation5 + $0xc0] sm:$0xff]
    %v4278 = vld [vmem:[#allocation5 + $0xc8] sm:$0xff]
    %v4279 = vld [vmem:[#allocation5 + $0xd0] sm:$0xff]
    %v4280 = vld [vmem:[#allocation5 + $0xd8] sm:$0xff]
    %v4281 = vld [vmem:[#allocation5 + $0xe0] sm:$0xff]
    %v4282 = vld [vmem:[#allocation5 + $0xe8] sm:$0xff]
    %v4283 = vld [vmem:[#allocation5 + $0xf0] sm:$0xff]
    %v4284 = vld [vmem:[#allocation5 + $0xf8] sm:$0xff]
    %v4285 = vld [vmem:[#allocation16] sm:$0x1]
    %v4287 = vlaneseq
    %v4288 = vshrl.u32 %v4287, 7
    %v4289 = vsub.s32 0, %v4288
    %v4290 = vrot.slane %v4285, %v4289
    %4292 = vmatprep.subr.bf16.mxu0 0
    %4293 = vmatpush1.bf16.msra.mxu0 %v4253
    %4294 = vmatprep.subr.bf16.mxu0 0
    %4295 = vmatpush1.bf16.msra.mxu0 %v4254
    %4296 = vmatprep.subr.bf16.mxu0 0
    %4297 = vmatpush1.bf16.msra.mxu0 %v4255
    %4298 = vmatprep.subr.bf16.mxu0 0
    %4299 = vmatpush1.bf16.msra.mxu0 %v4256
    %4300 = vmatprep.subr.bf16.mxu0 0
    %4301 = vmatpush1.bf16.msra.mxu0 %v4257
    %4302 = vmatprep.subr.bf16.mxu0 0
    %4303 = vmatpush1.bf16.msra.mxu0 %v4258
    %4304 = vmatprep.subr.bf16.mxu0 0
    %4305 = vmatpush1.bf16.msra.mxu0 %v4259
    %4306 = vmatprep.subr.bf16.mxu0 0
    %4307 = vmatpush1.bf16.msra.mxu0 %v4260
    %4308 = vmatprep.subr.bf16.mxu0 0
    %4309 = vmatpush1.bf16.msra.mxu0 %v4261
    %4310 = vmatprep.subr.bf16.mxu0 0
    %4311 = vmatpush1.bf16.msra.mxu0 %v4262
    %4312 = vmatprep.subr.bf16.mxu0 0
    %4313 = vmatpush1.bf16.msra.mxu0 %v4263
    %4314 = vmatprep.subr.bf16.mxu0 0
    %4315 = vmatpush1.bf16.msra.mxu0 %v4264
    %4316 = vmatprep.subr.bf16.mxu0 0
    %4317 = vmatpush1.bf16.msra.mxu0 %v4265
    %4318 = vmatprep.subr.bf16.mxu0 0
    %4319 = vmatpush1.bf16.msra.mxu0 %v4266
    %4320 = vmatprep.subr.bf16.mxu0 0
    %4321 = vmatpush1.bf16.msra.mxu0 %v4267
    %4322 = vmatprep.subr.bf16.mxu0 0
    %4323 = vmatpush1.bf16.msra.mxu0 %v4268
    %4324 = vmatprep.mubr.bf16.mxu0 %v4246
    %4325 = vmatmul.mubr.bf16.gmra.mrb[0].mxu0 %v4245
    %v4326 = vpop.f32.mrb[0].mxu0
    %v4327 = vadd.f32 %v4290, %v4326
    %v4328 = vpop.f32.mrb[0].mxu0
    %v4329 = vpop.f32.mrb[0].mxu0
    %v4330 = vadd.f32 %v4290, %v4329
    %v4331 = vpop.f32.mrb[0].mxu0
    %4332 = vdwg.mxu0
    %4333 = vmatprep.subr.bf16.mxu0 0
    %4334 = vmatpush1.bf16.msra.mxu0 %v4269
    %4335 = vmatprep.subr.bf16.mxu0 0
    %4336 = vmatpush1.bf16.msra.mxu0 %v4270
    %4337 = vmatprep.subr.bf16.mxu0 0
    %4338 = vmatpush1.bf16.msra.mxu0 %v4271
    %4339 = vmatprep.subr.bf16.mxu0 0
    %4340 = vmatpush1.bf16.msra.mxu0 %v4272
    %4341 = vmatprep.subr.bf16.mxu0 0
    %4342 = vmatpush1.bf16.msra.mxu0 %v4273
    %4343 = vmatprep.subr.bf16.mxu0 0
    %4344 = vmatpush1.bf16.msra.mxu0 %v4274
    %4345 = vmatprep.subr.bf16.mxu0 0
    %4346 = vmatpush1.bf16.msra.mxu0 %v4275
    %4347 = vmatprep.subr.bf16.mxu0 0
    %4348 = vmatpush1.bf16.msra.mxu0 %v4276
    %4349 = vmatprep.subr.bf16.mxu0 0
    %4350 = vmatpush1.bf16.msra.mxu0 %v4277
    %4351 = vmatprep.subr.bf16.mxu0 0
    %4352 = vmatpush1.bf16.msra.mxu0 %v4278
    %4353 = vmatprep.subr.bf16.mxu0 0
    %4354 = vmatpush1.bf16.msra.mxu0 %v4279
    %4355 = vmatprep.subr.bf16.mxu0 0
    %4356 = vmatpush1.bf16.msra.mxu0 %v4280
    %4357 = vmatprep.subr.bf16.mxu0 0
    %4358 = vmatpush1.bf16.msra.mxu0 %v4281
    %4359 = vmatprep.subr.bf16.mxu0 0
    %4360 = vmatpush1.bf16.msra.mxu0 %v4282
    %4361 = vmatprep.subr.bf16.mxu0 0
    %4362 = vmatpush1.bf16.msra.mxu0 %v4283
    %4363 = vmatprep.subr.bf16.mxu0 0
    %4364 = vmatpush1.bf16.msra.mxu0 %v4284
    %4365 = vmatprep.mubr.bf16.mxu0 %v4248
    %4366 = vmatmul.mubr.bf16.gmra.mrb[0].mxu0 %v4247
    %v4367 = vpop.f32.mrb[0].mxu0
    %v4368 = vadd.f32 %v4327, %v4367
    %v4369 = vpop.f32.mrb[0].mxu0
    %v4370 = vpop.f32.mrb[0].mxu0
    %v4371 = vadd.f32 %v4330, %v4370
    %v4372 = vpop.f32.mrb[0].mxu0
    %4373 = vdwg.mxu0
    %4374 = vst [vmem:[%s18] sm:$0xff] %v4368
    %4375 = vst [vmem:[%s18 + $0x8] sm:$0xff] %v4371
    %v4376 = vmax.f32 %v4368, 0.0
    %v4377 = vmax.f32 %v4371, 0.0
    %v4378 = vpack.c.bf16 %v4377, %v4376
    %s4379 = smul.u32 4, 16
    %s4380 = smul.u32 %s4379, 4
    %s4381 = sshll.u32 %s4380, 4
    %4382 = dma.done %s253, %s4381
    %v4383 = vld [vmem:[#allocation6] sm:$0xff]
    %v4384 = vld [vmem:[#allocation6 + $0x8] sm:$0xff]
    %v4385 = vld [vmem:[#allocation6 + $0x10] sm:$0xff]
    %v4386 = vld [vmem:[#allocation6 + $0x18] sm:$0xff]
    %v4387 = vld [vmem:[#allocation6 + $0x20] sm:$0xff]
    %v4388 = vld [vmem:[#allocation6 + $0x28] sm:$0xff]
    %v4389 = vld [vmem:[#allocation6 + $0x30] sm:$0xff]
    %v4390 = vld [vmem:[#allocation6 + $0x38] sm:$0xff]
    %v4391 = vld [vmem:[#allocation6 + $0x40] sm:$0xff]
    %v4392 = vld [vmem:[#allocation6 + $0x48] sm:$0xff]
    %v4393 = vld [vmem:[#allocation6 + $0x50] sm:$0xff]
    %v4394 = vld [vmem:[#allocation6 + $0x58] sm:$0xff]
    %v4395 = vld [vmem:[#allocation6 + $0x60] sm:$0xff]
    %v4396 = vld [vmem:[#allocation6 + $0x68] sm:$0xff]
    %v4397 = vld [vmem:[#allocation6 + $0x70] sm:$0xff]
    %v4398 = vld [vmem:[#allocation6 + $0x78] sm:$0xff]
    %v4399 = vld [vmem:[#allocation6 + $0x80] sm:$0xff]
    %v4400 = vld [vmem:[#allocation6 + $0x88] sm:$0xff]
    %v4401 = vld [vmem:[#allocation6 + $0x90] sm:$0xff]
    %v4402 = vld [vmem:[#allocation6 + $0x98] sm:$0xff]
    %v4403 = vld [vmem:[#allocation6 + $0xa0] sm:$0xff]
    %v4404 = vld [vmem:[#allocation6 + $0xa8] sm:$0xff]
    %v4405 = vld [vmem:[#allocation6 + $0xb0] sm:$0xff]
    %v4406 = vld [vmem:[#allocation6 + $0xb8] sm:$0xff]
    %v4407 = vld [vmem:[#allocation6 + $0xc0] sm:$0xff]
    %v4408 = vld [vmem:[#allocation6 + $0xc8] sm:$0xff]
    %v4409 = vld [vmem:[#allocation6 + $0xd0] sm:$0xff]
    %v4410 = vld [vmem:[#allocation6 + $0xd8] sm:$0xff]
    %v4411 = vld [vmem:[#allocation6 + $0xe0] sm:$0xff]
    %v4412 = vld [vmem:[#allocation6 + $0xe8] sm:$0xff]
    %v4413 = vld [vmem:[#allocation6 + $0xf0] sm:$0xff]
    %v4414 = vld [vmem:[#allocation6 + $0xf8] sm:$0xff]
    %v4415 = vld [vmem:[#allocation18] sm:$0xf]
    %v4417 = vlaneseq
    %v4418 = vshrl.u32 %v4417, 7
    %v4419 = vsub.s32 0, %v4418
    %v4420 = vrot.slane %v4415, %v4419
    %v4421 = vlaneseq
    %v4422 = vshrl.u32 %v4421, 7
    %v4423 = vsub.s32 1, %v4422
    %v4424 = vrot.slane %v4415, %v4423
    %v4425 = vlaneseq
    %v4426 = vshrl.u32 %v4425, 7
    %v4427 = vsub.s32 2, %v4426
    %v4428 = vrot.slane %v4415, %v4427
    %v4429 = vlaneseq
    %v4430 = vshrl.u32 %v4429, 7
    %v4431 = vsub.s32 3, %v4430
    %v4432 = vrot.slane %v4415, %v4431
    %4437 = vmatprep.subr.bf16.mxu0 %v4384
    %4438 = vmatpush1.bf16.msra.mxu0 %v4383
    %4439 = vmatprep.subr.bf16.mxu0 %v4388
    %4440 = vmatpush1.bf16.msra.mxu0 %v4387
    %4441 = vmatprep.subr.bf16.mxu0 %v4392
    %4442 = vmatpush1.bf16.msra.mxu0 %v4391
    %4443 = vmatprep.subr.bf16.mxu0 %v4396
    %4444 = vmatpush1.bf16.msra.mxu0 %v4395
    %4445 = vmatprep.subr.bf16.mxu0 %v4400
    %4446 = vmatpush1.bf16.msra.mxu0 %v4399
    %4447 = vmatprep.subr.bf16.mxu0 %v4404
    %4448 = vmatpush1.bf16.msra.mxu0 %v4403
    %4449 = vmatprep.subr.bf16.mxu0 %v4408
    %4450 = vmatpush1.bf16.msra.mxu0 %v4407
    %4451 = vmatprep.subr.bf16.mxu0 %v4412
    %4452 = vmatpush1.bf16.msra.mxu0 %v4411
    %4453 = vmatprep.subr.bf16.mxu0 0
    %4454 = vmatpush1.bf16.msra.mxu0 0
    %4455 = vmatprep.subr.bf16.mxu0 0
    %4456 = vmatpush1.bf16.msra.mxu0 0
    %4457 = vmatprep.subr.bf16.mxu0 0
    %4458 = vmatpush1.bf16.msra.mxu0 0
    %4459 = vmatprep.subr.bf16.mxu0 0
    %4460 = vmatpush1.bf16.msra.mxu0 0
    %4461 = vmatprep.subr.bf16.mxu0 0
    %4462 = vmatpush1.bf16.msra.mxu0 0
    %4463 = vmatprep.subr.bf16.mxu0 0
    %4464 = vmatpush1.bf16.msra.mxu0 0
    %4465 = vmatprep.subr.bf16.mxu0 0
    %4466 = vmatpush1.bf16.msra.mxu0 0
    %4467 = vmatprep.subr.bf16.mxu0 0
    %4468 = vmatpush1.bf16.msra.mxu0 0
    %4469 = vmatprep.mubr.bf16.mxu0 0
    %4470 = vmatmul.mubr.bf16.gmra.mrb[0].mxu0 %v4378
    %v4471 = vpop.f32.mrb[0].mxu0
    %v4472 = vadd.f32 %v4420, %v4471
    %v4473 = vpop.f32.mrb[0].mxu0
    %v4474 = vadd.f32 %v4424, %v4473
    %v4475 = vpop.f32.mrb[0].mxu0
    %v4476 = vadd.f32 %v4420, %v4475
    %v4477 = vpop.f32.mrb[0].mxu0
    %v4478 = vadd.f32 %v4424, %v4477
    %4479 = vdwg.mxu0
    %4480 = vmatprep.subr.bf16.mxu0 %v4386
    %4481 = vmatpush1.bf16.msra.mxu0 %v4385
    %4482 = vmatprep.subr.bf16.mxu0 %v4390
    %4483 = vmatpush1.bf16.msra.mxu0 %v4389
    %4484 = vmatprep.subr.bf16.mxu0 %v4394
    %4485 = vmatpush1.bf16.msra.mxu0 %v4393
    %4486 = vmatprep.subr.bf16.mxu0 %v4398
    %4487 = vmatpush1.bf16.msra.mxu0 %v4397
    %4488 = vmatprep.subr.bf16.mxu0 %v4402
    %4489 = vmatpush1.bf16.msra.mxu0 %v4401
    %4490 = vmatprep.subr.bf16.mxu0 %v4406
    %4491 = vmatpush1.bf16.msra.mxu0 %v4405
    %4492 = vmatprep.subr.bf16.mxu0 %v4410
    %4493 = vmatpush1.bf16.msra.mxu0 %v4409
    %4494 = vmatprep.subr.bf16.mxu0 %v4414
    %4495 = vmatpush1.bf16.msra.mxu0 %v4413
    %4496 = vmatprep.subr.bf16.mxu0 0
    %4497 = vmatpush1.bf16.msra.mxu0 0
    %4498 = vmatprep.subr.bf16.mxu0 0
    %4499 = vmatpush1.bf16.msra.mxu0 0
    %4500 = vmatprep.subr.bf16.mxu0 0
    %4501 = vmatpush1.bf16.msra.mxu0 0
    %4502 = vmatprep.subr.bf16.mxu0 0
    %4503 = vmatpush1.bf16.msra.mxu0 0
    %4504 = vmatprep.subr.bf16.mxu0 0
    %4505 = vmatpush1.bf16.msra.mxu0 0
    %4506 = vmatprep.subr.bf16.mxu0 0
    %4507 = vmatpush1.bf16.msra.mxu0 0
    %4508 = vmatprep.subr.bf16.mxu0 0
    %4509 = vmatpush1.bf16.msra.mxu0 0
    %4510 = vmatprep.subr.bf16.mxu0 0
    %4511 = vmatpush1.bf16.msra.mxu0 0
    %4512 = vmatprep.mubr.bf16.mxu0 0
    %4513 = vmatmul.mubr.bf16.gmra.mrb[0].mxu0 %v4378
    %v4514 = vpop.f32.mrb[0].mxu0
    %v4515 = vadd.f32 %v4428, %v4514
    %v4516 = vpop.f32.mrb[0].mxu0
    %v4517 = vadd.f32 %v4432, %v4516
    %v4518 = vpop.f32.mrb[0].mxu0
    %v4519 = vadd.f32 %v4428, %v4518
    %v4520 = vpop.f32.mrb[0].mxu0
    %v4521 = vadd.f32 %v4432, %v4520
    %4522 = vdwg.mxu0
    %v4523 = vmax.f32 %v4472, 0.0
    %v4524 = vmax.f32 %v4474, 0.0
    %v4525 = vmax.f32 %v4515, 0.0
    %v4526 = vmax.f32 %v4517, 0.0
    %v4527 = vmax.f32 %v4476, 0.0
    %v4528 = vmax.f32 %v4478, 0.0
    %v4529 = vmax.f32 %v4519, 0.0
    %v4530 = vmax.f32 %v4521, 0.0
    %v4531 = vpack.c.bf16 %v4527, %v4523
    %v4532 = vpack.c.bf16 %v4528, %v4524
    %v4533 = vpack.c.bf16 %v4529, %v4525
    %v4534 = vpack.c.bf16 %v4530, %v4526
    %s4535 = smul.u32 %s4249, 8
    %s4536 = sshll.u32 %s4535, 4
    %4537 = dma.done %s288, %s4536
    %v4538 = vld [vmem:[#allocation7] sm:$0xff]
    %v4539 = vld [vmem:[#allocation7 + $0x8] sm:$0xff]
    %v4540 = vld [vmem:[#allocation7 + $0x10] sm:$0xff]
    %v4541 = vld [vmem:[#allocation7 + $0x18] sm:$0xff]
    %v4542 = vld [vmem:[#allocation7 + $0x20] sm:$0xff]
    %v4543 = vld [vmem:[#allocation7 + $0x28] sm:$0xff]
    %v4544 = vld [vmem:[#allocation7 + $0x30] sm:$0xff]
    %v4545 = vld [vmem:[#allocation7 + $0x38] sm:$0xff]
    %v4546 = vld [vmem:[#allocation7 + $0x40] sm:$0xff]
    %v4547 = vld [vmem:[#allocation7 + $0x48] sm:$0xff]
    %v4548 = vld [vmem:[#allocation7 + $0x50] sm:$0xff]
    %v4549 = vld [vmem:[#allocation7 + $0x58] sm:$0xff]
    %v4550 = vld [vmem:[#allocation7 + $0x60] sm:$0xff]
    %v4551 = vld [vmem:[#allocation7 + $0x68] sm:$0xff]
    %v4552 = vld [vmem:[#allocation7 + $0x70] sm:$0xff]
    %v4553 = vld [vmem:[#allocation7 + $0x78] sm:$0xff]
    %v4554 = vld [vmem:[#allocation7 + $0x80] sm:$0xff]
    %v4555 = vld [vmem:[#allocation7 + $0x88] sm:$0xff]
    %v4556 = vld [vmem:[#allocation7 + $0x90] sm:$0xff]
    %v4557 = vld [vmem:[#allocation7 + $0x98] sm:$0xff]
    %v4558 = vld [vmem:[#allocation7 + $0xa0] sm:$0xff]
    %v4559 = vld [vmem:[#allocation7 + $0xa8] sm:$0xff]
    %v4560 = vld [vmem:[#allocation7 + $0xb0] sm:$0xff]
    %v4561 = vld [vmem:[#allocation7 + $0xb8] sm:$0xff]
    %v4562 = vld [vmem:[#allocation7 + $0xc0] sm:$0xff]
    %v4563 = vld [vmem:[#allocation7 + $0xc8] sm:$0xff]
    %v4564 = vld [vmem:[#allocation7 + $0xd0] sm:$0xff]
    %v4565 = vld [vmem:[#allocation7 + $0xd8] sm:$0xff]
    %v4566 = vld [vmem:[#allocation7 + $0xe0] sm:$0xff]
    %v4567 = vld [vmem:[#allocation7 + $0xe8] sm:$0xff]
    %v4568 = vld [vmem:[#allocation7 + $0xf0] sm:$0xff]
    %v4569 = vld [vmem:[#allocation7 + $0xf8] sm:$0xff]
    %v4570 = vld [vmem:[#allocation7 + $0x100] sm:$0xff]
    %v4571 = vld [vmem:[#allocation7 + $0x108] sm:$0xff]
    %v4572 = vld [vmem:[#allocation7 + $0x110] sm:$0xff]
    %v4573 = vld [vmem:[#allocation7 + $0x118] sm:$0xff]
    %v4574 = vld [vmem:[#allocation7 + $0x120] sm:$0xff]
    %v4575 = vld [vmem:[#allocation7 + $0x128] sm:$0xff]
    %v4576 = vld [vmem:[#allocation7 + $0x130] sm:$0xff]
    %v4577 = vld [vmem:[#allocation7 + $0x138] sm:$0xff]
    %v4578 = vld [vmem:[#allocation7 + $0x140] sm:$0xff]
    %v4579 = vld [vmem:[#allocation7 + $0x148] sm:$0xff]
    %v4580 = vld [vmem:[#allocation7 + $0x150] sm:$0xff]
    %v4581 = vld [vmem:[#allocation7 + $0x158] sm:$0xff]
    %v4582 = vld [vmem:[#allocation7 + $0x160] sm:$0xff]
    %v4583 = vld [vmem:[#allocation7 + $0x168] sm:$0xff]
    %v4584 = vld [vmem:[#allocation7 + $0x170] sm:$0xff]
    %v4585 = vld [vmem:[#allocation7 + $0x178] sm:$0xff]
    %v4586 = vld [vmem:[#allocation7 + $0x180] sm:$0xff]
    %v4587 = vld [vmem:[#allocation7 + $0x188] sm:$0xff]
    %v4588 = vld [vmem:[#allocation7 + $0x190] sm:$0xff]
    %v4589 = vld [vmem:[#allocation7 + $0x198] sm:$0xff]
    %v4590 = vld [vmem:[#allocation7 + $0x1a0] sm:$0xff]
    %v4591 = vld [vmem:[#allocation7 + $0x1a8] sm:$0xff]
    %v4592 = vld [vmem:[#allocation7 + $0x1b0] sm:$0xff]
    %v4593 = vld [vmem:[#allocation7 + $0x1b8] sm:$0xff]
    %v4594 = vld [vmem:[#allocation7 + $0x1c0] sm:$0xff]
    %v4595 = vld [vmem:[#allocation7 + $0x1c8] sm:$0xff]
    %v4596 = vld [vmem:[#allocation7 + $0x1d0] sm:$0xff]
    %v4597 = vld [vmem:[#allocation7 + $0x1d8] sm:$0xff]
    %v4598 = vld [vmem:[#allocation7 + $0x1e0] sm:$0xff]
    %v4599 = vld [vmem:[#allocation7 + $0x1e8] sm:$0xff]
    %v4600 = vld [vmem:[#allocation7 + $0x1f0] sm:$0xff]
    %v4601 = vld [vmem:[#allocation7 + $0x1f8] sm:$0xff]
    %v4602 = vld [vmem:[#allocation7 + $0x200] sm:$0xff]
    %v4603 = vld [vmem:[#allocation7 + $0x208] sm:$0xff]
    %v4604 = vld [vmem:[#allocation7 + $0x210] sm:$0xff]
    %v4605 = vld [vmem:[#allocation7 + $0x218] sm:$0xff]
    %v4606 = vld [vmem:[#allocation7 + $0x220] sm:$0xff]
    %v4607 = vld [vmem:[#allocation7 + $0x228] sm:$0xff]
    %v4608 = vld [vmem:[#allocation7 + $0x230] sm:$0xff]
    %v4609 = vld [vmem:[#allocation7 + $0x238] sm:$0xff]
    %v4610 = vld [vmem:[#allocation7 + $0x240] sm:$0xff]
    %v4611 = vld [vmem:[#allocation7 + $0x248] sm:$0xff]
    %v4612 = vld [vmem:[#allocation7 + $0x250] sm:$0xff]
    %v4613 = vld [vmem:[#allocation7 + $0x258] sm:$0xff]
    %v4614 = vld [vmem:[#allocation7 + $0x260] sm:$0xff]
    %v4615 = vld [vmem:[#allocation7 + $0x268] sm:$0xff]
    %v4616 = vld [vmem:[#allocation7 + $0x270] sm:$0xff]
    %v4617 = vld [vmem:[#allocation7 + $0x278] sm:$0xff]
    %v4618 = vld [vmem:[#allocation7 + $0x280] sm:$0xff]
    %v4619 = vld [vmem:[#allocation7 + $0x288] sm:$0xff]
    %v4620 = vld [vmem:[#allocation7 + $0x290] sm:$0xff]
    %v4621 = vld [vmem:[#allocation7 + $0x298] sm:$0xff]
    %v4622 = vld [vmem:[#allocation7 + $0x2a0] sm:$0xff]
    %v4623 = vld [vmem:[#allocation7 + $0x2a8] sm:$0xff]
    %v4624 = vld [vmem:[#allocation7 + $0x2b0] sm:$0xff]
    %v4625 = vld [vmem:[#allocation7 + $0x2b8] sm:$0xff]
    %v4626 = vld [vmem:[#allocation7 + $0x2c0] sm:$0xff]
    %v4627 = vld [vmem:[#allocation7 + $0x2c8] sm:$0xff]
    %v4628 = vld [vmem:[#allocation7 + $0x2d0] sm:$0xff]
    %v4629 = vld [vmem:[#allocation7 + $0x2d8] sm:$0xff]
    %v4630 = vld [vmem:[#allocation7 + $0x2e0] sm:$0xff]
    %v4631 = vld [vmem:[#allocation7 + $0x2e8] sm:$0xff]
    %v4632 = vld [vmem:[#allocation7 + $0x2f0] sm:$0xff]
    %v4633 = vld [vmem:[#allocation7 + $0x2f8] sm:$0xff]
    %v4634 = vld [vmem:[#allocation7 + $0x300] sm:$0xff]
    %v4635 = vld [vmem:[#allocation7 + $0x308] sm:$0xff]
    %v4636 = vld [vmem:[#allocation7 + $0x310] sm:$0xff]
    %v4637 = vld [vmem:[#allocation7 + $0x318] sm:$0xff]
    %v4638 = vld [vmem:[#allocation7 + $0x320] sm:$0xff]
    %v4639 = vld [vmem:[#allocation7 + $0x328] sm:$0xff]
    %v4640 = vld [vmem:[#allocation7 + $0x330] sm:$0xff]
    %v4641 = vld [vmem:[#allocation7 + $0x338] sm:$0xff]
    %v4642 = vld [vmem:[#allocation7 + $0x340] sm:$0xff]
    %v4643 = vld [vmem:[#allocation7 + $0x348] sm:$0xff]
    %v4644 = vld [vmem:[#allocation7 + $0x350] sm:$0xff]
    %v4645 = vld [vmem:[#allocation7 + $0x358] sm:$0xff]
    %v4646 = vld [vmem:[#allocation7 + $0x360] sm:$0xff]
    %v4647 = vld [vmem:[#allocation7 + $0x368] sm:$0xff]
    %v4648 = vld [vmem:[#allocation7 + $0x370] sm:$0xff]
    %v4649 = vld [vmem:[#allocation7 + $0x378] sm:$0xff]
    %v4650 = vld [vmem:[#allocation7 + $0x380] sm:$0xff]
    %v4651 = vld [vmem:[#allocation7 + $0x388] sm:$0xff]
    %v4652 = vld [vmem:[#allocation7 + $0x390] sm:$0xff]
    %v4653 = vld [vmem:[#allocation7 + $0x398] sm:$0xff]
    %v4654 = vld [vmem:[#allocation7 + $0x3a0] sm:$0xff]
    %v4655 = vld [vmem:[#allocation7 + $0x3a8] sm:$0xff]
    %v4656 = vld [vmem:[#allocation7 + $0x3b0] sm:$0xff]
    %v4657 = vld [vmem:[#allocation7 + $0x3b8] sm:$0xff]
    %v4658 = vld [vmem:[#allocation7 + $0x3c0] sm:$0xff]
    %v4659 = vld [vmem:[#allocation7 + $0x3c8] sm:$0xff]
    %v4660 = vld [vmem:[#allocation7 + $0x3d0] sm:$0xff]
    %v4661 = vld [vmem:[#allocation7 + $0x3d8] sm:$0xff]
    %v4662 = vld [vmem:[#allocation7 + $0x3e0] sm:$0xff]
    %v4663 = vld [vmem:[#allocation7 + $0x3e8] sm:$0xff]
    %v4664 = vld [vmem:[#allocation7 + $0x3f0] sm:$0xff]
    %v4665 = vld [vmem:[#allocation7 + $0x3f8] sm:$0xff]
    %v4666 = vld [vmem:[#allocation7 + $0x400] sm:$0xff]
    %v4667 = vld [vmem:[#allocation7 + $0x408] sm:$0xff]
    %v4668 = vld [vmem:[#allocation7 + $0x410] sm:$0xff]
    %v4669 = vld [vmem:[#allocation7 + $0x418] sm:$0xff]
    %v4670 = vld [vmem:[#allocation7 + $0x420] sm:$0xff]
    %v4671 = vld [vmem:[#allocation7 + $0x428] sm:$0xff]
    %v4672 = vld [vmem:[#allocation7 + $0x430] sm:$0xff]
    %v4673 = vld [vmem:[#allocation7 + $0x438] sm:$0xff]
    %v4674 = vld [vmem:[#allocation7 + $0x440] sm:$0xff]
    %v4675 = vld [vmem:[#allocation7 + $0x448] sm:$0xff]
    %v4676 = vld [vmem:[#allocation7 + $0x450] sm:$0xff]
    %v4677 = vld [vmem:[#allocation7 + $0x458] sm:$0xff]
    %v4678 = vld [vmem:[#allocation7 + $0x460] sm:$0xff]
    %v4679 = vld [vmem:[#allocation7 + $0x468] sm:$0xff]
    %v4680 = vld [vmem:[#allocation7 + $0x470] sm:$0xff]
    %v4681 = vld [vmem:[#allocation7 + $0x478] sm:$0xff]
    %v4682 = vld [vmem:[#allocation7 + $0x480] sm:$0xff]
    %v4683 = vld [vmem:[#allocation7 + $0x488] sm:$0xff]
    %v4684 = vld [vmem:[#allocation7 + $0x490] sm:$0xff]
    %v4685 = vld [vmem:[#allocation7 + $0x498] sm:$0xff]
    %v4686 = vld [vmem:[#allocation7 + $0x4a0] sm:$0xff]
    %v4687 = vld [vmem:[#allocation7 + $0x4a8] sm:$0xff]
    %v4688 = vld [vmem:[#allocation7 + $0x4b0] sm:$0xff]
    %v4689 = vld [vmem:[#allocation7 + $0x4b8] sm:$0xff]
    %v4690 = vld [vmem:[#allocation7 + $0x4c0] sm:$0xff]
    %v4691 = vld [vmem:[#allocation7 + $0x4c8] sm:$0xff]
    %v4692 = vld [vmem:[#allocation7 + $0x4d0] sm:$0xff]
    %v4693 = vld [vmem:[#allocation7 + $0x4d8] sm:$0xff]
    %v4694 = vld [vmem:[#allocation7 + $0x4e0] sm:$0xff]
    %v4695 = vld [vmem:[#allocation7 + $0x4e8] sm:$0xff]
    %v4696 = vld [vmem:[#allocation7 + $0x4f0] sm:$0xff]
    %v4697 = vld [vmem:[#allocation7 + $0x4f8] sm:$0xff]
    %v4698 = vld [vmem:[#allocation7 + $0x500] sm:$0xff]
    %v4699 = vld [vmem:[#allocation7 + $0x508] sm:$0xff]
    %v4700 = vld [vmem:[#allocation7 + $0x510] sm:$0xff]
    %v4701 = vld [vmem:[#allocation7 + $0x518] sm:$0xff]
    %v4702 = vld [vmem:[#allocation7 + $0x520] sm:$0xff]
    %v4703 = vld [vmem:[#allocation7 + $0x528] sm:$0xff]
    %v4704 = vld [vmem:[#allocation7 + $0x530] sm:$0xff]
    %v4705 = vld [vmem:[#allocation7 + $0x538] sm:$0xff]
    %v4706 = vld [vmem:[#allocation7 + $0x540] sm:$0xff]
    %v4707 = vld [vmem:[#allocation7 + $0x548] sm:$0xff]
    %v4708 = vld [vmem:[#allocation7 + $0x550] sm:$0xff]
    %v4709 = vld [vmem:[#allocation7 + $0x558] sm:$0xff]
    %v4710 = vld [vmem:[#allocation7 + $0x560] sm:$0xff]
    %v4711 = vld [vmem:[#allocation7 + $0x568] sm:$0xff]
    %v4712 = vld [vmem:[#allocation7 + $0x570] sm:$0xff]
    %v4713 = vld [vmem:[#allocation7 + $0x578] sm:$0xff]
    %v4714 = vld [vmem:[#allocation7 + $0x580] sm:$0xff]
    %v4715 = vld [vmem:[#allocation7 + $0x588] sm:$0xff]
    %v4716 = vld [vmem:[#allocation7 + $0x590] sm:$0xff]
    %v4717 = vld [vmem:[#allocation7 + $0x598] sm:$0xff]
    %v4718 = vld [vmem:[#allocation7 + $0x5a0] sm:$0xff]
    %v4719 = vld [vmem:[#allocation7 + $0x5a8] sm:$0xff]
    %v4720 = vld [vmem:[#allocation7 + $0x5b0] sm:$0xff]
    %v4721 = vld [vmem:[#allocation7 + $0x5b8] sm:$0xff]
    %v4722 = vld [vmem:[#allocation7 + $0x5c0] sm:$0xff]
    %v4723 = vld [vmem:[#allocation7 + $0x5c8] sm:$0xff]
    %v4724 = vld [vmem:[#allocation7 + $0x5d0] sm:$0xff]
    %v4725 = vld [vmem:[#allocation7 + $0x5d8] sm:$0xff]
    %v4726 = vld [vmem:[#allocation7 + $0x5e0] sm:$0xff]
    %v4727 = vld [vmem:[#allocation7 + $0x5e8] sm:$0xff]
    %v4728 = vld [vmem:[#allocation7 + $0x5f0] sm:$0xff]
    %v4729 = vld [vmem:[#allocation7 + $0x5f8] sm:$0xff]
    %v4730 = vld [vmem:[#allocation7 + $0x600] sm:$0xff]
    %v4731 = vld [vmem:[#allocation7 + $0x608] sm:$0xff]
    %v4732 = vld [vmem:[#allocation7 + $0x610] sm:$0xff]
    %v4733 = vld [vmem:[#allocation7 + $0x618] sm:$0xff]
    %v4734 = vld [vmem:[#allocation7 + $0x620] sm:$0xff]
    %v4735 = vld [vmem:[#allocation7 + $0x628] sm:$0xff]
    %v4736 = vld [vmem:[#allocation7 + $0x630] sm:$0xff]
    %v4737 = vld [vmem:[#allocation7 + $0x638] sm:$0xff]
    %v4738 = vld [vmem:[#allocation7 + $0x640] sm:$0xff]
    %v4739 = vld [vmem:[#allocation7 + $0x648] sm:$0xff]
    %v4740 = vld [vmem:[#allocation7 + $0x650] sm:$0xff]
    %v4741 = vld [vmem:[#allocation7 + $0x658] sm:$0xff]
    %v4742 = vld [vmem:[#allocation7 + $0x660] sm:$0xff]
    %v4743 = vld [vmem:[#allocation7 + $0x668] sm:$0xff]
    %v4744 = vld [vmem:[#allocation7 + $0x670] sm:$0xff]
    %v4745 = vld [vmem:[#allocation7 + $0x678] sm:$0xff]
    %v4746 = vld [vmem:[#allocation7 + $0x680] sm:$0xff]
    %v4747 = vld [vmem:[#allocation7 + $0x688] sm:$0xff]
    %v4748 = vld [vmem:[#allocation7 + $0x690] sm:$0xff]
    %v4749 = vld [vmem:[#allocation7 + $0x698] sm:$0xff]
    %v4750 = vld [vmem:[#allocation7 + $0x6a0] sm:$0xff]
    %v4751 = vld [vmem:[#allocation7 + $0x6a8] sm:$0xff]
    %v4752 = vld [vmem:[#allocation7 + $0x6b0] sm:$0xff]
    %v4753 = vld [vmem:[#allocation7 + $0x6b8] sm:$0xff]
    %v4754 = vld [vmem:[#allocation7 + $0x6c0] sm:$0xff]
    %v4755 = vld [vmem:[#allocation7 + $0x6c8] sm:$0xff]
    %v4756 = vld [vmem:[#allocation7 + $0x6d0] sm:$0xff]
    %v4757 = vld [vmem:[#allocation7 + $0x6d8] sm:$0xff]
    %v4758 = vld [vmem:[#allocation7 + $0x6e0] sm:$0xff]
    %v4759 = vld [vmem:[#allocation7 + $0x6e8] sm:$0xff]
    %v4760 = vld [vmem:[#allocation7 + $0x6f0] sm:$0xff]
    %v4761 = vld [vmem:[#allocation7 + $0x6f8] sm:$0xff]
    %v4762 = vld [vmem:[#allocation7 + $0x700] sm:$0xff]
    %v4763 = vld [vmem:[#allocation7 + $0x708] sm:$0xff]
    %v4764 = vld [vmem:[#allocation7 + $0x710] sm:$0xff]
    %v4765 = vld [vmem:[#allocation7 + $0x718] sm:$0xff]
    %v4766 = vld [vmem:[#allocation7 + $0x720] sm:$0xff]
    %v4767 = vld [vmem:[#allocation7 + $0x728] sm:$0xff]
    %v4768 = vld [vmem:[#allocation7 + $0x730] sm:$0xff]
    %v4769 = vld [vmem:[#allocation7 + $0x738] sm:$0xff]
    %v4770 = vld [vmem:[#allocation7 + $0x740] sm:$0xff]
    %v4771 = vld [vmem:[#allocation7 + $0x748] sm:$0xff]
    %v4772 = vld [vmem:[#allocation7 + $0x750] sm:$0xff]
    %v4773 = vld [vmem:[#allocation7 + $0x758] sm:$0xff]
    %v4774 = vld [vmem:[#allocation7 + $0x760] sm:$0xff]
    %v4775 = vld [vmem:[#allocation7 + $0x768] sm:$0xff]
    %v4776 = vld [vmem:[#allocation7 + $0x770] sm:$0xff]
    %v4777 = vld [vmem:[#allocation7 + $0x778] sm:$0xff]
    %v4778 = vld [vmem:[#allocation7 + $0x780] sm:$0xff]
    %v4779 = vld [vmem:[#allocation7 + $0x788] sm:$0xff]
    %v4780 = vld [vmem:[#allocation7 + $0x790] sm:$0xff]
    %v4781 = vld [vmem:[#allocation7 + $0x798] sm:$0xff]
    %v4782 = vld [vmem:[#allocation7 + $0x7a0] sm:$0xff]
    %v4783 = vld [vmem:[#allocation7 + $0x7a8] sm:$0xff]
    %v4784 = vld [vmem:[#allocation7 + $0x7b0] sm:$0xff]
    %v4785 = vld [vmem:[#allocation7 + $0x7b8] sm:$0xff]
    %v4786 = vld [vmem:[#allocation7 + $0x7c0] sm:$0xff]
    %v4787 = vld [vmem:[#allocation7 + $0x7c8] sm:$0xff]
    %v4788 = vld [vmem:[#allocation7 + $0x7d0] sm:$0xff]
    %v4789 = vld [vmem:[#allocation7 + $0x7d8] sm:$0xff]
    %v4790 = vld [vmem:[#allocation7 + $0x7e0] sm:$0xff]
    %v4791 = vld [vmem:[#allocation7 + $0x7e8] sm:$0xff]
    %v4792 = vld [vmem:[#allocation7 + $0x7f0] sm:$0xff]
    %v4793 = vld [vmem:[#allocation7 + $0x7f8] sm:$0xff]
    %v4794 = vld [vmem:[#allocation19] sm:$0xff]
    %v4796 = vlaneseq
    %v4797 = vshrl.u32 %v4796, 7
    %v4798 = vsub.s32 0, %v4797
    %v4799 = vrot.slane %v4794, %v4798
    %v4800 = vlaneseq
    %v4801 = vshrl.u32 %v4800, 7
    %v4802 = vsub.s32 1, %v4801
    %v4803 = vrot.slane %v4794, %v4802
    %v4804 = vlaneseq
    %v4805 = vshrl.u32 %v4804, 7
    %v4806 = vsub.s32 2, %v4805
    %v4807 = vrot.slane %v4794, %v4806
    %v4808 = vlaneseq
    %v4809 = vshrl.u32 %v4808, 7
    %v4810 = vsub.s32 3, %v4809
    %v4811 = vrot.slane %v4794, %v4810
    %v4812 = vlaneseq
    %v4813 = vshrl.u32 %v4812, 7
    %v4814 = vsub.s32 4, %v4813
    %v4815 = vrot.slane %v4794, %v4814
    %v4816 = vlaneseq
    %v4817 = vshrl.u32 %v4816, 7
    %v4818 = vsub.s32 5, %v4817
    %v4819 = vrot.slane %v4794, %v4818
    %v4820 = vlaneseq
    %v4821 = vshrl.u32 %v4820, 7
    %v4822 = vsub.s32 6, %v4821
    %v4823 = vrot.slane %v4794, %v4822
    %v4824 = vlaneseq
    %v4825 = vshrl.u32 %v4824, 7
    %v4826 = vsub.s32 7, %v4825
    %v4827 = vrot.slane %v4794, %v4826
    %4836 = vmatprep.subr.bf16.mxu0 %v4539
    %4837 = vmatpush1.bf16.msra.mxu0 %v4538
    %4838 = vmatprep.subr.bf16.mxu0 %v4547
    %4839 = vmatpush1.bf16.msra.mxu0 %v4546
    %4840 = vmatprep.subr.bf16.mxu0 %v4555
    %4841 = vmatpush1.bf16.msra.mxu0 %v4554
    %4842 = vmatprep.subr.bf16.mxu0 %v4563
    %4843 = vmatpush1.bf16.msra.mxu0 %v4562
    %4844 = vmatprep.subr.bf16.mxu0 %v4571
    %4845 = vmatpush1.bf16.msra.mxu0 %v4570
    %4846 = vmatprep.subr.bf16.mxu0 %v4579
    %4847 = vmatpush1.bf16.msra.mxu0 %v4578
    %4848 = vmatprep.subr.bf16.mxu0 %v4587
    %4849 = vmatpush1.bf16.msra.mxu0 %v4586
    %4850 = vmatprep.subr.bf16.mxu0 %v4595
    %4851 = vmatpush1.bf16.msra.mxu0 %v4594
    %4852 = vmatprep.subr.bf16.mxu0 %v4603
    %4853 = vmatpush1.bf16.msra.mxu0 %v4602
    %4854 = vmatprep.subr.bf16.mxu0 %v4611
    %4855 = vmatpush1.bf16.msra.mxu0 %v4610
    %4856 = vmatprep.subr.bf16.mxu0 %v4619
    %4857 = vmatpush1.bf16.msra.mxu0 %v4618
    %4858 = vmatprep.subr.bf16.mxu0 %v4627
    %4859 = vmatpush1.bf16.msra.mxu0 %v4626
    %4860 = vmatprep.subr.bf16.mxu0 %v4635
    %4861 = vmatpush1.bf16.msra.mxu0 %v4634
    %4862 = vmatprep.subr.bf16.mxu0 %v4643
    %4863 = vmatpush1.bf16.msra.mxu0 %v4642
    %4864 = vmatprep.subr.bf16.mxu0 %v4651
    %4865 = vmatpush1.bf16.msra.mxu0 %v4650
    %4866 = vmatprep.subr.bf16.mxu0 %v4659
    %4867 = vmatpush1.bf16.msra.mxu0 %v4658
    %4868 = vmatprep.mubr.bf16.mxu0 %v4532
    %4869 = vmatmul.mubr.bf16.gmra.mrb[0].mxu0 %v4531
    %v4870 = vpop.f32.mrb[0].mxu0
    %v4871 = vadd.f32 %v4799, %v4870
    %v4872 = vpop.f32.mrb[0].mxu0
    %v4873 = vadd.f32 %v4803, %v4872
    %v4874 = vpop.f32.mrb[0].mxu0
    %v4875 = vadd.f32 %v4799, %v4874
    %v4876 = vpop.f32.mrb[0].mxu0
    %v4877 = vadd.f32 %v4803, %v4876
    %4878 = vdwg.mxu0
    %4879 = vmatprep.subr.bf16.mxu0 %v4667
    %4880 = vmatpush1.bf16.msra.mxu0 %v4666
    %4881 = vmatprep.subr.bf16.mxu0 %v4675
    %4882 = vmatpush1.bf16.msra.mxu0 %v4674
    %4883 = vmatprep.subr.bf16.mxu0 %v4683
    %4884 = vmatpush1.bf16.msra.mxu0 %v4682
    %4885 = vmatprep.subr.bf16.mxu0 %v4691
    %4886 = vmatpush1.bf16.msra.mxu0 %v4690
    %4887 = vmatprep.subr.bf16.mxu0 %v4699
    %4888 = vmatpush1.bf16.msra.mxu0 %v4698
    %4889 = vmatprep.subr.bf16.mxu0 %v4707
    %4890 = vmatpush1.bf16.msra.mxu0 %v4706
    %4891 = vmatprep.subr.bf16.mxu0 %v4715
    %4892 = vmatpush1.bf16.msra.mxu0 %v4714
    %4893 = vmatprep.subr.bf16.mxu0 %v4723
    %4894 = vmatpush1.bf16.msra.mxu0 %v4722
    %4895 = vmatprep.subr.bf16.mxu0 %v4731
    %4896 = vmatpush1.bf16.msra.mxu0 %v4730
    %4897 = vmatprep.subr.bf16.mxu0 %v4739
    %4898 = vmatpush1.bf16.msra.mxu0 %v4738
    %4899 = vmatprep.subr.bf16.mxu0 %v4747
    %4900 = vmatpush1.bf16.msra.mxu0 %v4746
    %4901 = vmatprep.subr.bf16.mxu0 %v4755
    %4902 = vmatpush1.bf16.msra.mxu0 %v4754
    %4903 = vmatprep.subr.bf16.mxu0 %v4763
    %4904 = vmatpush1.bf16.msra.mxu0 %v4762
    %4905 = vmatprep.subr.bf16.mxu0 %v4771
    %4906 = vmatpush1.bf16.msra.mxu0 %v4770
    %4907 = vmatprep.subr.bf16.mxu0 %v4779
    %4908 = vmatpush1.bf16.msra.mxu0 %v4778
    %4909 = vmatprep.subr.bf16.mxu0 %v4787
    %4910 = vmatpush1.bf16.msra.mxu0 %v4786
    %4911 = vmatprep.mubr.bf16.mxu0 %v4534
    %4912 = vmatmul.mubr.bf16.gmra.mrb[0].mxu0 %v4533
    %v4913 = vpop.f32.mrb[0].mxu0
    %v4914 = vadd.f32 %v4871, %v4913
    %v4915 = vpop.f32.mrb[0].mxu0
    %v4916 = vadd.f32 %v4873, %v4915
    %v4917 = vpop.f32.mrb[0].mxu0
    %v4918 = vadd.f32 %v4875, %v4917
    %v4919 = vpop.f32.mrb[0].mxu0
    %v4920 = vadd.f32 %v4877, %v4919
    %4921 = vdwg.mxu0
    %4922 = vmatprep.subr.bf16.mxu0 %v4541
    %4923 = vmatpush1.bf16.msra.mxu0 %v4540
    %4924 = vmatprep.subr.bf16.mxu0 %v4549
    %4925 = vmatpush1.bf16.msra.mxu0 %v4548
    %4926 = vmatprep.subr.bf16.mxu0 %v4557
    %4927 = vmatpush1.bf16.msra.mxu0 %v4556
    %4928 = vmatprep.subr.bf16.mxu0 %v4565
    %4929 = vmatpush1.bf16.msra.mxu0 %v4564
    %4930 = vmatprep.subr.bf16.mxu0 %v4573
    %4931 = vmatpush1.bf16.msra.mxu0 %v4572
    %4932 = vmatprep.subr.bf16.mxu0 %v4581
    %4933 = vmatpush1.bf16.msra.mxu0 %v4580
    %4934 = vmatprep.subr.bf16.mxu0 %v4589
    %4935 = vmatpush1.bf16.msra.mxu0 %v4588
    %4936 = vmatprep.subr.bf16.mxu0 %v4597
    %4937 = vmatpush1.bf16.msra.mxu0 %v4596
    %4938 = vmatprep.subr.bf16.mxu0 %v4605
    %4939 = vmatpush1.bf16.msra.mxu0 %v4604
    %4940 = vmatprep.subr.bf16.mxu0 %v4613
    %4941 = vmatpush1.bf16.msra.mxu0 %v4612
    %4942 = vmatprep.subr.bf16.mxu0 %v4621
    %4943 = vmatpush1.bf16.msra.mxu0 %v4620
    %4944 = vmatprep.subr.bf16.mxu0 %v4629
    %4945 = vmatpush1.bf16.msra.mxu0 %v4628
    %4946 = vmatprep.subr.bf16.mxu0 %v4637
    %4947 = vmatpush1.bf16.msra.mxu0 %v4636
    %4948 = vmatprep.subr.bf16.mxu0 %v4645
    %4949 = vmatpush1.bf16.msra.mxu0 %v4644
    %4950 = vmatprep.subr.bf16.mxu0 %v4653
    %4951 = vmatpush1.bf16.msra.mxu0 %v4652
    %4952 = vmatprep.subr.bf16.mxu0 %v4661
    %4953 = vmatpush1.bf16.msra.mxu0 %v4660
    %4954 = vmatprep.mubr.bf16.mxu0 %v4532
    %4955 = vmatmul.mubr.bf16.gmra.mrb[0].mxu0 %v4531
    %v4956 = vpop.f32.mrb[0].mxu0
    %v4957 = vadd.f32 %v4807, %v4956
    %v4958 = vpop.f32.mrb[0].mxu0
    %v4959 = vadd.f32 %v4811, %v4958
    %v4960 = vpop.f32.mrb[0].mxu0
    %v4961 = vadd.f32 %v4807, %v4960
    %v4962 = vpop.f32.mrb[0].mxu0
    %v4963 = vadd.f32 %v4811, %v4962
    %4964 = vdwg.mxu0
    %4965 = vmatprep.subr.bf16.mxu0 %v4669
    %4966 = vmatpush1.bf16.msra.mxu0 %v4668
    %4967 = vmatprep.subr.bf16.mxu0 %v4677
    %4968 = vmatpush1.bf16.msra.mxu0 %v4676
    %4969 = vmatprep.subr.bf16.mxu0 %v4685
    %4970 = vmatpush1.bf16.msra.mxu0 %v4684
    %4971 = vmatprep.subr.bf16.mxu0 %v4693
    %4972 = vmatpush1.bf16.msra.mxu0 %v4692
    %4973 = vmatprep.subr.bf16.mxu0 %v4701
    %4974 = vmatpush1.bf16.msra.mxu0 %v4700
    %4975 = vmatprep.subr.bf16.mxu0 %v4709
    %4976 = vmatpush1.bf16.msra.mxu0 %v4708
    %4977 = vmatprep.subr.bf16.mxu0 %v4717
    %4978 = vmatpush1.bf16.msra.mxu0 %v4716
    %4979 = vmatprep.subr.bf16.mxu0 %v4725
    %4980 = vmatpush1.bf16.msra.mxu0 %v4724
    %4981 = vmatprep.subr.bf16.mxu0 %v4733
    %4982 = vmatpush1.bf16.msra.mxu0 %v4732
    %4983 = vmatprep.subr.bf16.mxu0 %v4741
    %4984 = vmatpush1.bf16.msra.mxu0 %v4740
    %4985 = vmatprep.subr.bf16.mxu0 %v4749
    %4986 = vmatpush1.bf16.msra.mxu0 %v4748
    %4987 = vmatprep.subr.bf16.mxu0 %v4757
    %4988 = vmatpush1.bf16.msra.mxu0 %v4756
    %4989 = vmatprep.subr.bf16.mxu0 %v4765
    %4990 = vmatpush1.bf16.msra.mxu0 %v4764
    %4991 = vmatprep.subr.bf16.mxu0 %v4773
    %4992 = vmatpush1.bf16.msra.mxu0 %v4772
    %4993 = vmatprep.subr.bf16.mxu0 %v4781
    %4994 = vmatpush1.bf16.msra.mxu0 %v4780
    %4995 = vmatprep.subr.bf16.mxu0 %v4789
    %4996 = vmatpush1.bf16.msra.mxu0 %v4788
    %4997 = vmatprep.mubr.bf16.mxu0 %v4534
    %4998 = vmatmul.mubr.bf16.gmra.mrb[0].mxu0 %v4533
    %v4999 = vpop.f32.mrb[0].mxu0
    %v5000 = vadd.f32 %v4957, %v4999
    %v5001 = vpop.f32.mrb[0].mxu0
    %v5002 = vadd.f32 %v4959, %v5001
    %v5003 = vpop.f32.mrb[0].mxu0
    %v5004 = vadd.f32 %v4961, %v5003
    %v5005 = vpop.f32.mrb[0].mxu0
    %v5006 = vadd.f32 %v4963, %v5005
    %5007 = vdwg.mxu0
    %5008 = vmatprep.subr.bf16.mxu0 %v4543
    %5009 = vmatpush1.bf16.msra.mxu0 %v4542
    %5010 = vmatprep.subr.bf16.mxu0 %v4551
    %5011 = vmatpush1.bf16.msra.mxu0 %v4550
    %5012 = vmatprep.subr.bf16.mxu0 %v4559
    %5013 = vmatpush1.bf16.msra.mxu0 %v4558
    %5014 = vmatprep.subr.bf16.mxu0 %v4567
    %5015 = vmatpush1.bf16.msra.mxu0 %v4566
    %5016 = vmatprep.subr.bf16.mxu0 %v4575
    %5017 = vmatpush1.bf16.msra.mxu0 %v4574
    %5018 = vmatprep.subr.bf16.mxu0 %v4583
    %5019 = vmatpush1.bf16.msra.mxu0 %v4582
    %5020 = vmatprep.subr.bf16.mxu0 %v4591
    %5021 = vmatpush1.bf16.msra.mxu0 %v4590
    %5022 = vmatprep.subr.bf16.mxu0 %v4599
    %5023 = vmatpush1.bf16.msra.mxu0 %v4598
    %5024 = vmatprep.subr.bf16.mxu0 %v4607
    %5025 = vmatpush1.bf16.msra.mxu0 %v4606
    %5026 = vmatprep.subr.bf16.mxu0 %v4615
    %5027 = vmatpush1.bf16.msra.mxu0 %v4614
    %5028 = vmatprep.subr.bf16.mxu0 %v4623
    %5029 = vmatpush1.bf16.msra.mxu0 %v4622
    %5030 = vmatprep.subr.bf16.mxu0 %v4631
    %5031 = vmatpush1.bf16.msra.mxu0 %v4630
    %5032 = vmatprep.subr.bf16.mxu0 %v4639
    %5033 = vmatpush1.bf16.msra.mxu0 %v4638
    %5034 = vmatprep.subr.bf16.mxu0 %v4647
    %5035 = vmatpush1.bf16.msra.mxu0 %v4646
    %5036 = vmatprep.subr.bf16.mxu0 %v4655
    %5037 = vmatpush1.bf16.msra.mxu0 %v4654
    %5038 = vmatprep.subr.bf16.mxu0 %v4663
    %5039 = vmatpush1.bf16.msra.mxu0 %v4662
    %5040 = vmatprep.mubr.bf16.mxu0 %v4532
    %5041 = vmatmul.mubr.bf16.gmra.mrb[0].mxu0 %v4531
    %v5042 = vpop.f32.mrb[0].mxu0
    %v5043 = vadd.f32 %v4815, %v5042
    %v5044 = vpop.f32.mrb[0].mxu0
    %v5045 = vadd.f32 %v4819, %v5044
    %v5046 = vpop.f32.mrb[0].mxu0
    %v5047 = vadd.f32 %v4815, %v5046
    %v5048 = vpop.f32.mrb[0].mxu0
    %v5049 = vadd.f32 %v4819, %v5048
    %5050 = vdwg.mxu0
    %5051 = vmatprep.subr.bf16.mxu0 %v4671
    %5052 = vmatpush1.bf16.msra.mxu0 %v4670
    %5053 = vmatprep.subr.bf16.mxu0 %v4679
    %5054 = vmatpush1.bf16.msra.mxu0 %v4678
    %5055 = vmatprep.subr.bf16.mxu0 %v4687
    %5056 = vmatpush1.bf16.msra.mxu0 %v4686
    %5057 = vmatprep.subr.bf16.mxu0 %v4695
    %5058 = vmatpush1.bf16.msra.mxu0 %v4694
    %5059 = vmatprep.subr.bf16.mxu0 %v4703
    %5060 = vmatpush1.bf16.msra.mxu0 %v4702
    %5061 = vmatprep.subr.bf16.mxu0 %v4711
    %5062 = vmatpush1.bf16.msra.mxu0 %v4710
    %5063 = vmatprep.subr.bf16.mxu0 %v4719
    %5064 = vmatpush1.bf16.msra.mxu0 %v4718
    %5065 = vmatprep.subr.bf16.mxu0 %v4727
    %5066 = vmatpush1.bf16.msra.mxu0 %v4726
    %5067 = vmatprep.subr.bf16.mxu0 %v4735
    %5068 = vmatpush1.bf16.msra.mxu0 %v4734
    %5069 = vmatprep.subr.bf16.mxu0 %v4743
    %5070 = vmatpush1.bf16.msra.mxu0 %v4742
    %5071 = vmatprep.subr.bf16.mxu0 %v4751
    %5072 = vmatpush1.bf16.msra.mxu0 %v4750
    %5073 = vmatprep.subr.bf16.mxu0 %v4759
    %5074 = vmatpush1.bf16.msra.mxu0 %v4758
    %5075 = vmatprep.subr.bf16.mxu0 %v4767
    %5076 = vmatpush1.bf16.msra.mxu0 %v4766
    %5077 = vmatprep.subr.bf16.mxu0 %v4775
    %5078 = vmatpush1.bf16.msra.mxu0 %v4774
    %5079 = vmatprep.subr.bf16.mxu0 %v4783
    %5080 = vmatpush1.bf16.msra.mxu0 %v4782
    %5081 = vmatprep.subr.bf16.mxu0 %v4791
    %5082 = vmatpush1.bf16.msra.mxu0 %v4790
    %5083 = vmatprep.mubr.bf16.mxu0 %v4534
    %5084 = vmatmul.mubr.bf16.gmra.mrb[0].mxu0 %v4533
    %v5085 = vpop.f32.mrb[0].mxu0
    %v5086 = vadd.f32 %v5043, %v5085
    %v5087 = vpop.f32.mrb[0].mxu0
    %v5088 = vadd.f32 %v5045, %v5087
    %v5089 = vpop.f32.mrb[0].mxu0
    %v5090 = vadd.f32 %v5047, %v5089
    %v5091 = vpop.f32.mrb[0].mxu0
    %v5092 = vadd.f32 %v5049, %v5091
    %5093 = vdwg.mxu0
    %5094 = vmatprep.subr.bf16.mxu0 %v4545
    %5095 = vmatpush1.bf16.msra.mxu0 %v4544
    %5096 = vmatprep.subr.bf16.mxu0 %v4553
    %5097 = vmatpush1.bf16.msra.mxu0 %v4552
    %5098 = vmatprep.subr.bf16.mxu0 %v4561
    %5099 = vmatpush1.bf16.msra.mxu0 %v4560
    %5100 = vmatprep.subr.bf16.mxu0 %v4569
    %5101 = vmatpush1.bf16.msra.mxu0 %v4568
    %5102 = vmatprep.subr.bf16.mxu0 %v4577
    %5103 = vmatpush1.bf16.msra.mxu0 %v4576
    %5104 = vmatprep.subr.bf16.mxu0 %v4585
    %5105 = vmatpush1.bf16.msra.mxu0 %v4584
    %5106 = vmatprep.subr.bf16.mxu0 %v4593
    %5107 = vmatpush1.bf16.msra.mxu0 %v4592
    %5108 = vmatprep.subr.bf16.mxu0 %v4601
    %5109 = vmatpush1.bf16.msra.mxu0 %v4600
    %5110 = vmatprep.subr.bf16.mxu0 %v4609
    %5111 = vmatpush1.bf16.msra.mxu0 %v4608
    %5112 = vmatprep.subr.bf16.mxu0 %v4617
    %5113 = vmatpush1.bf16.msra.mxu0 %v4616
    %5114 = vmatprep.subr.bf16.mxu0 %v4625
    %5115 = vmatpush1.bf16.msra.mxu0 %v4624
    %5116 = vmatprep.subr.bf16.mxu0 %v4633
    %5117 = vmatpush1.bf16.msra.mxu0 %v4632
    %5118 = vmatprep.subr.bf16.mxu0 %v4641
    %5119 = vmatpush1.bf16.msra.mxu0 %v4640
    %5120 = vmatprep.subr.bf16.mxu0 %v4649
    %5121 = vmatpush1.bf16.msra.mxu0 %v4648
    %5122 = vmatprep.subr.bf16.mxu0 %v4657
    %5123 = vmatpush1.bf16.msra.mxu0 %v4656
    %5124 = vmatprep.subr.bf16.mxu0 %v4665
    %5125 = vmatpush1.bf16.msra.mxu0 %v4664
    %5126 = vmatprep.mubr.bf16.mxu0 %v4532
    %5127 = vmatmul.mubr.bf16.gmra.mrb[0].mxu0 %v4531
    %v5128 = vpop.f32.mrb[0].mxu0
    %v5129 = vadd.f32 %v4823, %v5128
    %v5130 = vpop.f32.mrb[0].mxu0
    %v5131 = vadd.f32 %v4827, %v5130
    %v5132 = vpop.f32.mrb[0].mxu0
    %v5133 = vadd.f32 %v4823, %v5132
    %v5134 = vpop.f32.mrb[0].mxu0
    %v5135 = vadd.f32 %v4827, %v5134
    %5136 = vdwg.mxu0
    %5137 = vmatprep.subr.bf16.mxu0 %v4673
    %5138 = vmatpush1.bf16.msra.mxu0 %v4672
    %5139 = vmatprep.subr.bf16.mxu0 %v4681
    %5140 = vmatpush1.bf16.msra.mxu0 %v4680
    %5141 = vmatprep.subr.bf16.mxu0 %v4689
    %5142 = vmatpush1.bf16.msra.mxu0 %v4688
    %5143 = vmatprep.subr.bf16.mxu0 %v4697
    %5144 = vmatpush1.bf16.msra.mxu0 %v4696
    %5145 = vmatprep.subr.bf16.mxu0 %v4705
    %5146 = vmatpush1.bf16.msra.mxu0 %v4704
    %5147 = vmatprep.subr.bf16.mxu0 %v4713
    %5148 = vmatpush1.bf16.msra.mxu0 %v4712
    %5149 = vmatprep.subr.bf16.mxu0 %v4721
    %5150 = vmatpush1.bf16.msra.mxu0 %v4720
    %5151 = vmatprep.subr.bf16.mxu0 %v4729
    %5152 = vmatpush1.bf16.msra.mxu0 %v4728
    %5153 = vmatprep.subr.bf16.mxu0 %v4737
    %5154 = vmatpush1.bf16.msra.mxu0 %v4736
    %5155 = vmatprep.subr.bf16.mxu0 %v4745
    %5156 = vmatpush1.bf16.msra.mxu0 %v4744
    %5157 = vmatprep.subr.bf16.mxu0 %v4753
    %5158 = vmatpush1.bf16.msra.mxu0 %v4752
    %5159 = vmatprep.subr.bf16.mxu0 %v4761
    %5160 = vmatpush1.bf16.msra.mxu0 %v4760
    %5161 = vmatprep.subr.bf16.mxu0 %v4769
    %5162 = vmatpush1.bf16.msra.mxu0 %v4768
    %5163 = vmatprep.subr.bf16.mxu0 %v4777
    %5164 = vmatpush1.bf16.msra.mxu0 %v4776
    %5165 = vmatprep.subr.bf16.mxu0 %v4785
    %5166 = vmatpush1.bf16.msra.mxu0 %v4784
    %5167 = vmatprep.subr.bf16.mxu0 %v4793
    %5168 = vmatpush1.bf16.msra.mxu0 %v4792
    %5169 = vmatprep.mubr.bf16.mxu0 %v4534
    %5170 = vmatmul.mubr.bf16.gmra.mrb[0].mxu0 %v4533
    %v5171 = vpop.f32.mrb[0].mxu0
    %v5172 = vadd.f32 %v5129, %v5171
    %v5173 = vpop.f32.mrb[0].mxu0
    %v5174 = vadd.f32 %v5131, %v5173
    %v5175 = vpop.f32.mrb[0].mxu0
    %v5176 = vadd.f32 %v5133, %v5175
    %v5177 = vpop.f32.mrb[0].mxu0
    %v5178 = vadd.f32 %v5135, %v5177
    %5179 = vdwg.mxu0
    %v5180 = vmax.f32 %v4914, 0.0
    %v5181 = vmax.f32 %v4916, 0.0
    %v5182 = vmax.f32 %v5000, 0.0
    %v5183 = vmax.f32 %v5002, 0.0
    %v5184 = vmax.f32 %v5086, 0.0
    %v5185 = vmax.f32 %v5088, 0.0
    %v5186 = vmax.f32 %v5172, 0.0
    %v5187 = vmax.f32 %v5174, 0.0
    %v5188 = vmax.f32 %v4918, 0.0
    %v5189 = vmax.f32 %v4920, 0.0
    %v5190 = vmax.f32 %v5004, 0.0
    %v5191 = vmax.f32 %v5006, 0.0
    %v5192 = vmax.f32 %v5090, 0.0
    %v5193 = vmax.f32 %v5092, 0.0
    %v5194 = vmax.f32 %v5176, 0.0
    %v5195 = vmax.f32 %v5178, 0.0
    %v5196 = vpack.c.bf16 %v5188, %v5180
    %v5197 = vpack.c.bf16 %v5189, %v5181
    %v5198 = vpack.c.bf16 %v5190, %v5182
    %v5199 = vpack.c.bf16 %v5191, %v5183
    %v5200 = vpack.c.bf16 %v5192, %v5184
    %v5201 = vpack.c.bf16 %v5193, %v5185
    %v5202 = vpack.c.bf16 %v5194, %v5186
    %v5203 = vpack.c.bf16 %v5195, %v5187
    %s5204 = smul.u32 %s3611, 16
    %s5205 = sshll.u32 %s5204, 4
    %5206 = dma.done %s323, %s5205
    %v5207 = vld [vmem:[#allocation8] sm:$0xff]
    %v5208 = vld [vmem:[#allocation8 + $0x8] sm:$0xff]
    %v5209 = vld [vmem:[#allocation8 + $0x10] sm:$0xff]
    %v5210 = vld [vmem:[#allocation8 + $0x18] sm:$0xff]
    %v5211 = vld [vmem:[#allocation8 + $0x20] sm:$0xff]
    %v5212 = vld [vmem:[#allocation8 + $0x28] sm:$0xff]
    %v5213 = vld [vmem:[#allocation8 + $0x30] sm:$0xff]
    %v5214 = vld [vmem:[#allocation8 + $0x38] sm:$0xff]
    %v5215 = vld [vmem:[#allocation8 + $0x40] sm:$0xff]
    %v5216 = vld [vmem:[#allocation8 + $0x48] sm:$0xff]
    %v5217 = vld [vmem:[#allocation8 + $0x50] sm:$0xff]
    %v5218 = vld [vmem:[#allocation8 + $0x58] sm:$0xff]
    %v5219 = vld [vmem:[#allocation8 + $0x60] sm:$0xff]
    %v5220 = vld [vmem:[#allocation8 + $0x68] sm:$0xff]
    %v5221 = vld [vmem:[#allocation8 + $0x70] sm:$0xff]
    %v5222 = vld [vmem:[#allocation8 + $0x78] sm:$0xff]
    %v5223 = vld [vmem:[#allocation8 + $0x80] sm:$0xff]
    %v5224 = vld [vmem:[#allocation8 + $0x88] sm:$0xff]
    %v5225 = vld [vmem:[#allocation8 + $0x90] sm:$0xff]
    %v5226 = vld [vmem:[#allocation8 + $0x98] sm:$0xff]
    %v5227 = vld [vmem:[#allocation8 + $0xa0] sm:$0xff]
    %v5228 = vld [vmem:[#allocation8 + $0xa8] sm:$0xff]
    %v5229 = vld [vmem:[#allocation8 + $0xb0] sm:$0xff]
    %v5230 = vld [vmem:[#allocation8 + $0xb8] sm:$0xff]
    %v5231 = vld [vmem:[#allocation8 + $0xc0] sm:$0xff]
    %v5232 = vld [vmem:[#allocation8 + $0xc8] sm:$0xff]
    %v5233 = vld [vmem:[#allocation8 + $0xd0] sm:$0xff]
    %v5234 = vld [vmem:[#allocation8 + $0xd8] sm:$0xff]
    %v5235 = vld [vmem:[#allocation8 + $0xe0] sm:$0xff]
    %v5236 = vld [vmem:[#allocation8 + $0xe8] sm:$0xff]
    %v5237 = vld [vmem:[#allocation8 + $0xf0] sm:$0xff]
    %v5238 = vld [vmem:[#allocation8 + $0xf8] sm:$0xff]
    %v5239 = vld [vmem:[#allocation8 + $0x100] sm:$0xff]
    %v5240 = vld [vmem:[#allocation8 + $0x108] sm:$0xff]
    %v5241 = vld [vmem:[#allocation8 + $0x110] sm:$0xff]
    %v5242 = vld [vmem:[#allocation8 + $0x118] sm:$0xff]
    %v5243 = vld [vmem:[#allocation8 + $0x120] sm:$0xff]
    %v5244 = vld [vmem:[#allocation8 + $0x128] sm:$0xff]
    %v5245 = vld [vmem:[#allocation8 + $0x130] sm:$0xff]
    %v5246 = vld [vmem:[#allocation8 + $0x138] sm:$0xff]
    %v5247 = vld [vmem:[#allocation8 + $0x140] sm:$0xff]
    %v5248 = vld [vmem:[#allocation8 + $0x148] sm:$0xff]
    %v5249 = vld [vmem:[#allocation8 + $0x150] sm:$0xff]
    %v5250 = vld [vmem:[#allocation8 + $0x158] sm:$0xff]
    %v5251 = vld [vmem:[#allocation8 + $0x160] sm:$0xff]
    %v5252 = vld [vmem:[#allocation8 + $0x168] sm:$0xff]
    %v5253 = vld [vmem:[#allocation8 + $0x170] sm:$0xff]
    %v5254 = vld [vmem:[#allocation8 + $0x178] sm:$0xff]
    %v5255 = vld [vmem:[#allocation8 + $0x180] sm:$0xff]
    %v5256 = vld [vmem:[#allocation8 + $0x188] sm:$0xff]
    %v5257 = vld [vmem:[#allocation8 + $0x190] sm:$0xff]
    %v5258 = vld [vmem:[#allocation8 + $0x198] sm:$0xff]
    %v5259 = vld [vmem:[#allocation8 + $0x1a0] sm:$0xff]
    %v5260 = vld [vmem:[#allocation8 + $0x1a8] sm:$0xff]
    %v5261 = vld [vmem:[#allocation8 + $0x1b0] sm:$0xff]
    %v5262 = vld [vmem:[#allocation8 + $0x1b8] sm:$0xff]
    %v5263 = vld [vmem:[#allocation8 + $0x1c0] sm:$0xff]
    %v5264 = vld [vmem:[#allocation8 + $0x1c8] sm:$0xff]
    %v5265 = vld [vmem:[#allocation8 + $0x1d0] sm:$0xff]
    %v5266 = vld [vmem:[#allocation8 + $0x1d8] sm:$0xff]
    %v5267 = vld [vmem:[#allocation8 + $0x1e0] sm:$0xff]
    %v5268 = vld [vmem:[#allocation8 + $0x1e8] sm:$0xff]
    %v5269 = vld [vmem:[#allocation8 + $0x1f0] sm:$0xff]
    %v5270 = vld [vmem:[#allocation8 + $0x1f8] sm:$0xff]
    %v5271 = vld [vmem:[#allocation8 + $0x200] sm:$0xff]
    %v5272 = vld [vmem:[#allocation8 + $0x208] sm:$0xff]
    %v5273 = vld [vmem:[#allocation8 + $0x210] sm:$0xff]
    %v5274 = vld [vmem:[#allocation8 + $0x218] sm:$0xff]
    %v5275 = vld [vmem:[#allocation8 + $0x220] sm:$0xff]
    %v5276 = vld [vmem:[#allocation8 + $0x228] sm:$0xff]
    %v5277 = vld [vmem:[#allocation8 + $0x230] sm:$0xff]
    %v5278 = vld [vmem:[#allocation8 + $0x238] sm:$0xff]
    %v5279 = vld [vmem:[#allocation8 + $0x240] sm:$0xff]
    %v5280 = vld [vmem:[#allocation8 + $0x248] sm:$0xff]
    %v5281 = vld [vmem:[#allocation8 + $0x250] sm:$0xff]
    %v5282 = vld [vmem:[#allocation8 + $0x258] sm:$0xff]
    %v5283 = vld [vmem:[#allocation8 + $0x260] sm:$0xff]
    %v5284 = vld [vmem:[#allocation8 + $0x268] sm:$0xff]
    %v5285 = vld [vmem:[#allocation8 + $0x270] sm:$0xff]
    %v5286 = vld [vmem:[#allocation8 + $0x278] sm:$0xff]
    %v5287 = vld [vmem:[#allocation8 + $0x280] sm:$0xff]
    %v5288 = vld [vmem:[#allocation8 + $0x288] sm:$0xff]
    %v5289 = vld [vmem:[#allocation8 + $0x290] sm:$0xff]
    %v5290 = vld [vmem:[#allocation8 + $0x298] sm:$0xff]
    %v5291 = vld [vmem:[#allocation8 + $0x2a0] sm:$0xff]
    %v5292 = vld [vmem:[#allocation8 + $0x2a8] sm:$0xff]
    %v5293 = vld [vmem:[#allocation8 + $0x2b0] sm:$0xff]
    %v5294 = vld [vmem:[#allocation8 + $0x2b8] sm:$0xff]
    %v5295 = vld [vmem:[#allocation8 + $0x2c0] sm:$0xff]
    %v5296 = vld [vmem:[#allocation8 + $0x2c8] sm:$0xff]
    %v5297 = vld [vmem:[#allocation8 + $0x2d0] sm:$0xff]
    %v5298 = vld [vmem:[#allocation8 + $0x2d8] sm:$0xff]
    %v5299 = vld [vmem:[#allocation8 + $0x2e0] sm:$0xff]
    %v5300 = vld [vmem:[#allocation8 + $0x2e8] sm:$0xff]
    %v5301 = vld [vmem:[#allocation8 + $0x2f0] sm:$0xff]
    %v5302 = vld [vmem:[#allocation8 + $0x2f8] sm:$0xff]
    %v5303 = vld [vmem:[#allocation8 + $0x300] sm:$0xff]
    %v5304 = vld [vmem:[#allocation8 + $0x308] sm:$0xff]
    %v5305 = vld [vmem:[#allocation8 + $0x310] sm:$0xff]
    %v5306 = vld [vmem:[#allocation8 + $0x318] sm:$0xff]
    %v5307 = vld [vmem:[#allocation8 + $0x320] sm:$0xff]
    %v5308 = vld [vmem:[#allocation8 + $0x328] sm:$0xff]
    %v5309 = vld [vmem:[#allocation8 + $0x330] sm:$0xff]
    %v5310 = vld [vmem:[#allocation8 + $0x338] sm:$0xff]
    %v5311 = vld [vmem:[#allocation8 + $0x340] sm:$0xff]
    %v5312 = vld [vmem:[#allocation8 + $0x348] sm:$0xff]
    %v5313 = vld [vmem:[#allocation8 + $0x350] sm:$0xff]
    %v5314 = vld [vmem:[#allocation8 + $0x358] sm:$0xff]
    %v5315 = vld [vmem:[#allocation8 + $0x360] sm:$0xff]
    %v5316 = vld [vmem:[#allocation8 + $0x368] sm:$0xff]
    %v5317 = vld [vmem:[#allocation8 + $0x370] sm:$0xff]
    %v5318 = vld [vmem:[#allocation8 + $0x378] sm:$0xff]
    %v5319 = vld [vmem:[#allocation8 + $0x380] sm:$0xff]
    %v5320 = vld [vmem:[#allocation8 + $0x388] sm:$0xff]
    %v5321 = vld [vmem:[#allocation8 + $0x390] sm:$0xff]
    %v5322 = vld [vmem:[#allocation8 + $0x398] sm:$0xff]
    %v5323 = vld [vmem:[#allocation8 + $0x3a0] sm:$0xff]
    %v5324 = vld [vmem:[#allocation8 + $0x3a8] sm:$0xff]
    %v5325 = vld [vmem:[#allocation8 + $0x3b0] sm:$0xff]
    %v5326 = vld [vmem:[#allocation8 + $0x3b8] sm:$0xff]
    %v5327 = vld [vmem:[#allocation8 + $0x3c0] sm:$0xff]
    %v5328 = vld [vmem:[#allocation8 + $0x3c8] sm:$0xff]
    %v5329 = vld [vmem:[#allocation8 + $0x3d0] sm:$0xff]
    %v5330 = vld [vmem:[#allocation8 + $0x3d8] sm:$0xff]
    %v5331 = vld [vmem:[#allocation8 + $0x3e0] sm:$0xff]
    %v5332 = vld [vmem:[#allocation8 + $0x3e8] sm:$0xff]
    %v5333 = vld [vmem:[#allocation8 + $0x3f0] sm:$0xff]
    %v5334 = vld [vmem:[#allocation8 + $0x3f8] sm:$0xff]
    %v5335 = vld [vmem:[#allocation8 + $0x400] sm:$0xff]
    %v5336 = vld [vmem:[#allocation8 + $0x408] sm:$0xff]
    %v5337 = vld [vmem:[#allocation8 + $0x410] sm:$0xff]
    %v5338 = vld [vmem:[#allocation8 + $0x418] sm:$0xff]
    %v5339 = vld [vmem:[#allocation8 + $0x420] sm:$0xff]
    %v5340 = vld [vmem:[#allocation8 + $0x428] sm:$0xff]
    %v5341 = vld [vmem:[#allocation8 + $0x430] sm:$0xff]
    %v5342 = vld [vmem:[#allocation8 + $0x438] sm:$0xff]
    %v5343 = vld [vmem:[#allocation8 + $0x440] sm:$0xff]
    %v5344 = vld [vmem:[#allocation8 + $0x448] sm:$0xff]
    %v5345 = vld [vmem:[#allocation8 + $0x450] sm:$0xff]
    %v5346 = vld [vmem:[#allocation8 + $0x458] sm:$0xff]
    %v5347 = vld [vmem:[#allocation8 + $0x460] sm:$0xff]
    %v5348 = vld [vmem:[#allocation8 + $0x468] sm:$0xff]
    %v5349 = vld [vmem:[#allocation8 + $0x470] sm:$0xff]
    %v5350 = vld [vmem:[#allocation8 + $0x478] sm:$0xff]
    %v5351 = vld [vmem:[#allocation8 + $0x480] sm:$0xff]
    %v5352 = vld [vmem:[#allocation8 + $0x488] sm:$0xff]
    %v5353 = vld [vmem:[#allocation8 + $0x490] sm:$0xff]
    %v5354 = vld [vmem:[#allocation8 + $0x498] sm:$0xff]
    %v5355 = vld [vmem:[#allocation8 + $0x4a0] sm:$0xff]
    %v5356 = vld [vmem:[#allocation8 + $0x4a8] sm:$0xff]
    %v5357 = vld [vmem:[#allocation8 + $0x4b0] sm:$0xff]
    %v5358 = vld [vmem:[#allocation8 + $0x4b8] sm:$0xff]
    %v5359 = vld [vmem:[#allocation8 + $0x4c0] sm:$0xff]
    %v5360 = vld [vmem:[#allocation8 + $0x4c8] sm:$0xff]
    %v5361 = vld [vmem:[#allocation8 + $0x4d0] sm:$0xff]
    %v5362 = vld [vmem:[#allocation8 + $0x4d8] sm:$0xff]
    %v5363 = vld [vmem:[#allocation8 + $0x4e0] sm:$0xff]
    %v5364 = vld [vmem:[#allocation8 + $0x4e8] sm:$0xff]
    %v5365 = vld [vmem:[#allocation8 + $0x4f0] sm:$0xff]
    %v5366 = vld [vmem:[#allocation8 + $0x4f8] sm:$0xff]
    %v5367 = vld [vmem:[#allocation8 + $0x500] sm:$0xff]
    %v5368 = vld [vmem:[#allocation8 + $0x508] sm:$0xff]
    %v5369 = vld [vmem:[#allocation8 + $0x510] sm:$0xff]
    %v5370 = vld [vmem:[#allocation8 + $0x518] sm:$0xff]
    %v5371 = vld [vmem:[#allocation8 + $0x520] sm:$0xff]
    %v5372 = vld [vmem:[#allocation8 + $0x528] sm:$0xff]
    %v5373 = vld [vmem:[#allocation8 + $0x530] sm:$0xff]
    %v5374 = vld [vmem:[#allocation8 + $0x538] sm:$0xff]
    %v5375 = vld [vmem:[#allocation8 + $0x540] sm:$0xff]
    %v5376 = vld [vmem:[#allocation8 + $0x548] sm:$0xff]
    %v5377 = vld [vmem:[#allocation8 + $0x550] sm:$0xff]
    %v5378 = vld [vmem:[#allocation8 + $0x558] sm:$0xff]
    %v5379 = vld [vmem:[#allocation8 + $0x560] sm:$0xff]
    %v5380 = vld [vmem:[#allocation8 + $0x568] sm:$0xff]
    %v5381 = vld [vmem:[#allocation8 + $0x570] sm:$0xff]
    %v5382 = vld [vmem:[#allocation8 + $0x578] sm:$0xff]
    %v5383 = vld [vmem:[#allocation8 + $0x580] sm:$0xff]
    %v5384 = vld [vmem:[#allocation8 + $0x588] sm:$0xff]
    %v5385 = vld [vmem:[#allocation8 + $0x590] sm:$0xff]
    %v5386 = vld [vmem:[#allocation8 + $0x598] sm:$0xff]
    %v5387 = vld [vmem:[#allocation8 + $0x5a0] sm:$0xff]
    %v5388 = vld [vmem:[#allocation8 + $0x5a8] sm:$0xff]
    %v5389 = vld [vmem:[#allocation8 + $0x5b0] sm:$0xff]
    %v5390 = vld [vmem:[#allocation8 + $0x5b8] sm:$0xff]
    %v5391 = vld [vmem:[#allocation8 + $0x5c0] sm:$0xff]
    %v5392 = vld [vmem:[#allocation8 + $0x5c8] sm:$0xff]
    %v5393 = vld [vmem:[#allocation8 + $0x5d0] sm:$0xff]
    %v5394 = vld [vmem:[#allocation8 + $0x5d8] sm:$0xff]
    %v5395 = vld [vmem:[#allocation8 + $0x5e0] sm:$0xff]
    %v5396 = vld [vmem:[#allocation8 + $0x5e8] sm:$0xff]
    %v5397 = vld [vmem:[#allocation8 + $0x5f0] sm:$0xff]
    %v5398 = vld [vmem:[#allocation8 + $0x5f8] sm:$0xff]
    %v5399 = vld [vmem:[#allocation8 + $0x600] sm:$0xff]
    %v5400 = vld [vmem:[#allocation8 + $0x608] sm:$0xff]
    %v5401 = vld [vmem:[#allocation8 + $0x610] sm:$0xff]
    %v5402 = vld [vmem:[#allocation8 + $0x618] sm:$0xff]
    %v5403 = vld [vmem:[#allocation8 + $0x620] sm:$0xff]
    %v5404 = vld [vmem:[#allocation8 + $0x628] sm:$0xff]
    %v5405 = vld [vmem:[#allocation8 + $0x630] sm:$0xff]
    %v5406 = vld [vmem:[#allocation8 + $0x638] sm:$0xff]
    %v5407 = vld [vmem:[#allocation8 + $0x640] sm:$0xff]
    %v5408 = vld [vmem:[#allocation8 + $0x648] sm:$0xff]
    %v5409 = vld [vmem:[#allocation8 + $0x650] sm:$0xff]
    %v5410 = vld [vmem:[#allocation8 + $0x658] sm:$0xff]
    %v5411 = vld [vmem:[#allocation8 + $0x660] sm:$0xff]
    %v5412 = vld [vmem:[#allocation8 + $0x668] sm:$0xff]
    %v5413 = vld [vmem:[#allocation8 + $0x670] sm:$0xff]
    %v5414 = vld [vmem:[#allocation8 + $0x678] sm:$0xff]
    %v5415 = vld [vmem:[#allocation8 + $0x680] sm:$0xff]
    %v5416 = vld [vmem:[#allocation8 + $0x688] sm:$0xff]
    %v5417 = vld [vmem:[#allocation8 + $0x690] sm:$0xff]
    %v5418 = vld [vmem:[#allocation8 + $0x698] sm:$0xff]
    %v5419 = vld [vmem:[#allocation8 + $0x6a0] sm:$0xff]
    %v5420 = vld [vmem:[#allocation8 + $0x6a8] sm:$0xff]
    %v5421 = vld [vmem:[#allocation8 + $0x6b0] sm:$0xff]
    %v5422 = vld [vmem:[#allocation8 + $0x6b8] sm:$0xff]
    %v5423 = vld [vmem:[#allocation8 + $0x6c0] sm:$0xff]
    %v5424 = vld [vmem:[#allocation8 + $0x6c8] sm:$0xff]
    %v5425 = vld [vmem:[#allocation8 + $0x6d0] sm:$0xff]
    %v5426 = vld [vmem:[#allocation8 + $0x6d8] sm:$0xff]
    %v5427 = vld [vmem:[#allocation8 + $0x6e0] sm:$0xff]
    %v5428 = vld [vmem:[#allocation8 + $0x6e8] sm:$0xff]
    %v5429 = vld [vmem:[#allocation8 + $0x6f0] sm:$0xff]
    %v5430 = vld [vmem:[#allocation8 + $0x6f8] sm:$0xff]
    %v5431 = vld [vmem:[#allocation8 + $0x700] sm:$0xff]
    %v5432 = vld [vmem:[#allocation8 + $0x708] sm:$0xff]
    %v5433 = vld [vmem:[#allocation8 + $0x710] sm:$0xff]
    %v5434 = vld [vmem:[#allocation8 + $0x718] sm:$0xff]
    %v5435 = vld [vmem:[#allocation8 + $0x720] sm:$0xff]
    %v5436 = vld [vmem:[#allocation8 + $0x728] sm:$0xff]
    %v5437 = vld [vmem:[#allocation8 + $0x730] sm:$0xff]
    %v5438 = vld [vmem:[#allocation8 + $0x738] sm:$0xff]
    %v5439 = vld [vmem:[#allocation8 + $0x740] sm:$0xff]
    %v5440 = vld [vmem:[#allocation8 + $0x748] sm:$0xff]
    %v5441 = vld [vmem:[#allocation8 + $0x750] sm:$0xff]
    %v5442 = vld [vmem:[#allocation8 + $0x758] sm:$0xff]
    %v5443 = vld [vmem:[#allocation8 + $0x760] sm:$0xff]
    %v5444 = vld [vmem:[#allocation8 + $0x768] sm:$0xff]
    %v5445 = vld [vmem:[#allocation8 + $0x770] sm:$0xff]
    %v5446 = vld [vmem:[#allocation8 + $0x778] sm:$0xff]
    %v5447 = vld [vmem:[#allocation8 + $0x780] sm:$0xff]
    %v5448 = vld [vmem:[#allocation8 + $0x788] sm:$0xff]
    %v5449 = vld [vmem:[#allocation8 + $0x790] sm:$0xff]
    %v5450 = vld [vmem:[#allocation8 + $0x798] sm:$0xff]
    %v5451 = vld [vmem:[#allocation8 + $0x7a0] sm:$0xff]
    %v5452 = vld [vmem:[#allocation8 + $0x7a8] sm:$0xff]
    %v5453 = vld [vmem:[#allocation8 + $0x7b0] sm:$0xff]
    %v5454 = vld [vmem:[#allocation8 + $0x7b8] sm:$0xff]
    %v5455 = vld [vmem:[#allocation8 + $0x7c0] sm:$0xff]
    %v5456 = vld [vmem:[#allocation8 + $0x7c8] sm:$0xff]
    %v5457 = vld [vmem:[#allocation8 + $0x7d0] sm:$0xff]
    %v5458 = vld [vmem:[#allocation8 + $0x7d8] sm:$0xff]
    %v5459 = vld [vmem:[#allocation8 + $0x7e0] sm:$0xff]
    %v5460 = vld [vmem:[#allocation8 + $0x7e8] sm:$0xff]
    %v5461 = vld [vmem:[#allocation8 + $0x7f0] sm:$0xff]
    %v5462 = vld [vmem:[#allocation8 + $0x7f8] sm:$0xff]
    %v5463 = vld [vmem:[#allocation8 + $0x800] sm:$0xff]
    %v5464 = vld [vmem:[#allocation8 + $0x808] sm:$0xff]
    %v5465 = vld [vmem:[#allocation8 + $0x810] sm:$0xff]
    %v5466 = vld [vmem:[#allocation8 + $0x818] sm:$0xff]
    %v5467 = vld [vmem:[#allocation8 + $0x820] sm:$0xff]
    %v5468 = vld [vmem:[#allocation8 + $0x828] sm:$0xff]
    %v5469 = vld [vmem:[#allocation8 + $0x830] sm:$0xff]
    %v5470 = vld [vmem:[#allocation8 + $0x838] sm:$0xff]
    %v5471 = vld [vmem:[#allocation8 + $0x840] sm:$0xff]
    %v5472 = vld [vmem:[#allocation8 + $0x848] sm:$0xff]
    %v5473 = vld [vmem:[#allocation8 + $0x850] sm:$0xff]
    %v5474 = vld [vmem:[#allocation8 + $0x858] sm:$0xff]
    %v5475 = vld [vmem:[#allocation8 + $0x860] sm:$0xff]
    %v5476 = vld [vmem:[#allocation8 + $0x868] sm:$0xff]
    %v5477 = vld [vmem:[#allocation8 + $0x870] sm:$0xff]
    %v5478 = vld [vmem:[#allocation8 + $0x878] sm:$0xff]
    %v5479 = vld [vmem:[#allocation8 + $0x880] sm:$0xff]
    %v5480 = vld [vmem:[#allocation8 + $0x888] sm:$0xff]
    %v5481 = vld [vmem:[#allocation8 + $0x890] sm:$0xff]
    %v5482 = vld [vmem:[#allocation8 + $0x898] sm:$0xff]
    %v5483 = vld [vmem:[#allocation8 + $0x8a0] sm:$0xff]
    %v5484 = vld [vmem:[#allocation8 + $0x8a8] sm:$0xff]
    %v5485 = vld [vmem:[#allocation8 + $0x8b0] sm:$0xff]
    %v5486 = vld [vmem:[#allocation8 + $0x8b8] sm:$0xff]
    %v5487 = vld [vmem:[#allocation8 + $0x8c0] sm:$0xff]
    %v5488 = vld [vmem:[#allocation8 + $0x8c8] sm:$0xff]
    %v5489 = vld [vmem:[#allocation8 + $0x8d0] sm:$0xff]
    %v5490 = vld [vmem:[#allocation8 + $0x8d8] sm:$0xff]
    %v5491 = vld [vmem:[#allocation8 + $0x8e0] sm:$0xff]
    %v5492 = vld [vmem:[#allocation8 + $0x8e8] sm:$0xff]
    %v5493 = vld [vmem:[#allocation8 + $0x8f0] sm:$0xff]
    %v5494 = vld [vmem:[#allocation8 + $0x8f8] sm:$0xff]
    %v5495 = vld [vmem:[#allocation8 + $0x900] sm:$0xff]
    %v5496 = vld [vmem:[#allocation8 + $0x908] sm:$0xff]
    %v5497 = vld [vmem:[#allocation8 + $0x910] sm:$0xff]
    %v5498 = vld [vmem:[#allocation8 + $0x918] sm:$0xff]
    %v5499 = vld [vmem:[#allocation8 + $0x920] sm:$0xff]
    %v5500 = vld [vmem:[#allocation8 + $0x928] sm:$0xff]
    %v5501 = vld [vmem:[#allocation8 + $0x930] sm:$0xff]
    %v5502 = vld [vmem:[#allocation8 + $0x938] sm:$0xff]
    %v5503 = vld [vmem:[#allocation8 + $0x940] sm:$0xff]
    %v5504 = vld [vmem:[#allocation8 + $0x948] sm:$0xff]
    %v5505 = vld [vmem:[#allocation8 + $0x950] sm:$0xff]
    %v5506 = vld [vmem:[#allocation8 + $0x958] sm:$0xff]
    %v5507 = vld [vmem:[#allocation8 + $0x960] sm:$0xff]
    %v5508 = vld [vmem:[#allocation8 + $0x968] sm:$0xff]
    %v5509 = vld [vmem:[#allocation8 + $0x970] sm:$0xff]
    %v5510 = vld [vmem:[#allocation8 + $0x978] sm:$0xff]
    %v5511 = vld [vmem:[#allocation8 + $0x980] sm:$0xff]
    %v5512 = vld [vmem:[#allocation8 + $0x988] sm:$0xff]
    %v5513 = vld [vmem:[#allocation8 + $0x990] sm:$0xff]
    %v5514 = vld [vmem:[#allocation8 + $0x998] sm:$0xff]
    %v5515 = vld [vmem:[#allocation8 + $0x9a0] sm:$0xff]
    %v5516 = vld [vmem:[#allocation8 + $0x9a8] sm:$0xff]
    %v5517 = vld [vmem:[#allocation8 + $0x9b0] sm:$0xff]
    %v5518 = vld [vmem:[#allocation8 + $0x9b8] sm:$0xff]
    %v5519 = vld [vmem:[#allocation8 + $0x9c0] sm:$0xff]
    %v5520 = vld [vmem:[#allocation8 + $0x9c8] sm:$0xff]
    %v5521 = vld [vmem:[#allocation8 + $0x9d0] sm:$0xff]
    %v5522 = vld [vmem:[#allocation8 + $0x9d8] sm:$0xff]
    %v5523 = vld [vmem:[#allocation8 + $0x9e0] sm:$0xff]
    %v5524 = vld [vmem:[#allocation8 + $0x9e8] sm:$0xff]
    %v5525 = vld [vmem:[#allocation8 + $0x9f0] sm:$0xff]
    %v5526 = vld [vmem:[#allocation8 + $0x9f8] sm:$0xff]
    %v5527 = vld [vmem:[#allocation8 + $0xa00] sm:$0xff]
    %v5528 = vld [vmem:[#allocation8 + $0xa08] sm:$0xff]
    %v5529 = vld [vmem:[#allocation8 + $0xa10] sm:$0xff]
    %v5530 = vld [vmem:[#allocation8 + $0xa18] sm:$0xff]
    %v5531 = vld [vmem:[#allocation8 + $0xa20] sm:$0xff]
    %v5532 = vld [vmem:[#allocation8 + $0xa28] sm:$0xff]
    %v5533 = vld [vmem:[#allocation8 + $0xa30] sm:$0xff]
    %v5534 = vld [vmem:[#allocation8 + $0xa38] sm:$0xff]
    %v5535 = vld [vmem:[#allocation8 + $0xa40] sm:$0xff]
    %v5536 = vld [vmem:[#allocation8 + $0xa48] sm:$0xff]
    %v5537 = vld [vmem:[#allocation8 + $0xa50] sm:$0xff]
    %v5538 = vld [vmem:[#allocation8 + $0xa58] sm:$0xff]
    %v5539 = vld [vmem:[#allocation8 + $0xa60] sm:$0xff]
    %v5540 = vld [vmem:[#allocation8 + $0xa68] sm:$0xff]
    %v5541 = vld [vmem:[#allocation8 + $0xa70] sm:$0xff]
    %v5542 = vld [vmem:[#allocation8 + $0xa78] sm:$0xff]
    %v5543 = vld [vmem:[#allocation8 + $0xa80] sm:$0xff]
    %v5544 = vld [vmem:[#allocation8 + $0xa88] sm:$0xff]
    %v5545 = vld [vmem:[#allocation8 + $0xa90] sm:$0xff]
    %v5546 = vld [vmem:[#allocation8 + $0xa98] sm:$0xff]
    %v5547 = vld [vmem:[#allocation8 + $0xaa0] sm:$0xff]
    %v5548 = vld [vmem:[#allocation8 + $0xaa8] sm:$0xff]
    %v5549 = vld [vmem:[#allocation8 + $0xab0] sm:$0xff]
    %v5550 = vld [vmem:[#allocation8 + $0xab8] sm:$0xff]
    %v5551 = vld [vmem:[#allocation8 + $0xac0] sm:$0xff]
    %v5552 = vld [vmem:[#allocation8 + $0xac8] sm:$0xff]
    %v5553 = vld [vmem:[#allocation8 + $0xad0] sm:$0xff]
    %v5554 = vld [vmem:[#allocation8 + $0xad8] sm:$0xff]
    %v5555 = vld [vmem:[#allocation8 + $0xae0] sm:$0xff]
    %v5556 = vld [vmem:[#allocation8 + $0xae8] sm:$0xff]
    %v5557 = vld [vmem:[#allocation8 + $0xaf0] sm:$0xff]
    %v5558 = vld [vmem:[#allocation8 + $0xaf8] sm:$0xff]
    %v5559 = vld [vmem:[#allocation8 + $0xb00] sm:$0xff]
    %v5560 = vld [vmem:[#allocation8 + $0xb08] sm:$0xff]
    %v5561 = vld [vmem:[#allocation8 + $0xb10] sm:$0xff]
    %v5562 = vld [vmem:[#allocation8 + $0xb18] sm:$0xff]
    %v5563 = vld [vmem:[#allocation8 + $0xb20] sm:$0xff]
    %v5564 = vld [vmem:[#allocation8 + $0xb28] sm:$0xff]
    %v5565 = vld [vmem:[#allocation8 + $0xb30] sm:$0xff]
    %v5566 = vld [vmem:[#allocation8 + $0xb38] sm:$0xff]
    %v5567 = vld [vmem:[#allocation8 + $0xb40] sm:$0xff]
    %v5568 = vld [vmem:[#allocation8 + $0xb48] sm:$0xff]
    %v5569 = vld [vmem:[#allocation8 + $0xb50] sm:$0xff]
    %v5570 = vld [vmem:[#allocation8 + $0xb58] sm:$0xff]
    %v5571 = vld [vmem:[#allocation8 + $0xb60] sm:$0xff]
    %v5572 = vld [vmem:[#allocation8 + $0xb68] sm:$0xff]
    %v5573 = vld [vmem:[#allocation8 + $0xb70] sm:$0xff]
    %v5574 = vld [vmem:[#allocation8 + $0xb78] sm:$0xff]
    %v5575 = vld [vmem:[#allocation8 + $0xb80] sm:$0xff]
    %v5576 = vld [vmem:[#allocation8 + $0xb88] sm:$0xff]
    %v5577 = vld [vmem:[#allocation8 + $0xb90] sm:$0xff]
    %v5578 = vld [vmem:[#allocation8 + $0xb98] sm:$0xff]
    %v5579 = vld [vmem:[#allocation8 + $0xba0] sm:$0xff]
    %v5580 = vld [vmem:[#allocation8 + $0xba8] sm:$0xff]
    %v5581 = vld [vmem:[#allocation8 + $0xbb0] sm:$0xff]
    %v5582 = vld [vmem:[#allocation8 + $0xbb8] sm:$0xff]
    %v5583 = vld [vmem:[#allocation8 + $0xbc0] sm:$0xff]
    %v5584 = vld [vmem:[#allocation8 + $0xbc8] sm:$0xff]
    %v5585 = vld [vmem:[#allocation8 + $0xbd0] sm:$0xff]
    %v5586 = vld [vmem:[#allocation8 + $0xbd8] sm:$0xff]
    %v5587 = vld [vmem:[#allocation8 + $0xbe0] sm:$0xff]
    %v5588 = vld [vmem:[#allocation8 + $0xbe8] sm:$0xff]
    %v5589 = vld [vmem:[#allocation8 + $0xbf0] sm:$0xff]
    %v5590 = vld [vmem:[#allocation8 + $0xbf8] sm:$0xff]
    %v5591 = vld [vmem:[#allocation8 + $0xc00] sm:$0xff]
    %v5592 = vld [vmem:[#allocation8 + $0xc08] sm:$0xff]
    %v5593 = vld [vmem:[#allocation8 + $0xc10] sm:$0xff]
    %v5594 = vld [vmem:[#allocation8 + $0xc18] sm:$0xff]
    %v5595 = vld [vmem:[#allocation8 + $0xc20] sm:$0xff]
    %v5596 = vld [vmem:[#allocation8 + $0xc28] sm:$0xff]
    %v5597 = vld [vmem:[#allocation8 + $0xc30] sm:$0xff]
    %v5598 = vld [vmem:[#allocation8 + $0xc38] sm:$0xff]
    %v5599 = vld [vmem:[#allocation8 + $0xc40] sm:$0xff]
    %v5600 = vld [vmem:[#allocation8 + $0xc48] sm:$0xff]
    %v5601 = vld [vmem:[#allocation8 + $0xc50] sm:$0xff]
    %v5602 = vld [vmem:[#allocation8 + $0xc58] sm:$0xff]
    %v5603 = vld [vmem:[#allocation8 + $0xc60] sm:$0xff]
    %v5604 = vld [vmem:[#allocation8 + $0xc68] sm:$0xff]
    %v5605 = vld [vmem:[#allocation8 + $0xc70] sm:$0xff]
    %v5606 = vld [vmem:[#allocation8 + $0xc78] sm:$0xff]
    %v5607 = vld [vmem:[#allocation8 + $0xc80] sm:$0xff]
    %v5608 = vld [vmem:[#allocation8 + $0xc88] sm:$0xff]
    %v5609 = vld [vmem:[#allocation8 + $0xc90] sm:$0xff]
    %v5610 = vld [vmem:[#allocation8 + $0xc98] sm:$0xff]
    %v5611 = vld [vmem:[#allocation8 + $0xca0] sm:$0xff]
    %v5612 = vld [vmem:[#allocation8 + $0xca8] sm:$0xff]
    %v5613 = vld [vmem:[#allocation8 + $0xcb0] sm:$0xff]
    %v5614 = vld [vmem:[#allocation8 + $0xcb8] sm:$0xff]
    %v5615 = vld [vmem:[#allocation8 + $0xcc0] sm:$0xff]
    %v5616 = vld [vmem:[#allocation8 + $0xcc8] sm:$0xff]
    %v5617 = vld [vmem:[#allocation8 + $0xcd0] sm:$0xff]
    %v5618 = vld [vmem:[#allocation8 + $0xcd8] sm:$0xff]
    %v5619 = vld [vmem:[#allocation8 + $0xce0] sm:$0xff]
    %v5620 = vld [vmem:[#allocation8 + $0xce8] sm:$0xff]
    %v5621 = vld [vmem:[#allocation8 + $0xcf0] sm:$0xff]
    %v5622 = vld [vmem:[#allocation8 + $0xcf8] sm:$0xff]
    %v5623 = vld [vmem:[#allocation8 + $0xd00] sm:$0xff]
    %v5624 = vld [vmem:[#allocation8 + $0xd08] sm:$0xff]
    %v5625 = vld [vmem:[#allocation8 + $0xd10] sm:$0xff]
    %v5626 = vld [vmem:[#allocation8 + $0xd18] sm:$0xff]
    %v5627 = vld [vmem:[#allocation8 + $0xd20] sm:$0xff]
    %v5628 = vld [vmem:[#allocation8 + $0xd28] sm:$0xff]
    %v5629 = vld [vmem:[#allocation8 + $0xd30] sm:$0xff]
    %v5630 = vld [vmem:[#allocation8 + $0xd38] sm:$0xff]
    %v5631 = vld [vmem:[#allocation8 + $0xd40] sm:$0xff]
    %v5632 = vld [vmem:[#allocation8 + $0xd48] sm:$0xff]
    %v5633 = vld [vmem:[#allocation8 + $0xd50] sm:$0xff]
    %v5634 = vld [vmem:[#allocation8 + $0xd58] sm:$0xff]
    %v5635 = vld [vmem:[#allocation8 + $0xd60] sm:$0xff]
    %v5636 = vld [vmem:[#allocation8 + $0xd68] sm:$0xff]
    %v5637 = vld [vmem:[#allocation8 + $0xd70] sm:$0xff]
    %v5638 = vld [vmem:[#allocation8 + $0xd78] sm:$0xff]
    %v5639 = vld [vmem:[#allocation8 + $0xd80] sm:$0xff]
    %v5640 = vld [vmem:[#allocation8 + $0xd88] sm:$0xff]
    %v5641 = vld [vmem:[#allocation8 + $0xd90] sm:$0xff]
    %v5642 = vld [vmem:[#allocation8 + $0xd98] sm:$0xff]
    %v5643 = vld [vmem:[#allocation8 + $0xda0] sm:$0xff]
    %v5644 = vld [vmem:[#allocation8 + $0xda8] sm:$0xff]
    %v5645 = vld [vmem:[#allocation8 + $0xdb0] sm:$0xff]
    %v5646 = vld [vmem:[#allocation8 + $0xdb8] sm:$0xff]
    %v5647 = vld [vmem:[#allocation8 + $0xdc0] sm:$0xff]
    %v5648 = vld [vmem:[#allocation8 + $0xdc8] sm:$0xff]
    %v5649 = vld [vmem:[#allocation8 + $0xdd0] sm:$0xff]
    %v5650 = vld [vmem:[#allocation8 + $0xdd8] sm:$0xff]
    %v5651 = vld [vmem:[#allocation8 + $0xde0] sm:$0xff]
    %v5652 = vld [vmem:[#allocation8 + $0xde8] sm:$0xff]
    %v5653 = vld [vmem:[#allocation8 + $0xdf0] sm:$0xff]
    %v5654 = vld [vmem:[#allocation8 + $0xdf8] sm:$0xff]
    %v5655 = vld [vmem:[#allocation8 + $0xe00] sm:$0xff]
    %v5656 = vld [vmem:[#allocation8 + $0xe08] sm:$0xff]
    %v5657 = vld [vmem:[#allocation8 + $0xe10] sm:$0xff]
    %v5658 = vld [vmem:[#allocation8 + $0xe18] sm:$0xff]
    %v5659 = vld [vmem:[#allocation8 + $0xe20] sm:$0xff]
    %v5660 = vld [vmem:[#allocation8 + $0xe28] sm:$0xff]
    %v5661 = vld [vmem:[#allocation8 + $0xe30] sm:$0xff]
    %v5662 = vld [vmem:[#allocation8 + $0xe38] sm:$0xff]
    %v5663 = vld [vmem:[#allocation8 + $0xe40] sm:$0xff]
    %v5664 = vld [vmem:[#allocation8 + $0xe48] sm:$0xff]
    %v5665 = vld [vmem:[#allocation8 + $0xe50] sm:$0xff]
    %v5666 = vld [vmem:[#allocation8 + $0xe58] sm:$0xff]
    %v5667 = vld [vmem:[#allocation8 + $0xe60] sm:$0xff]
    %v5668 = vld [vmem:[#allocation8 + $0xe68] sm:$0xff]
    %v5669 = vld [vmem:[#allocation8 + $0xe70] sm:$0xff]
    %v5670 = vld [vmem:[#allocation8 + $0xe78] sm:$0xff]
    %v5671 = vld [vmem:[#allocation8 + $0xe80] sm:$0xff]
    %v5672 = vld [vmem:[#allocation8 + $0xe88] sm:$0xff]
    %v5673 = vld [vmem:[#allocation8 + $0xe90] sm:$0xff]
    %v5674 = vld [vmem:[#allocation8 + $0xe98] sm:$0xff]
    %v5675 = vld [vmem:[#allocation8 + $0xea0] sm:$0xff]
    %v5676 = vld [vmem:[#allocation8 + $0xea8] sm:$0xff]
    %v5677 = vld [vmem:[#allocation8 + $0xeb0] sm:$0xff]
    %v5678 = vld [vmem:[#allocation8 + $0xeb8] sm:$0xff]
    %v5679 = vld [vmem:[#allocation8 + $0xec0] sm:$0xff]
    %v5680 = vld [vmem:[#allocation8 + $0xec8] sm:$0xff]
    %v5681 = vld [vmem:[#allocation8 + $0xed0] sm:$0xff]
    %v5682 = vld [vmem:[#allocation8 + $0xed8] sm:$0xff]
    %v5683 = vld [vmem:[#allocation8 + $0xee0] sm:$0xff]
    %v5684 = vld [vmem:[#allocation8 + $0xee8] sm:$0xff]
    %v5685 = vld [vmem:[#allocation8 + $0xef0] sm:$0xff]
    %v5686 = vld [vmem:[#allocation8 + $0xef8] sm:$0xff]
    %v5687 = vld [vmem:[#allocation8 + $0xf00] sm:$0xff]
    %v5688 = vld [vmem:[#allocation8 + $0xf08] sm:$0xff]
    %v5689 = vld [vmem:[#allocation8 + $0xf10] sm:$0xff]
    %v5690 = vld [vmem:[#allocation8 + $0xf18] sm:$0xff]
    %v5691 = vld [vmem:[#allocation8 + $0xf20] sm:$0xff]
    %v5692 = vld [vmem:[#allocation8 + $0xf28] sm:$0xff]
    %v5693 = vld [vmem:[#allocation8 + $0xf30] sm:$0xff]
    %v5694 = vld [vmem:[#allocation8 + $0xf38] sm:$0xff]
    %v5695 = vld [vmem:[#allocation8 + $0xf40] sm:$0xff]
    %v5696 = vld [vmem:[#allocation8 + $0xf48] sm:$0xff]
    %v5697 = vld [vmem:[#allocation8 + $0xf50] sm:$0xff]
    %v5698 = vld [vmem:[#allocation8 + $0xf58] sm:$0xff]
    %v5699 = vld [vmem:[#allocation8 + $0xf60] sm:$0xff]
    %v5700 = vld [vmem:[#allocation8 + $0xf68] sm:$0xff]
    %v5701 = vld [vmem:[#allocation8 + $0xf70] sm:$0xff]
    %v5702 = vld [vmem:[#allocation8 + $0xf78] sm:$0xff]
    %v5703 = vld [vmem:[#allocation8 + $0xf80] sm:$0xff]
    %v5704 = vld [vmem:[#allocation8 + $0xf88] sm:$0xff]
    %v5705 = vld [vmem:[#allocation8 + $0xf90] sm:$0xff]
    %v5706 = vld [vmem:[#allocation8 + $0xf98] sm:$0xff]
    %v5707 = vld [vmem:[#allocation8 + $0xfa0] sm:$0xff]
    %v5708 = vld [vmem:[#allocation8 + $0xfa8] sm:$0xff]
    %v5709 = vld [vmem:[#allocation8 + $0xfb0] sm:$0xff]
    %v5710 = vld [vmem:[#allocation8 + $0xfb8] sm:$0xff]
    %v5711 = vld [vmem:[#allocation8 + $0xfc0] sm:$0xff]
    %v5712 = vld [vmem:[#allocation8 + $0xfc8] sm:$0xff]
    %v5713 = vld [vmem:[#allocation8 + $0xfd0] sm:$0xff]
    %v5714 = vld [vmem:[#allocation8 + $0xfd8] sm:$0xff]
    %v5715 = vld [vmem:[#allocation8 + $0xfe0] sm:$0xff]
    %v5716 = vld [vmem:[#allocation8 + $0xfe8] sm:$0xff]
    %v5717 = vld [vmem:[#allocation8 + $0xff0] sm:$0xff]
    %v5718 = vld [vmem:[#allocation8 + $0xff8] sm:$0xff]
    %v5719 = vld [vmem:[#allocation8 + $0x1000] sm:$0xff]
    %v5720 = vld [vmem:[#allocation8 + $0x1008] sm:$0xff]
    %v5721 = vld [vmem:[#allocation8 + $0x1010] sm:$0xff]
    %v5722 = vld [vmem:[#allocation8 + $0x1018] sm:$0xff]
    %v5723 = vld [vmem:[#allocation8 + $0x1020] sm:$0xff]
    %v5724 = vld [vmem:[#allocation8 + $0x1028] sm:$0xff]
    %v5725 = vld [vmem:[#allocation8 + $0x1030] sm:$0xff]
    %v5726 = vld [vmem:[#allocation8 + $0x1038] sm:$0xff]
    %v5727 = vld [vmem:[#allocation8 + $0x1040] sm:$0xff]
    %v5728 = vld [vmem:[#allocation8 + $0x1048] sm:$0xff]
    %v5729 = vld [vmem:[#allocation8 + $0x1050] sm:$0xff]
    %v5730 = vld [vmem:[#allocation8 + $0x1058] sm:$0xff]
    %v5731 = vld [vmem:[#allocation8 + $0x1060] sm:$0xff]
    %v5732 = vld [vmem:[#allocation8 + $0x1068] sm:$0xff]
    %v5733 = vld [vmem:[#allocation8 + $0x1070] sm:$0xff]
    %v5734 = vld [vmem:[#allocation8 + $0x1078] sm:$0xff]
    %v5735 = vld [vmem:[#allocation8 + $0x1080] sm:$0xff]
    %v5736 = vld [vmem:[#allocation8 + $0x1088] sm:$0xff]
    %v5737 = vld [vmem:[#allocation8 + $0x1090] sm:$0xff]
    %v5738 = vld [vmem:[#allocation8 + $0x1098] sm:$0xff]
    %v5739 = vld [vmem:[#allocation8 + $0x10a0] sm:$0xff]
    %v5740 = vld [vmem:[#allocation8 + $0x10a8] sm:$0xff]
    %v5741 = vld [vmem:[#allocation8 + $0x10b0] sm:$0xff]
    %v5742 = vld [vmem:[#allocation8 + $0x10b8] sm:$0xff]
    %v5743 = vld [vmem:[#allocation8 + $0x10c0] sm:$0xff]
    %v5744 = vld [vmem:[#allocation8 + $0x10c8] sm:$0xff]
    %v5745 = vld [vmem:[#allocation8 + $0x10d0] sm:$0xff]
    %v5746 = vld [vmem:[#allocation8 + $0x10d8] sm:$0xff]
    %v5747 = vld [vmem:[#allocation8 + $0x10e0] sm:$0xff]
    %v5748 = vld [vmem:[#allocation8 + $0x10e8] sm:$0xff]
    %v5749 = vld [vmem:[#allocation8 + $0x10f0] sm:$0xff]
    %v5750 = vld [vmem:[#allocation8 + $0x10f8] sm:$0xff]
    %v5751 = vld [vmem:[#allocation8 + $0x1100] sm:$0xff]
    %v5752 = vld [vmem:[#allocation8 + $0x1108] sm:$0xff]
    %v5753 = vld [vmem:[#allocation8 + $0x1110] sm:$0xff]
    %v5754 = vld [vmem:[#allocation8 + $0x1118] sm:$0xff]
    %v5755 = vld [vmem:[#allocation8 + $0x1120] sm:$0xff]
    %v5756 = vld [vmem:[#allocation8 + $0x1128] sm:$0xff]
    %v5757 = vld [vmem:[#allocation8 + $0x1130] sm:$0xff]
    %v5758 = vld [vmem:[#allocation8 + $0x1138] sm:$0xff]
    %v5759 = vld [vmem:[#allocation8 + $0x1140] sm:$0xff]
    %v5760 = vld [vmem:[#allocation8 + $0x1148] sm:$0xff]
    %v5761 = vld [vmem:[#allocation8 + $0x1150] sm:$0xff]
    %v5762 = vld [vmem:[#allocation8 + $0x1158] sm:$0xff]
    %v5763 = vld [vmem:[#allocation8 + $0x1160] sm:$0xff]
    %v5764 = vld [vmem:[#allocation8 + $0x1168] sm:$0xff]
    %v5765 = vld [vmem:[#allocation8 + $0x1170] sm:$0xff]
    %v5766 = vld [vmem:[#allocation8 + $0x1178] sm:$0xff]
    %v5767 = vld [vmem:[#allocation8 + $0x1180] sm:$0xff]
    %v5768 = vld [vmem:[#allocation8 + $0x1188] sm:$0xff]
    %v5769 = vld [vmem:[#allocation8 + $0x1190] sm:$0xff]
    %v5770 = vld [vmem:[#allocation8 + $0x1198] sm:$0xff]
    %v5771 = vld [vmem:[#allocation8 + $0x11a0] sm:$0xff]
    %v5772 = vld [vmem:[#allocation8 + $0x11a8] sm:$0xff]
    %v5773 = vld [vmem:[#allocation8 + $0x11b0] sm:$0xff]
    %v5774 = vld [vmem:[#allocation8 + $0x11b8] sm:$0xff]
    %v5775 = vld [vmem:[#allocation8 + $0x11c0] sm:$0xff]
    %v5776 = vld [vmem:[#allocation8 + $0x11c8] sm:$0xff]
    %v5777 = vld [vmem:[#allocation8 + $0x11d0] sm:$0xff]
    %v5778 = vld [vmem:[#allocation8 + $0x11d8] sm:$0xff]
    %v5779 = vld [vmem:[#allocation8 + $0x11e0] sm:$0xff]
    %v5780 = vld [vmem:[#allocation8 + $0x11e8] sm:$0xff]
    %v5781 = vld [vmem:[#allocation8 + $0x11f0] sm:$0xff]
    %v5782 = vld [vmem:[#allocation8 + $0x11f8] sm:$0xff]
    %v5783 = vld [vmem:[#allocation8 + $0x1200] sm:$0xff]
    %v5784 = vld [vmem:[#allocation8 + $0x1208] sm:$0xff]
    %v5785 = vld [vmem:[#allocation8 + $0x1210] sm:$0xff]
    %v5786 = vld [vmem:[#allocation8 + $0x1218] sm:$0xff]
    %v5787 = vld [vmem:[#allocation8 + $0x1220] sm:$0xff]
    %v5788 = vld [vmem:[#allocation8 + $0x1228] sm:$0xff]
    %v5789 = vld [vmem:[#allocation8 + $0x1230] sm:$0xff]
    %v5790 = vld [vmem:[#allocation8 + $0x1238] sm:$0xff]
    %v5791 = vld [vmem:[#allocation8 + $0x1240] sm:$0xff]
    %v5792 = vld [vmem:[#allocation8 + $0x1248] sm:$0xff]
    %v5793 = vld [vmem:[#allocation8 + $0x1250] sm:$0xff]
    %v5794 = vld [vmem:[#allocation8 + $0x1258] sm:$0xff]
    %v5795 = vld [vmem:[#allocation8 + $0x1260] sm:$0xff]
    %v5796 = vld [vmem:[#allocation8 + $0x1268] sm:$0xff]
    %v5797 = vld [vmem:[#allocation8 + $0x1270] sm:$0xff]
    %v5798 = vld [vmem:[#allocation8 + $0x1278] sm:$0xff]
    %v5799 = vld [vmem:[#allocation8 + $0x1280] sm:$0xff]
    %v5800 = vld [vmem:[#allocation8 + $0x1288] sm:$0xff]
    %v5801 = vld [vmem:[#allocation8 + $0x1290] sm:$0xff]
    %v5802 = vld [vmem:[#allocation8 + $0x1298] sm:$0xff]
    %v5803 = vld [vmem:[#allocation8 + $0x12a0] sm:$0xff]
    %v5804 = vld [vmem:[#allocation8 + $0x12a8] sm:$0xff]
    %v5805 = vld [vmem:[#allocation8 + $0x12b0] sm:$0xff]
    %v5806 = vld [vmem:[#allocation8 + $0x12b8] sm:$0xff]
    %v5807 = vld [vmem:[#allocation8 + $0x12c0] sm:$0xff]
    %v5808 = vld [vmem:[#allocation8 + $0x12c8] sm:$0xff]
    %v5809 = vld [vmem:[#allocation8 + $0x12d0] sm:$0xff]
    %v5810 = vld [vmem:[#allocation8 + $0x12d8] sm:$0xff]
    %v5811 = vld [vmem:[#allocation8 + $0x12e0] sm:$0xff]
    %v5812 = vld [vmem:[#allocation8 + $0x12e8] sm:$0xff]
    %v5813 = vld [vmem:[#allocation8 + $0x12f0] sm:$0xff]
    %v5814 = vld [vmem:[#allocation8 + $0x12f8] sm:$0xff]
    %v5815 = vld [vmem:[#allocation8 + $0x1300] sm:$0xff]
    %v5816 = vld [vmem:[#allocation8 + $0x1308] sm:$0xff]
    %v5817 = vld [vmem:[#allocation8 + $0x1310] sm:$0xff]
    %v5818 = vld [vmem:[#allocation8 + $0x1318] sm:$0xff]
    %v5819 = vld [vmem:[#allocation8 + $0x1320] sm:$0xff]
    %v5820 = vld [vmem:[#allocation8 + $0x1328] sm:$0xff]
    %v5821 = vld [vmem:[#allocation8 + $0x1330] sm:$0xff]
    %v5822 = vld [vmem:[#allocation8 + $0x1338] sm:$0xff]
    %v5823 = vld [vmem:[#allocation8 + $0x1340] sm:$0xff]
    %v5824 = vld [vmem:[#allocation8 + $0x1348] sm:$0xff]
    %v5825 = vld [vmem:[#allocation8 + $0x1350] sm:$0xff]
    %v5826 = vld [vmem:[#allocation8 + $0x1358] sm:$0xff]
    %v5827 = vld [vmem:[#allocation8 + $0x1360] sm:$0xff]
    %v5828 = vld [vmem:[#allocation8 + $0x1368] sm:$0xff]
    %v5829 = vld [vmem:[#allocation8 + $0x1370] sm:$0xff]
    %v5830 = vld [vmem:[#allocation8 + $0x1378] sm:$0xff]
    %v5831 = vld [vmem:[#allocation8 + $0x1380] sm:$0xff]
    %v5832 = vld [vmem:[#allocation8 + $0x1388] sm:$0xff]
    %v5833 = vld [vmem:[#allocation8 + $0x1390] sm:$0xff]
    %v5834 = vld [vmem:[#allocation8 + $0x1398] sm:$0xff]
    %v5835 = vld [vmem:[#allocation8 + $0x13a0] sm:$0xff]
    %v5836 = vld [vmem:[#allocation8 + $0x13a8] sm:$0xff]
    %v5837 = vld [vmem:[#allocation8 + $0x13b0] sm:$0xff]
    %v5838 = vld [vmem:[#allocation8 + $0x13b8] sm:$0xff]
    %v5839 = vld [vmem:[#allocation8 + $0x13c0] sm:$0xff]
    %v5840 = vld [vmem:[#allocation8 + $0x13c8] sm:$0xff]
    %v5841 = vld [vmem:[#allocation8 + $0x13d0] sm:$0xff]
    %v5842 = vld [vmem:[#allocation8 + $0x13d8] sm:$0xff]
    %v5843 = vld [vmem:[#allocation8 + $0x13e0] sm:$0xff]
    %v5844 = vld [vmem:[#allocation8 + $0x13e8] sm:$0xff]
    %v5845 = vld [vmem:[#allocation8 + $0x13f0] sm:$0xff]
    %v5846 = vld [vmem:[#allocation8 + $0x13f8] sm:$0xff]
    %v5847 = vld [vmem:[#allocation8 + $0x1400] sm:$0xff]
    %v5848 = vld [vmem:[#allocation8 + $0x1408] sm:$0xff]
    %v5849 = vld [vmem:[#allocation8 + $0x1410] sm:$0xff]
    %v5850 = vld [vmem:[#allocation8 + $0x1418] sm:$0xff]
    %v5851 = vld [vmem:[#allocation8 + $0x1420] sm:$0xff]
    %v5852 = vld [vmem:[#allocation8 + $0x1428] sm:$0xff]
    %v5853 = vld [vmem:[#allocation8 + $0x1430] sm:$0xff]
    %v5854 = vld [vmem:[#allocation8 + $0x1438] sm:$0xff]
    %v5855 = vld [vmem:[#allocation8 + $0x1440] sm:$0xff]
    %v5856 = vld [vmem:[#allocation8 + $0x1448] sm:$0xff]
    %v5857 = vld [vmem:[#allocation8 + $0x1450] sm:$0xff]
    %v5858 = vld [vmem:[#allocation8 + $0x1458] sm:$0xff]
    %v5859 = vld [vmem:[#allocation8 + $0x1460] sm:$0xff]
    %v5860 = vld [vmem:[#allocation8 + $0x1468] sm:$0xff]
    %v5861 = vld [vmem:[#allocation8 + $0x1470] sm:$0xff]
    %v5862 = vld [vmem:[#allocation8 + $0x1478] sm:$0xff]
    %v5863 = vld [vmem:[#allocation8 + $0x1480] sm:$0xff]
    %v5864 = vld [vmem:[#allocation8 + $0x1488] sm:$0xff]
    %v5865 = vld [vmem:[#allocation8 + $0x1490] sm:$0xff]
    %v5866 = vld [vmem:[#allocation8 + $0x1498] sm:$0xff]
    %v5867 = vld [vmem:[#allocation8 + $0x14a0] sm:$0xff]
    %v5868 = vld [vmem:[#allocation8 + $0x14a8] sm:$0xff]
    %v5869 = vld [vmem:[#allocation8 + $0x14b0] sm:$0xff]
    %v5870 = vld [vmem:[#allocation8 + $0x14b8] sm:$0xff]
    %v5871 = vld [vmem:[#allocation8 + $0x14c0] sm:$0xff]
    %v5872 = vld [vmem:[#allocation8 + $0x14c8] sm:$0xff]
    %v5873 = vld [vmem:[#allocation8 + $0x14d0] sm:$0xff]
    %v5874 = vld [vmem:[#allocation8 + $0x14d8] sm:$0xff]
    %v5875 = vld [vmem:[#allocation8 + $0x14e0] sm:$0xff]
    %v5876 = vld [vmem:[#allocation8 + $0x14e8] sm:$0xff]
    %v5877 = vld [vmem:[#allocation8 + $0x14f0] sm:$0xff]
    %v5878 = vld [vmem:[#allocation8 + $0x14f8] sm:$0xff]
    %v5879 = vld [vmem:[#allocation8 + $0x1500] sm:$0xff]
    %v5880 = vld [vmem:[#allocation8 + $0x1508] sm:$0xff]
    %v5881 = vld [vmem:[#allocation8 + $0x1510] sm:$0xff]
    %v5882 = vld [vmem:[#allocation8 + $0x1518] sm:$0xff]
    %v5883 = vld [vmem:[#allocation8 + $0x1520] sm:$0xff]
    %v5884 = vld [vmem:[#allocation8 + $0x1528] sm:$0xff]
    %v5885 = vld [vmem:[#allocation8 + $0x1530] sm:$0xff]
    %v5886 = vld [vmem:[#allocation8 + $0x1538] sm:$0xff]
    %v5887 = vld [vmem:[#allocation8 + $0x1540] sm:$0xff]
    %v5888 = vld [vmem:[#allocation8 + $0x1548] sm:$0xff]
    %v5889 = vld [vmem:[#allocation8 + $0x1550] sm:$0xff]
    %v5890 = vld [vmem:[#allocation8 + $0x1558] sm:$0xff]
    %v5891 = vld [vmem:[#allocation8 + $0x1560] sm:$0xff]
    %v5892 = vld [vmem:[#allocation8 + $0x1568] sm:$0xff]
    %v5893 = vld [vmem:[#allocation8 + $0x1570] sm:$0xff]
    %v5894 = vld [vmem:[#allocation8 + $0x1578] sm:$0xff]
    %v5895 = vld [vmem:[#allocation8 + $0x1580] sm:$0xff]
    %v5896 = vld [vmem:[#allocation8 + $0x1588] sm:$0xff]
    %v5897 = vld [vmem:[#allocation8 + $0x1590] sm:$0xff]
    %v5898 = vld [vmem:[#allocation8 + $0x1598] sm:$0xff]
    %v5899 = vld [vmem:[#allocation8 + $0x15a0] sm:$0xff]
    %v5900 = vld [vmem:[#allocation8 + $0x15a8] sm:$0xff]
    %v5901 = vld [vmem:[#allocation8 + $0x15b0] sm:$0xff]
    %v5902 = vld [vmem:[#allocation8 + $0x15b8] sm:$0xff]
    %v5903 = vld [vmem:[#allocation8 + $0x15c0] sm:$0xff]
    %v5904 = vld [vmem:[#allocation8 + $0x15c8] sm:$0xff]
    %v5905 = vld [vmem:[#allocation8 + $0x15d0] sm:$0xff]
    %v5906 = vld [vmem:[#allocation8 + $0x15d8] sm:$0xff]
    %v5907 = vld [vmem:[#allocation8 + $0x15e0] sm:$0xff]
    %v5908 = vld [vmem:[#allocation8 + $0x15e8] sm:$0xff]
    %v5909 = vld [vmem:[#allocation8 + $0x15f0] sm:$0xff]
    %v5910 = vld [vmem:[#allocation8 + $0x15f8] sm:$0xff]
    %v5911 = vld [vmem:[#allocation8 + $0x1600] sm:$0xff]
    %v5912 = vld [vmem:[#allocation8 + $0x1608] sm:$0xff]
    %v5913 = vld [vmem:[#allocation8 + $0x1610] sm:$0xff]
    %v5914 = vld [vmem:[#allocation8 + $0x1618] sm:$0xff]
    %v5915 = vld [vmem:[#allocation8 + $0x1620] sm:$0xff]
    %v5916 = vld [vmem:[#allocation8 + $0x1628] sm:$0xff]
    %v5917 = vld [vmem:[#allocation8 + $0x1630] sm:$0xff]
    %v5918 = vld [vmem:[#allocation8 + $0x1638] sm:$0xff]
    %v5919 = vld [vmem:[#allocation8 + $0x1640] sm:$0xff]
    %v5920 = vld [vmem:[#allocation8 + $0x1648] sm:$0xff]
    %v5921 = vld [vmem:[#allocation8 + $0x1650] sm:$0xff]
    %v5922 = vld [vmem:[#allocation8 + $0x1658] sm:$0xff]
    %v5923 = vld [vmem:[#allocation8 + $0x1660] sm:$0xff]
    %v5924 = vld [vmem:[#allocation8 + $0x1668] sm:$0xff]
    %v5925 = vld [vmem:[#allocation8 + $0x1670] sm:$0xff]
    %v5926 = vld [vmem:[#allocation8 + $0x1678] sm:$0xff]
    %v5927 = vld [vmem:[#allocation8 + $0x1680] sm:$0xff]
    %v5928 = vld [vmem:[#allocation8 + $0x1688] sm:$0xff]
    %v5929 = vld [vmem:[#allocation8 + $0x1690] sm:$0xff]
    %v5930 = vld [vmem:[#allocation8 + $0x1698] sm:$0xff]
    %v5931 = vld [vmem:[#allocation8 + $0x16a0] sm:$0xff]
    %v5932 = vld [vmem:[#allocation8 + $0x16a8] sm:$0xff]
    %v5933 = vld [vmem:[#allocation8 + $0x16b0] sm:$0xff]
    %v5934 = vld [vmem:[#allocation8 + $0x16b8] sm:$0xff]
    %v5935 = vld [vmem:[#allocation8 + $0x16c0] sm:$0xff]
    %v5936 = vld [vmem:[#allocation8 + $0x16c8] sm:$0xff]
    %v5937 = vld [vmem:[#allocation8 + $0x16d0] sm:$0xff]
    %v5938 = vld [vmem:[#allocation8 + $0x16d8] sm:$0xff]
    %v5939 = vld [vmem:[#allocation8 + $0x16e0] sm:$0xff]
    %v5940 = vld [vmem:[#allocation8 + $0x16e8] sm:$0xff]
    %v5941 = vld [vmem:[#allocation8 + $0x16f0] sm:$0xff]
    %v5942 = vld [vmem:[#allocation8 + $0x16f8] sm:$0xff]
    %v5943 = vld [vmem:[#allocation8 + $0x1700] sm:$0xff]
    %v5944 = vld [vmem:[#allocation8 + $0x1708] sm:$0xff]
    %v5945 = vld [vmem:[#allocation8 + $0x1710] sm:$0xff]
    %v5946 = vld [vmem:[#allocation8 + $0x1718] sm:$0xff]
    %v5947 = vld [vmem:[#allocation8 + $0x1720] sm:$0xff]
    %v5948 = vld [vmem:[#allocation8 + $0x1728] sm:$0xff]
    %v5949 = vld [vmem:[#allocation8 + $0x1730] sm:$0xff]
    %v5950 = vld [vmem:[#allocation8 + $0x1738] sm:$0xff]
    %v5951 = vld [vmem:[#allocation8 + $0x1740] sm:$0xff]
    %v5952 = vld [vmem:[#allocation8 + $0x1748] sm:$0xff]
    %v5953 = vld [vmem:[#allocation8 + $0x1750] sm:$0xff]
    %v5954 = vld [vmem:[#allocation8 + $0x1758] sm:$0xff]
    %v5955 = vld [vmem:[#allocation8 + $0x1760] sm:$0xff]
    %v5956 = vld [vmem:[#allocation8 + $0x1768] sm:$0xff]
    %v5957 = vld [vmem:[#allocation8 + $0x1770] sm:$0xff]
    %v5958 = vld [vmem:[#allocation8 + $0x1778] sm:$0xff]
    %v5959 = vld [vmem:[#allocation8 + $0x1780] sm:$0xff]
    %v5960 = vld [vmem:[#allocation8 + $0x1788] sm:$0xff]
    %v5961 = vld [vmem:[#allocation8 + $0x1790] sm:$0xff]
    %v5962 = vld [vmem:[#allocation8 + $0x1798] sm:$0xff]
    %v5963 = vld [vmem:[#allocation8 + $0x17a0] sm:$0xff]
    %v5964 = vld [vmem:[#allocation8 + $0x17a8] sm:$0xff]
    %v5965 = vld [vmem:[#allocation8 + $0x17b0] sm:$0xff]
    %v5966 = vld [vmem:[#allocation8 + $0x17b8] sm:$0xff]
    %v5967 = vld [vmem:[#allocation8 + $0x17c0] sm:$0xff]
    %v5968 = vld [vmem:[#allocation8 + $0x17c8] sm:$0xff]
    %v5969 = vld [vmem:[#allocation8 + $0x17d0] sm:$0xff]
    %v5970 = vld [vmem:[#allocation8 + $0x17d8] sm:$0xff]
    %v5971 = vld [vmem:[#allocation8 + $0x17e0] sm:$0xff]
    %v5972 = vld [vmem:[#allocation8 + $0x17e8] sm:$0xff]
    %v5973 = vld [vmem:[#allocation8 + $0x17f0] sm:$0xff]
    %v5974 = vld [vmem:[#allocation8 + $0x17f8] sm:$0xff]
    %v5975 = vld [vmem:[#allocation8 + $0x1800] sm:$0xff]
    %v5976 = vld [vmem:[#allocation8 + $0x1808] sm:$0xff]
    %v5977 = vld [vmem:[#allocation8 + $0x1810] sm:$0xff]
    %v5978 = vld [vmem:[#allocation8 + $0x1818] sm:$0xff]
    %v5979 = vld [vmem:[#allocation8 + $0x1820] sm:$0xff]
    %v5980 = vld [vmem:[#allocation8 + $0x1828] sm:$0xff]
    %v5981 = vld [vmem:[#allocation8 + $0x1830] sm:$0xff]
    %v5982 = vld [vmem:[#allocation8 + $0x1838] sm:$0xff]
    %v5983 = vld [vmem:[#allocation8 + $0x1840] sm:$0xff]
    %v5984 = vld [vmem:[#allocation8 + $0x1848] sm:$0xff]
    %v5985 = vld [vmem:[#allocation8 + $0x1850] sm:$0xff]
    %v5986 = vld [vmem:[#allocation8 + $0x1858] sm:$0xff]
    %v5987 = vld [vmem:[#allocation8 + $0x1860] sm:$0xff]
    %v5988 = vld [vmem:[#allocation8 + $0x1868] sm:$0xff]
    %v5989 = vld [vmem:[#allocation8 + $0x1870] sm:$0xff]
    %v5990 = vld [vmem:[#allocation8 + $0x1878] sm:$0xff]
    %v5991 = vld [vmem:[#allocation8 + $0x1880] sm:$0xff]
    %v5992 = vld [vmem:[#allocation8 + $0x1888] sm:$0xff]
    %v5993 = vld [vmem:[#allocation8 + $0x1890] sm:$0xff]
    %v5994 = vld [vmem:[#allocation8 + $0x1898] sm:$0xff]
    %v5995 = vld [vmem:[#allocation8 + $0x18a0] sm:$0xff]
    %v5996 = vld [vmem:[#allocation8 + $0x18a8] sm:$0xff]
    %v5997 = vld [vmem:[#allocation8 + $0x18b0] sm:$0xff]
    %v5998 = vld [vmem:[#allocation8 + $0x18b8] sm:$0xff]
    %v5999 = vld [vmem:[#allocation8 + $0x18c0] sm:$0xff]
    %v6000 = vld [vmem:[#allocation8 + $0x18c8] sm:$0xff]
    %v6001 = vld [vmem:[#allocation8 + $0x18d0] sm:$0xff]
    %v6002 = vld [vmem:[#allocation8 + $0x18d8] sm:$0xff]
    %v6003 = vld [vmem:[#allocation8 + $0x18e0] sm:$0xff]
    %v6004 = vld [vmem:[#allocation8 + $0x18e8] sm:$0xff]
    %v6005 = vld [vmem:[#allocation8 + $0x18f0] sm:$0xff]
    %v6006 = vld [vmem:[#allocation8 + $0x18f8] sm:$0xff]
    %v6007 = vld [vmem:[#allocation8 + $0x1900] sm:$0xff]
    %v6008 = vld [vmem:[#allocation8 + $0x1908] sm:$0xff]
    %v6009 = vld [vmem:[#allocation8 + $0x1910] sm:$0xff]
    %v6010 = vld [vmem:[#allocation8 + $0x1918] sm:$0xff]
    %v6011 = vld [vmem:[#allocation8 + $0x1920] sm:$0xff]
    %v6012 = vld [vmem:[#allocation8 + $0x1928] sm:$0xff]
    %v6013 = vld [vmem:[#allocation8 + $0x1930] sm:$0xff]
    %v6014 = vld [vmem:[#allocation8 + $0x1938] sm:$0xff]
    %v6015 = vld [vmem:[#allocation8 + $0x1940] sm:$0xff]
    %v6016 = vld [vmem:[#allocation8 + $0x1948] sm:$0xff]
    %v6017 = vld [vmem:[#allocation8 + $0x1950] sm:$0xff]
    %v6018 = vld [vmem:[#allocation8 + $0x1958] sm:$0xff]
    %v6019 = vld [vmem:[#allocation8 + $0x1960] sm:$0xff]
    %v6020 = vld [vmem:[#allocation8 + $0x1968] sm:$0xff]
    %v6021 = vld [vmem:[#allocation8 + $0x1970] sm:$0xff]
    %v6022 = vld [vmem:[#allocation8 + $0x1978] sm:$0xff]
    %v6023 = vld [vmem:[#allocation8 + $0x1980] sm:$0xff]
    %v6024 = vld [vmem:[#allocation8 + $0x1988] sm:$0xff]
    %v6025 = vld [vmem:[#allocation8 + $0x1990] sm:$0xff]
    %v6026 = vld [vmem:[#allocation8 + $0x1998] sm:$0xff]
    %v6027 = vld [vmem:[#allocation8 + $0x19a0] sm:$0xff]
    %v6028 = vld [vmem:[#allocation8 + $0x19a8] sm:$0xff]
    %v6029 = vld [vmem:[#allocation8 + $0x19b0] sm:$0xff]
    %v6030 = vld [vmem:[#allocation8 + $0x19b8] sm:$0xff]
    %v6031 = vld [vmem:[#allocation8 + $0x19c0] sm:$0xff]
    %v6032 = vld [vmem:[#allocation8 + $0x19c8] sm:$0xff]
    %v6033 = vld [vmem:[#allocation8 + $0x19d0] sm:$0xff]
    %v6034 = vld [vmem:[#allocation8 + $0x19d8] sm:$0xff]
    %v6035 = vld [vmem:[#allocation8 + $0x19e0] sm:$0xff]
    %v6036 = vld [vmem:[#allocation8 + $0x19e8] sm:$0xff]
    %v6037 = vld [vmem:[#allocation8 + $0x19f0] sm:$0xff]
    %v6038 = vld [vmem:[#allocation8 + $0x19f8] sm:$0xff]
    %v6039 = vld [vmem:[#allocation8 + $0x1a00] sm:$0xff]
    %v6040 = vld [vmem:[#allocation8 + $0x1a08] sm:$0xff]
    %v6041 = vld [vmem:[#allocation8 + $0x1a10] sm:$0xff]
    %v6042 = vld [vmem:[#allocation8 + $0x1a18] sm:$0xff]
    %v6043 = vld [vmem:[#allocation8 + $0x1a20] sm:$0xff]
    %v6044 = vld [vmem:[#allocation8 + $0x1a28] sm:$0xff]
    %v6045 = vld [vmem:[#allocation8 + $0x1a30] sm:$0xff]
    %v6046 = vld [vmem:[#allocation8 + $0x1a38] sm:$0xff]
    %v6047 = vld [vmem:[#allocation8 + $0x1a40] sm:$0xff]
    %v6048 = vld [vmem:[#allocation8 + $0x1a48] sm:$0xff]
    %v6049 = vld [vmem:[#allocation8 + $0x1a50] sm:$0xff]
    %v6050 = vld [vmem:[#allocation8 + $0x1a58] sm:$0xff]
    %v6051 = vld [vmem:[#allocation8 + $0x1a60] sm:$0xff]
    %v6052 = vld [vmem:[#allocation8 + $0x1a68] sm:$0xff]
    %v6053 = vld [vmem:[#allocation8 + $0x1a70] sm:$0xff]
    %v6054 = vld [vmem:[#allocation8 + $0x1a78] sm:$0xff]
    %v6055 = vld [vmem:[#allocation8 + $0x1a80] sm:$0xff]
    %v6056 = vld [vmem:[#allocation8 + $0x1a88] sm:$0xff]
    %v6057 = vld [vmem:[#allocation8 + $0x1a90] sm:$0xff]
    %v6058 = vld [vmem:[#allocation8 + $0x1a98] sm:$0xff]
    %v6059 = vld [vmem:[#allocation8 + $0x1aa0] sm:$0xff]
    %v6060 = vld [vmem:[#allocation8 + $0x1aa8] sm:$0xff]
    %v6061 = vld [vmem:[#allocation8 + $0x1ab0] sm:$0xff]
    %v6062 = vld [vmem:[#allocation8 + $0x1ab8] sm:$0xff]
    %v6063 = vld [vmem:[#allocation8 + $0x1ac0] sm:$0xff]
    %v6064 = vld [vmem:[#allocation8 + $0x1ac8] sm:$0xff]
    %v6065 = vld [vmem:[#allocation8 + $0x1ad0] sm:$0xff]
    %v6066 = vld [vmem:[#allocation8 + $0x1ad8] sm:$0xff]
    %v6067 = vld [vmem:[#allocation8 + $0x1ae0] sm:$0xff]
    %v6068 = vld [vmem:[#allocation8 + $0x1ae8] sm:$0xff]
    %v6069 = vld [vmem:[#allocation8 + $0x1af0] sm:$0xff]
    %v6070 = vld [vmem:[#allocation8 + $0x1af8] sm:$0xff]
    %v6071 = vld [vmem:[#allocation8 + $0x1b00] sm:$0xff]
    %v6072 = vld [vmem:[#allocation8 + $0x1b08] sm:$0xff]
    %v6073 = vld [vmem:[#allocation8 + $0x1b10] sm:$0xff]
    %v6074 = vld [vmem:[#allocation8 + $0x1b18] sm:$0xff]
    %v6075 = vld [vmem:[#allocation8 + $0x1b20] sm:$0xff]
    %v6076 = vld [vmem:[#allocation8 + $0x1b28] sm:$0xff]
    %v6077 = vld [vmem:[#allocation8 + $0x1b30] sm:$0xff]
    %v6078 = vld [vmem:[#allocation8 + $0x1b38] sm:$0xff]
    %v6079 = vld [vmem:[#allocation8 + $0x1b40] sm:$0xff]
    %v6080 = vld [vmem:[#allocation8 + $0x1b48] sm:$0xff]
    %v6081 = vld [vmem:[#allocation8 + $0x1b50] sm:$0xff]
    %v6082 = vld [vmem:[#allocation8 + $0x1b58] sm:$0xff]
    %v6083 = vld [vmem:[#allocation8 + $0x1b60] sm:$0xff]
    %v6084 = vld [vmem:[#allocation8 + $0x1b68] sm:$0xff]
    %v6085 = vld [vmem:[#allocation8 + $0x1b70] sm:$0xff]
    %v6086 = vld [vmem:[#allocation8 + $0x1b78] sm:$0xff]
    %v6087 = vld [vmem:[#allocation8 + $0x1b80] sm:$0xff]
    %v6088 = vld [vmem:[#allocation8 + $0x1b88] sm:$0xff]
    %v6089 = vld [vmem:[#allocation8 + $0x1b90] sm:$0xff]
    %v6090 = vld [vmem:[#allocation8 + $0x1b98] sm:$0xff]
    %v6091 = vld [vmem:[#allocation8 + $0x1ba0] sm:$0xff]
    %v6092 = vld [vmem:[#allocation8 + $0x1ba8] sm:$0xff]
    %v6093 = vld [vmem:[#allocation8 + $0x1bb0] sm:$0xff]
    %v6094 = vld [vmem:[#allocation8 + $0x1bb8] sm:$0xff]
    %v6095 = vld [vmem:[#allocation8 + $0x1bc0] sm:$0xff]
    %v6096 = vld [vmem:[#allocation8 + $0x1bc8] sm:$0xff]
    %v6097 = vld [vmem:[#allocation8 + $0x1bd0] sm:$0xff]
    %v6098 = vld [vmem:[#allocation8 + $0x1bd8] sm:$0xff]
    %v6099 = vld [vmem:[#allocation8 + $0x1be0] sm:$0xff]
    %v6100 = vld [vmem:[#allocation8 + $0x1be8] sm:$0xff]
    %v6101 = vld [vmem:[#allocation8 + $0x1bf0] sm:$0xff]
    %v6102 = vld [vmem:[#allocation8 + $0x1bf8] sm:$0xff]
    %v6103 = vld [vmem:[#allocation8 + $0x1c00] sm:$0xff]
    %v6104 = vld [vmem:[#allocation8 + $0x1c08] sm:$0xff]
    %v6105 = vld [vmem:[#allocation8 + $0x1c10] sm:$0xff]
    %v6106 = vld [vmem:[#allocation8 + $0x1c18] sm:$0xff]
    %v6107 = vld [vmem:[#allocation8 + $0x1c20] sm:$0xff]
    %v6108 = vld [vmem:[#allocation8 + $0x1c28] sm:$0xff]
    %v6109 = vld [vmem:[#allocation8 + $0x1c30] sm:$0xff]
    %v6110 = vld [vmem:[#allocation8 + $0x1c38] sm:$0xff]
    %v6111 = vld [vmem:[#allocation8 + $0x1c40] sm:$0xff]
    %v6112 = vld [vmem:[#allocation8 + $0x1c48] sm:$0xff]
    %v6113 = vld [vmem:[#allocation8 + $0x1c50] sm:$0xff]
    %v6114 = vld [vmem:[#allocation8 + $0x1c58] sm:$0xff]
    %v6115 = vld [vmem:[#allocation8 + $0x1c60] sm:$0xff]
    %v6116 = vld [vmem:[#allocation8 + $0x1c68] sm:$0xff]
    %v6117 = vld [vmem:[#allocation8 + $0x1c70] sm:$0xff]
    %v6118 = vld [vmem:[#allocation8 + $0x1c78] sm:$0xff]
    %v6119 = vld [vmem:[#allocation8 + $0x1c80] sm:$0xff]
    %v6120 = vld [vmem:[#allocation8 + $0x1c88] sm:$0xff]
    %v6121 = vld [vmem:[#allocation8 + $0x1c90] sm:$0xff]
    %v6122 = vld [vmem:[#allocation8 + $0x1c98] sm:$0xff]
    %v6123 = vld [vmem:[#allocation8 + $0x1ca0] sm:$0xff]
    %v6124 = vld [vmem:[#allocation8 + $0x1ca8] sm:$0xff]
    %v6125 = vld [vmem:[#allocation8 + $0x1cb0] sm:$0xff]
    %v6126 = vld [vmem:[#allocation8 + $0x1cb8] sm:$0xff]
    %v6127 = vld [vmem:[#allocation8 + $0x1cc0] sm:$0xff]
    %v6128 = vld [vmem:[#allocation8 + $0x1cc8] sm:$0xff]
    %v6129 = vld [vmem:[#allocation8 + $0x1cd0] sm:$0xff]
    %v6130 = vld [vmem:[#allocation8 + $0x1cd8] sm:$0xff]
    %v6131 = vld [vmem:[#allocation8 + $0x1ce0] sm:$0xff]
    %v6132 = vld [vmem:[#allocation8 + $0x1ce8] sm:$0xff]
    %v6133 = vld [vmem:[#allocation8 + $0x1cf0] sm:$0xff]
    %v6134 = vld [vmem:[#allocation8 + $0x1cf8] sm:$0xff]
    %v6135 = vld [vmem:[#allocation8 + $0x1d00] sm:$0xff]
    %v6136 = vld [vmem:[#allocation8 + $0x1d08] sm:$0xff]
    %v6137 = vld [vmem:[#allocation8 + $0x1d10] sm:$0xff]
    %v6138 = vld [vmem:[#allocation8 + $0x1d18] sm:$0xff]
    %v6139 = vld [vmem:[#allocation8 + $0x1d20] sm:$0xff]
    %v6140 = vld [vmem:[#allocation8 + $0x1d28] sm:$0xff]
    %v6141 = vld [vmem:[#allocation8 + $0x1d30] sm:$0xff]
    %v6142 = vld [vmem:[#allocation8 + $0x1d38] sm:$0xff]
    %v6143 = vld [vmem:[#allocation8 + $0x1d40] sm:$0xff]
    %v6144 = vld [vmem:[#allocation8 + $0x1d48] sm:$0xff]
    %v6145 = vld [vmem:[#allocation8 + $0x1d50] sm:$0xff]
    %v6146 = vld [vmem:[#allocation8 + $0x1d58] sm:$0xff]
    %v6147 = vld [vmem:[#allocation8 + $0x1d60] sm:$0xff]
    %v6148 = vld [vmem:[#allocation8 + $0x1d68] sm:$0xff]
    %v6149 = vld [vmem:[#allocation8 + $0x1d70] sm:$0xff]
    %v6150 = vld [vmem:[#allocation8 + $0x1d78] sm:$0xff]
    %v6151 = vld [vmem:[#allocation8 + $0x1d80] sm:$0xff]
    %v6152 = vld [vmem:[#allocation8 + $0x1d88] sm:$0xff]
    %v6153 = vld [vmem:[#allocation8 + $0x1d90] sm:$0xff]
    %v6154 = vld [vmem:[#allocation8 + $0x1d98] sm:$0xff]
    %v6155 = vld [vmem:[#allocation8 + $0x1da0] sm:$0xff]
    %v6156 = vld [vmem:[#allocation8 + $0x1da8] sm:$0xff]
    %v6157 = vld [vmem:[#allocation8 + $0x1db0] sm:$0xff]
    %v6158 = vld [vmem:[#allocation8 + $0x1db8] sm:$0xff]
    %v6159 = vld [vmem:[#allocation8 + $0x1dc0] sm:$0xff]
    %v6160 = vld [vmem:[#allocation8 + $0x1dc8] sm:$0xff]
    %v6161 = vld [vmem:[#allocation8 + $0x1dd0] sm:$0xff]
    %v6162 = vld [vmem:[#allocation8 + $0x1dd8] sm:$0xff]
    %v6163 = vld [vmem:[#allocation8 + $0x1de0] sm:$0xff]
    %v6164 = vld [vmem:[#allocation8 + $0x1de8] sm:$0xff]
    %v6165 = vld [vmem:[#allocation8 + $0x1df0] sm:$0xff]
    %v6166 = vld [vmem:[#allocation8 + $0x1df8] sm:$0xff]
    %v6167 = vld [vmem:[#allocation8 + $0x1e00] sm:$0xff]
    %v6168 = vld [vmem:[#allocation8 + $0x1e08] sm:$0xff]
    %v6169 = vld [vmem:[#allocation8 + $0x1e10] sm:$0xff]
    %v6170 = vld [vmem:[#allocation8 + $0x1e18] sm:$0xff]
    %v6171 = vld [vmem:[#allocation8 + $0x1e20] sm:$0xff]
    %v6172 = vld [vmem:[#allocation8 + $0x1e28] sm:$0xff]
    %v6173 = vld [vmem:[#allocation8 + $0x1e30] sm:$0xff]
    %v6174 = vld [vmem:[#allocation8 + $0x1e38] sm:$0xff]
    %v6175 = vld [vmem:[#allocation8 + $0x1e40] sm:$0xff]
    %v6176 = vld [vmem:[#allocation8 + $0x1e48] sm:$0xff]
    %v6177 = vld [vmem:[#allocation8 + $0x1e50] sm:$0xff]
    %v6178 = vld [vmem:[#allocation8 + $0x1e58] sm:$0xff]
    %v6179 = vld [vmem:[#allocation8 + $0x1e60] sm:$0xff]
    %v6180 = vld [vmem:[#allocation8 + $0x1e68] sm:$0xff]
    %v6181 = vld [vmem:[#allocation8 + $0x1e70] sm:$0xff]
    %v6182 = vld [vmem:[#allocation8 + $0x1e78] sm:$0xff]
    %v6183 = vld [vmem:[#allocation8 + $0x1e80] sm:$0xff]
    %v6184 = vld [vmem:[#allocation8 + $0x1e88] sm:$0xff]
    %v6185 = vld [vmem:[#allocation8 + $0x1e90] sm:$0xff]
    %v6186 = vld [vmem:[#allocation8 + $0x1e98] sm:$0xff]
    %v6187 = vld [vmem:[#allocation8 + $0x1ea0] sm:$0xff]
    %v6188 = vld [vmem:[#allocation8 + $0x1ea8] sm:$0xff]
    %v6189 = vld [vmem:[#allocation8 + $0x1eb0] sm:$0xff]
    %v6190 = vld [vmem:[#allocation8 + $0x1eb8] sm:$0xff]
    %v6191 = vld [vmem:[#allocation8 + $0x1ec0] sm:$0xff]
    %v6192 = vld [vmem:[#allocation8 + $0x1ec8] sm:$0xff]
    %v6193 = vld [vmem:[#allocation8 + $0x1ed0] sm:$0xff]
    %v6194 = vld [vmem:[#allocation8 + $0x1ed8] sm:$0xff]
    %v6195 = vld [vmem:[#allocation8 + $0x1ee0] sm:$0xff]
    %v6196 = vld [vmem:[#allocation8 + $0x1ee8] sm:$0xff]
    %v6197 = vld [vmem:[#allocation8 + $0x1ef0] sm:$0xff]
    %v6198 = vld [vmem:[#allocation8 + $0x1ef8] sm:$0xff]
    %v6199 = vld [vmem:[#allocation8 + $0x1f00] sm:$0xff]
    %v6200 = vld [vmem:[#allocation8 + $0x1f08] sm:$0xff]
    %v6201 = vld [vmem:[#allocation8 + $0x1f10] sm:$0xff]
    %v6202 = vld [vmem:[#allocation8 + $0x1f18] sm:$0xff]
    %v6203 = vld [vmem:[#allocation8 + $0x1f20] sm:$0xff]
    %v6204 = vld [vmem:[#allocation8 + $0x1f28] sm:$0xff]
    %v6205 = vld [vmem:[#allocation8 + $0x1f30] sm:$0xff]
    %v6206 = vld [vmem:[#allocation8 + $0x1f38] sm:$0xff]
    %v6207 = vld [vmem:[#allocation8 + $0x1f40] sm:$0xff]
    %v6208 = vld [vmem:[#allocation8 + $0x1f48] sm:$0xff]
    %v6209 = vld [vmem:[#allocation8 + $0x1f50] sm:$0xff]
    %v6210 = vld [vmem:[#allocation8 + $0x1f58] sm:$0xff]
    %v6211 = vld [vmem:[#allocation8 + $0x1f60] sm:$0xff]
    %v6212 = vld [vmem:[#allocation8 + $0x1f68] sm:$0xff]
    %v6213 = vld [vmem:[#allocation8 + $0x1f70] sm:$0xff]
    %v6214 = vld [vmem:[#allocation8 + $0x1f78] sm:$0xff]
    %v6215 = vld [vmem:[#allocation8 + $0x1f80] sm:$0xff]
    %v6216 = vld [vmem:[#allocation8 + $0x1f88] sm:$0xff]
    %v6217 = vld [vmem:[#allocation8 + $0x1f90] sm:$0xff]
    %v6218 = vld [vmem:[#allocation8 + $0x1f98] sm:$0xff]
    %v6219 = vld [vmem:[#allocation8 + $0x1fa0] sm:$0xff]
    %v6220 = vld [vmem:[#allocation8 + $0x1fa8] sm:$0xff]
    %v6221 = vld [vmem:[#allocation8 + $0x1fb0] sm:$0xff]
    %v6222 = vld [vmem:[#allocation8 + $0x1fb8] sm:$0xff]
    %v6223 = vld [vmem:[#allocation8 + $0x1fc0] sm:$0xff]
    %v6224 = vld [vmem:[#allocation8 + $0x1fc8] sm:$0xff]
    %v6225 = vld [vmem:[#allocation8 + $0x1fd0] sm:$0xff]
    %v6226 = vld [vmem:[#allocation8 + $0x1fd8] sm:$0xff]
    %v6227 = vld [vmem:[#allocation8 + $0x1fe0] sm:$0xff]
    %v6228 = vld [vmem:[#allocation8 + $0x1fe8] sm:$0xff]
    %v6229 = vld [vmem:[#allocation8 + $0x1ff0] sm:$0xff]
    %v6230 = vld [vmem:[#allocation8 + $0x1ff8] sm:$0xff]
    %v6231 = vld [vmem:[#allocation21] sm:$0xff]
    %v6232 = vld [vmem:[#allocation21 + $0x8] sm:$0xff]
    %v6235 = vlaneseq
    %v6236 = vshrl.u32 %v6235, 7
    %v6237 = vsub.s32 0, %v6236
    %v6238 = vrot.slane %v6231, %v6237
    %v6239 = vlaneseq
    %v6240 = vshrl.u32 %v6239, 7
    %v6241 = vsub.s32 1, %v6240
    %v6242 = vrot.slane %v6231, %v6241
    %v6243 = vlaneseq
    %v6244 = vshrl.u32 %v6243, 7
    %v6245 = vsub.s32 2, %v6244
    %v6246 = vrot.slane %v6231, %v6245
    %v6247 = vlaneseq
    %v6248 = vshrl.u32 %v6247, 7
    %v6249 = vsub.s32 3, %v6248
    %v6250 = vrot.slane %v6231, %v6249
    %v6251 = vlaneseq
    %v6252 = vshrl.u32 %v6251, 7
    %v6253 = vsub.s32 4, %v6252
    %v6254 = vrot.slane %v6231, %v6253
    %v6255 = vlaneseq
    %v6256 = vshrl.u32 %v6255, 7
    %v6257 = vsub.s32 5, %v6256
    %v6258 = vrot.slane %v6231, %v6257
    %v6259 = vlaneseq
    %v6260 = vshrl.u32 %v6259, 7
    %v6261 = vsub.s32 6, %v6260
    %v6262 = vrot.slane %v6231, %v6261
    %v6263 = vlaneseq
    %v6264 = vshrl.u32 %v6263, 7
    %v6265 = vsub.s32 7, %v6264
    %v6266 = vrot.slane %v6231, %v6265
    %v6267 = vlaneseq
    %v6268 = vshrl.u32 %v6267, 7
    %v6269 = vsub.s32 0, %v6268
    %v6270 = vrot.slane %v6232, %v6269
    %v6271 = vlaneseq
    %v6272 = vshrl.u32 %v6271, 7
    %v6273 = vsub.s32 1, %v6272
    %v6274 = vrot.slane %v6232, %v6273
    %v6275 = vlaneseq
    %v6276 = vshrl.u32 %v6275, 7
    %v6277 = vsub.s32 2, %v6276
    %v6278 = vrot.slane %v6232, %v6277
    %v6279 = vlaneseq
    %v6280 = vshrl.u32 %v6279, 7
    %v6281 = vsub.s32 3, %v6280
    %v6282 = vrot.slane %v6232, %v6281
    %v6283 = vlaneseq
    %v6284 = vshrl.u32 %v6283, 7
    %v6285 = vsub.s32 4, %v6284
    %v6286 = vrot.slane %v6232, %v6285
    %v6287 = vlaneseq
    %v6288 = vshrl.u32 %v6287, 7
    %v6289 = vsub.s32 5, %v6288
    %v6290 = vrot.slane %v6232, %v6289
    %v6291 = vlaneseq
    %v6292 = vshrl.u32 %v6291, 7
    %v6293 = vsub.s32 6, %v6292
    %v6294 = vrot.slane %v6232, %v6293
    %v6295 = vlaneseq
    %v6296 = vshrl.u32 %v6295, 7
    %v6297 = vsub.s32 7, %v6296
    %v6298 = vrot.slane %v6232, %v6297
    %6315 = vmatprep.subr.bf16.mxu0 %v5208
    %6316 = vmatpush1.bf16.msra.mxu0 %v5207
    %6317 = vmatprep.subr.bf16.mxu0 %v5224
    %6318 = vmatpush1.bf16.msra.mxu0 %v5223
    %6319 = vmatprep.subr.bf16.mxu0 %v5240
    %6320 = vmatpush1.bf16.msra.mxu0 %v5239
    %6321 = vmatprep.subr.bf16.mxu0 %v5256
    %6322 = vmatpush1.bf16.msra.mxu0 %v5255
    %6323 = vmatprep.subr.bf16.mxu0 %v5272
    %6324 = vmatpush1.bf16.msra.mxu0 %v5271
    %6325 = vmatprep.subr.bf16.mxu0 %v5288
    %6326 = vmatpush1.bf16.msra.mxu0 %v5287
    %6327 = vmatprep.subr.bf16.mxu0 %v5304
    %6328 = vmatpush1.bf16.msra.mxu0 %v5303
    %6329 = vmatprep.subr.bf16.mxu0 %v5320
    %6330 = vmatpush1.bf16.msra.mxu0 %v5319
    %6331 = vmatprep.subr.bf16.mxu0 %v5336
    %6332 = vmatpush1.bf16.msra.mxu0 %v5335
    %6333 = vmatprep.subr.bf16.mxu0 %v5352
    %6334 = vmatpush1.bf16.msra.mxu0 %v5351
    %6335 = vmatprep.subr.bf16.mxu0 %v5368
    %6336 = vmatpush1.bf16.msra.mxu0 %v5367
    %6337 = vmatprep.subr.bf16.mxu0 %v5384
    %6338 = vmatpush1.bf16.msra.mxu0 %v5383
    %6339 = vmatprep.subr.bf16.mxu0 %v5400
    %6340 = vmatpush1.bf16.msra.mxu0 %v5399
    %6341 = vmatprep.subr.bf16.mxu0 %v5416
    %6342 = vmatpush1.bf16.msra.mxu0 %v5415
    %6343 = vmatprep.subr.bf16.mxu0 %v5432
    %6344 = vmatpush1.bf16.msra.mxu0 %v5431
    %6345 = vmatprep.subr.bf16.mxu0 %v5448
    %6346 = vmatpush1.bf16.msra.mxu0 %v5447
    %6347 = vmatprep.mubr.bf16.mxu0 %v5197
    %6348 = vmatmul.mubr.bf16.gmra.mrb[0].mxu0 %v5196
    %v6349 = vpop.f32.mrb[0].mxu0
    %v6350 = vadd.f32 %v6238, %v6349
    %v6351 = vpop.f32.mrb[0].mxu0
    %v6352 = vadd.f32 %v6242, %v6351
    %v6353 = vpop.f32.mrb[0].mxu0
    %v6354 = vadd.f32 %v6238, %v6353
    %v6355 = vpop.f32.mrb[0].mxu0
    %v6356 = vadd.f32 %v6242, %v6355
    %6357 = vdwg.mxu0
    %6358 = vmatprep.subr.bf16.mxu0 %v5464
    %6359 = vmatpush1.bf16.msra.mxu0 %v5463
    %6360 = vmatprep.subr.bf16.mxu0 %v5480
    %6361 = vmatpush1.bf16.msra.mxu0 %v5479
    %6362 = vmatprep.subr.bf16.mxu0 %v5496
    %6363 = vmatpush1.bf16.msra.mxu0 %v5495
    %6364 = vmatprep.subr.bf16.mxu0 %v5512
    %6365 = vmatpush1.bf16.msra.mxu0 %v5511
    %6366 = vmatprep.subr.bf16.mxu0 %v5528
    %6367 = vmatpush1.bf16.msra.mxu0 %v5527
    %6368 = vmatprep.subr.bf16.mxu0 %v5544
    %6369 = vmatpush1.bf16.msra.mxu0 %v5543
    %6370 = vmatprep.subr.bf16.mxu0 %v5560
    %6371 = vmatpush1.bf16.msra.mxu0 %v5559
    %6372 = vmatprep.subr.bf16.mxu0 %v5576
    %6373 = vmatpush1.bf16.msra.mxu0 %v5575
    %6374 = vmatprep.subr.bf16.mxu0 %v5592
    %6375 = vmatpush1.bf16.msra.mxu0 %v5591
    %6376 = vmatprep.subr.bf16.mxu0 %v5608
    %6377 = vmatpush1.bf16.msra.mxu0 %v5607
    %6378 = vmatprep.subr.bf16.mxu0 %v5624
    %6379 = vmatpush1.bf16.msra.mxu0 %v5623
    %6380 = vmatprep.subr.bf16.mxu0 %v5640
    %6381 = vmatpush1.bf16.msra.mxu0 %v5639
    %6382 = vmatprep.subr.bf16.mxu0 %v5656
    %6383 = vmatpush1.bf16.msra.mxu0 %v5655
    %6384 = vmatprep.subr.bf16.mxu0 %v5672
    %6385 = vmatpush1.bf16.msra.mxu0 %v5671
    %6386 = vmatprep.subr.bf16.mxu0 %v5688
    %6387 = vmatpush1.bf16.msra.mxu0 %v5687
    %6388 = vmatprep.subr.bf16.mxu0 %v5704
    %6389 = vmatpush1.bf16.msra.mxu0 %v5703
    %6390 = vmatprep.mubr.bf16.mxu0 %v5199
    %6391 = vmatmul.mubr.bf16.gmra.mrb[0].mxu0 %v5198
    %v6392 = vpop.f32.mrb[0].mxu0
    %v6393 = vadd.f32 %v6350, %v6392
    %v6394 = vpop.f32.mrb[0].mxu0
    %v6395 = vadd.f32 %v6352, %v6394
    %v6396 = vpop.f32.mrb[0].mxu0
    %v6397 = vadd.f32 %v6354, %v6396
    %v6398 = vpop.f32.mrb[0].mxu0
    %v6399 = vadd.f32 %v6356, %v6398
    %6400 = vdwg.mxu0
    %6401 = vmatprep.subr.bf16.mxu0 %v5720
    %6402 = vmatpush1.bf16.msra.mxu0 %v5719
    %6403 = vmatprep.subr.bf16.mxu0 %v5736
    %6404 = vmatpush1.bf16.msra.mxu0 %v5735
    %6405 = vmatprep.subr.bf16.mxu0 %v5752
    %6406 = vmatpush1.bf16.msra.mxu0 %v5751
    %6407 = vmatprep.subr.bf16.mxu0 %v5768
    %6408 = vmatpush1.bf16.msra.mxu0 %v5767
    %6409 = vmatprep.subr.bf16.mxu0 %v5784
    %6410 = vmatpush1.bf16.msra.mxu0 %v5783
    %6411 = vmatprep.subr.bf16.mxu0 %v5800
    %6412 = vmatpush1.bf16.msra.mxu0 %v5799
    %6413 = vmatprep.subr.bf16.mxu0 %v5816
    %6414 = vmatpush1.bf16.msra.mxu0 %v5815
    %6415 = vmatprep.subr.bf16.mxu0 %v5832
    %6416 = vmatpush1.bf16.msra.mxu0 %v5831
    %6417 = vmatprep.subr.bf16.mxu0 %v5848
    %6418 = vmatpush1.bf16.msra.mxu0 %v5847
    %6419 = vmatprep.subr.bf16.mxu0 %v5864
    %6420 = vmatpush1.bf16.msra.mxu0 %v5863
    %6421 = vmatprep.subr.bf16.mxu0 %v5880
    %6422 = vmatpush1.bf16.msra.mxu0 %v5879
    %6423 = vmatprep.subr.bf16.mxu0 %v5896
    %6424 = vmatpush1.bf16.msra.mxu0 %v5895
    %6425 = vmatprep.subr.bf16.mxu0 %v5912
    %6426 = vmatpush1.bf16.msra.mxu0 %v5911
    %6427 = vmatprep.subr.bf16.mxu0 %v5928
    %6428 = vmatpush1.bf16.msra.mxu0 %v5927
    %6429 = vmatprep.subr.bf16.mxu0 %v5944
    %6430 = vmatpush1.bf16.msra.mxu0 %v5943
    %6431 = vmatprep.subr.bf16.mxu0 %v5960
    %6432 = vmatpush1.bf16.msra.mxu0 %v5959
    %6433 = vmatprep.mubr.bf16.mxu0 %v5201
    %6434 = vmatmul.mubr.bf16.gmra.mrb[0].mxu0 %v5200
    %v6435 = vpop.f32.mrb[0].mxu0
    %v6436 = vadd.f32 %v6393, %v6435
    %v6437 = vpop.f32.mrb[0].mxu0
    %v6438 = vadd.f32 %v6395, %v6437
    %v6439 = vpop.f32.mrb[0].mxu0
    %v6440 = vadd.f32 %v6397, %v6439
    %v6441 = vpop.f32.mrb[0].mxu0
    %v6442 = vadd.f32 %v6399, %v6441
    %6443 = vdwg.mxu0
    %6444 = vmatprep.subr.bf16.mxu0 %v5976
    %6445 = vmatpush1.bf16.msra.mxu0 %v5975
    %6446 = vmatprep.subr.bf16.mxu0 %v5992
    %6447 = vmatpush1.bf16.msra.mxu0 %v5991
    %6448 = vmatprep.subr.bf16.mxu0 %v6008
    %6449 = vmatpush1.bf16.msra.mxu0 %v6007
    %6450 = vmatprep.subr.bf16.mxu0 %v6024
    %6451 = vmatpush1.bf16.msra.mxu0 %v6023
    %6452 = vmatprep.subr.bf16.mxu0 %v6040
    %6453 = vmatpush1.bf16.msra.mxu0 %v6039
    %6454 = vmatprep.subr.bf16.mxu0 %v6056
    %6455 = vmatpush1.bf16.msra.mxu0 %v6055
    %6456 = vmatprep.subr.bf16.mxu0 %v6072
    %6457 = vmatpush1.bf16.msra.mxu0 %v6071
    %6458 = vmatprep.subr.bf16.mxu0 %v6088
    %6459 = vmatpush1.bf16.msra.mxu0 %v6087
    %6460 = vmatprep.subr.bf16.mxu0 %v6104
    %6461 = vmatpush1.bf16.msra.mxu0 %v6103
    %6462 = vmatprep.subr.bf16.mxu0 %v6120
    %6463 = vmatpush1.bf16.msra.mxu0 %v6119
    %6464 = vmatprep.subr.bf16.mxu0 %v6136
    %6465 = vmatpush1.bf16.msra.mxu0 %v6135
    %6466 = vmatprep.subr.bf16.mxu0 %v6152
    %6467 = vmatpush1.bf16.msra.mxu0 %v6151
    %6468 = vmatprep.subr.bf16.mxu0 %v6168
    %6469 = vmatpush1.bf16.msra.mxu0 %v6167
    %6470 = vmatprep.subr.bf16.mxu0 %v6184
    %6471 = vmatpush1.bf16.msra.mxu0 %v6183
    %6472 = vmatprep.subr.bf16.mxu0 %v6200
    %6473 = vmatpush1.bf16.msra.mxu0 %v6199
    %6474 = vmatprep.subr.bf16.mxu0 %v6216
    %6475 = vmatpush1.bf16.msra.mxu0 %v6215
    %6476 = vmatprep.mubr.bf16.mxu0 %v5203
    %6477 = vmatmul.mubr.bf16.gmra.mrb[0].mxu0 %v5202
    %v6478 = vpop.f32.mrb[0].mxu0
    %v6479 = vadd.f32 %v6436, %v6478
    %v6480 = vpop.f32.mrb[0].mxu0
    %v6481 = vadd.f32 %v6438, %v6480
    %v6482 = vpop.f32.mrb[0].mxu0
    %v6483 = vadd.f32 %v6440, %v6482
    %v6484 = vpop.f32.mrb[0].mxu0
    %v6485 = vadd.f32 %v6442, %v6484
    %6486 = vdwg.mxu0
    %6487 = vmatprep.subr.bf16.mxu0 %v5210
    %6488 = vmatpush1.bf16.msra.mxu0 %v5209
    %6489 = vmatprep.subr.bf16.mxu0 %v5226
    %6490 = vmatpush1.bf16.msra.mxu0 %v5225
    %6491 = vmatprep.subr.bf16.mxu0 %v5242
    %6492 = vmatpush1.bf16.msra.mxu0 %v5241
    %6493 = vmatprep.subr.bf16.mxu0 %v5258
    %6494 = vmatpush1.bf16.msra.mxu0 %v5257
    %6495 = vmatprep.subr.bf16.mxu0 %v5274
    %6496 = vmatpush1.bf16.msra.mxu0 %v5273
    %6497 = vmatprep.subr.bf16.mxu0 %v5290
    %6498 = vmatpush1.bf16.msra.mxu0 %v5289
    %6499 = vmatprep.subr.bf16.mxu0 %v5306
    %6500 = vmatpush1.bf16.msra.mxu0 %v5305
    %6501 = vmatprep.subr.bf16.mxu0 %v5322
    %6502 = vmatpush1.bf16.msra.mxu0 %v5321
    %6503 = vmatprep.subr.bf16.mxu0 %v5338
    %6504 = vmatpush1.bf16.msra.mxu0 %v5337
    %6505 = vmatprep.subr.bf16.mxu0 %v5354
    %6506 = vmatpush1.bf16.msra.mxu0 %v5353
    %6507 = vmatprep.subr.bf16.mxu0 %v5370
    %6508 = vmatpush1.bf16.msra.mxu0 %v5369
    %6509 = vmatprep.subr.bf16.mxu0 %v5386
    %6510 = vmatpush1.bf16.msra.mxu0 %v5385
    %6511 = vmatprep.subr.bf16.mxu0 %v5402
    %6512 = vmatpush1.bf16.msra.mxu0 %v5401
    %6513 = vmatprep.subr.bf16.mxu0 %v5418
    %6514 = vmatpush1.bf16.msra.mxu0 %v5417
    %6515 = vmatprep.subr.bf16.mxu0 %v5434
    %6516 = vmatpush1.bf16.msra.mxu0 %v5433
    %6517 = vmatprep.subr.bf16.mxu0 %v5450
    %6518 = vmatpush1.bf16.msra.mxu0 %v5449
    %6519 = vmatprep.mubr.bf16.mxu0 %v5197
    %6520 = vmatmul.mubr.bf16.gmra.mrb[0].mxu0 %v5196
    %v6521 = vpop.f32.mrb[0].mxu0
    %v6522 = vadd.f32 %v6246, %v6521
    %v6523 = vpop.f32.mrb[0].mxu0
    %v6524 = vadd.f32 %v6250, %v6523
    %v6525 = vpop.f32.mrb[0].mxu0
    %v6526 = vadd.f32 %v6246, %v6525
    %v6527 = vpop.f32.mrb[0].mxu0
    %v6528 = vadd.f32 %v6250, %v6527
    %6529 = vdwg.mxu0
    %6530 = vmatprep.subr.bf16.mxu0 %v5466
    %6531 = vmatpush1.bf16.msra.mxu0 %v5465
    %6532 = vmatprep.subr.bf16.mxu0 %v5482
    %6533 = vmatpush1.bf16.msra.mxu0 %v5481
    %6534 = vmatprep.subr.bf16.mxu0 %v5498
    %6535 = vmatpush1.bf16.msra.mxu0 %v5497
    %6536 = vmatprep.subr.bf16.mxu0 %v5514
    %6537 = vmatpush1.bf16.msra.mxu0 %v5513
    %6538 = vmatprep.subr.bf16.mxu0 %v5530
    %6539 = vmatpush1.bf16.msra.mxu0 %v5529
    %6540 = vmatprep.subr.bf16.mxu0 %v5546
    %6541 = vmatpush1.bf16.msra.mxu0 %v5545
    %6542 = vmatprep.subr.bf16.mxu0 %v5562
    %6543 = vmatpush1.bf16.msra.mxu0 %v5561
    %6544 = vmatprep.subr.bf16.mxu0 %v5578
    %6545 = vmatpush1.bf16.msra.mxu0 %v5577
    %6546 = vmatprep.subr.bf16.mxu0 %v5594
    %6547 = vmatpush1.bf16.msra.mxu0 %v5593
    %6548 = vmatprep.subr.bf16.mxu0 %v5610
    %6549 = vmatpush1.bf16.msra.mxu0 %v5609
    %6550 = vmatprep.subr.bf16.mxu0 %v5626
    %6551 = vmatpush1.bf16.msra.mxu0 %v5625
    %6552 = vmatprep.subr.bf16.mxu0 %v5642
    %6553 = vmatpush1.bf16.msra.mxu0 %v5641
    %6554 = vmatprep.subr.bf16.mxu0 %v5658
    %6555 = vmatpush1.bf16.msra.mxu0 %v5657
    %6556 = vmatprep.subr.bf16.mxu0 %v5674
    %6557 = vmatpush1.bf16.msra.mxu0 %v5673
    %6558 = vmatprep.subr.bf16.mxu0 %v5690
    %6559 = vmatpush1.bf16.msra.mxu0 %v5689
    %6560 = vmatprep.subr.bf16.mxu0 %v5706
    %6561 = vmatpush1.bf16.msra.mxu0 %v5705
    %6562 = vmatprep.mubr.bf16.mxu0 %v5199
    %6563 = vmatmul.mubr.bf16.gmra.mrb[0].mxu0 %v5198
    %v6564 = vpop.f32.mrb[0].mxu0
    %v6565 = vadd.f32 %v6522, %v6564
    %v6566 = vpop.f32.mrb[0].mxu0
    %v6567 = vadd.f32 %v6524, %v6566
    %v6568 = vpop.f32.mrb[0].mxu0
    %v6569 = vadd.f32 %v6526, %v6568
    %v6570 = vpop.f32.mrb[0].mxu0
    %v6571 = vadd.f32 %v6528, %v6570
    %6572 = vdwg.mxu0
    %6573 = vmatprep.subr.bf16.mxu0 %v5722
    %6574 = vmatpush1.bf16.msra.mxu0 %v5721
    %6575 = vmatprep.subr.bf16.mxu0 %v5738
    %6576 = vmatpush1.bf16.msra.mxu0 %v5737
    %6577 = vmatprep.subr.bf16.mxu0 %v5754
    %6578 = vmatpush1.bf16.msra.mxu0 %v5753
    %6579 = vmatprep.subr.bf16.mxu0 %v5770
    %6580 = vmatpush1.bf16.msra.mxu0 %v5769
    %6581 = vmatprep.subr.bf16.mxu0 %v5786
    %6582 = vmatpush1.bf16.msra.mxu0 %v5785
    %6583 = vmatprep.subr.bf16.mxu0 %v5802
    %6584 = vmatpush1.bf16.msra.mxu0 %v5801
    %6585 = vmatprep.subr.bf16.mxu0 %v5818
    %6586 = vmatpush1.bf16.msra.mxu0 %v5817
    %6587 = vmatprep.subr.bf16.mxu0 %v5834
    %6588 = vmatpush1.bf16.msra.mxu0 %v5833
    %6589 = vmatprep.subr.bf16.mxu0 %v5850
    %6590 = vmatpush1.bf16.msra.mxu0 %v5849
    %6591 = vmatprep.subr.bf16.mxu0 %v5866
    %6592 = vmatpush1.bf16.msra.mxu0 %v5865
    %6593 = vmatprep.subr.bf16.mxu0 %v5882
    %6594 = vmatpush1.bf16.msra.mxu0 %v5881
    %6595 = vmatprep.subr.bf16.mxu0 %v5898
    %6596 = vmatpush1.bf16.msra.mxu0 %v5897
    %6597 = vmatprep.subr.bf16.mxu0 %v5914
    %6598 = vmatpush1.bf16.msra.mxu0 %v5913
    %6599 = vmatprep.subr.bf16.mxu0 %v5930
    %6600 = vmatpush1.bf16.msra.mxu0 %v5929
    %6601 = vmatprep.subr.bf16.mxu0 %v5946
    %6602 = vmatpush1.bf16.msra.mxu0 %v5945
    %6603 = vmatprep.subr.bf16.mxu0 %v5962
    %6604 = vmatpush1.bf16.msra.mxu0 %v5961
    %6605 = vmatprep.mubr.bf16.mxu0 %v5201
    %6606 = vmatmul.mubr.bf16.gmra.mrb[0].mxu0 %v5200
    %v6607 = vpop.f32.mrb[0].mxu0
    %v6608 = vadd.f32 %v6565, %v6607
    %v6609 = vpop.f32.mrb[0].mxu0
    %v6610 = vadd.f32 %v6567, %v6609
    %v6611 = vpop.f32.mrb[0].mxu0
    %v6612 = vadd.f32 %v6569, %v6611
    %v6613 = vpop.f32.mrb[0].mxu0
    %v6614 = vadd.f32 %v6571, %v6613
    %6615 = vdwg.mxu0
    %6616 = vmatprep.subr.bf16.mxu0 %v5978
    %6617 = vmatpush1.bf16.msra.mxu0 %v5977
    %6618 = vmatprep.subr.bf16.mxu0 %v5994
    %6619 = vmatpush1.bf16.msra.mxu0 %v5993
    %6620 = vmatprep.subr.bf16.mxu0 %v6010
    %6621 = vmatpush1.bf16.msra.mxu0 %v6009
    %6622 = vmatprep.subr.bf16.mxu0 %v6026
    %6623 = vmatpush1.bf16.msra.mxu0 %v6025
    %6624 = vmatprep.subr.bf16.mxu0 %v6042
    %6625 = vmatpush1.bf16.msra.mxu0 %v6041
    %6626 = vmatprep.subr.bf16.mxu0 %v6058
    %6627 = vmatpush1.bf16.msra.mxu0 %v6057
    %6628 = vmatprep.subr.bf16.mxu0 %v6074
    %6629 = vmatpush1.bf16.msra.mxu0 %v6073
    %6630 = vmatprep.subr.bf16.mxu0 %v6090
    %6631 = vmatpush1.bf16.msra.mxu0 %v6089
    %6632 = vmatprep.subr.bf16.mxu0 %v6106
    %6633 = vmatpush1.bf16.msra.mxu0 %v6105
    %6634 = vmatprep.subr.bf16.mxu0 %v6122
    %6635 = vmatpush1.bf16.msra.mxu0 %v6121
    %6636 = vmatprep.subr.bf16.mxu0 %v6138
    %6637 = vmatpush1.bf16.msra.mxu0 %v6137
    %6638 = vmatprep.subr.bf16.mxu0 %v6154
    %6639 = vmatpush1.bf16.msra.mxu0 %v6153
    %6640 = vmatprep.subr.bf16.mxu0 %v6170
    %6641 = vmatpush1.bf16.msra.mxu0 %v6169
    %6642 = vmatprep.subr.bf16.mxu0 %v6186
    %6643 = vmatpush1.bf16.msra.mxu0 %v6185
    %6644 = vmatprep.subr.bf16.mxu0 %v6202
    %6645 = vmatpush1.bf16.msra.mxu0 %v6201
    %6646 = vmatprep.subr.bf16.mxu0 %v6218
    %6647 = vmatpush1.bf16.msra.mxu0 %v6217
    %6648 = vmatprep.mubr.bf16.mxu0 %v5203
    %6649 = vmatmul.mubr.bf16.gmra.mrb[0].mxu0 %v5202
    %v6650 = vpop.f32.mrb[0].mxu0
    %v6651 = vadd.f32 %v6608, %v6650
    %v6652 = vpop.f32.mrb[0].mxu0
    %v6653 = vadd.f32 %v6610, %v6652
    %v6654 = vpop.f32.mrb[0].mxu0
    %v6655 = vadd.f32 %v6612, %v6654
    %v6656 = vpop.f32.mrb[0].mxu0
    %v6657 = vadd.f32 %v6614, %v6656
    %6658 = vdwg.mxu0
    %6659 = vmatprep.subr.bf16.mxu0 %v5212
    %6660 = vmatpush1.bf16.msra.mxu0 %v5211
    %6661 = vmatprep.subr.bf16.mxu0 %v5228
    %6662 = vmatpush1.bf16.msra.mxu0 %v5227
    %6663 = vmatprep.subr.bf16.mxu0 %v5244
    %6664 = vmatpush1.bf16.msra.mxu0 %v5243
    %6665 = vmatprep.subr.bf16.mxu0 %v5260
    %6666 = vmatpush1.bf16.msra.mxu0 %v5259
    %6667 = vmatprep.subr.bf16.mxu0 %v5276
    %6668 = vmatpush1.bf16.msra.mxu0 %v5275
    %6669 = vmatprep.subr.bf16.mxu0 %v5292
    %6670 = vmatpush1.bf16.msra.mxu0 %v5291
    %6671 = vmatprep.subr.bf16.mxu0 %v5308
    %6672 = vmatpush1.bf16.msra.mxu0 %v5307
    %6673 = vmatprep.subr.bf16.mxu0 %v5324
    %6674 = vmatpush1.bf16.msra.mxu0 %v5323
    %6675 = vmatprep.subr.bf16.mxu0 %v5340
    %6676 = vmatpush1.bf16.msra.mxu0 %v5339
    %6677 = vmatprep.subr.bf16.mxu0 %v5356
    %6678 = vmatpush1.bf16.msra.mxu0 %v5355
    %6679 = vmatprep.subr.bf16.mxu0 %v5372
    %6680 = vmatpush1.bf16.msra.mxu0 %v5371
    %6681 = vmatprep.subr.bf16.mxu0 %v5388
    %6682 = vmatpush1.bf16.msra.mxu0 %v5387
    %6683 = vmatprep.subr.bf16.mxu0 %v5404
    %6684 = vmatpush1.bf16.msra.mxu0 %v5403
    %6685 = vmatprep.subr.bf16.mxu0 %v5420
    %6686 = vmatpush1.bf16.msra.mxu0 %v5419
    %6687 = vmatprep.subr.bf16.mxu0 %v5436
    %6688 = vmatpush1.bf16.msra.mxu0 %v5435
    %6689 = vmatprep.subr.bf16.mxu0 %v5452
    %6690 = vmatpush1.bf16.msra.mxu0 %v5451
    %6691 = vmatprep.mubr.bf16.mxu0 %v5197
    %6692 = vmatmul.mubr.bf16.gmra.mrb[0].mxu0 %v5196
    %v6693 = vpop.f32.mrb[0].mxu0
    %v6694 = vadd.f32 %v6254, %v6693
    %v6695 = vpop.f32.mrb[0].mxu0
    %v6696 = vadd.f32 %v6258, %v6695
    %v6697 = vpop.f32.mrb[0].mxu0
    %v6698 = vadd.f32 %v6254, %v6697
    %v6699 = vpop.f32.mrb[0].mxu0
    %v6700 = vadd.f32 %v6258, %v6699
    %6701 = vdwg.mxu0
    %6702 = vmatprep.subr.bf16.mxu0 %v5468
    %6703 = vmatpush1.bf16.msra.mxu0 %v5467
    %6704 = vmatprep.subr.bf16.mxu0 %v5484
    %6705 = vmatpush1.bf16.msra.mxu0 %v5483
    %6706 = vmatprep.subr.bf16.mxu0 %v5500
    %6707 = vmatpush1.bf16.msra.mxu0 %v5499
    %6708 = vmatprep.subr.bf16.mxu0 %v5516
    %6709 = vmatpush1.bf16.msra.mxu0 %v5515
    %6710 = vmatprep.subr.bf16.mxu0 %v5532
    %6711 = vmatpush1.bf16.msra.mxu0 %v5531
    %6712 = vmatprep.subr.bf16.mxu0 %v5548
    %6713 = vmatpush1.bf16.msra.mxu0 %v5547
    %6714 = vmatprep.subr.bf16.mxu0 %v5564
    %6715 = vmatpush1.bf16.msra.mxu0 %v5563
    %6716 = vmatprep.subr.bf16.mxu0 %v5580
    %6717 = vmatpush1.bf16.msra.mxu0 %v5579
    %6718 = vmatprep.subr.bf16.mxu0 %v5596
    %6719 = vmatpush1.bf16.msra.mxu0 %v5595
    %6720 = vmatprep.subr.bf16.mxu0 %v5612
    %6721 = vmatpush1.bf16.msra.mxu0 %v5611
    %6722 = vmatprep.subr.bf16.mxu0 %v5628
    %6723 = vmatpush1.bf16.msra.mxu0 %v5627
    %6724 = vmatprep.subr.bf16.mxu0 %v5644
    %6725 = vmatpush1.bf16.msra.mxu0 %v5643
    %6726 = vmatprep.subr.bf16.mxu0 %v5660
    %6727 = vmatpush1.bf16.msra.mxu0 %v5659
    %6728 = vmatprep.subr.bf16.mxu0 %v5676
    %6729 = vmatpush1.bf16.msra.mxu0 %v5675
    %6730 = vmatprep.subr.bf16.mxu0 %v5692
    %6731 = vmatpush1.bf16.msra.mxu0 %v5691
    %6732 = vmatprep.subr.bf16.mxu0 %v5708
    %6733 = vmatpush1.bf16.msra.mxu0 %v5707
    %6734 = vmatprep.mubr.bf16.mxu0 %v5199
    %6735 = vmatmul.mubr.bf16.gmra.mrb[0].mxu0 %v5198
    %v6736 = vpop.f32.mrb[0].mxu0
    %v6737 = vadd.f32 %v6694, %v6736
    %v6738 = vpop.f32.mrb[0].mxu0
    %v6739 = vadd.f32 %v6696, %v6738
    %v6740 = vpop.f32.mrb[0].mxu0
    %v6741 = vadd.f32 %v6698, %v6740
    %v6742 = vpop.f32.mrb[0].mxu0
    %v6743 = vadd.f32 %v6700, %v6742
    %6744 = vdwg.mxu0
    %6745 = vmatprep.subr.bf16.mxu0 %v5724
    %6746 = vmatpush1.bf16.msra.mxu0 %v5723
    %6747 = vmatprep.subr.bf16.mxu0 %v5740
    %6748 = vmatpush1.bf16.msra.mxu0 %v5739
    %6749 = vmatprep.subr.bf16.mxu0 %v5756
    %6750 = vmatpush1.bf16.msra.mxu0 %v5755
    %6751 = vmatprep.subr.bf16.mxu0 %v5772
    %6752 = vmatpush1.bf16.msra.mxu0 %v5771
    %6753 = vmatprep.subr.bf16.mxu0 %v5788
    %6754 = vmatpush1.bf16.msra.mxu0 %v5787
    %6755 = vmatprep.subr.bf16.mxu0 %v5804
    %6756 = vmatpush1.bf16.msra.mxu0 %v5803
    %6757 = vmatprep.subr.bf16.mxu0 %v5820
    %6758 = vmatpush1.bf16.msra.mxu0 %v5819
    %6759 = vmatprep.subr.bf16.mxu0 %v5836
    %6760 = vmatpush1.bf16.msra.mxu0 %v5835
    %6761 = vmatprep.subr.bf16.mxu0 %v5852
    %6762 = vmatpush1.bf16.msra.mxu0 %v5851
    %6763 = vmatprep.subr.bf16.mxu0 %v5868
    %6764 = vmatpush1.bf16.msra.mxu0 %v5867
    %6765 = vmatprep.subr.bf16.mxu0 %v5884
    %6766 = vmatpush1.bf16.msra.mxu0 %v5883
    %6767 = vmatprep.subr.bf16.mxu0 %v5900
    %6768 = vmatpush1.bf16.msra.mxu0 %v5899
    %6769 = vmatprep.subr.bf16.mxu0 %v5916
    %6770 = vmatpush1.bf16.msra.mxu0 %v5915
    %6771 = vmatprep.subr.bf16.mxu0 %v5932
    %6772 = vmatpush1.bf16.msra.mxu0 %v5931
    %6773 = vmatprep.subr.bf16.mxu0 %v5948
    %6774 = vmatpush1.bf16.msra.mxu0 %v5947
    %6775 = vmatprep.subr.bf16.mxu0 %v5964
    %6776 = vmatpush1.bf16.msra.mxu0 %v5963
    %6777 = vmatprep.mubr.bf16.mxu0 %v5201
    %6778 = vmatmul.mubr.bf16.gmra.mrb[0].mxu0 %v5200
    %v6779 = vpop.f32.mrb[0].mxu0
    %v6780 = vadd.f32 %v6737, %v6779
    %v6781 = vpop.f32.mrb[0].mxu0
    %v6782 = vadd.f32 %v6739, %v6781
    %v6783 = vpop.f32.mrb[0].mxu0
    %v6784 = vadd.f32 %v6741, %v6783
    %v6785 = vpop.f32.mrb[0].mxu0
    %v6786 = vadd.f32 %v6743, %v6785
    %6787 = vdwg.mxu0
    %6788 = vmatprep.subr.bf16.mxu0 %v5980
    %6789 = vmatpush1.bf16.msra.mxu0 %v5979
    %6790 = vmatprep.subr.bf16.mxu0 %v5996
    %6791 = vmatpush1.bf16.msra.mxu0 %v5995
    %6792 = vmatprep.subr.bf16.mxu0 %v6012
    %6793 = vmatpush1.bf16.msra.mxu0 %v6011
    %6794 = vmatprep.subr.bf16.mxu0 %v6028
    %6795 = vmatpush1.bf16.msra.mxu0 %v6027
    %6796 = vmatprep.subr.bf16.mxu0 %v6044
    %6797 = vmatpush1.bf16.msra.mxu0 %v6043
    %6798 = vmatprep.subr.bf16.mxu0 %v6060
    %6799 = vmatpush1.bf16.msra.mxu0 %v6059
    %6800 = vmatprep.subr.bf16.mxu0 %v6076
    %6801 = vmatpush1.bf16.msra.mxu0 %v6075
    %6802 = vmatprep.subr.bf16.mxu0 %v6092
    %6803 = vmatpush1.bf16.msra.mxu0 %v6091
    %6804 = vmatprep.subr.bf16.mxu0 %v6108
    %6805 = vmatpush1.bf16.msra.mxu0 %v6107
    %6806 = vmatprep.subr.bf16.mxu0 %v6124
    %6807 = vmatpush1.bf16.msra.mxu0 %v6123
    %6808 = vmatprep.subr.bf16.mxu0 %v6140
    %6809 = vmatpush1.bf16.msra.mxu0 %v6139
    %6810 = vmatprep.subr.bf16.mxu0 %v6156
    %6811 = vmatpush1.bf16.msra.mxu0 %v6155
    %6812 = vmatprep.subr.bf16.mxu0 %v6172
    %6813 = vmatpush1.bf16.msra.mxu0 %v6171
    %6814 = vmatprep.subr.bf16.mxu0 %v6188
    %6815 = vmatpush1.bf16.msra.mxu0 %v6187
    %6816 = vmatprep.subr.bf16.mxu0 %v6204
    %6817 = vmatpush1.bf16.msra.mxu0 %v6203
    %6818 = vmatprep.subr.bf16.mxu0 %v6220
    %6819 = vmatpush1.bf16.msra.mxu0 %v6219
    %6820 = vmatprep.mubr.bf16.mxu0 %v5203
    %6821 = vmatmul.mubr.bf16.gmra.mrb[0].mxu0 %v5202
    %v6822 = vpop.f32.mrb[0].mxu0
    %v6823 = vadd.f32 %v6780, %v6822
    %v6824 = vpop.f32.mrb[0].mxu0
    %v6825 = vadd.f32 %v6782, %v6824
    %v6826 = vpop.f32.mrb[0].mxu0
    %v6827 = vadd.f32 %v6784, %v6826
    %v6828 = vpop.f32.mrb[0].mxu0
    %v6829 = vadd.f32 %v6786, %v6828
    %6830 = vdwg.mxu0
    %6831 = vmatprep.subr.bf16.mxu0 %v5214
    %6832 = vmatpush1.bf16.msra.mxu0 %v5213
    %6833 = vmatprep.subr.bf16.mxu0 %v5230
    %6834 = vmatpush1.bf16.msra.mxu0 %v5229
    %6835 = vmatprep.subr.bf16.mxu0 %v5246
    %6836 = vmatpush1.bf16.msra.mxu0 %v5245
    %6837 = vmatprep.subr.bf16.mxu0 %v5262
    %6838 = vmatpush1.bf16.msra.mxu0 %v5261
    %6839 = vmatprep.subr.bf16.mxu0 %v5278
    %6840 = vmatpush1.bf16.msra.mxu0 %v5277
    %6841 = vmatprep.subr.bf16.mxu0 %v5294
    %6842 = vmatpush1.bf16.msra.mxu0 %v5293
    %6843 = vmatprep.subr.bf16.mxu0 %v5310
    %6844 = vmatpush1.bf16.msra.mxu0 %v5309
    %6845 = vmatprep.subr.bf16.mxu0 %v5326
    %6846 = vmatpush1.bf16.msra.mxu0 %v5325
    %6847 = vmatprep.subr.bf16.mxu0 %v5342
    %6848 = vmatpush1.bf16.msra.mxu0 %v5341
    %6849 = vmatprep.subr.bf16.mxu0 %v5358
    %6850 = vmatpush1.bf16.msra.mxu0 %v5357
    %6851 = vmatprep.subr.bf16.mxu0 %v5374
    %6852 = vmatpush1.bf16.msra.mxu0 %v5373
    %6853 = vmatprep.subr.bf16.mxu0 %v5390
    %6854 = vmatpush1.bf16.msra.mxu0 %v5389
    %6855 = vmatprep.subr.bf16.mxu0 %v5406
    %6856 = vmatpush1.bf16.msra.mxu0 %v5405
    %6857 = vmatprep.subr.bf16.mxu0 %v5422
    %6858 = vmatpush1.bf16.msra.mxu0 %v5421
    %6859 = vmatprep.subr.bf16.mxu0 %v5438
    %6860 = vmatpush1.bf16.msra.mxu0 %v5437
    %6861 = vmatprep.subr.bf16.mxu0 %v5454
    %6862 = vmatpush1.bf16.msra.mxu0 %v5453
    %6863 = vmatprep.mubr.bf16.mxu0 %v5197
    %6864 = vmatmul.mubr.bf16.gmra.mrb[0].mxu0 %v5196
    %v6865 = vpop.f32.mrb[0].mxu0
    %v6866 = vadd.f32 %v6262, %v6865
    %v6867 = vpop.f32.mrb[0].mxu0
    %v6868 = vadd.f32 %v6266, %v6867
    %v6869 = vpop.f32.mrb[0].mxu0
    %v6870 = vadd.f32 %v6262, %v6869
    %v6871 = vpop.f32.mrb[0].mxu0
    %v6872 = vadd.f32 %v6266, %v6871
    %6873 = vdwg.mxu0
    %6874 = vmatprep.subr.bf16.mxu0 %v5470
    %6875 = vmatpush1.bf16.msra.mxu0 %v5469
    %6876 = vmatprep.subr.bf16.mxu0 %v5486
    %6877 = vmatpush1.bf16.msra.mxu0 %v5485
    %6878 = vmatprep.subr.bf16.mxu0 %v5502
    %6879 = vmatpush1.bf16.msra.mxu0 %v5501
    %6880 = vmatprep.subr.bf16.mxu0 %v5518
    %6881 = vmatpush1.bf16.msra.mxu0 %v5517
    %6882 = vmatprep.subr.bf16.mxu0 %v5534
    %6883 = vmatpush1.bf16.msra.mxu0 %v5533
    %6884 = vmatprep.subr.bf16.mxu0 %v5550
    %6885 = vmatpush1.bf16.msra.mxu0 %v5549
    %6886 = vmatprep.subr.bf16.mxu0 %v5566
    %6887 = vmatpush1.bf16.msra.mxu0 %v5565
    %6888 = vmatprep.subr.bf16.mxu0 %v5582
    %6889 = vmatpush1.bf16.msra.mxu0 %v5581
    %6890 = vmatprep.subr.bf16.mxu0 %v5598
    %6891 = vmatpush1.bf16.msra.mxu0 %v5597
    %6892 = vmatprep.subr.bf16.mxu0 %v5614
    %6893 = vmatpush1.bf16.msra.mxu0 %v5613
    %6894 = vmatprep.subr.bf16.mxu0 %v5630
    %6895 = vmatpush1.bf16.msra.mxu0 %v5629
    %6896 = vmatprep.subr.bf16.mxu0 %v5646
    %6897 = vmatpush1.bf16.msra.mxu0 %v5645
    %6898 = vmatprep.subr.bf16.mxu0 %v5662
    %6899 = vmatpush1.bf16.msra.mxu0 %v5661
    %6900 = vmatprep.subr.bf16.mxu0 %v5678
    %6901 = vmatpush1.bf16.msra.mxu0 %v5677
    %6902 = vmatprep.subr.bf16.mxu0 %v5694
    %6903 = vmatpush1.bf16.msra.mxu0 %v5693
    %6904 = vmatprep.subr.bf16.mxu0 %v5710
    %6905 = vmatpush1.bf16.msra.mxu0 %v5709
    %6906 = vmatprep.mubr.bf16.mxu0 %v5199
    %6907 = vmatmul.mubr.bf16.gmra.mrb[0].mxu0 %v5198
    %v6908 = vpop.f32.mrb[0].mxu0
    %v6909 = vadd.f32 %v6866, %v6908
    %v6910 = vpop.f32.mrb[0].mxu0
    %v6911 = vadd.f32 %v6868, %v6910
    %v6912 = vpop.f32.mrb[0].mxu0
    %v6913 = vadd.f32 %v6870, %v6912
    %v6914 = vpop.f32.mrb[0].mxu0
    %v6915 = vadd.f32 %v6872, %v6914
    %6916 = vdwg.mxu0
    %6917 = vmatprep.subr.bf16.mxu0 %v5726
    %6918 = vmatpush1.bf16.msra.mxu0 %v5725
    %6919 = vmatprep.subr.bf16.mxu0 %v5742
    %6920 = vmatpush1.bf16.msra.mxu0 %v5741
    %6921 = vmatprep.subr.bf16.mxu0 %v5758
    %6922 = vmatpush1.bf16.msra.mxu0 %v5757
    %6923 = vmatprep.subr.bf16.mxu0 %v5774
    %6924 = vmatpush1.bf16.msra.mxu0 %v5773
    %6925 = vmatprep.subr.bf16.mxu0 %v5790
    %6926 = vmatpush1.bf16.msra.mxu0 %v5789
    %6927 = vmatprep.subr.bf16.mxu0 %v5806
    %6928 = vmatpush1.bf16.msra.mxu0 %v5805
    %6929 = vmatprep.subr.bf16.mxu0 %v5822
    %6930 = vmatpush1.bf16.msra.mxu0 %v5821
    %6931 = vmatprep.subr.bf16.mxu0 %v5838
    %6932 = vmatpush1.bf16.msra.mxu0 %v5837
    %6933 = vmatprep.subr.bf16.mxu0 %v5854
    %6934 = vmatpush1.bf16.msra.mxu0 %v5853
    %6935 = vmatprep.subr.bf16.mxu0 %v5870
    %6936 = vmatpush1.bf16.msra.mxu0 %v5869
    %6937 = vmatprep.subr.bf16.mxu0 %v5886
    %6938 = vmatpush1.bf16.msra.mxu0 %v5885
    %6939 = vmatprep.subr.bf16.mxu0 %v5902
    %6940 = vmatpush1.bf16.msra.mxu0 %v5901
    %6941 = vmatprep.subr.bf16.mxu0 %v5918
    %6942 = vmatpush1.bf16.msra.mxu0 %v5917
    %6943 = vmatprep.subr.bf16.mxu0 %v5934
    %6944 = vmatpush1.bf16.msra.mxu0 %v5933
    %6945 = vmatprep.subr.bf16.mxu0 %v5950
    %6946 = vmatpush1.bf16.msra.mxu0 %v5949
    %6947 = vmatprep.subr.bf16.mxu0 %v5966
    %6948 = vmatpush1.bf16.msra.mxu0 %v5965
    %6949 = vmatprep.mubr.bf16.mxu0 %v5201
    %6950 = vmatmul.mubr.bf16.gmra.mrb[0].mxu0 %v5200
    %v6951 = vpop.f32.mrb[0].mxu0
    %v6952 = vadd.f32 %v6909, %v6951
    %v6953 = vpop.f32.mrb[0].mxu0
    %v6954 = vadd.f32 %v6911, %v6953
    %v6955 = vpop.f32.mrb[0].mxu0
    %v6956 = vadd.f32 %v6913, %v6955
    %v6957 = vpop.f32.mrb[0].mxu0
    %v6958 = vadd.f32 %v6915, %v6957
    %6959 = vdwg.mxu0
    %6960 = vmatprep.subr.bf16.mxu0 %v5982
    %6961 = vmatpush1.bf16.msra.mxu0 %v5981
    %6962 = vmatprep.subr.bf16.mxu0 %v5998
    %6963 = vmatpush1.bf16.msra.mxu0 %v5997
    %6964 = vmatprep.subr.bf16.mxu0 %v6014
    %6965 = vmatpush1.bf16.msra.mxu0 %v6013
    %6966 = vmatprep.subr.bf16.mxu0 %v6030
    %6967 = vmatpush1.bf16.msra.mxu0 %v6029
    %6968 = vmatprep.subr.bf16.mxu0 %v6046
    %6969 = vmatpush1.bf16.msra.mxu0 %v6045
    %6970 = vmatprep.subr.bf16.mxu0 %v6062
    %6971 = vmatpush1.bf16.msra.mxu0 %v6061
    %6972 = vmatprep.subr.bf16.mxu0 %v6078
    %6973 = vmatpush1.bf16.msra.mxu0 %v6077
    %6974 = vmatprep.subr.bf16.mxu0 %v6094
    %6975 = vmatpush1.bf16.msra.mxu0 %v6093
    %6976 = vmatprep.subr.bf16.mxu0 %v6110
    %6977 = vmatpush1.bf16.msra.mxu0 %v6109
    %6978 = vmatprep.subr.bf16.mxu0 %v6126
    %6979 = vmatpush1.bf16.msra.mxu0 %v6125
    %6980 = vmatprep.subr.bf16.mxu0 %v6142
    %6981 = vmatpush1.bf16.msra.mxu0 %v6141
    %6982 = vmatprep.subr.bf16.mxu0 %v6158
    %6983 = vmatpush1.bf16.msra.mxu0 %v6157
    %6984 = vmatprep.subr.bf16.mxu0 %v6174
    %6985 = vmatpush1.bf16.msra.mxu0 %v6173
    %6986 = vmatprep.subr.bf16.mxu0 %v6190
    %6987 = vmatpush1.bf16.msra.mxu0 %v6189
    %6988 = vmatprep.subr.bf16.mxu0 %v6206
    %6989 = vmatpush1.bf16.msra.mxu0 %v6205
    %6990 = vmatprep.subr.bf16.mxu0 %v6222
    %6991 = vmatpush1.bf16.msra.mxu0 %v6221
    %6992 = vmatprep.mubr.bf16.mxu0 %v5203
    %6993 = vmatmul.mubr.bf16.gmra.mrb[0].mxu0 %v5202
    %v6994 = vpop.f32.mrb[0].mxu0
    %v6995 = vadd.f32 %v6952, %v6994
    %v6996 = vpop.f32.mrb[0].mxu0
    %v6997 = vadd.f32 %v6954, %v6996
    %v6998 = vpop.f32.mrb[0].mxu0
    %v6999 = vadd.f32 %v6956, %v6998
    %v7000 = vpop.f32.mrb[0].mxu0
    %v7001 = vadd.f32 %v6958, %v7000
    %7002 = vdwg.mxu0
    %7003 = vmatprep.subr.bf16.mxu0 %v5216
    %7004 = vmatpush1.bf16.msra.mxu0 %v5215
    %7005 = vmatprep.subr.bf16.mxu0 %v5232
    %7006 = vmatpush1.bf16.msra.mxu0 %v5231
    %7007 = vmatprep.subr.bf16.mxu0 %v5248
    %7008 = vmatpush1.bf16.msra.mxu0 %v5247
    %7009 = vmatprep.subr.bf16.mxu0 %v5264
    %7010 = vmatpush1.bf16.msra.mxu0 %v5263
    %7011 = vmatprep.subr.bf16.mxu0 %v5280
    %7012 = vmatpush1.bf16.msra.mxu0 %v5279
    %7013 = vmatprep.subr.bf16.mxu0 %v5296
    %7014 = vmatpush1.bf16.msra.mxu0 %v5295
    %7015 = vmatprep.subr.bf16.mxu0 %v5312
    %7016 = vmatpush1.bf16.msra.mxu0 %v5311
    %7017 = vmatprep.subr.bf16.mxu0 %v5328
    %7018 = vmatpush1.bf16.msra.mxu0 %v5327
    %7019 = vmatprep.subr.bf16.mxu0 %v5344
    %7020 = vmatpush1.bf16.msra.mxu0 %v5343
    %7021 = vmatprep.subr.bf16.mxu0 %v5360
    %7022 = vmatpush1.bf16.msra.mxu0 %v5359
    %7023 = vmatprep.subr.bf16.mxu0 %v5376
    %7024 = vmatpush1.bf16.msra.mxu0 %v5375
    %7025 = vmatprep.subr.bf16.mxu0 %v5392
    %7026 = vmatpush1.bf16.msra.mxu0 %v5391
    %7027 = vmatprep.subr.bf16.mxu0 %v5408
    %7028 = vmatpush1.bf16.msra.mxu0 %v5407
    %7029 = vmatprep.subr.bf16.mxu0 %v5424
    %7030 = vmatpush1.bf16.msra.mxu0 %v5423
    %7031 = vmatprep.subr.bf16.mxu0 %v5440
    %7032 = vmatpush1.bf16.msra.mxu0 %v5439
    %7033 = vmatprep.subr.bf16.mxu0 %v5456
    %7034 = vmatpush1.bf16.msra.mxu0 %v5455
    %7035 = vmatprep.mubr.bf16.mxu0 %v5197
    %7036 = vmatmul.mubr.bf16.gmra.mrb[0].mxu0 %v5196
    %v7037 = vpop.f32.mrb[0].mxu0
    %v7038 = vadd.f32 %v6270, %v7037
    %v7039 = vpop.f32.mrb[0].mxu0
    %v7040 = vadd.f32 %v6274, %v7039
    %v7041 = vpop.f32.mrb[0].mxu0
    %v7042 = vadd.f32 %v6270, %v7041
    %v7043 = vpop.f32.mrb[0].mxu0
    %v7044 = vadd.f32 %v6274, %v7043
    %7045 = vdwg.mxu0
    %7046 = vmatprep.subr.bf16.mxu0 %v5472
    %7047 = vmatpush1.bf16.msra.mxu0 %v5471
    %7048 = vmatprep.subr.bf16.mxu0 %v5488
    %7049 = vmatpush1.bf16.msra.mxu0 %v5487
    %7050 = vmatprep.subr.bf16.mxu0 %v5504
    %7051 = vmatpush1.bf16.msra.mxu0 %v5503
    %7052 = vmatprep.subr.bf16.mxu0 %v5520
    %7053 = vmatpush1.bf16.msra.mxu0 %v5519
    %7054 = vmatprep.subr.bf16.mxu0 %v5536
    %7055 = vmatpush1.bf16.msra.mxu0 %v5535
    %7056 = vmatprep.subr.bf16.mxu0 %v5552
    %7057 = vmatpush1.bf16.msra.mxu0 %v5551
    %7058 = vmatprep.subr.bf16.mxu0 %v5568
    %7059 = vmatpush1.bf16.msra.mxu0 %v5567
    %7060 = vmatprep.subr.bf16.mxu0 %v5584
    %7061 = vmatpush1.bf16.msra.mxu0 %v5583
    %7062 = vmatprep.subr.bf16.mxu0 %v5600
    %7063 = vmatpush1.bf16.msra.mxu0 %v5599
    %7064 = vmatprep.subr.bf16.mxu0 %v5616
    %7065 = vmatpush1.bf16.msra.mxu0 %v5615
    %7066 = vmatprep.subr.bf16.mxu0 %v5632
    %7067 = vmatpush1.bf16.msra.mxu0 %v5631
    %7068 = vmatprep.subr.bf16.mxu0 %v5648
    %7069 = vmatpush1.bf16.msra.mxu0 %v5647
    %7070 = vmatprep.subr.bf16.mxu0 %v5664
    %7071 = vmatpush1.bf16.msra.mxu0 %v5663
    %7072 = vmatprep.subr.bf16.mxu0 %v5680
    %7073 = vmatpush1.bf16.msra.mxu0 %v5679
    %7074 = vmatprep.subr.bf16.mxu0 %v5696
    %7075 = vmatpush1.bf16.msra.mxu0 %v5695
    %7076 = vmatprep.subr.bf16.mxu0 %v5712
    %7077 = vmatpush1.bf16.msra.mxu0 %v5711
    %7078 = vmatprep.mubr.bf16.mxu0 %v5199
    %7079 = vmatmul.mubr.bf16.gmra.mrb[0].mxu0 %v5198
    %v7080 = vpop.f32.mrb[0].mxu0
    %v7081 = vadd.f32 %v7038, %v7080
    %v7082 = vpop.f32.mrb[0].mxu0
    %v7083 = vadd.f32 %v7040, %v7082
    %v7084 = vpop.f32.mrb[0].mxu0
    %v7085 = vadd.f32 %v7042, %v7084
    %v7086 = vpop.f32.mrb[0].mxu0
    %v7087 = vadd.f32 %v7044, %v7086
    %7088 = vdwg.mxu0
    %7089 = vmatprep.subr.bf16.mxu0 %v5728
    %7090 = vmatpush1.bf16.msra.mxu0 %v5727
    %7091 = vmatprep.subr.bf16.mxu0 %v5744
    %7092 = vmatpush1.bf16.msra.mxu0 %v5743
    %7093 = vmatprep.subr.bf16.mxu0 %v5760
    %7094 = vmatpush1.bf16.msra.mxu0 %v5759
    %7095 = vmatprep.subr.bf16.mxu0 %v5776
    %7096 = vmatpush1.bf16.msra.mxu0 %v5775
    %7097 = vmatprep.subr.bf16.mxu0 %v5792
    %7098 = vmatpush1.bf16.msra.mxu0 %v5791
    %7099 = vmatprep.subr.bf16.mxu0 %v5808
    %7100 = vmatpush1.bf16.msra.mxu0 %v5807
    %7101 = vmatprep.subr.bf16.mxu0 %v5824
    %7102 = vmatpush1.bf16.msra.mxu0 %v5823
    %7103 = vmatprep.subr.bf16.mxu0 %v5840
    %7104 = vmatpush1.bf16.msra.mxu0 %v5839
    %7105 = vmatprep.subr.bf16.mxu0 %v5856
    %7106 = vmatpush1.bf16.msra.mxu0 %v5855
    %7107 = vmatprep.subr.bf16.mxu0 %v5872
    %7108 = vmatpush1.bf16.msra.mxu0 %v5871
    %7109 = vmatprep.subr.bf16.mxu0 %v5888
    %7110 = vmatpush1.bf16.msra.mxu0 %v5887
    %7111 = vmatprep.subr.bf16.mxu0 %v5904
    %7112 = vmatpush1.bf16.msra.mxu0 %v5903
    %7113 = vmatprep.subr.bf16.mxu0 %v5920
    %7114 = vmatpush1.bf16.msra.mxu0 %v5919
    %7115 = vmatprep.subr.bf16.mxu0 %v5936
    %7116 = vmatpush1.bf16.msra.mxu0 %v5935
    %7117 = vmatprep.subr.bf16.mxu0 %v5952
    %7118 = vmatpush1.bf16.msra.mxu0 %v5951
    %7119 = vmatprep.subr.bf16.mxu0 %v5968
    %7120 = vmatpush1.bf16.msra.mxu0 %v5967
    %7121 = vmatprep.mubr.bf16.mxu0 %v5201
    %7122 = vmatmul.mubr.bf16.gmra.mrb[0].mxu0 %v5200
    %v7123 = vpop.f32.mrb[0].mxu0
    %v7124 = vadd.f32 %v7081, %v7123
    %v7125 = vpop.f32.mrb[0].mxu0
    %v7126 = vadd.f32 %v7083, %v7125
    %v7127 = vpop.f32.mrb[0].mxu0
    %v7128 = vadd.f32 %v7085, %v7127
    %v7129 = vpop.f32.mrb[0].mxu0
    %v7130 = vadd.f32 %v7087, %v7129
    %7131 = vdwg.mxu0
    %7132 = vmatprep.subr.bf16.mxu0 %v5984
    %7133 = vmatpush1.bf16.msra.mxu0 %v5983
    %7134 = vmatprep.subr.bf16.mxu0 %v6000
    %7135 = vmatpush1.bf16.msra.mxu0 %v5999
    %7136 = vmatprep.subr.bf16.mxu0 %v6016
    %7137 = vmatpush1.bf16.msra.mxu0 %v6015
    %7138 = vmatprep.subr.bf16.mxu0 %v6032
    %7139 = vmatpush1.bf16.msra.mxu0 %v6031
    %7140 = vmatprep.subr.bf16.mxu0 %v6048
    %7141 = vmatpush1.bf16.msra.mxu0 %v6047
    %7142 = vmatprep.subr.bf16.mxu0 %v6064
    %7143 = vmatpush1.bf16.msra.mxu0 %v6063
    %7144 = vmatprep.subr.bf16.mxu0 %v6080
    %7145 = vmatpush1.bf16.msra.mxu0 %v6079
    %7146 = vmatprep.subr.bf16.mxu0 %v6096
    %7147 = vmatpush1.bf16.msra.mxu0 %v6095
    %7148 = vmatprep.subr.bf16.mxu0 %v6112
    %7149 = vmatpush1.bf16.msra.mxu0 %v6111
    %7150 = vmatprep.subr.bf16.mxu0 %v6128
    %7151 = vmatpush1.bf16.msra.mxu0 %v6127
    %7152 = vmatprep.subr.bf16.mxu0 %v6144
    %7153 = vmatpush1.bf16.msra.mxu0 %v6143
    %7154 = vmatprep.subr.bf16.mxu0 %v6160
    %7155 = vmatpush1.bf16.msra.mxu0 %v6159
    %7156 = vmatprep.subr.bf16.mxu0 %v6176
    %7157 = vmatpush1.bf16.msra.mxu0 %v6175
    %7158 = vmatprep.subr.bf16.mxu0 %v6192
    %7159 = vmatpush1.bf16.msra.mxu0 %v6191
    %7160 = vmatprep.subr.bf16.mxu0 %v6208
    %7161 = vmatpush1.bf16.msra.mxu0 %v6207
    %7162 = vmatprep.subr.bf16.mxu0 %v6224
    %7163 = vmatpush1.bf16.msra.mxu0 %v6223
    %7164 = vmatprep.mubr.bf16.mxu0 %v5203
    %7165 = vmatmul.mubr.bf16.gmra.mrb[0].mxu0 %v5202
    %v7166 = vpop.f32.mrb[0].mxu0
    %v7167 = vadd.f32 %v7124, %v7166
    %v7168 = vpop.f32.mrb[0].mxu0
    %v7169 = vadd.f32 %v7126, %v7168
    %v7170 = vpop.f32.mrb[0].mxu0
    %v7171 = vadd.f32 %v7128, %v7170
    %v7172 = vpop.f32.mrb[0].mxu0
    %v7173 = vadd.f32 %v7130, %v7172
    %7174 = vdwg.mxu0
    %7175 = vmatprep.subr.bf16.mxu0 %v5218
    %7176 = vmatpush1.bf16.msra.mxu0 %v5217
    %7177 = vmatprep.subr.bf16.mxu0 %v5234
    %7178 = vmatpush1.bf16.msra.mxu0 %v5233
    %7179 = vmatprep.subr.bf16.mxu0 %v5250
    %7180 = vmatpush1.bf16.msra.mxu0 %v5249
    %7181 = vmatprep.subr.bf16.mxu0 %v5266
    %7182 = vmatpush1.bf16.msra.mxu0 %v5265
    %7183 = vmatprep.subr.bf16.mxu0 %v5282
    %7184 = vmatpush1.bf16.msra.mxu0 %v5281
    %7185 = vmatprep.subr.bf16.mxu0 %v5298
    %7186 = vmatpush1.bf16.msra.mxu0 %v5297
    %7187 = vmatprep.subr.bf16.mxu0 %v5314
    %7188 = vmatpush1.bf16.msra.mxu0 %v5313
    %7189 = vmatprep.subr.bf16.mxu0 %v5330
    %7190 = vmatpush1.bf16.msra.mxu0 %v5329
    %7191 = vmatprep.subr.bf16.mxu0 %v5346
    %7192 = vmatpush1.bf16.msra.mxu0 %v5345
    %7193 = vmatprep.subr.bf16.mxu0 %v5362
    %7194 = vmatpush1.bf16.msra.mxu0 %v5361
    %7195 = vmatprep.subr.bf16.mxu0 %v5378
    %7196 = vmatpush1.bf16.msra.mxu0 %v5377
    %7197 = vmatprep.subr.bf16.mxu0 %v5394
    %7198 = vmatpush1.bf16.msra.mxu0 %v5393
    %7199 = vmatprep.subr.bf16.mxu0 %v5410
    %7200 = vmatpush1.bf16.msra.mxu0 %v5409
    %7201 = vmatprep.subr.bf16.mxu0 %v5426
    %7202 = vmatpush1.bf16.msra.mxu0 %v5425
    %7203 = vmatprep.subr.bf16.mxu0 %v5442
    %7204 = vmatpush1.bf16.msra.mxu0 %v5441
    %7205 = vmatprep.subr.bf16.mxu0 %v5458
    %7206 = vmatpush1.bf16.msra.mxu0 %v5457
    %7207 = vmatprep.mubr.bf16.mxu0 %v5197
    %7208 = vmatmul.mubr.bf16.gmra.mrb[0].mxu0 %v5196
    %v7209 = vpop.f32.mrb[0].mxu0
    %v7210 = vadd.f32 %v6278, %v7209
    %v7211 = vpop.f32.mrb[0].mxu0
    %v7212 = vadd.f32 %v6282, %v7211
    %v7213 = vpop.f32.mrb[0].mxu0
    %v7214 = vadd.f32 %v6278, %v7213
    %v7215 = vpop.f32.mrb[0].mxu0
    %v7216 = vadd.f32 %v6282, %v7215
    %7217 = vdwg.mxu0
    %7218 = vmatprep.subr.bf16.mxu0 %v5474
    %7219 = vmatpush1.bf16.msra.mxu0 %v5473
    %7220 = vmatprep.subr.bf16.mxu0 %v5490
    %7221 = vmatpush1.bf16.msra.mxu0 %v5489
    %7222 = vmatprep.subr.bf16.mxu0 %v5506
    %7223 = vmatpush1.bf16.msra.mxu0 %v5505
    %7224 = vmatprep.subr.bf16.mxu0 %v5522
    %7225 = vmatpush1.bf16.msra.mxu0 %v5521
    %7226 = vmatprep.subr.bf16.mxu0 %v5538
    %7227 = vmatpush1.bf16.msra.mxu0 %v5537
    %7228 = vmatprep.subr.bf16.mxu0 %v5554
    %7229 = vmatpush1.bf16.msra.mxu0 %v5553
    %7230 = vmatprep.subr.bf16.mxu0 %v5570
    %7231 = vmatpush1.bf16.msra.mxu0 %v5569
    %7232 = vmatprep.subr.bf16.mxu0 %v5586
    %7233 = vmatpush1.bf16.msra.mxu0 %v5585
    %7234 = vmatprep.subr.bf16.mxu0 %v5602
    %7235 = vmatpush1.bf16.msra.mxu0 %v5601
    %7236 = vmatprep.subr.bf16.mxu0 %v5618
    %7237 = vmatpush1.bf16.msra.mxu0 %v5617
    %7238 = vmatprep.subr.bf16.mxu0 %v5634
    %7239 = vmatpush1.bf16.msra.mxu0 %v5633
    %7240 = vmatprep.subr.bf16.mxu0 %v5650
    %7241 = vmatpush1.bf16.msra.mxu0 %v5649
    %7242 = vmatprep.subr.bf16.mxu0 %v5666
    %7243 = vmatpush1.bf16.msra.mxu0 %v5665
    %7244 = vmatprep.subr.bf16.mxu0 %v5682
    %7245 = vmatpush1.bf16.msra.mxu0 %v5681
    %7246 = vmatprep.subr.bf16.mxu0 %v5698
    %7247 = vmatpush1.bf16.msra.mxu0 %v5697
    %7248 = vmatprep.subr.bf16.mxu0 %v5714
    %7249 = vmatpush1.bf16.msra.mxu0 %v5713
    %7250 = vmatprep.mubr.bf16.mxu0 %v5199
    %7251 = vmatmul.mubr.bf16.gmra.mrb[0].mxu0 %v5198
    %v7252 = vpop.f32.mrb[0].mxu0
    %v7253 = vadd.f32 %v7210, %v7252
    %v7254 = vpop.f32.mrb[0].mxu0
    %v7255 = vadd.f32 %v7212, %v7254
    %v7256 = vpop.f32.mrb[0].mxu0
    %v7257 = vadd.f32 %v7214, %v7256
    %v7258 = vpop.f32.mrb[0].mxu0
    %v7259 = vadd.f32 %v7216, %v7258
    %7260 = vdwg.mxu0
    %7261 = vmatprep.subr.bf16.mxu0 %v5730
    %7262 = vmatpush1.bf16.msra.mxu0 %v5729
    %7263 = vmatprep.subr.bf16.mxu0 %v5746
    %7264 = vmatpush1.bf16.msra.mxu0 %v5745
    %7265 = vmatprep.subr.bf16.mxu0 %v5762
    %7266 = vmatpush1.bf16.msra.mxu0 %v5761
    %7267 = vmatprep.subr.bf16.mxu0 %v5778
    %7268 = vmatpush1.bf16.msra.mxu0 %v5777
    %7269 = vmatprep.subr.bf16.mxu0 %v5794
    %7270 = vmatpush1.bf16.msra.mxu0 %v5793
    %7271 = vmatprep.subr.bf16.mxu0 %v5810
    %7272 = vmatpush1.bf16.msra.mxu0 %v5809
    %7273 = vmatprep.subr.bf16.mxu0 %v5826
    %7274 = vmatpush1.bf16.msra.mxu0 %v5825
    %7275 = vmatprep.subr.bf16.mxu0 %v5842
    %7276 = vmatpush1.bf16.msra.mxu0 %v5841
    %7277 = vmatprep.subr.bf16.mxu0 %v5858
    %7278 = vmatpush1.bf16.msra.mxu0 %v5857
    %7279 = vmatprep.subr.bf16.mxu0 %v5874
    %7280 = vmatpush1.bf16.msra.mxu0 %v5873
    %7281 = vmatprep.subr.bf16.mxu0 %v5890
    %7282 = vmatpush1.bf16.msra.mxu0 %v5889
    %7283 = vmatprep.subr.bf16.mxu0 %v5906
    %7284 = vmatpush1.bf16.msra.mxu0 %v5905
    %7285 = vmatprep.subr.bf16.mxu0 %v5922
    %7286 = vmatpush1.bf16.msra.mxu0 %v5921
    %7287 = vmatprep.subr.bf16.mxu0 %v5938
    %7288 = vmatpush1.bf16.msra.mxu0 %v5937
    %7289 = vmatprep.subr.bf16.mxu0 %v5954
    %7290 = vmatpush1.bf16.msra.mxu0 %v5953
    %7291 = vmatprep.subr.bf16.mxu0 %v5970
    %7292 = vmatpush1.bf16.msra.mxu0 %v5969
    %7293 = vmatprep.mubr.bf16.mxu0 %v5201
    %7294 = vmatmul.mubr.bf16.gmra.mrb[0].mxu0 %v5200
    %v7295 = vpop.f32.mrb[0].mxu0
    %v7296 = vadd.f32 %v7253, %v7295
    %v7297 = vpop.f32.mrb[0].mxu0
    %v7298 = vadd.f32 %v7255, %v7297
    %v7299 = vpop.f32.mrb[0].mxu0
    %v7300 = vadd.f32 %v7257, %v7299
    %v7301 = vpop.f32.mrb[0].mxu0
    %v7302 = vadd.f32 %v7259, %v7301
    %7303 = vdwg.mxu0
    %7304 = vmatprep.subr.bf16.mxu0 %v5986
    %7305 = vmatpush1.bf16.msra.mxu0 %v5985
    %7306 = vmatprep.subr.bf16.mxu0 %v6002
    %7307 = vmatpush1.bf16.msra.mxu0 %v6001
    %7308 = vmatprep.subr.bf16.mxu0 %v6018
    %7309 = vmatpush1.bf16.msra.mxu0 %v6017
    %7310 = vmatprep.subr.bf16.mxu0 %v6034
    %7311 = vmatpush1.bf16.msra.mxu0 %v6033
    %7312 = vmatprep.subr.bf16.mxu0 %v6050
    %7313 = vmatpush1.bf16.msra.mxu0 %v6049
    %7314 = vmatprep.subr.bf16.mxu0 %v6066
    %7315 = vmatpush1.bf16.msra.mxu0 %v6065
    %7316 = vmatprep.subr.bf16.mxu0 %v6082
    %7317 = vmatpush1.bf16.msra.mxu0 %v6081
    %7318 = vmatprep.subr.bf16.mxu0 %v6098
    %7319 = vmatpush1.bf16.msra.mxu0 %v6097
    %7320 = vmatprep.subr.bf16.mxu0 %v6114
    %7321 = vmatpush1.bf16.msra.mxu0 %v6113
    %7322 = vmatprep.subr.bf16.mxu0 %v6130
    %7323 = vmatpush1.bf16.msra.mxu0 %v6129
    %7324 = vmatprep.subr.bf16.mxu0 %v6146
    %7325 = vmatpush1.bf16.msra.mxu0 %v6145
    %7326 = vmatprep.subr.bf16.mxu0 %v6162
    %7327 = vmatpush1.bf16.msra.mxu0 %v6161
    %7328 = vmatprep.subr.bf16.mxu0 %v6178
    %7329 = vmatpush1.bf16.msra.mxu0 %v6177
    %7330 = vmatprep.subr.bf16.mxu0 %v6194
    %7331 = vmatpush1.bf16.msra.mxu0 %v6193
    %7332 = vmatprep.subr.bf16.mxu0 %v6210
    %7333 = vmatpush1.bf16.msra.mxu0 %v6209
    %7334 = vmatprep.subr.bf16.mxu0 %v6226
    %7335 = vmatpush1.bf16.msra.mxu0 %v6225
    %7336 = vmatprep.mubr.bf16.mxu0 %v5203
    %7337 = vmatmul.mubr.bf16.gmra.mrb[0].mxu0 %v5202
    %v7338 = vpop.f32.mrb[0].mxu0
    %v7339 = vadd.f32 %v7296, %v7338
    %v7340 = vpop.f32.mrb[0].mxu0
    %v7341 = vadd.f32 %v7298, %v7340
    %v7342 = vpop.f32.mrb[0].mxu0
    %v7343 = vadd.f32 %v7300, %v7342
    %v7344 = vpop.f32.mrb[0].mxu0
    %v7345 = vadd.f32 %v7302, %v7344
    %7346 = vdwg.mxu0
    %7347 = vmatprep.subr.bf16.mxu0 %v5220
    %7348 = vmatpush1.bf16.msra.mxu0 %v5219
    %7349 = vmatprep.subr.bf16.mxu0 %v5236
    %7350 = vmatpush1.bf16.msra.mxu0 %v5235
    %7351 = vmatprep.subr.bf16.mxu0 %v5252
    %7352 = vmatpush1.bf16.msra.mxu0 %v5251
    %7353 = vmatprep.subr.bf16.mxu0 %v5268
    %7354 = vmatpush1.bf16.msra.mxu0 %v5267
    %7355 = vmatprep.subr.bf16.mxu0 %v5284
    %7356 = vmatpush1.bf16.msra.mxu0 %v5283
    %7357 = vmatprep.subr.bf16.mxu0 %v5300
    %7358 = vmatpush1.bf16.msra.mxu0 %v5299
    %7359 = vmatprep.subr.bf16.mxu0 %v5316
    %7360 = vmatpush1.bf16.msra.mxu0 %v5315
    %7361 = vmatprep.subr.bf16.mxu0 %v5332
    %7362 = vmatpush1.bf16.msra.mxu0 %v5331
    %7363 = vmatprep.subr.bf16.mxu0 %v5348
    %7364 = vmatpush1.bf16.msra.mxu0 %v5347
    %7365 = vmatprep.subr.bf16.mxu0 %v5364
    %7366 = vmatpush1.bf16.msra.mxu0 %v5363
    %7367 = vmatprep.subr.bf16.mxu0 %v5380
    %7368 = vmatpush1.bf16.msra.mxu0 %v5379
    %7369 = vmatprep.subr.bf16.mxu0 %v5396
    %7370 = vmatpush1.bf16.msra.mxu0 %v5395
    %7371 = vmatprep.subr.bf16.mxu0 %v5412
    %7372 = vmatpush1.bf16.msra.mxu0 %v5411
    %7373 = vmatprep.subr.bf16.mxu0 %v5428
    %7374 = vmatpush1.bf16.msra.mxu0 %v5427
    %7375 = vmatprep.subr.bf16.mxu0 %v5444
    %7376 = vmatpush1.bf16.msra.mxu0 %v5443
    %7377 = vmatprep.subr.bf16.mxu0 %v5460
    %7378 = vmatpush1.bf16.msra.mxu0 %v5459
    %7379 = vmatprep.mubr.bf16.mxu0 %v5197
    %7380 = vmatmul.mubr.bf16.gmra.mrb[0].mxu0 %v5196
    %v7381 = vpop.f32.mrb[0].mxu0
    %v7382 = vadd.f32 %v6286, %v7381
    %v7383 = vpop.f32.mrb[0].mxu0
    %v7384 = vadd.f32 %v6290, %v7383
    %v7385 = vpop.f32.mrb[0].mxu0
    %v7386 = vadd.f32 %v6286, %v7385
    %v7387 = vpop.f32.mrb[0].mxu0
    %v7388 = vadd.f32 %v6290, %v7387
    %7389 = vdwg.mxu0
    %7390 = vmatprep.subr.bf16.mxu0 %v5476
    %7391 = vmatpush1.bf16.msra.mxu0 %v5475
    %7392 = vmatprep.subr.bf16.mxu0 %v5492
    %7393 = vmatpush1.bf16.msra.mxu0 %v5491
    %7394 = vmatprep.subr.bf16.mxu0 %v5508
    %7395 = vmatpush1.bf16.msra.mxu0 %v5507
    %7396 = vmatprep.subr.bf16.mxu0 %v5524
    %7397 = vmatpush1.bf16.msra.mxu0 %v5523
    %7398 = vmatprep.subr.bf16.mxu0 %v5540
    %7399 = vmatpush1.bf16.msra.mxu0 %v5539
    %7400 = vmatprep.subr.bf16.mxu0 %v5556
    %7401 = vmatpush1.bf16.msra.mxu0 %v5555
    %7402 = vmatprep.subr.bf16.mxu0 %v5572
    %7403 = vmatpush1.bf16.msra.mxu0 %v5571
    %7404 = vmatprep.subr.bf16.mxu0 %v5588
    %7405 = vmatpush1.bf16.msra.mxu0 %v5587
    %7406 = vmatprep.subr.bf16.mxu0 %v5604
    %7407 = vmatpush1.bf16.msra.mxu0 %v5603
    %7408 = vmatprep.subr.bf16.mxu0 %v5620
    %7409 = vmatpush1.bf16.msra.mxu0 %v5619
    %7410 = vmatprep.subr.bf16.mxu0 %v5636
    %7411 = vmatpush1.bf16.msra.mxu0 %v5635
    %7412 = vmatprep.subr.bf16.mxu0 %v5652
    %7413 = vmatpush1.bf16.msra.mxu0 %v5651
    %7414 = vmatprep.subr.bf16.mxu0 %v5668
    %7415 = vmatpush1.bf16.msra.mxu0 %v5667
    %7416 = vmatprep.subr.bf16.mxu0 %v5684
    %7417 = vmatpush1.bf16.msra.mxu0 %v5683
    %7418 = vmatprep.subr.bf16.mxu0 %v5700
    %7419 = vmatpush1.bf16.msra.mxu0 %v5699
    %7420 = vmatprep.subr.bf16.mxu0 %v5716
    %7421 = vmatpush1.bf16.msra.mxu0 %v5715
    %7422 = vmatprep.mubr.bf16.mxu0 %v5199
    %7423 = vmatmul.mubr.bf16.gmra.mrb[0].mxu0 %v5198
    %v7424 = vpop.f32.mrb[0].mxu0
    %v7425 = vadd.f32 %v7382, %v7424
    %v7426 = vpop.f32.mrb[0].mxu0
    %v7427 = vadd.f32 %v7384, %v7426
    %v7428 = vpop.f32.mrb[0].mxu0
    %v7429 = vadd.f32 %v7386, %v7428
    %v7430 = vpop.f32.mrb[0].mxu0
    %v7431 = vadd.f32 %v7388, %v7430
    %7432 = vdwg.mxu0
    %7433 = vmatprep.subr.bf16.mxu0 %v5732
    %7434 = vmatpush1.bf16.msra.mxu0 %v5731
    %7435 = vmatprep.subr.bf16.mxu0 %v5748
    %7436 = vmatpush1.bf16.msra.mxu0 %v5747
    %7437 = vmatprep.subr.bf16.mxu0 %v5764
    %7438 = vmatpush1.bf16.msra.mxu0 %v5763
    %7439 = vmatprep.subr.bf16.mxu0 %v5780
    %7440 = vmatpush1.bf16.msra.mxu0 %v5779
    %7441 = vmatprep.subr.bf16.mxu0 %v5796
    %7442 = vmatpush1.bf16.msra.mxu0 %v5795
    %7443 = vmatprep.subr.bf16.mxu0 %v5812
    %7444 = vmatpush1.bf16.msra.mxu0 %v5811
    %7445 = vmatprep.subr.bf16.mxu0 %v5828
    %7446 = vmatpush1.bf16.msra.mxu0 %v5827
    %7447 = vmatprep.subr.bf16.mxu0 %v5844
    %7448 = vmatpush1.bf16.msra.mxu0 %v5843
    %7449 = vmatprep.subr.bf16.mxu0 %v5860
    %7450 = vmatpush1.bf16.msra.mxu0 %v5859
    %7451 = vmatprep.subr.bf16.mxu0 %v5876
    %7452 = vmatpush1.bf16.msra.mxu0 %v5875
    %7453 = vmatprep.subr.bf16.mxu0 %v5892
    %7454 = vmatpush1.bf16.msra.mxu0 %v5891
    %7455 = vmatprep.subr.bf16.mxu0 %v5908
    %7456 = vmatpush1.bf16.msra.mxu0 %v5907
    %7457 = vmatprep.subr.bf16.mxu0 %v5924
    %7458 = vmatpush1.bf16.msra.mxu0 %v5923
    %7459 = vmatprep.subr.bf16.mxu0 %v5940
    %7460 = vmatpush1.bf16.msra.mxu0 %v5939
    %7461 = vmatprep.subr.bf16.mxu0 %v5956
    %7462 = vmatpush1.bf16.msra.mxu0 %v5955
    %7463 = vmatprep.subr.bf16.mxu0 %v5972
    %7464 = vmatpush1.bf16.msra.mxu0 %v5971
    %7465 = vmatprep.mubr.bf16.mxu0 %v5201
    %7466 = vmatmul.mubr.bf16.gmra.mrb[0].mxu0 %v5200
    %v7467 = vpop.f32.mrb[0].mxu0
    %v7468 = vadd.f32 %v7425, %v7467
    %v7469 = vpop.f32.mrb[0].mxu0
    %v7470 = vadd.f32 %v7427, %v7469
    %v7471 = vpop.f32.mrb[0].mxu0
    %v7472 = vadd.f32 %v7429, %v7471
    %v7473 = vpop.f32.mrb[0].mxu0
    %v7474 = vadd.f32 %v7431, %v7473
    %7475 = vdwg.mxu0
    %7476 = vmatprep.subr.bf16.mxu0 %v5988
    %7477 = vmatpush1.bf16.msra.mxu0 %v5987
    %7478 = vmatprep.subr.bf16.mxu0 %v6004
    %7479 = vmatpush1.bf16.msra.mxu0 %v6003
    %7480 = vmatprep.subr.bf16.mxu0 %v6020
    %7481 = vmatpush1.bf16.msra.mxu0 %v6019
    %7482 = vmatprep.subr.bf16.mxu0 %v6036
    %7483 = vmatpush1.bf16.msra.mxu0 %v6035
    %7484 = vmatprep.subr.bf16.mxu0 %v6052
    %7485 = vmatpush1.bf16.msra.mxu0 %v6051
    %7486 = vmatprep.subr.bf16.mxu0 %v6068
    %7487 = vmatpush1.bf16.msra.mxu0 %v6067
    %7488 = vmatprep.subr.bf16.mxu0 %v6084
    %7489 = vmatpush1.bf16.msra.mxu0 %v6083
    %7490 = vmatprep.subr.bf16.mxu0 %v6100
    %7491 = vmatpush1.bf16.msra.mxu0 %v6099
    %7492 = vmatprep.subr.bf16.mxu0 %v6116
    %7493 = vmatpush1.bf16.msra.mxu0 %v6115
    %7494 = vmatprep.subr.bf16.mxu0 %v6132
    %7495 = vmatpush1.bf16.msra.mxu0 %v6131
    %7496 = vmatprep.subr.bf16.mxu0 %v6148
    %7497 = vmatpush1.bf16.msra.mxu0 %v6147
    %7498 = vmatprep.subr.bf16.mxu0 %v6164
    %7499 = vmatpush1.bf16.msra.mxu0 %v6163
    %7500 = vmatprep.subr.bf16.mxu0 %v6180
    %7501 = vmatpush1.bf16.msra.mxu0 %v6179
    %7502 = vmatprep.subr.bf16.mxu0 %v6196
    %7503 = vmatpush1.bf16.msra.mxu0 %v6195
    %7504 = vmatprep.subr.bf16.mxu0 %v6212
    %7505 = vmatpush1.bf16.msra.mxu0 %v6211
    %7506 = vmatprep.subr.bf16.mxu0 %v6228
    %7507 = vmatpush1.bf16.msra.mxu0 %v6227
    %7508 = vmatprep.mubr.bf16.mxu0 %v5203
    %7509 = vmatmul.mubr.bf16.gmra.mrb[0].mxu0 %v5202
    %v7510 = vpop.f32.mrb[0].mxu0
    %v7511 = vadd.f32 %v7468, %v7510
    %v7512 = vpop.f32.mrb[0].mxu0
    %v7513 = vadd.f32 %v7470, %v7512
    %v7514 = vpop.f32.mrb[0].mxu0
    %v7515 = vadd.f32 %v7472, %v7514
    %v7516 = vpop.f32.mrb[0].mxu0
    %v7517 = vadd.f32 %v7474, %v7516
    %7518 = vdwg.mxu0
    %7519 = vmatprep.subr.bf16.mxu0 %v5222
    %7520 = vmatpush1.bf16.msra.mxu0 %v5221
    %7521 = vmatprep.subr.bf16.mxu0 %v5238
    %7522 = vmatpush1.bf16.msra.mxu0 %v5237
    %7523 = vmatprep.subr.bf16.mxu0 %v5254
    %7524 = vmatpush1.bf16.msra.mxu0 %v5253
    %7525 = vmatprep.subr.bf16.mxu0 %v5270
    %7526 = vmatpush1.bf16.msra.mxu0 %v5269
    %7527 = vmatprep.subr.bf16.mxu0 %v5286
    %7528 = vmatpush1.bf16.msra.mxu0 %v5285
    %7529 = vmatprep.subr.bf16.mxu0 %v5302
    %7530 = vmatpush1.bf16.msra.mxu0 %v5301
    %7531 = vmatprep.subr.bf16.mxu0 %v5318
    %7532 = vmatpush1.bf16.msra.mxu0 %v5317
    %7533 = vmatprep.subr.bf16.mxu0 %v5334
    %7534 = vmatpush1.bf16.msra.mxu0 %v5333
    %7535 = vmatprep.subr.bf16.mxu0 %v5350
    %7536 = vmatpush1.bf16.msra.mxu0 %v5349
    %7537 = vmatprep.subr.bf16.mxu0 %v5366
    %7538 = vmatpush1.bf16.msra.mxu0 %v5365
    %7539 = vmatprep.subr.bf16.mxu0 %v5382
    %7540 = vmatpush1.bf16.msra.mxu0 %v5381
    %7541 = vmatprep.subr.bf16.mxu0 %v5398
    %7542 = vmatpush1.bf16.msra.mxu0 %v5397
    %7543 = vmatprep.subr.bf16.mxu0 %v5414
    %7544 = vmatpush1.bf16.msra.mxu0 %v5413
    %7545 = vmatprep.subr.bf16.mxu0 %v5430
    %7546 = vmatpush1.bf16.msra.mxu0 %v5429
    %7547 = vmatprep.subr.bf16.mxu0 %v5446
    %7548 = vmatpush1.bf16.msra.mxu0 %v5445
    %7549 = vmatprep.subr.bf16.mxu0 %v5462
    %7550 = vmatpush1.bf16.msra.mxu0 %v5461
    %7551 = vmatprep.mubr.bf16.mxu0 %v5197
    %7552 = vmatmul.mubr.bf16.gmra.mrb[0].mxu0 %v5196
    %v7553 = vpop.f32.mrb[0].mxu0
    %v7554 = vadd.f32 %v6294, %v7553
    %v7555 = vpop.f32.mrb[0].mxu0
    %v7556 = vadd.f32 %v6298, %v7555
    %v7557 = vpop.f32.mrb[0].mxu0
    %v7558 = vadd.f32 %v6294, %v7557
    %v7559 = vpop.f32.mrb[0].mxu0
    %v7560 = vadd.f32 %v6298, %v7559
    %7561 = vdwg.mxu0
    %7562 = vmatprep.subr.bf16.mxu0 %v5478
    %7563 = vmatpush1.bf16.msra.mxu0 %v5477
    %7564 = vmatprep.subr.bf16.mxu0 %v5494
    %7565 = vmatpush1.bf16.msra.mxu0 %v5493
    %7566 = vmatprep.subr.bf16.mxu0 %v5510
    %7567 = vmatpush1.bf16.msra.mxu0 %v5509
    %7568 = vmatprep.subr.bf16.mxu0 %v5526
    %7569 = vmatpush1.bf16.msra.mxu0 %v5525
    %7570 = vmatprep.subr.bf16.mxu0 %v5542
    %7571 = vmatpush1.bf16.msra.mxu0 %v5541
    %7572 = vmatprep.subr.bf16.mxu0 %v5558
    %7573 = vmatpush1.bf16.msra.mxu0 %v5557
    %7574 = vmatprep.subr.bf16.mxu0 %v5574
    %7575 = vmatpush1.bf16.msra.mxu0 %v5573
    %7576 = vmatprep.subr.bf16.mxu0 %v5590
    %7577 = vmatpush1.bf16.msra.mxu0 %v5589
    %7578 = vmatprep.subr.bf16.mxu0 %v5606
    %7579 = vmatpush1.bf16.msra.mxu0 %v5605
    %7580 = vmatprep.subr.bf16.mxu0 %v5622
    %7581 = vmatpush1.bf16.msra.mxu0 %v5621
    %7582 = vmatprep.subr.bf16.mxu0 %v5638
    %7583 = vmatpush1.bf16.msra.mxu0 %v5637
    %7584 = vmatprep.subr.bf16.mxu0 %v5654
    %7585 = vmatpush1.bf16.msra.mxu0 %v5653
    %7586 = vmatprep.subr.bf16.mxu0 %v5670
    %7587 = vmatpush1.bf16.msra.mxu0 %v5669
    %7588 = vmatprep.subr.bf16.mxu0 %v5686
    %7589 = vmatpush1.bf16.msra.mxu0 %v5685
    %7590 = vmatprep.subr.bf16.mxu0 %v5702
    %7591 = vmatpush1.bf16.msra.mxu0 %v5701
    %7592 = vmatprep.subr.bf16.mxu0 %v5718
    %7593 = vmatpush1.bf16.msra.mxu0 %v5717
    %7594 = vmatprep.mubr.bf16.mxu0 %v5199
    %7595 = vmatmul.mubr.bf16.gmra.mrb[0].mxu0 %v5198
    %v7596 = vpop.f32.mrb[0].mxu0
    %v7597 = vadd.f32 %v7554, %v7596
    %v7598 = vpop.f32.mrb[0].mxu0
    %v7599 = vadd.f32 %v7556, %v7598
    %v7600 = vpop.f32.mrb[0].mxu0
    %v7601 = vadd.f32 %v7558, %v7600
    %v7602 = vpop.f32.mrb[0].mxu0
    %v7603 = vadd.f32 %v7560, %v7602
    %7604 = vdwg.mxu0
    %7605 = vmatprep.subr.bf16.mxu0 %v5734
    %7606 = vmatpush1.bf16.msra.mxu0 %v5733
    %7607 = vmatprep.subr.bf16.mxu0 %v5750
    %7608 = vmatpush1.bf16.msra.mxu0 %v5749
    %7609 = vmatprep.subr.bf16.mxu0 %v5766
    %7610 = vmatpush1.bf16.msra.mxu0 %v5765
    %7611 = vmatprep.subr.bf16.mxu0 %v5782
    %7612 = vmatpush1.bf16.msra.mxu0 %v5781
    %7613 = vmatprep.subr.bf16.mxu0 %v5798
    %7614 = vmatpush1.bf16.msra.mxu0 %v5797
    %7615 = vmatprep.subr.bf16.mxu0 %v5814
    %7616 = vmatpush1.bf16.msra.mxu0 %v5813
    %7617 = vmatprep.subr.bf16.mxu0 %v5830
    %7618 = vmatpush1.bf16.msra.mxu0 %v5829
    %7619 = vmatprep.subr.bf16.mxu0 %v5846
    %7620 = vmatpush1.bf16.msra.mxu0 %v5845
    %7621 = vmatprep.subr.bf16.mxu0 %v5862
    %7622 = vmatpush1.bf16.msra.mxu0 %v5861
    %7623 = vmatprep.subr.bf16.mxu0 %v5878
    %7624 = vmatpush1.bf16.msra.mxu0 %v5877
    %7625 = vmatprep.subr.bf16.mxu0 %v5894
    %7626 = vmatpush1.bf16.msra.mxu0 %v5893
    %7627 = vmatprep.subr.bf16.mxu0 %v5910
    %7628 = vmatpush1.bf16.msra.mxu0 %v5909
    %7629 = vmatprep.subr.bf16.mxu0 %v5926
    %7630 = vmatpush1.bf16.msra.mxu0 %v5925
    %7631 = vmatprep.subr.bf16.mxu0 %v5942
    %7632 = vmatpush1.bf16.msra.mxu0 %v5941
    %7633 = vmatprep.subr.bf16.mxu0 %v5958
    %7634 = vmatpush1.bf16.msra.mxu0 %v5957
    %7635 = vmatprep.subr.bf16.mxu0 %v5974
    %7636 = vmatpush1.bf16.msra.mxu0 %v5973
    %7637 = vmatprep.mubr.bf16.mxu0 %v5201
    %7638 = vmatmul.mubr.bf16.gmra.mrb[0].mxu0 %v5200
    %v7639 = vpop.f32.mrb[0].mxu0
    %v7640 = vadd.f32 %v7597, %v7639
    %v7641 = vpop.f32.mrb[0].mxu0
    %v7642 = vadd.f32 %v7599, %v7641
    %v7643 = vpop.f32.mrb[0].mxu0
    %v7644 = vadd.f32 %v7601, %v7643
    %v7645 = vpop.f32.mrb[0].mxu0
    %v7646 = vadd.f32 %v7603, %v7645
    %7647 = vdwg.mxu0
    %7648 = vmatprep.subr.bf16.mxu0 %v5990
    %7649 = vmatpush1.bf16.msra.mxu0 %v5989
    %7650 = vmatprep.subr.bf16.mxu0 %v6006
    %7651 = vmatpush1.bf16.msra.mxu0 %v6005
    %7652 = vmatprep.subr.bf16.mxu0 %v6022
    %7653 = vmatpush1.bf16.msra.mxu0 %v6021
    %7654 = vmatprep.subr.bf16.mxu0 %v6038
    %7655 = vmatpush1.bf16.msra.mxu0 %v6037
    %7656 = vmatprep.subr.bf16.mxu0 %v6054
    %7657 = vmatpush1.bf16.msra.mxu0 %v6053
    %7658 = vmatprep.subr.bf16.mxu0 %v6070
    %7659 = vmatpush1.bf16.msra.mxu0 %v6069
    %7660 = vmatprep.subr.bf16.mxu0 %v6086
    %7661 = vmatpush1.bf16.msra.mxu0 %v6085
    %7662 = vmatprep.subr.bf16.mxu0 %v6102
    %7663 = vmatpush1.bf16.msra.mxu0 %v6101
    %7664 = vmatprep.subr.bf16.mxu0 %v6118
    %7665 = vmatpush1.bf16.msra.mxu0 %v6117
    %7666 = vmatprep.subr.bf16.mxu0 %v6134
    %7667 = vmatpush1.bf16.msra.mxu0 %v6133
    %7668 = vmatprep.subr.bf16.mxu0 %v6150
    %7669 = vmatpush1.bf16.msra.mxu0 %v6149
    %7670 = vmatprep.subr.bf16.mxu0 %v6166
    %7671 = vmatpush1.bf16.msra.mxu0 %v6165
    %7672 = vmatprep.subr.bf16.mxu0 %v6182
    %7673 = vmatpush1.bf16.msra.mxu0 %v6181
    %7674 = vmatprep.subr.bf16.mxu0 %v6198
    %7675 = vmatpush1.bf16.msra.mxu0 %v6197
    %7676 = vmatprep.subr.bf16.mxu0 %v6214
    %7677 = vmatpush1.bf16.msra.mxu0 %v6213
    %7678 = vmatprep.subr.bf16.mxu0 %v6230
    %7679 = vmatpush1.bf16.msra.mxu0 %v6229
    %7680 = vmatprep.mubr.bf16.mxu0 %v5203
    %7681 = vmatmul.mubr.bf16.gmra.mrb[0].mxu0 %v5202
    %v7682 = vpop.f32.mrb[0].mxu0
    %v7683 = vadd.f32 %v7640, %v7682
    %v7684 = vpop.f32.mrb[0].mxu0
    %v7685 = vadd.f32 %v7642, %v7684
    %v7686 = vpop.f32.mrb[0].mxu0
    %v7687 = vadd.f32 %v7644, %v7686
    %v7688 = vpop.f32.mrb[0].mxu0
    %v7689 = vadd.f32 %v7646, %v7688
    %7690 = vdwg.mxu0
    %v7691 = vmax.f32 %v6479, 0.0
    %v7692 = vmax.f32 %v6481, 0.0
    %v7693 = vmax.f32 %v6651, 0.0
    %v7694 = vmax.f32 %v6653, 0.0
    %v7695 = vmax.f32 %v6823, 0.0
    %v7696 = vmax.f32 %v6825, 0.0
    %v7697 = vmax.f32 %v6995, 0.0
    %v7698 = vmax.f32 %v6997, 0.0
    %v7699 = vmax.f32 %v7167, 0.0
    %v7700 = vmax.f32 %v7169, 0.0
    %v7701 = vmax.f32 %v7339, 0.0
    %v7702 = vmax.f32 %v7341, 0.0
    %v7703 = vmax.f32 %v7511, 0.0
    %v7704 = vmax.f32 %v7513, 0.0
    %v7705 = vmax.f32 %v7683, 0.0
    %v7706 = vmax.f32 %v7685, 0.0
    %v7707 = vmax.f32 %v6483, 0.0
    %v7708 = vmax.f32 %v6485, 0.0
    %v7709 = vmax.f32 %v6655, 0.0
    %v7710 = vmax.f32 %v6657, 0.0
    %v7711 = vmax.f32 %v6827, 0.0
    %v7712 = vmax.f32 %v6829, 0.0
    %v7713 = vmax.f32 %v6999, 0.0
    %v7714 = vmax.f32 %v7001, 0.0
    %v7715 = vmax.f32 %v7171, 0.0
    %v7716 = vmax.f32 %v7173, 0.0
    %v7717 = vmax.f32 %v7343, 0.0
    %v7718 = vmax.f32 %v7345, 0.0
    %v7719 = vmax.f32 %v7515, 0.0
    %v7720 = vmax.f32 %v7517, 0.0
    %v7721 = vmax.f32 %v7687, 0.0
    %v7722 = vmax.f32 %v7689, 0.0
    %v7723 = vpack.c.bf16 %v7707, %v7691
    %v7724 = vpack.c.bf16 %v7708, %v7692
    %v7725 = vpack.c.bf16 %v7709, %v7693
    %v7726 = vpack.c.bf16 %v7710, %v7694
    %v7727 = vpack.c.bf16 %v7711, %v7695
    %v7728 = vpack.c.bf16 %v7712, %v7696
    %v7729 = vpack.c.bf16 %v7713, %v7697
    %v7730 = vpack.c.bf16 %v7714, %v7698
    %v7731 = vpack.c.bf16 %v7715, %v7699
    %v7732 = vpack.c.bf16 %v7716, %v7700
    %v7733 = vpack.c.bf16 %v7717, %v7701
    %v7734 = vpack.c.bf16 %v7718, %v7702
    %v7735 = vpack.c.bf16 %v7719, %v7703
    %v7736 = vpack.c.bf16 %v7720, %v7704
    %v7737 = vpack.c.bf16 %v7721, %v7705
    %v7738 = vpack.c.bf16 %v7722, %v7706
    %s7739 = smul.u32 %s1141, 2
    %s7740 = sshll.u32 %s7739, 4
    %7741 = dma.done %s358, %s7740
    %v7742 = vld [vmem:[#allocation9] sm:$0xff]
    %v7743 = vld [vmem:[#allocation9 + $0x8] sm:$0xff]
    %v7744 = vld [vmem:[#allocation9 + $0x10] sm:$0xff]
    %v7745 = vld [vmem:[#allocation9 + $0x18] sm:$0xff]
    %v7746 = vld [vmem:[#allocation9 + $0x20] sm:$0xff]
    %v7747 = vld [vmem:[#allocation9 + $0x28] sm:$0xff]
    %v7748 = vld [vmem:[#allocation9 + $0x30] sm:$0xff]
    %v7749 = vld [vmem:[#allocation9 + $0x38] sm:$0xff]
    %v7750 = vld [vmem:[#allocation9 + $0x40] sm:$0xff]
    %v7751 = vld [vmem:[#allocation9 + $0x48] sm:$0xff]
    %v7752 = vld [vmem:[#allocation9 + $0x50] sm:$0xff]
    %v7753 = vld [vmem:[#allocation9 + $0x58] sm:$0xff]
    %v7754 = vld [vmem:[#allocation9 + $0x60] sm:$0xff]
    %v7755 = vld [vmem:[#allocation9 + $0x68] sm:$0xff]
    %v7756 = vld [vmem:[#allocation9 + $0x70] sm:$0xff]
    %v7757 = vld [vmem:[#allocation9 + $0x78] sm:$0xff]
    %v7758 = vld [vmem:[#allocation9 + $0x80] sm:$0xff]
    %v7759 = vld [vmem:[#allocation9 + $0x88] sm:$0xff]
    %v7760 = vld [vmem:[#allocation9 + $0x90] sm:$0xff]
    %v7761 = vld [vmem:[#allocation9 + $0x98] sm:$0xff]
    %v7762 = vld [vmem:[#allocation9 + $0xa0] sm:$0xff]
    %v7763 = vld [vmem:[#allocation9 + $0xa8] sm:$0xff]
    %v7764 = vld [vmem:[#allocation9 + $0xb0] sm:$0xff]
    %v7765 = vld [vmem:[#allocation9 + $0xb8] sm:$0xff]
    %v7766 = vld [vmem:[#allocation9 + $0xc0] sm:$0xff]
    %v7767 = vld [vmem:[#allocation9 + $0xc8] sm:$0xff]
    %v7768 = vld [vmem:[#allocation9 + $0xd0] sm:$0xff]
    %v7769 = vld [vmem:[#allocation9 + $0xd8] sm:$0xff]
    %v7770 = vld [vmem:[#allocation9 + $0xe0] sm:$0xff]
    %v7771 = vld [vmem:[#allocation9 + $0xe8] sm:$0xff]
    %v7772 = vld [vmem:[#allocation9 + $0xf0] sm:$0xff]
    %v7773 = vld [vmem:[#allocation9 + $0xf8] sm:$0xff]
    %v7774 = vld [vmem:[#allocation9 + $0x100] sm:$0xff]
    %v7775 = vld [vmem:[#allocation9 + $0x108] sm:$0xff]
    %v7776 = vld [vmem:[#allocation9 + $0x110] sm:$0xff]
    %v7777 = vld [vmem:[#allocation9 + $0x118] sm:$0xff]
    %v7778 = vld [vmem:[#allocation9 + $0x120] sm:$0xff]
    %v7779 = vld [vmem:[#allocation9 + $0x128] sm:$0xff]
    %v7780 = vld [vmem:[#allocation9 + $0x130] sm:$0xff]
    %v7781 = vld [vmem:[#allocation9 + $0x138] sm:$0xff]
    %v7782 = vld [vmem:[#allocation9 + $0x140] sm:$0xff]
    %v7783 = vld [vmem:[#allocation9 + $0x148] sm:$0xff]
    %v7784 = vld [vmem:[#allocation9 + $0x150] sm:$0xff]
    %v7785 = vld [vmem:[#allocation9 + $0x158] sm:$0xff]
    %v7786 = vld [vmem:[#allocation9 + $0x160] sm:$0xff]
    %v7787 = vld [vmem:[#allocation9 + $0x168] sm:$0xff]
    %v7788 = vld [vmem:[#allocation9 + $0x170] sm:$0xff]
    %v7789 = vld [vmem:[#allocation9 + $0x178] sm:$0xff]
    %v7790 = vld [vmem:[#allocation9 + $0x180] sm:$0xff]
    %v7791 = vld [vmem:[#allocation9 + $0x188] sm:$0xff]
    %v7792 = vld [vmem:[#allocation9 + $0x190] sm:$0xff]
    %v7793 = vld [vmem:[#allocation9 + $0x198] sm:$0xff]
    %v7794 = vld [vmem:[#allocation9 + $0x1a0] sm:$0xff]
    %v7795 = vld [vmem:[#allocation9 + $0x1a8] sm:$0xff]
    %v7796 = vld [vmem:[#allocation9 + $0x1b0] sm:$0xff]
    %v7797 = vld [vmem:[#allocation9 + $0x1b8] sm:$0xff]
    %v7798 = vld [vmem:[#allocation9 + $0x1c0] sm:$0xff]
    %v7799 = vld [vmem:[#allocation9 + $0x1c8] sm:$0xff]
    %v7800 = vld [vmem:[#allocation9 + $0x1d0] sm:$0xff]
    %v7801 = vld [vmem:[#allocation9 + $0x1d8] sm:$0xff]
    %v7802 = vld [vmem:[#allocation9 + $0x1e0] sm:$0xff]
    %v7803 = vld [vmem:[#allocation9 + $0x1e8] sm:$0xff]
    %v7804 = vld [vmem:[#allocation9 + $0x1f0] sm:$0xff]
    %v7805 = vld [vmem:[#allocation9 + $0x1f8] sm:$0xff]
    %v7806 = vld [vmem:[#allocation9 + $0x200] sm:$0xff]
    %v7807 = vld [vmem:[#allocation9 + $0x208] sm:$0xff]
    %v7808 = vld [vmem:[#allocation9 + $0x210] sm:$0xff]
    %v7809 = vld [vmem:[#allocation9 + $0x218] sm:$0xff]
    %v7810 = vld [vmem:[#allocation9 + $0x220] sm:$0xff]
    %v7811 = vld [vmem:[#allocation9 + $0x228] sm:$0xff]
    %v7812 = vld [vmem:[#allocation9 + $0x230] sm:$0xff]
    %v7813 = vld [vmem:[#allocation9 + $0x238] sm:$0xff]
    %v7814 = vld [vmem:[#allocation9 + $0x240] sm:$0xff]
    %v7815 = vld [vmem:[#allocation9 + $0x248] sm:$0xff]
    %v7816 = vld [vmem:[#allocation9 + $0x250] sm:$0xff]
    %v7817 = vld [vmem:[#allocation9 + $0x258] sm:$0xff]
    %v7818 = vld [vmem:[#allocation9 + $0x260] sm:$0xff]
    %v7819 = vld [vmem:[#allocation9 + $0x268] sm:$0xff]
    %v7820 = vld [vmem:[#allocation9 + $0x270] sm:$0xff]
    %v7821 = vld [vmem:[#allocation9 + $0x278] sm:$0xff]
    %v7822 = vld [vmem:[#allocation9 + $0x280] sm:$0xff]
    %v7823 = vld [vmem:[#allocation9 + $0x288] sm:$0xff]
    %v7824 = vld [vmem:[#allocation9 + $0x290] sm:$0xff]
    %v7825 = vld [vmem:[#allocation9 + $0x298] sm:$0xff]
    %v7826 = vld [vmem:[#allocation9 + $0x2a0] sm:$0xff]
    %v7827 = vld [vmem:[#allocation9 + $0x2a8] sm:$0xff]
    %v7828 = vld [vmem:[#allocation9 + $0x2b0] sm:$0xff]
    %v7829 = vld [vmem:[#allocation9 + $0x2b8] sm:$0xff]
    %v7830 = vld [vmem:[#allocation9 + $0x2c0] sm:$0xff]
    %v7831 = vld [vmem:[#allocation9 + $0x2c8] sm:$0xff]
    %v7832 = vld [vmem:[#allocation9 + $0x2d0] sm:$0xff]
    %v7833 = vld [vmem:[#allocation9 + $0x2d8] sm:$0xff]
    %v7834 = vld [vmem:[#allocation9 + $0x2e0] sm:$0xff]
    %v7835 = vld [vmem:[#allocation9 + $0x2e8] sm:$0xff]
    %v7836 = vld [vmem:[#allocation9 + $0x2f0] sm:$0xff]
    %v7837 = vld [vmem:[#allocation9 + $0x2f8] sm:$0xff]
    %v7838 = vld [vmem:[#allocation9 + $0x300] sm:$0xff]
    %v7839 = vld [vmem:[#allocation9 + $0x308] sm:$0xff]
    %v7840 = vld [vmem:[#allocation9 + $0x310] sm:$0xff]
    %v7841 = vld [vmem:[#allocation9 + $0x318] sm:$0xff]
    %v7842 = vld [vmem:[#allocation9 + $0x320] sm:$0xff]
    %v7843 = vld [vmem:[#allocation9 + $0x328] sm:$0xff]
    %v7844 = vld [vmem:[#allocation9 + $0x330] sm:$0xff]
    %v7845 = vld [vmem:[#allocation9 + $0x338] sm:$0xff]
    %v7846 = vld [vmem:[#allocation9 + $0x340] sm:$0xff]
    %v7847 = vld [vmem:[#allocation9 + $0x348] sm:$0xff]
    %v7848 = vld [vmem:[#allocation9 + $0x350] sm:$0xff]
    %v7849 = vld [vmem:[#allocation9 + $0x358] sm:$0xff]
    %v7850 = vld [vmem:[#allocation9 + $0x360] sm:$0xff]
    %v7851 = vld [vmem:[#allocation9 + $0x368] sm:$0xff]
    %v7852 = vld [vmem:[#allocation9 + $0x370] sm:$0xff]
    %v7853 = vld [vmem:[#allocation9 + $0x378] sm:$0xff]
    %v7854 = vld [vmem:[#allocation9 + $0x380] sm:$0xff]
    %v7855 = vld [vmem:[#allocation9 + $0x388] sm:$0xff]
    %v7856 = vld [vmem:[#allocation9 + $0x390] sm:$0xff]
    %v7857 = vld [vmem:[#allocation9 + $0x398] sm:$0xff]
    %v7858 = vld [vmem:[#allocation9 + $0x3a0] sm:$0xff]
    %v7859 = vld [vmem:[#allocation9 + $0x3a8] sm:$0xff]
    %v7860 = vld [vmem:[#allocation9 + $0x3b0] sm:$0xff]
    %v7861 = vld [vmem:[#allocation9 + $0x3b8] sm:$0xff]
    %v7862 = vld [vmem:[#allocation9 + $0x3c0] sm:$0xff]
    %v7863 = vld [vmem:[#allocation9 + $0x3c8] sm:$0xff]
    %v7864 = vld [vmem:[#allocation9 + $0x3d0] sm:$0xff]
    %v7865 = vld [vmem:[#allocation9 + $0x3d8] sm:$0xff]
    %v7866 = vld [vmem:[#allocation9 + $0x3e0] sm:$0xff]
    %v7867 = vld [vmem:[#allocation9 + $0x3e8] sm:$0xff]
    %v7868 = vld [vmem:[#allocation9 + $0x3f0] sm:$0xff]
    %v7869 = vld [vmem:[#allocation9 + $0x3f8] sm:$0xff]
    %v7870 = vld [vmem:[#allocation9 + $0x400] sm:$0xff]
    %v7871 = vld [vmem:[#allocation9 + $0x408] sm:$0xff]
    %v7872 = vld [vmem:[#allocation9 + $0x410] sm:$0xff]
    %v7873 = vld [vmem:[#allocation9 + $0x418] sm:$0xff]
    %v7874 = vld [vmem:[#allocation9 + $0x420] sm:$0xff]
    %v7875 = vld [vmem:[#allocation9 + $0x428] sm:$0xff]
    %v7876 = vld [vmem:[#allocation9 + $0x430] sm:$0xff]
    %v7877 = vld [vmem:[#allocation9 + $0x438] sm:$0xff]
    %v7878 = vld [vmem:[#allocation9 + $0x440] sm:$0xff]
    %v7879 = vld [vmem:[#allocation9 + $0x448] sm:$0xff]
    %v7880 = vld [vmem:[#allocation9 + $0x450] sm:$0xff]
    %v7881 = vld [vmem:[#allocation9 + $0x458] sm:$0xff]
    %v7882 = vld [vmem:[#allocation9 + $0x460] sm:$0xff]
    %v7883 = vld [vmem:[#allocation9 + $0x468] sm:$0xff]
    %v7884 = vld [vmem:[#allocation9 + $0x470] sm:$0xff]
    %v7885 = vld [vmem:[#allocation9 + $0x478] sm:$0xff]
    %v7886 = vld [vmem:[#allocation9 + $0x480] sm:$0xff]
    %v7887 = vld [vmem:[#allocation9 + $0x488] sm:$0xff]
    %v7888 = vld [vmem:[#allocation9 + $0x490] sm:$0xff]
    %v7889 = vld [vmem:[#allocation9 + $0x498] sm:$0xff]
    %v7890 = vld [vmem:[#allocation9 + $0x4a0] sm:$0xff]
    %v7891 = vld [vmem:[#allocation9 + $0x4a8] sm:$0xff]
    %v7892 = vld [vmem:[#allocation9 + $0x4b0] sm:$0xff]
    %v7893 = vld [vmem:[#allocation9 + $0x4b8] sm:$0xff]
    %v7894 = vld [vmem:[#allocation9 + $0x4c0] sm:$0xff]
    %v7895 = vld [vmem:[#allocation9 + $0x4c8] sm:$0xff]
    %v7896 = vld [vmem:[#allocation9 + $0x4d0] sm:$0xff]
    %v7897 = vld [vmem:[#allocation9 + $0x4d8] sm:$0xff]
    %v7898 = vld [vmem:[#allocation9 + $0x4e0] sm:$0xff]
    %v7899 = vld [vmem:[#allocation9 + $0x4e8] sm:$0xff]
    %v7900 = vld [vmem:[#allocation9 + $0x4f0] sm:$0xff]
    %v7901 = vld [vmem:[#allocation9 + $0x4f8] sm:$0xff]
    %v7902 = vld [vmem:[#allocation9 + $0x500] sm:$0xff]
    %v7903 = vld [vmem:[#allocation9 + $0x508] sm:$0xff]
    %v7904 = vld [vmem:[#allocation9 + $0x510] sm:$0xff]
    %v7905 = vld [vmem:[#allocation9 + $0x518] sm:$0xff]
    %v7906 = vld [vmem:[#allocation9 + $0x520] sm:$0xff]
    %v7907 = vld [vmem:[#allocation9 + $0x528] sm:$0xff]
    %v7908 = vld [vmem:[#allocation9 + $0x530] sm:$0xff]
    %v7909 = vld [vmem:[#allocation9 + $0x538] sm:$0xff]
    %v7910 = vld [vmem:[#allocation9 + $0x540] sm:$0xff]
    %v7911 = vld [vmem:[#allocation9 + $0x548] sm:$0xff]
    %v7912 = vld [vmem:[#allocation9 + $0x550] sm:$0xff]
    %v7913 = vld [vmem:[#allocation9 + $0x558] sm:$0xff]
    %v7914 = vld [vmem:[#allocation9 + $0x560] sm:$0xff]
    %v7915 = vld [vmem:[#allocation9 + $0x568] sm:$0xff]
    %v7916 = vld [vmem:[#allocation9 + $0x570] sm:$0xff]
    %v7917 = vld [vmem:[#allocation9 + $0x578] sm:$0xff]
    %v7918 = vld [vmem:[#allocation9 + $0x580] sm:$0xff]
    %v7919 = vld [vmem:[#allocation9 + $0x588] sm:$0xff]
    %v7920 = vld [vmem:[#allocation9 + $0x590] sm:$0xff]
    %v7921 = vld [vmem:[#allocation9 + $0x598] sm:$0xff]
    %v7922 = vld [vmem:[#allocation9 + $0x5a0] sm:$0xff]
    %v7923 = vld [vmem:[#allocation9 + $0x5a8] sm:$0xff]
    %v7924 = vld [vmem:[#allocation9 + $0x5b0] sm:$0xff]
    %v7925 = vld [vmem:[#allocation9 + $0x5b8] sm:$0xff]
    %v7926 = vld [vmem:[#allocation9 + $0x5c0] sm:$0xff]
    %v7927 = vld [vmem:[#allocation9 + $0x5c8] sm:$0xff]
    %v7928 = vld [vmem:[#allocation9 + $0x5d0] sm:$0xff]
    %v7929 = vld [vmem:[#allocation9 + $0x5d8] sm:$0xff]
    %v7930 = vld [vmem:[#allocation9 + $0x5e0] sm:$0xff]
    %v7931 = vld [vmem:[#allocation9 + $0x5e8] sm:$0xff]
    %v7932 = vld [vmem:[#allocation9 + $0x5f0] sm:$0xff]
    %v7933 = vld [vmem:[#allocation9 + $0x5f8] sm:$0xff]
    %v7934 = vld [vmem:[#allocation9 + $0x600] sm:$0xff]
    %v7935 = vld [vmem:[#allocation9 + $0x608] sm:$0xff]
    %v7936 = vld [vmem:[#allocation9 + $0x610] sm:$0xff]
    %v7937 = vld [vmem:[#allocation9 + $0x618] sm:$0xff]
    %v7938 = vld [vmem:[#allocation9 + $0x620] sm:$0xff]
    %v7939 = vld [vmem:[#allocation9 + $0x628] sm:$0xff]
    %v7940 = vld [vmem:[#allocation9 + $0x630] sm:$0xff]
    %v7941 = vld [vmem:[#allocation9 + $0x638] sm:$0xff]
    %v7942 = vld [vmem:[#allocation9 + $0x640] sm:$0xff]
    %v7943 = vld [vmem:[#allocation9 + $0x648] sm:$0xff]
    %v7944 = vld [vmem:[#allocation9 + $0x650] sm:$0xff]
    %v7945 = vld [vmem:[#allocation9 + $0x658] sm:$0xff]
    %v7946 = vld [vmem:[#allocation9 + $0x660] sm:$0xff]
    %v7947 = vld [vmem:[#allocation9 + $0x668] sm:$0xff]
    %v7948 = vld [vmem:[#allocation9 + $0x670] sm:$0xff]
    %v7949 = vld [vmem:[#allocation9 + $0x678] sm:$0xff]
    %v7950 = vld [vmem:[#allocation9 + $0x680] sm:$0xff]
    %v7951 = vld [vmem:[#allocation9 + $0x688] sm:$0xff]
    %v7952 = vld [vmem:[#allocation9 + $0x690] sm:$0xff]
    %v7953 = vld [vmem:[#allocation9 + $0x698] sm:$0xff]
    %v7954 = vld [vmem:[#allocation9 + $0x6a0] sm:$0xff]
    %v7955 = vld [vmem:[#allocation9 + $0x6a8] sm:$0xff]
    %v7956 = vld [vmem:[#allocation9 + $0x6b0] sm:$0xff]
    %v7957 = vld [vmem:[#allocation9 + $0x6b8] sm:$0xff]
    %v7958 = vld [vmem:[#allocation9 + $0x6c0] sm:$0xff]
    %v7959 = vld [vmem:[#allocation9 + $0x6c8] sm:$0xff]
    %v7960 = vld [vmem:[#allocation9 + $0x6d0] sm:$0xff]
    %v7961 = vld [vmem:[#allocation9 + $0x6d8] sm:$0xff]
    %v7962 = vld [vmem:[#allocation9 + $0x6e0] sm:$0xff]
    %v7963 = vld [vmem:[#allocation9 + $0x6e8] sm:$0xff]
    %v7964 = vld [vmem:[#allocation9 + $0x6f0] sm:$0xff]
    %v7965 = vld [vmem:[#allocation9 + $0x6f8] sm:$0xff]
    %v7966 = vld [vmem:[#allocation9 + $0x700] sm:$0xff]
    %v7967 = vld [vmem:[#allocation9 + $0x708] sm:$0xff]
    %v7968 = vld [vmem:[#allocation9 + $0x710] sm:$0xff]
    %v7969 = vld [vmem:[#allocation9 + $0x718] sm:$0xff]
    %v7970 = vld [vmem:[#allocation9 + $0x720] sm:$0xff]
    %v7971 = vld [vmem:[#allocation9 + $0x728] sm:$0xff]
    %v7972 = vld [vmem:[#allocation9 + $0x730] sm:$0xff]
    %v7973 = vld [vmem:[#allocation9 + $0x738] sm:$0xff]
    %v7974 = vld [vmem:[#allocation9 + $0x740] sm:$0xff]
    %v7975 = vld [vmem:[#allocation9 + $0x748] sm:$0xff]
    %v7976 = vld [vmem:[#allocation9 + $0x750] sm:$0xff]
    %v7977 = vld [vmem:[#allocation9 + $0x758] sm:$0xff]
    %v7978 = vld [vmem:[#allocation9 + $0x760] sm:$0xff]
    %v7979 = vld [vmem:[#allocation9 + $0x768] sm:$0xff]
    %v7980 = vld [vmem:[#allocation9 + $0x770] sm:$0xff]
    %v7981 = vld [vmem:[#allocation9 + $0x778] sm:$0xff]
    %v7982 = vld [vmem:[#allocation9 + $0x780] sm:$0xff]
    %v7983 = vld [vmem:[#allocation9 + $0x788] sm:$0xff]
    %v7984 = vld [vmem:[#allocation9 + $0x790] sm:$0xff]
    %v7985 = vld [vmem:[#allocation9 + $0x798] sm:$0xff]
    %v7986 = vld [vmem:[#allocation9 + $0x7a0] sm:$0xff]
    %v7987 = vld [vmem:[#allocation9 + $0x7a8] sm:$0xff]
    %v7988 = vld [vmem:[#allocation9 + $0x7b0] sm:$0xff]
    %v7989 = vld [vmem:[#allocation9 + $0x7b8] sm:$0xff]
    %v7990 = vld [vmem:[#allocation9 + $0x7c0] sm:$0xff]
    %v7991 = vld [vmem:[#allocation9 + $0x7c8] sm:$0xff]
    %v7992 = vld [vmem:[#allocation9 + $0x7d0] sm:$0xff]
    %v7993 = vld [vmem:[#allocation9 + $0x7d8] sm:$0xff]
    %v7994 = vld [vmem:[#allocation9 + $0x7e0] sm:$0xff]
    %v7995 = vld [vmem:[#allocation9 + $0x7e8] sm:$0xff]
    %v7996 = vld [vmem:[#allocation9 + $0x7f0] sm:$0xff]
    %v7997 = vld [vmem:[#allocation9 + $0x7f8] sm:$0xff]
    %v7998 = vld [vmem:[#allocation22] sm:$0x3]
    %v8000 = vlaneseq
    %v8001 = vshrl.u32 %v8000, 7
    %v8002 = vsub.s32 0, %v8001
    %v8003 = vrot.slane %v7998, %v8002
    %v8004 = vlaneseq
    %v8005 = vshrl.u32 %v8004, 7
    %v8006 = vsub.s32 1, %v8005
    %v8007 = vrot.slane %v7998, %v8006
    %8010 = vmatprep.subr.bf16.mxu0 %v7743
    %8011 = vmatpush1.bf16.msra.mxu0 %v7742
    %8012 = vmatprep.subr.bf16.mxu0 %v7745
    %8013 = vmatpush1.bf16.msra.mxu0 %v7744
    %8014 = vmatprep.subr.bf16.mxu0 %v7747
    %8015 = vmatpush1.bf16.msra.mxu0 %v7746
    %8016 = vmatprep.subr.bf16.mxu0 %v7749
    %8017 = vmatpush1.bf16.msra.mxu0 %v7748
    %8018 = vmatprep.subr.bf16.mxu0 %v7751
    %8019 = vmatpush1.bf16.msra.mxu0 %v7750
    %8020 = vmatprep.subr.bf16.mxu0 %v7753
    %8021 = vmatpush1.bf16.msra.mxu0 %v7752
    %8022 = vmatprep.subr.bf16.mxu0 %v7755
    %8023 = vmatpush1.bf16.msra.mxu0 %v7754
    %8024 = vmatprep.subr.bf16.mxu0 %v7757
    %8025 = vmatpush1.bf16.msra.mxu0 %v7756
    %8026 = vmatprep.subr.bf16.mxu0 %v7759
    %8027 = vmatpush1.bf16.msra.mxu0 %v7758
    %8028 = vmatprep.subr.bf16.mxu0 %v7761
    %8029 = vmatpush1.bf16.msra.mxu0 %v7760
    %8030 = vmatprep.subr.bf16.mxu0 %v7763
    %8031 = vmatpush1.bf16.msra.mxu0 %v7762
    %8032 = vmatprep.subr.bf16.mxu0 %v7765
    %8033 = vmatpush1.bf16.msra.mxu0 %v7764
    %8034 = vmatprep.subr.bf16.mxu0 %v7767
    %8035 = vmatpush1.bf16.msra.mxu0 %v7766
    %8036 = vmatprep.subr.bf16.mxu0 %v7769
    %8037 = vmatpush1.bf16.msra.mxu0 %v7768
    %8038 = vmatprep.subr.bf16.mxu0 %v7771
    %8039 = vmatpush1.bf16.msra.mxu0 %v7770
    %8040 = vmatprep.subr.bf16.mxu0 %v7773
    %8041 = vmatpush1.bf16.msra.mxu0 %v7772
    %8042 = vmatprep.mubr.bf16.mxu0 %v7724
    %8043 = vmatmul.mubr.bf16.gmra.mrb[0].mxu0 %v7723
    %v8044 = vpop.f32.mrb[0].mxu0
    %v8045 = vadd.f32 %v8003, %v8044
    %v8046 = vpop.f32.mrb[0].mxu0
    %v8047 = vadd.f32 %v8007, %v8046
    %v8048 = vpop.f32.mrb[0].mxu0
    %v8049 = vadd.f32 %v8003, %v8048
    %v8050 = vpop.f32.mrb[0].mxu0
    %v8051 = vadd.f32 %v8007, %v8050
    %8052 = vdwg.mxu0
    %8053 = vmatprep.subr.bf16.mxu0 %v7775
    %8054 = vmatpush1.bf16.msra.mxu0 %v7774
    %8055 = vmatprep.subr.bf16.mxu0 %v7777
    %8056 = vmatpush1.bf16.msra.mxu0 %v7776
    %8057 = vmatprep.subr.bf16.mxu0 %v7779
    %8058 = vmatpush1.bf16.msra.mxu0 %v7778
    %8059 = vmatprep.subr.bf16.mxu0 %v7781
    %8060 = vmatpush1.bf16.msra.mxu0 %v7780
    %8061 = vmatprep.subr.bf16.mxu0 %v7783
    %8062 = vmatpush1.bf16.msra.mxu0 %v7782
    %8063 = vmatprep.subr.bf16.mxu0 %v7785
    %8064 = vmatpush1.bf16.msra.mxu0 %v7784
    %8065 = vmatprep.subr.bf16.mxu0 %v7787
    %8066 = vmatpush1.bf16.msra.mxu0 %v7786
    %8067 = vmatprep.subr.bf16.mxu0 %v7789
    %8068 = vmatpush1.bf16.msra.mxu0 %v7788
    %8069 = vmatprep.subr.bf16.mxu0 %v7791
    %8070 = vmatpush1.bf16.msra.mxu0 %v7790
    %8071 = vmatprep.subr.bf16.mxu0 %v7793
    %8072 = vmatpush1.bf16.msra.mxu0 %v7792
    %8073 = vmatprep.subr.bf16.mxu0 %v7795
    %8074 = vmatpush1.bf16.msra.mxu0 %v7794
    %8075 = vmatprep.subr.bf16.mxu0 %v7797
    %8076 = vmatpush1.bf16.msra.mxu0 %v7796
    %8077 = vmatprep.subr.bf16.mxu0 %v7799
    %8078 = vmatpush1.bf16.msra.mxu0 %v7798
    %8079 = vmatprep.subr.bf16.mxu0 %v7801
    %8080 = vmatpush1.bf16.msra.mxu0 %v7800
    %8081 = vmatprep.subr.bf16.mxu0 %v7803
    %8082 = vmatpush1.bf16.msra.mxu0 %v7802
    %8083 = vmatprep.subr.bf16.mxu0 %v7805
    %8084 = vmatpush1.bf16.msra.mxu0 %v7804
    %8085 = vmatprep.mubr.bf16.mxu0 %v7726
    %8086 = vmatmul.mubr.bf16.gmra.mrb[0].mxu0 %v7725
    %v8087 = vpop.f32.mrb[0].mxu0
    %v8088 = vadd.f32 %v8045, %v8087
    %v8089 = vpop.f32.mrb[0].mxu0
    %v8090 = vadd.f32 %v8047, %v8089
    %v8091 = vpop.f32.mrb[0].mxu0
    %v8092 = vadd.f32 %v8049, %v8091
    %v8093 = vpop.f32.mrb[0].mxu0
    %v8094 = vadd.f32 %v8051, %v8093
    %8095 = vdwg.mxu0
    %8096 = vmatprep.subr.bf16.mxu0 %v7807
    %8097 = vmatpush1.bf16.msra.mxu0 %v7806
    %8098 = vmatprep.subr.bf16.mxu0 %v7809
    %8099 = vmatpush1.bf16.msra.mxu0 %v7808
    %8100 = vmatprep.subr.bf16.mxu0 %v7811
    %8101 = vmatpush1.bf16.msra.mxu0 %v7810
    %8102 = vmatprep.subr.bf16.mxu0 %v7813
    %8103 = vmatpush1.bf16.msra.mxu0 %v7812
    %8104 = vmatprep.subr.bf16.mxu0 %v7815
    %8105 = vmatpush1.bf16.msra.mxu0 %v7814
    %8106 = vmatprep.subr.bf16.mxu0 %v7817
    %8107 = vmatpush1.bf16.msra.mxu0 %v7816
    %8108 = vmatprep.subr.bf16.mxu0 %v7819
    %8109 = vmatpush1.bf16.msra.mxu0 %v7818
    %8110 = vmatprep.subr.bf16.mxu0 %v7821
    %8111 = vmatpush1.bf16.msra.mxu0 %v7820
    %8112 = vmatprep.subr.bf16.mxu0 %v7823
    %8113 = vmatpush1.bf16.msra.mxu0 %v7822
    %8114 = vmatprep.subr.bf16.mxu0 %v7825
    %8115 = vmatpush1.bf16.msra.mxu0 %v7824
    %8116 = vmatprep.subr.bf16.mxu0 %v7827
    %8117 = vmatpush1.bf16.msra.mxu0 %v7826
    %8118 = vmatprep.subr.bf16.mxu0 %v7829
    %8119 = vmatpush1.bf16.msra.mxu0 %v7828
    %8120 = vmatprep.subr.bf16.mxu0 %v7831
    %8121 = vmatpush1.bf16.msra.mxu0 %v7830
    %8122 = vmatprep.subr.bf16.mxu0 %v7833
    %8123 = vmatpush1.bf16.msra.mxu0 %v7832
    %8124 = vmatprep.subr.bf16.mxu0 %v7835
    %8125 = vmatpush1.bf16.msra.mxu0 %v7834
    %8126 = vmatprep.subr.bf16.mxu0 %v7837
    %8127 = vmatpush1.bf16.msra.mxu0 %v7836
    %8128 = vmatprep.mubr.bf16.mxu0 %v7728
    %8129 = vmatmul.mubr.bf16.gmra.mrb[0].mxu0 %v7727
    %v8130 = vpop.f32.mrb[0].mxu0
    %v8131 = vadd.f32 %v8088, %v8130
    %v8132 = vpop.f32.mrb[0].mxu0
    %v8133 = vadd.f32 %v8090, %v8132
    %v8134 = vpop.f32.mrb[0].mxu0
    %v8135 = vadd.f32 %v8092, %v8134
    %v8136 = vpop.f32.mrb[0].mxu0
    %v8137 = vadd.f32 %v8094, %v8136
    %8138 = vdwg.mxu0
    %8139 = vmatprep.subr.bf16.mxu0 %v7839
    %8140 = vmatpush1.bf16.msra.mxu0 %v7838
    %8141 = vmatprep.subr.bf16.mxu0 %v7841
    %8142 = vmatpush1.bf16.msra.mxu0 %v7840
    %8143 = vmatprep.subr.bf16.mxu0 %v7843
    %8144 = vmatpush1.bf16.msra.mxu0 %v7842
    %8145 = vmatprep.subr.bf16.mxu0 %v7845
    %8146 = vmatpush1.bf16.msra.mxu0 %v7844
    %8147 = vmatprep.subr.bf16.mxu0 %v7847
    %8148 = vmatpush1.bf16.msra.mxu0 %v7846
    %8149 = vmatprep.subr.bf16.mxu0 %v7849
    %8150 = vmatpush1.bf16.msra.mxu0 %v7848
    %8151 = vmatprep.subr.bf16.mxu0 %v7851
    %8152 = vmatpush1.bf16.msra.mxu0 %v7850
    %8153 = vmatprep.subr.bf16.mxu0 %v7853
    %8154 = vmatpush1.bf16.msra.mxu0 %v7852
    %8155 = vmatprep.subr.bf16.mxu0 %v7855
    %8156 = vmatpush1.bf16.msra.mxu0 %v7854
    %8157 = vmatprep.subr.bf16.mxu0 %v7857
    %8158 = vmatpush1.bf16.msra.mxu0 %v7856
    %8159 = vmatprep.subr.bf16.mxu0 %v7859
    %8160 = vmatpush1.bf16.msra.mxu0 %v7858
    %8161 = vmatprep.subr.bf16.mxu0 %v7861
    %8162 = vmatpush1.bf16.msra.mxu0 %v7860
    %8163 = vmatprep.subr.bf16.mxu0 %v7863
    %8164 = vmatpush1.bf16.msra.mxu0 %v7862
    %8165 = vmatprep.subr.bf16.mxu0 %v7865
    %8166 = vmatpush1.bf16.msra.mxu0 %v7864
    %8167 = vmatprep.subr.bf16.mxu0 %v7867
    %8168 = vmatpush1.bf16.msra.mxu0 %v7866
    %8169 = vmatprep.subr.bf16.mxu0 %v7869
    %8170 = vmatpush1.bf16.msra.mxu0 %v7868
    %8171 = vmatprep.mubr.bf16.mxu0 %v7730
    %8172 = vmatmul.mubr.bf16.gmra.mrb[0].mxu0 %v7729
    %v8173 = vpop.f32.mrb[0].mxu0
    %v8174 = vadd.f32 %v8131, %v8173
    %v8175 = vpop.f32.mrb[0].mxu0
    %v8176 = vadd.f32 %v8133, %v8175
    %v8177 = vpop.f32.mrb[0].mxu0
    %v8178 = vadd.f32 %v8135, %v8177
    %v8179 = vpop.f32.mrb[0].mxu0
    %v8180 = vadd.f32 %v8137, %v8179
    %8181 = vdwg.mxu0
    %8182 = vmatprep.subr.bf16.mxu0 %v7871
    %8183 = vmatpush1.bf16.msra.mxu0 %v7870
    %8184 = vmatprep.subr.bf16.mxu0 %v7873
    %8185 = vmatpush1.bf16.msra.mxu0 %v7872
    %8186 = vmatprep.subr.bf16.mxu0 %v7875
    %8187 = vmatpush1.bf16.msra.mxu0 %v7874
    %8188 = vmatprep.subr.bf16.mxu0 %v7877
    %8189 = vmatpush1.bf16.msra.mxu0 %v7876
    %8190 = vmatprep.subr.bf16.mxu0 %v7879
    %8191 = vmatpush1.bf16.msra.mxu0 %v7878
    %8192 = vmatprep.subr.bf16.mxu0 %v7881
    %8193 = vmatpush1.bf16.msra.mxu0 %v7880
    %8194 = vmatprep.subr.bf16.mxu0 %v7883
    %8195 = vmatpush1.bf16.msra.mxu0 %v7882
    %8196 = vmatprep.subr.bf16.mxu0 %v7885
    %8197 = vmatpush1.bf16.msra.mxu0 %v7884
    %8198 = vmatprep.subr.bf16.mxu0 %v7887
    %8199 = vmatpush1.bf16.msra.mxu0 %v7886
    %8200 = vmatprep.subr.bf16.mxu0 %v7889
    %8201 = vmatpush1.bf16.msra.mxu0 %v7888
    %8202 = vmatprep.subr.bf16.mxu0 %v7891
    %8203 = vmatpush1.bf16.msra.mxu0 %v7890
    %8204 = vmatprep.subr.bf16.mxu0 %v7893
    %8205 = vmatpush1.bf16.msra.mxu0 %v7892
    %8206 = vmatprep.subr.bf16.mxu0 %v7895
    %8207 = vmatpush1.bf16.msra.mxu0 %v7894
    %8208 = vmatprep.subr.bf16.mxu0 %v7897
    %8209 = vmatpush1.bf16.msra.mxu0 %v7896
    %8210 = vmatprep.subr.bf16.mxu0 %v7899
    %8211 = vmatpush1.bf16.msra.mxu0 %v7898
    %8212 = vmatprep.subr.bf16.mxu0 %v7901
    %8213 = vmatpush1.bf16.msra.mxu0 %v7900
    %8214 = vmatprep.mubr.bf16.mxu0 %v7732
    %8215 = vmatmul.mubr.bf16.gmra.mrb[0].mxu0 %v7731
    %v8216 = vpop.f32.mrb[0].mxu0
    %v8217 = vadd.f32 %v8174, %v8216
    %v8218 = vpop.f32.mrb[0].mxu0
    %v8219 = vadd.f32 %v8176, %v8218
    %v8220 = vpop.f32.mrb[0].mxu0
    %v8221 = vadd.f32 %v8178, %v8220
    %v8222 = vpop.f32.mrb[0].mxu0
    %v8223 = vadd.f32 %v8180, %v8222
    %8224 = vdwg.mxu0
    %8225 = vmatprep.subr.bf16.mxu0 %v7903
    %8226 = vmatpush1.bf16.msra.mxu0 %v7902
    %8227 = vmatprep.subr.bf16.mxu0 %v7905
    %8228 = vmatpush1.bf16.msra.mxu0 %v7904
    %8229 = vmatprep.subr.bf16.mxu0 %v7907
    %8230 = vmatpush1.bf16.msra.mxu0 %v7906
    %8231 = vmatprep.subr.bf16.mxu0 %v7909
    %8232 = vmatpush1.bf16.msra.mxu0 %v7908
    %8233 = vmatprep.subr.bf16.mxu0 %v7911
    %8234 = vmatpush1.bf16.msra.mxu0 %v7910
    %8235 = vmatprep.subr.bf16.mxu0 %v7913
    %8236 = vmatpush1.bf16.msra.mxu0 %v7912
    %8237 = vmatprep.subr.bf16.mxu0 %v7915
    %8238 = vmatpush1.bf16.msra.mxu0 %v7914
    %8239 = vmatprep.subr.bf16.mxu0 %v7917
    %8240 = vmatpush1.bf16.msra.mxu0 %v7916
    %8241 = vmatprep.subr.bf16.mxu0 %v7919
    %8242 = vmatpush1.bf16.msra.mxu0 %v7918
    %8243 = vmatprep.subr.bf16.mxu0 %v7921
    %8244 = vmatpush1.bf16.msra.mxu0 %v7920
    %8245 = vmatprep.subr.bf16.mxu0 %v7923
    %8246 = vmatpush1.bf16.msra.mxu0 %v7922
    %8247 = vmatprep.subr.bf16.mxu0 %v7925
    %8248 = vmatpush1.bf16.msra.mxu0 %v7924
    %8249 = vmatprep.subr.bf16.mxu0 %v7927
    %8250 = vmatpush1.bf16.msra.mxu0 %v7926
    %8251 = vmatprep.subr.bf16.mxu0 %v7929
    %8252 = vmatpush1.bf16.msra.mxu0 %v7928
    %8253 = vmatprep.subr.bf16.mxu0 %v7931
    %8254 = vmatpush1.bf16.msra.mxu0 %v7930
    %8255 = vmatprep.subr.bf16.mxu0 %v7933
    %8256 = vmatpush1.bf16.msra.mxu0 %v7932
    %8257 = vmatprep.mubr.bf16.mxu0 %v7734
    %8258 = vmatmul.mubr.bf16.gmra.mrb[0].mxu0 %v7733
    %v8259 = vpop.f32.mrb[0].mxu0
    %v8260 = vadd.f32 %v8217, %v8259
    %v8261 = vpop.f32.mrb[0].mxu0
    %v8262 = vadd.f32 %v8219, %v8261
    %v8263 = vpop.f32.mrb[0].mxu0
    %v8264 = vadd.f32 %v8221, %v8263
    %v8265 = vpop.f32.mrb[0].mxu0
    %v8266 = vadd.f32 %v8223, %v8265
    %8267 = vdwg.mxu0
    %8268 = vmatprep.subr.bf16.mxu0 %v7935
    %8269 = vmatpush1.bf16.msra.mxu0 %v7934
    %8270 = vmatprep.subr.bf16.mxu0 %v7937
    %8271 = vmatpush1.bf16.msra.mxu0 %v7936
    %8272 = vmatprep.subr.bf16.mxu0 %v7939
    %8273 = vmatpush1.bf16.msra.mxu0 %v7938
    %8274 = vmatprep.subr.bf16.mxu0 %v7941
    %8275 = vmatpush1.bf16.msra.mxu0 %v7940
    %8276 = vmatprep.subr.bf16.mxu0 %v7943
    %8277 = vmatpush1.bf16.msra.mxu0 %v7942
    %8278 = vmatprep.subr.bf16.mxu0 %v7945
    %8279 = vmatpush1.bf16.msra.mxu0 %v7944
    %8280 = vmatprep.subr.bf16.mxu0 %v7947
    %8281 = vmatpush1.bf16.msra.mxu0 %v7946
    %8282 = vmatprep.subr.bf16.mxu0 %v7949
    %8283 = vmatpush1.bf16.msra.mxu0 %v7948
    %8284 = vmatprep.subr.bf16.mxu0 %v7951
    %8285 = vmatpush1.bf16.msra.mxu0 %v7950
    %8286 = vmatprep.subr.bf16.mxu0 %v7953
    %8287 = vmatpush1.bf16.msra.mxu0 %v7952
    %8288 = vmatprep.subr.bf16.mxu0 %v7955
    %8289 = vmatpush1.bf16.msra.mxu0 %v7954
    %8290 = vmatprep.subr.bf16.mxu0 %v7957
    %8291 = vmatpush1.bf16.msra.mxu0 %v7956
    %8292 = vmatprep.subr.bf16.mxu0 %v7959
    %8293 = vmatpush1.bf16.msra.mxu0 %v7958
    %8294 = vmatprep.subr.bf16.mxu0 %v7961
    %8295 = vmatpush1.bf16.msra.mxu0 %v7960
    %8296 = vmatprep.subr.bf16.mxu0 %v7963
    %8297 = vmatpush1.bf16.msra.mxu0 %v7962
    %8298 = vmatprep.subr.bf16.mxu0 %v7965
    %8299 = vmatpush1.bf16.msra.mxu0 %v7964
    %8300 = vmatprep.mubr.bf16.mxu0 %v7736
    %8301 = vmatmul.mubr.bf16.gmra.mrb[0].mxu0 %v7735
    %v8302 = vpop.f32.mrb[0].mxu0
    %v8303 = vadd.f32 %v8260, %v8302
    %v8304 = vpop.f32.mrb[0].mxu0
    %v8305 = vadd.f32 %v8262, %v8304
    %v8306 = vpop.f32.mrb[0].mxu0
    %v8307 = vadd.f32 %v8264, %v8306
    %v8308 = vpop.f32.mrb[0].mxu0
    %v8309 = vadd.f32 %v8266, %v8308
    %8310 = vdwg.mxu0
    %8311 = vmatprep.subr.bf16.mxu0 %v7967
    %8312 = vmatpush1.bf16.msra.mxu0 %v7966
    %8313 = vmatprep.subr.bf16.mxu0 %v7969
    %8314 = vmatpush1.bf16.msra.mxu0 %v7968
    %8315 = vmatprep.subr.bf16.mxu0 %v7971
    %8316 = vmatpush1.bf16.msra.mxu0 %v7970
    %8317 = vmatprep.subr.bf16.mxu0 %v7973
    %8318 = vmatpush1.bf16.msra.mxu0 %v7972
    %8319 = vmatprep.subr.bf16.mxu0 %v7975
    %8320 = vmatpush1.bf16.msra.mxu0 %v7974
    %8321 = vmatprep.subr.bf16.mxu0 %v7977
    %8322 = vmatpush1.bf16.msra.mxu0 %v7976
    %8323 = vmatprep.subr.bf16.mxu0 %v7979
    %8324 = vmatpush1.bf16.msra.mxu0 %v7978
    %8325 = vmatprep.subr.bf16.mxu0 %v7981
    %8326 = vmatpush1.bf16.msra.mxu0 %v7980
    %8327 = vmatprep.subr.bf16.mxu0 %v7983
    %8328 = vmatpush1.bf16.msra.mxu0 %v7982
    %8329 = vmatprep.subr.bf16.mxu0 %v7985
    %8330 = vmatpush1.bf16.msra.mxu0 %v7984
    %8331 = vmatprep.subr.bf16.mxu0 %v7987
    %8332 = vmatpush1.bf16.msra.mxu0 %v7986
    %8333 = vmatprep.subr.bf16.mxu0 %v7989
    %8334 = vmatpush1.bf16.msra.mxu0 %v7988
    %8335 = vmatprep.subr.bf16.mxu0 %v7991
    %8336 = vmatpush1.bf16.msra.mxu0 %v7990
    %8337 = vmatprep.subr.bf16.mxu0 %v7993
    %8338 = vmatpush1.bf16.msra.mxu0 %v7992
    %8339 = vmatprep.subr.bf16.mxu0 %v7995
    %8340 = vmatpush1.bf16.msra.mxu0 %v7994
    %8341 = vmatprep.subr.bf16.mxu0 %v7997
    %8342 = vmatpush1.bf16.msra.mxu0 %v7996
    %8343 = vmatprep.mubr.bf16.mxu0 %v7738
    %8344 = vmatmul.mubr.bf16.gmra.mrb[0].mxu0 %v7737
    %v8345 = vpop.f32.mrb[0].mxu0
    %v8346 = vadd.f32 %v8303, %v8345
    %v8347 = vpop.f32.mrb[0].mxu0
    %v8348 = vadd.f32 %v8305, %v8347
    %v8349 = vpop.f32.mrb[0].mxu0
    %v8350 = vadd.f32 %v8307, %v8349
    %v8351 = vpop.f32.mrb[0].mxu0
    %v8352 = vadd.f32 %v8309, %v8351
    %8353 = vdwg.mxu0
    %8354 = vst [vmem:[%s17] sm:$0xff] %v8346
    %8355 = vst [vmem:[%s17 + $0x8] sm:$0xff] %v8348
    %8356 = vst [vmem:[%s17 + $0x10] sm:$0xff] %v8350
    %8357 = vst [vmem:[%s17 + $0x18] sm:$0xff] %v8352
    // Predicated region
    $region74: #{linear_autoencoder_forward.1} parent=1 // pred_check
      _
    $region75: #{linear_autoencoder_forward.1} parent=1 // pred_check_branch
      %8359 = sbr.rel (0) target = $region77
    $region76: #{linear_autoencoder_forward.1} parent=1 // pred_region
      _
    $region77: #{linear_autoencoder_forward.1} parent=1 // pred_fallthru
      _
    // Predicated region
    $region78: #{linear_autoencoder_forward.1} parent=1 // pred_check
      _
    $region79: #{linear_autoencoder_forward.1} parent=1 // pred_check_branch
      %8361 = sbr.rel (0) target = $region81
    $region80: #{linear_autoencoder_forward.1} parent=1 // pred_region
      _
    $region81: #{linear_autoencoder_forward.1} parent=1 // pred_fallthru
      _
    // Predicated region
    $region82: #{linear_autoencoder_forward.1} parent=1 // pred_check
      _
    $region83: #{linear_autoencoder_forward.1} parent=1 // pred_check_branch
      %8363 = sbr.rel (0) target = $region85
    $region84: #{linear_autoencoder_forward.1} parent=1 // pred_region
      _
    $region85: #{linear_autoencoder_forward.1} parent=1 // pred_fallthru
      _
    // Predicated region
    $region86: #{linear_autoencoder_forward.1} parent=1 // pred_check
      _
    $region87: #{linear_autoencoder_forward.1} parent=1 // pred_check_branch
      %8365 = sbr.rel (0) target = $region89
    $region88: #{linear_autoencoder_forward.1} parent=1 // pred_region
      _
    $region89: #{linear_autoencoder_forward.1} parent=1 // pred_fallthru
      _
    %8366 = vsyncpa [#allocation12], 1
    %8367 = vsyncpa [#allocation14], 1
    %8368 = vsyncpa [#allocation17], 1
    %8369 = vsyncpa [#allocation20], 1
    %8370 = vsyncpa [#allocation23], 1
  %8371 = vsyncmov [#allocation10]
  %s8372 = vpop.sfrf %8371
  %p8373 = scmp.eq.s32.totalorder %s8372, 0
  %p8374 = pneg %p8373
  %8376 = shalt.err (%p8374)
  %s8377 = scalar_lea.sflag [#allocation10], 1
  %8378 = vsyncmov %s8377
  %s8379 = vpop.sfrf %8378
  %p8380 = scmp.eq.s32.totalorder %s8379, 0
  %p8381 = pneg %p8380
  %8383 = shalt.err (%p8381)
  %s8384 = scalar_lea.sflag [#allocation10], 2
  %8385 = vsyncmov %s8384
  %s8386 = vpop.sfrf %8385
  %p8387 = scmp.eq.s32.totalorder %s8386, 0
  %p8388 = pneg %p8387
  %8390 = shalt.err (%p8388)
  %s8391 = scalar_lea.sflag [#allocation10], 3
  %8392 = vsyncmov %s8391
  %s8393 = vpop.sfrf %8392
  %p8394 = scmp.eq.s32.totalorder %s8393, 0
  %p8395 = pneg %p8394
  %8397 = shalt.err (%p8395)
  %s8398 = scalar_lea.sflag [#allocation10], 4
  %8399 = vsyncmov %s8398
  %s8400 = vpop.sfrf %8399
  %p8401 = scmp.eq.s32.totalorder %s8400, 0
  %p8402 = pneg %p8401
  %8404 = shalt.err (%p8402)
  %s8405 = scalar_lea.sflag [#allocation10], 5
  %8406 = vsyncmov %s8405
  %s8407 = vpop.sfrf %8406
  %p8408 = scmp.eq.s32.totalorder %s8407, 0
  %p8409 = pneg %p8408
  %8411 = shalt.err (%p8409)
  %s8412 = scalar_lea.sflag [#allocation10], 6
  %8413 = vsyncmov %s8412
  %s8414 = vpop.sfrf %8413
  %p8415 = scmp.eq.s32.totalorder %s8414, 0
  %p8416 = pneg %p8415
  %8418 = shalt.err (%p8416)
  %s8419 = scalar_lea.sflag [#allocation10], 7
  %8420 = vsyncmov %s8419
  %s8421 = vpop.sfrf %8420
  %p8422 = scmp.eq.s32.totalorder %s8421, 0
  %p8423 = pneg %p8422
  %8425 = shalt.err (%p8423)

</llo_original>
